<compile_context>
chip_gen: v5e
topology: v5e:2x2
jax: 0.10.0
libtpu: 0.0.40
codegen_flags: <defaults>
</compile_context>

<pallas_src>
import functools

import jax
import jax.numpy as jnp
from jax.experimental import pallas as pl
from jax.experimental.pallas import tpu as pltpu

FC_DIM = 512      # the reference module hard-codes a 512-wide output buffer
TILE_N = 8        # clips per encoder grid step (sublane-aligned)
P_TILE = 256      # positions per encoder grid step (per-clip intermediate = 512 KiB)
TILE_T = 128      # template columns per distance grid step (lane-dense output)


# --------------------------------------------------------------------------- #
# Encoder kernel: 1x1x1 Conv3d + ReLU + AdaptiveAvgPool3d((1,1,1)) + F.normalize
# --------------------------------------------------------------------------- #
def _encode_kernel(x_ref, w_ref, b_ref, o_ref, *, p_real, p_total):
    # x_ref: (TILE_N, C, P_TILE) lane-dense   w_ref: (C, F)   b_ref: (1, F)
    # o_ref: (TILE_N, F) f32 -- resident pooled-sum accumulator across the P axis.
    p_idx = pl.program_id(1)

    @pl.when(p_idx == 0)
    def _init():
        o_ref[...] = jnp.zeros_like(o_ref)

    tn, C, pt = x_ref.shape
    x = x_ref[...]                                   # (tn, C, pt)
    w = w_ref[...]                                   # (C, F)
    b = b_ref[...]                                   # (1, F)

    # Per clip: (pt, C) @ (C, F) on the MXU (K = C is tiny and zero-padded, but a
    # single matmul pass writes the big (pt, F) intermediate once, vs. ~3 full VMEM
    # passes per channel for a VPU broadcast-FMA loop).  Bias+ReLU on the VPU,
    # position-pool on the XLU, row accumulate into the resident output block.
    for n in range(tn):                              # static unroll, tn == TILE_N
        xt = x[n].T                                  # (pt, C) -- cheap rank-2 transpose
        y = jnp.dot(xt, w, preferred_element_type=jnp.float32)   # (pt, F)
        y = jnp.maximum(y + b, 0.0)                  # Conv3d bias + ReLU
        o_ref[pl.ds(n, 1), :] += jnp.sum(y, axis=0, keepdims=True)

    @pl.when(p_idx == pl.num_programs(1) - 1)
    def _finalize():
        acc = o_ref[...]
        if p_total > p_real:
            # Zero-padded positions contribute exactly ReLU(bias) each; remove them.
            acc = acc - float(p_total - p_real) * jnp.maximum(b, 0.0)
        emb = acc * (1.0 / float(p_real))            # AdaptiveAvgPool3d((1,1,1))
        ss = jnp.sum(emb * emb, axis=1, keepdims=True)
        # F.normalize(dim=-1, eps=1e-12) via EUP rsqrt (no VALU divide).
        o_ref[...] = emb * jax.lax.rsqrt(jnp.maximum(ss, 1e-24))


def encode_clips(x_cp, w, b, tile_n=TILE_N, p_tile=P_TILE):
    """x_cp: (N, C, P) f32, lane-dense (P last) -> (N, F) L2-normalized embeddings."""
    N, C, P = x_cp.shape
    F = w.shape[1]
    n_pad = (-N) % tile_n
    p_pad = (-P) % p_tile
    xp = jnp.pad(x_cp, ((0, n_pad), (0, 0), (0, p_pad)))
    Np, Pp = N + n_pad, P + p_pad

    kernel = functools.partial(_encode_kernel, p_real=P, p_total=Pp)
    out = pl.pallas_call(
        kernel,
        out_shape=jax.ShapeDtypeStruct((Np, F), jnp.float32),
        grid_spec=pltpu.PrefetchScalarGridSpec(
            num_scalar_prefetch=0,
            grid=(Np // tile_n, Pp // p_tile),          # reduction (P) axis last
            in_specs=[
                pl.BlockSpec((tile_n, C, p_tile), lambda n, p: (n, 0, p)),
                pl.BlockSpec((C, F), lambda n, p: (0, 0)),
                pl.BlockSpec((1, F), lambda n, p: (0, 0)),
            ],
            out_specs=pl.BlockSpec((tile_n, F), lambda n, p: (n, 0)),
        ),
        # Peak VMEM ~2-3 MiB (input double-buffer + per-clip intermediates) -> fits
        # default scoped VMEM on v5e/v6e/v7x.
        compiler_params=pltpu.CompilerParams(
            dimension_semantics=("parallel", "arbitrary")),
    )(xp, w, b.reshape(1, F))
    return out[:N]


# --------------------------------------------------------------------------- #
# Distance kernel: out[i, j] = || q[i] - e[j] ||_2 for unit-norm q, e
#                 = sqrt(max(2 - 2 * q.e, 0))   -- Gram matmul on the MXU
# --------------------------------------------------------------------------- #
def _dist_kernel(q_ref, e_ref, o_ref):
    # q_ref: (B, F)   e_ref: (TILE_T, F)   o_ref: (B, TILE_T)
    q = q_ref[...]
    e = e_ref[...]
    s = jax.lax.dot_general(q, e, (((1,), (1,)), ((), ())),
                            preferred_element_type=jnp.float32)   # (B, TILE_T)
    # Both operands are L2-normalized in the encoder; clamp guards fp round-off.
    o_ref[...] = jnp.sqrt(jnp.maximum(2.0 - 2.0 * s, 0.0))


def pairwise_dist(q_emb, e_emb, tile_t=TILE_T):
    B, F = q_emb.shape
    T = e_emb.shape[0]
    t_pad = (-T) % tile_t
    ep = jnp.pad(e_emb, ((0, t_pad), (0, 0)))
    Tp = T + t_pad
    out = pl.pallas_call(
        _dist_kernel,
        out_shape=jax.ShapeDtypeStruct((B, Tp), jnp.float32),
        grid_spec=pltpu.PrefetchScalarGridSpec(
            num_scalar_prefetch=0,
            grid=(Tp // tile_t,),
            in_specs=[
                pl.BlockSpec((B, F), lambda t: (0, 0)),
                pl.BlockSpec((tile_t, F), lambda t: (t, 0)),
            ],
            out_specs=pl.BlockSpec((B, tile_t), lambda t: (0, t)),   # lane-dense
        ),
        compiler_params=pltpu.CompilerParams(dimension_semantics=("parallel",)),
    )(q_emb, ep)
    return out[:, :T]


# --------------------------------------------------------------------------- #
# Module wrapper reproducing ClassicTemporal.forward (a_encoder=None path)
# --------------------------------------------------------------------------- #
class ClassicTemporalPallas:
    def __init__(self, conv_w, conv_b, fc_dim=FC_DIM, temp=0.1, window=4,
                 stride=2, threshold=0.2, mini_batchsize=100):
        # Synthetic video_enc_model = Conv3d(C, fc_dim, 1) + ReLU; conv_w: (C, fc_dim)
        assert fc_dim == FC_DIM, "reference module hard-codes an output dim of 512"
        self.conv_w = conv_w
        self.conv_b = conv_b
        self.fc_dim = fc_dim
        self.temp = temp
        self.window = window
        self.stride = stride
        self.threshold = threshold
        self.mini_batchsize = mini_batchsize  # chunking only; does not change results

    def __call__(self, q_f, t_f, labels=None, t_frame_ids=None, is_inference=False):
        # q_f: (B, window, C, H, W)   t_f: (B, t_len, window, C, H, W)
        B, t_len, window, C, H, W = t_f.shape
        P = window * H * W

        # Reference: q_f.view(-1, C, window, H, W) -- raw reinterpret, NO permute.
        q_cp = q_f.reshape(B, C, P)

        # Reference minibatch loop only ever encodes flattened clips [0:t_len], i.e.
        # batch 0's templates -> slice and permute only that slab (no full concat /
        # 6-D transpose of (B, t_len+1, ...) in HBM).
        e_cp = jnp.transpose(t_f[0], (0, 2, 1, 3, 4)).reshape(t_len, C, P)

        # Single fused encode for query + template clips (one launch).
        emb = encode_clips(jnp.concatenate([q_cp, e_cp], axis=0),
                           self.conv_w, self.conv_b)
        q_emb, e_emb = emb[:B], emb[B:]

        d = pairwise_dist(q_emb, e_emb)                 # (B, t_len)
        # output[:, t_len, :] is never written in the reference -> its norm is 0.
        return jnp.pad(d, ((0, 0), (0, 1)))             # (B, t_len+1)


# --------------------------------------------------------------------------- #
# Pure-JAX reference (mirrors the torch code with the synthetic encoder)
# --------------------------------------------------------------------------- #
def _reference_forward(q_f, t_f, conv_w, conv_b):
    B, t_len, window, C, H, W = t_f.shape
    P = window * H * W

    def encode(clips_ncp):  # (N, C, P)
        y = jnp.einsum('ncp,cf->npf', clips_ncp, conv_w) + conv_b[None, None, :]
        y = jnp.maximum(y, 0.0)
        emb = jnp.mean(y, axis=1)
        nrm = jnp.sqrt(jnp.sum(emb * emb, axis=1, keepdims=True))
        return emb / jnp.maximum(nrm, 1e-12)

    q_emb = encode(q_f.reshape(B, C, P))
    e_emb = encode(jnp.transpose(t_f[0], (0, 2, 1, 3, 4)).reshape(t_len, C, P))
    diff = q_emb[:, None, :] - e_emb[None, :, :]
    d = jnp.sqrt(jnp.sum(diff * diff, axis=-1))
    return jnp.pad(d, ((0, 0), (0, 1)))


if __name__ == "__main__":
    key = jax.random.PRNGKey(0)
    B, t_len, window, C, H, W = 2, 8, 4, 8, 8, 8
    k1, k2, k3, k4 = jax.random.split(key, 4)

    q_f = jax.random.normal(k1, (B, window, C, H, W), jnp.float32)
    t_f = jax.random.normal(k2, (B, t_len, window, C, H, W), jnp.float32)
    labels = jnp.zeros((B,), jnp.int32)  # unused by forward, kept for signature fidelity

    # Deterministic synthetic encoder parameters: Conv3d(C, 512, kernel_size=1) + ReLU
    # TODO(synk): the reference's video_enc_model is an external module; a real
    # backbone (e.g. 3D ResNet) is not reproduced here, only 1x1x1 conv + ReLU.
    conv_w = 0.05 * jax.random.normal(k3, (C, FC_DIM), jnp.float32)
    conv_b = 0.01 * jax.random.normal(k4, (FC_DIM,), jnp.float32)

    model = ClassicTemporalPallas(conv_w, conv_b, window=window)
    out = jax.block_until_ready(model(q_f, t_f, labels))
    assert out.shape == (B, t_len + 1) and out.dtype == jnp.float32

    ref = jax.block_until_ready(_reference_forward(q_f, t_f, conv_w, conv_b))
    max_err = float(jnp.max(jnp.abs(out - ref)))
    assert max_err < 1e-3, f"mismatch vs reference: {max_err}"
    print("KERNEL_OK")
</pallas_src>

<mosaic_0001>
module attributes {stable_mosaic.version = 11 : i64} {
  func.func @_encode_kernel(%arg0: i32, %arg1: i32, %arg2: memref<8x8x256xf32, #tpu.memory_space<vmem>>, %arg3: memref<8x512xf32, #tpu.memory_space<vmem>>, %arg4: memref<1x512xf32, #tpu.memory_space<vmem>>, %arg5: memref<8x512xf32, #tpu.memory_space<vmem>>) attributes {dimension_semantics = [#tpu.dimension_semantics<parallel>, #tpu.dimension_semantics<arbitrary>], iteration_bounds = array<i64: 2, 1>, scalar_prefetch = 0 : i64, scratch_operands = 0 : i64, tpu.core_type = #tpu.core_type<tc>, window_params = [{transform_indices = @transform_0, window_bounds = array<i64: 8, 8, 256>}, {pipeline_mode = #tpu.pipeline_mode<synchronous>, transform_indices = @transform_1, window_bounds = array<i64: 8, 512>}, {pipeline_mode = #tpu.pipeline_mode<synchronous>, transform_indices = @transform_2, window_bounds = array<i64: 1, 512>}, {transform_indices = @transform_3, window_bounds = array<i64: 8, 512>}]} {
    %c0_i32 = arith.constant 0 : i32
    %0 = arith.cmpi eq, %arg1, %c0_i32 : i32
    %1 = arith.extui %0 : i1 to i32
    %c0_i32_0 = arith.constant 0 : i32
    %2 = arith.cmpi ne, %1, %c0_i32_0 : i32
    scf.if %2 {
      %cst_57 = arith.constant 0.000000e+00 : f32
      %113 = vector.broadcast %cst_57 : f32 to vector<8x512xf32>
      %c0_58 = arith.constant 0 : index
      %c0_59 = arith.constant 0 : index
      %114 = vector.load %arg5[%c0_58, %c0_59] : memref<8x512xf32, #tpu.memory_space<vmem>>, vector<8x512xf32>
      tpu.vector_store %arg5[%c0_58, %c0_59], %113 {strides = array<i32>} : memref<8x512xf32, #tpu.memory_space<vmem>>, vector<8x512xf32>,
    } else {
    }
    %c0 = arith.constant 0 : index
    %c0_1 = arith.constant 0 : index
    %c0_2 = arith.constant 0 : index
    %3 = vector.load %arg2[%c0, %c0_1, %c0_2] : memref<8x8x256xf32, #tpu.memory_space<vmem>>, vector<8x8x256xf32>
    %c0_3 = arith.constant 0 : index
    %c0_4 = arith.constant 0 : index
    %4 = vector.load %arg3[%c0_3, %c0_4] : memref<8x512xf32, #tpu.memory_space<vmem>>, vector<8x512xf32>
    %c0_5 = arith.constant 0 : index
    %c0_6 = arith.constant 0 : index
    %5 = vector.load %arg4[%c0_5, %c0_6] : memref<1x512xf32, #tpu.memory_space<vmem>>, vector<1x512xf32>
    %6 = vector.extract_strided_slice %3 {offsets = [0, 0, 0], sizes = [1, 8, 256], strides = [1, 1, 1]} : vector<8x8x256xf32> to vector<1x8x256xf32>
    %7 = vector.shape_cast %6 : vector<1x8x256xf32> to vector<8x256xf32>
    %8 = tpu.transpose %7, [1, 0] : vector<8x256xf32> -> vector<256x8xf32>
    %cst = arith.constant dense<0.000000e+00> : vector<256x512xf32>
    %9 = tpu.matmul %8, %4, %cst {dimension_numbers = #tpu.dot_dimension_numbers<[1], [0], [0], [1], [0, 0, 1, 1], [], []>} : vector<256x8xf32>, vector<8x512xf32>, vector<256x512xf32> -> vector<256x512xf32>
    %10 = vector.broadcast %5 : vector<1x512xf32> to vector<256x512xf32>
    %11 = arith.addf %9, %10 : vector<256x512xf32>
    %cst_7 = arith.constant 0.000000e+00 : f32
    %12 = vector.broadcast %cst_7 : f32 to vector<256x512xf32>
    %13 = arith.maximumf %11, %12 : vector<256x512xf32>
    %c0_8 = arith.constant 0 : index
    %c0_9 = arith.constant 0 : index
    %14 = vector.load %arg5[%c0_8, %c0_9] : memref<8x512xf32, #tpu.memory_space<vmem>>, vector<1x512xf32>
    %cst_10 = arith.constant dense<0.000000e+00> : vector<512xf32>
    %15 = vector.multi_reduction <add>, %13, %cst_10 [0] : vector<256x512xf32> to vector<512xf32>
    %16 = vector.shape_cast %15 : vector<512xf32> to vector<1x512xf32>
    %17 = arith.addf %14, %16 : vector<1x512xf32>
    %c0_11 = arith.constant 0 : index
    %c0_12 = arith.constant 0 : index
    %18 = vector.load %arg5[%c0_11, %c0_12] : memref<8x512xf32, #tpu.memory_space<vmem>>, vector<1x512xf32>
    tpu.vector_store %arg5[%c0_11, %c0_12], %17 {strides = array<i32>} : memref<8x512xf32, #tpu.memory_space<vmem>>, vector<1x512xf32>,
    %19 = vector.extract_strided_slice %3 {offsets = [1, 0, 0], sizes = [1, 8, 256], strides = [1, 1, 1]} : vector<8x8x256xf32> to vector<1x8x256xf32>
    %20 = vector.shape_cast %19 : vector<1x8x256xf32> to vector<8x256xf32>
    %21 = tpu.transpose %20, [1, 0] : vector<8x256xf32> -> vector<256x8xf32>
    %cst_13 = arith.constant dense<0.000000e+00> : vector<256x512xf32>
    %22 = tpu.matmul %21, %4, %cst_13 {dimension_numbers = #tpu.dot_dimension_numbers<[1], [0], [0], [1], [0, 0, 1, 1], [], []>} : vector<256x8xf32>, vector<8x512xf32>, vector<256x512xf32> -> vector<256x512xf32>
    %23 = vector.broadcast %5 : vector<1x512xf32> to vector<256x512xf32>
    %24 = arith.addf %22, %23 : vector<256x512xf32>
    %cst_14 = arith.constant 0.000000e+00 : f32
    %25 = vector.broadcast %cst_14 : f32 to vector<256x512xf32>
    %26 = arith.maximumf %24, %25 : vector<256x512xf32>
    %c1 = arith.constant 1 : index
    %c0_15 = arith.constant 0 : index
    %27 = vector.load %arg5[%c1, %c0_15] : memref<8x512xf32, #tpu.memory_space<vmem>>, vector<1x512xf32>
    %cst_16 = arith.constant dense<0.000000e+00> : vector<512xf32>
    %28 = vector.multi_reduction <add>, %26, %cst_16 [0] : vector<256x512xf32> to vector<512xf32>
    %29 = vector.shape_cast %28 : vector<512xf32> to vector<1x512xf32>
    %30 = arith.addf %27, %29 : vector<1x512xf32>
    %c1_17 = arith.constant 1 : index
    %c0_18 = arith.constant 0 : index
    %31 = vector.load %arg5[%c1_17, %c0_18] : memref<8x512xf32, #tpu.memory_space<vmem>>, vector<1x512xf32>
    tpu.vector_store %arg5[%c1_17, %c0_18], %30 {strides = array<i32>} : memref<8x512xf32, #tpu.memory_space<vmem>>, vector<1x512xf32>,
    %32 = vector.extract_strided_slice %3 {offsets = [2, 0, 0], sizes = [1, 8, 256], strides = [1, 1, 1]} : vector<8x8x256xf32> to vector<1x8x256xf32>
    %33 = vector.shape_cast %32 : vector<1x8x256xf32> to vector<8x256xf32>
    %34 = tpu.transpose %33, [1, 0] : vector<8x256xf32> -> vector<256x8xf32>
    %cst_19 = arith.constant dense<0.000000e+00> : vector<256x512xf32>
    %35 = tpu.matmul %34, %4, %cst_19 {dimension_numbers = #tpu.dot_dimension_numbers<[1], [0], [0], [1], [0, 0, 1, 1], [], []>} : vector<256x8xf32>, vector<8x512xf32>, vector<256x512xf32> -> vector<256x512xf32>
    %36 = vector.broadcast %5 : vector<1x512xf32> to vector<256x512xf32>
    %37 = arith.addf %35, %36 : vector<256x512xf32>
    %cst_20 = arith.constant 0.000000e+00 : f32
    %38 = vector.broadcast %cst_20 : f32 to vector<256x512xf32>
    %39 = arith.maximumf %37, %38 : vector<256x512xf32>
    %c2 = arith.constant 2 : index
    %c0_21 = arith.constant 0 : index
    %40 = vector.load %arg5[%c2, %c0_21] : memref<8x512xf32, #tpu.memory_space<vmem>>, vector<1x512xf32>
    %cst_22 = arith.constant dense<0.000000e+00> : vector<512xf32>
    %41 = vector.multi_reduction <add>, %39, %cst_22 [0] : vector<256x512xf32> to vector<512xf32>
    %42 = vector.shape_cast %41 : vector<512xf32> to vector<1x512xf32>
    %43 = arith.addf %40, %42 : vector<1x512xf32>
    %c2_23 = arith.constant 2 : index
    %c0_24 = arith.constant 0 : index
    %44 = vector.load %arg5[%c2_23, %c0_24] : memref<8x512xf32, #tpu.memory_space<vmem>>, vector<1x512xf32>
    tpu.vector_store %arg5[%c2_23, %c0_24], %43 {strides = array<i32>} : memref<8x512xf32, #tpu.memory_space<vmem>>, vector<1x512xf32>,
    %45 = vector.extract_strided_slice %3 {offsets = [3, 0, 0], sizes = [1, 8, 256], strides = [1, 1, 1]} : vector<8x8x256xf32> to vector<1x8x256xf32>
    %46 = vector.shape_cast %45 : vector<1x8x256xf32> to vector<8x256xf32>
    %47 = tpu.transpose %46, [1, 0] : vector<8x256xf32> -> vector<256x8xf32>
    %cst_25 = arith.constant dense<0.000000e+00> : vector<256x512xf32>
    %48 = tpu.matmul %47, %4, %cst_25 {dimension_numbers = #tpu.dot_dimension_numbers<[1], [0], [0], [1], [0, 0, 1, 1], [], []>} : vector<256x8xf32>, vector<8x512xf32>, vector<256x512xf32> -> vector<256x512xf32>
    %49 = vector.broadcast %5 : vector<1x512xf32> to vector<256x512xf32>
    %50 = arith.addf %48, %49 : vector<256x512xf32>
    %cst_26 = arith.constant 0.000000e+00 : f32
    %51 = vector.broadcast %cst_26 : f32 to vector<256x512xf32>
    %52 = arith.maximumf %50, %51 : vector<256x512xf32>
    %c3 = arith.constant 3 : index
    %c0_27 = arith.constant 0 : index
    %53 = vector.load %arg5[%c3, %c0_27] : memref<8x512xf32, #tpu.memory_space<vmem>>, vector<1x512xf32>
    %cst_28 = arith.constant dense<0.000000e+00> : vector<512xf32>
    %54 = vector.multi_reduction <add>, %52, %cst_28 [0] : vector<256x512xf32> to vector<512xf32>
    %55 = vector.shape_cast %54 : vector<512xf32> to vector<1x512xf32>
    %56 = arith.addf %53, %55 : vector<1x512xf32>
    %c3_29 = arith.constant 3 : index
    %c0_30 = arith.constant 0 : index
    %57 = vector.load %arg5[%c3_29, %c0_30] : memref<8x512xf32, #tpu.memory_space<vmem>>, vector<1x512xf32>
    tpu.vector_store %arg5[%c3_29, %c0_30], %56 {strides = array<i32>} : memref<8x512xf32, #tpu.memory_space<vmem>>, vector<1x512xf32>,
    %58 = vector.extract_strided_slice %3 {offsets = [4, 0, 0], sizes = [1, 8, 256], strides = [1, 1, 1]} : vector<8x8x256xf32> to vector<1x8x256xf32>
    %59 = vector.shape_cast %58 : vector<1x8x256xf32> to vector<8x256xf32>
    %60 = tpu.transpose %59, [1, 0] : vector<8x256xf32> -> vector<256x8xf32>
    %cst_31 = arith.constant dense<0.000000e+00> : vector<256x512xf32>
    %61 = tpu.matmul %60, %4, %cst_31 {dimension_numbers = #tpu.dot_dimension_numbers<[1], [0], [0], [1], [0, 0, 1, 1], [], []>} : vector<256x8xf32>, vector<8x512xf32>, vector<256x512xf32> -> vector<256x512xf32>
    %62 = vector.broadcast %5 : vector<1x512xf32> to vector<256x512xf32>
    %63 = arith.addf %61, %62 : vector<256x512xf32>
    %cst_32 = arith.constant 0.000000e+00 : f32
    %64 = vector.broadcast %cst_32 : f32 to vector<256x512xf32>
    %65 = arith.maximumf %63, %64 : vector<256x512xf32>
    %c4 = arith.constant 4 : index
    %c0_33 = arith.constant 0 : index
    %66 = vector.load %arg5[%c4, %c0_33] : memref<8x512xf32, #tpu.memory_space<vmem>>, vector<1x512xf32>
    %cst_34 = arith.constant dense<0.000000e+00> : vector<512xf32>
    %67 = vector.multi_reduction <add>, %65, %cst_34 [0] : vector<256x512xf32> to vector<512xf32>
    %68 = vector.shape_cast %67 : vector<512xf32> to vector<1x512xf32>
    %69 = arith.addf %66, %68 : vector<1x512xf32>
    %c4_35 = arith.constant 4 : index
    %c0_36 = arith.constant 0 : index
    %70 = vector.load %arg5[%c4_35, %c0_36] : memref<8x512xf32, #tpu.memory_space<vmem>>, vector<1x512xf32>
    tpu.vector_store %arg5[%c4_35, %c0_36], %69 {strides = array<i32>} : memref<8x512xf32, #tpu.memory_space<vmem>>, vector<1x512xf32>,
    %71 = vector.extract_strided_slice %3 {offsets = [5, 0, 0], sizes = [1, 8, 256], strides = [1, 1, 1]} : vector<8x8x256xf32> to vector<1x8x256xf32>
    %72 = vector.shape_cast %71 : vector<1x8x256xf32> to vector<8x256xf32>
    %73 = tpu.transpose %72, [1, 0] : vector<8x256xf32> -> vector<256x8xf32>
    %cst_37 = arith.constant dense<0.000000e+00> : vector<256x512xf32>
    %74 = tpu.matmul %73, %4, %cst_37 {dimension_numbers = #tpu.dot_dimension_numbers<[1], [0], [0], [1], [0, 0, 1, 1], [], []>} : vector<256x8xf32>, vector<8x512xf32>, vector<256x512xf32> -> vector<256x512xf32>
    %75 = vector.broadcast %5 : vector<1x512xf32> to vector<256x512xf32>
    %76 = arith.addf %74, %75 : vector<256x512xf32>
    %cst_38 = arith.constant 0.000000e+00 : f32
    %77 = vector.broadcast %cst_38 : f32 to vector<256x512xf32>
    %78 = arith.maximumf %76, %77 : vector<256x512xf32>
    %c5 = arith.constant 5 : index
    %c0_39 = arith.constant 0 : index
    %79 = vector.load %arg5[%c5, %c0_39] : memref<8x512xf32, #tpu.memory_space<vmem>>, vector<1x512xf32>
    %cst_40 = arith.constant dense<0.000000e+00> : vector<512xf32>
    %80 = vector.multi_reduction <add>, %78, %cst_40 [0] : vector<256x512xf32> to vector<512xf32>
    %81 = vector.shape_cast %80 : vector<512xf32> to vector<1x512xf32>
    %82 = arith.addf %79, %81 : vector<1x512xf32>
    %c5_41 = arith.constant 5 : index
    %c0_42 = arith.constant 0 : index
    %83 = vector.load %arg5[%c5_41, %c0_42] : memref<8x512xf32, #tpu.memory_space<vmem>>, vector<1x512xf32>
    tpu.vector_store %arg5[%c5_41, %c0_42], %82 {strides = array<i32>} : memref<8x512xf32, #tpu.memory_space<vmem>>, vector<1x512xf32>,
    %84 = vector.extract_strided_slice %3 {offsets = [6, 0, 0], sizes = [1, 8, 256], strides = [1, 1, 1]} : vector<8x8x256xf32> to vector<1x8x256xf32>
    %85 = vector.shape_cast %84 : vector<1x8x256xf32> to vector<8x256xf32>
    %86 = tpu.transpose %85, [1, 0] : vector<8x256xf32> -> vector<256x8xf32>
    %cst_43 = arith.constant dense<0.000000e+00> : vector<256x512xf32>
    %87 = tpu.matmul %86, %4, %cst_43 {dimension_numbers = #tpu.dot_dimension_numbers<[1], [0], [0], [1], [0, 0, 1, 1], [], []>} : vector<256x8xf32>, vector<8x512xf32>, vector<256x512xf32> -> vector<256x512xf32>
    %88 = vector.broadcast %5 : vector<1x512xf32> to vector<256x512xf32>
    %89 = arith.addf %87, %88 : vector<256x512xf32>
    %cst_44 = arith.constant 0.000000e+00 : f32
    %90 = vector.broadcast %cst_44 : f32 to vector<256x512xf32>
    %91 = arith.maximumf %89, %90 : vector<256x512xf32>
    %c6 = arith.constant 6 : index
    %c0_45 = arith.constant 0 : index
    %92 = vector.load %arg5[%c6, %c0_45] : memref<8x512xf32, #tpu.memory_space<vmem>>, vector<1x512xf32>
    %cst_46 = arith.constant dense<0.000000e+00> : vector<512xf32>
    %93 = vector.multi_reduction <add>, %91, %cst_46 [0] : vector<256x512xf32> to vector<512xf32>
    %94 = vector.shape_cast %93 : vector<512xf32> to vector<1x512xf32>
    %95 = arith.addf %92, %94 : vector<1x512xf32>
    %c6_47 = arith.constant 6 : index
    %c0_48 = arith.constant 0 : index
    %96 = vector.load %arg5[%c6_47, %c0_48] : memref<8x512xf32, #tpu.memory_space<vmem>>, vector<1x512xf32>
    tpu.vector_store %arg5[%c6_47, %c0_48], %95 {strides = array<i32>} : memref<8x512xf32, #tpu.memory_space<vmem>>, vector<1x512xf32>,
    %97 = vector.extract_strided_slice %3 {offsets = [7, 0, 0], sizes = [1, 8, 256], strides = [1, 1, 1]} : vector<8x8x256xf32> to vector<1x8x256xf32>
    %98 = vector.shape_cast %97 : vector<1x8x256xf32> to vector<8x256xf32>
    %99 = tpu.transpose %98, [1, 0] : vector<8x256xf32> -> vector<256x8xf32>
    %cst_49 = arith.constant dense<0.000000e+00> : vector<256x512xf32>
    %100 = tpu.matmul %99, %4, %cst_49 {dimension_numbers = #tpu.dot_dimension_numbers<[1], [0], [0], [1], [0, 0, 1, 1], [], []>} : vector<256x8xf32>, vector<8x512xf32>, vector<256x512xf32> -> vector<256x512xf32>
    %101 = vector.broadcast %5 : vector<1x512xf32> to vector<256x512xf32>
    %102 = arith.addf %100, %101 : vector<256x512xf32>
    %cst_50 = arith.constant 0.000000e+00 : f32
    %103 = vector.broadcast %cst_50 : f32 to vector<256x512xf32>
    %104 = arith.maximumf %102, %103 : vector<256x512xf32>
    %c7 = arith.constant 7 : index
    %c0_51 = arith.constant 0 : index
    %105 = vector.load %arg5[%c7, %c0_51] : memref<8x512xf32, #tpu.memory_space<vmem>>, vector<1x512xf32>
    %cst_52 = arith.constant dense<0.000000e+00> : vector<512xf32>
    %106 = vector.multi_reduction <add>, %104, %cst_52 [0] : vector<256x512xf32> to vector<512xf32>
    %107 = vector.shape_cast %106 : vector<512xf32> to vector<1x512xf32>
    %108 = arith.addf %105, %107 : vector<1x512xf32>
    %c7_53 = arith.constant 7 : index
    %c0_54 = arith.constant 0 : index
    %109 = vector.load %arg5[%c7_53, %c0_54] : memref<8x512xf32, #tpu.memory_space<vmem>>, vector<1x512xf32>
    tpu.vector_store %arg5[%c7_53, %c0_54], %108 {strides = array<i32>} : memref<8x512xf32, #tpu.memory_space<vmem>>, vector<1x512xf32>,
    %c0_i32_55 = arith.constant 0 : i32
    %110 = arith.cmpi eq, %arg1, %c0_i32_55 : i32
    %111 = arith.extui %110 : i1 to i32
    %c0_i32_56 = arith.constant 0 : i32
    %112 = arith.cmpi ne, %111, %c0_i32_56 : i32
    scf.if %112 {
      %c0_57 = arith.constant 0 : index
      %c0_58 = arith.constant 0 : index
      %113 = vector.load %arg5[%c0_57, %c0_58] : memref<8x512xf32, #tpu.memory_space<vmem>>, vector<8x512xf32>
      %cst_59 = arith.constant 3.906250e-03 : f32
      %114 = vector.broadcast %cst_59 : f32 to vector<8x512xf32>
      %115 = arith.mulf %113, %114 : vector<8x512xf32>
      %116 = arith.mulf %115, %115 : vector<8x512xf32>
      %cst_60 = arith.constant dense<0.000000e+00> : vector<8xf32>
      %117 = vector.multi_reduction <add>, %116, %cst_60 [1] : vector<8x512xf32> to vector<8xf32>
      %118 = vector.shape_cast %117 : vector<8xf32> to vector<8x1xf32>
      %cst_61 = arith.constant 1.000000e-24 : f32
      %119 = vector.broadcast %cst_61 : f32 to vector<8x1xf32>
      %120 = arith.maximumf %118, %119 : vector<8x1xf32>
      %121 = math.rsqrt %120 : vector<8x1xf32>
      %122 = vector.broadcast %121 : vector<8x1xf32> to vector<8x512xf32>
      %123 = arith.mulf %115, %122 : vector<8x512xf32>
      %c0_62 = arith.constant 0 : index
      %c0_63 = arith.constant 0 : index
      %124 = vector.load %arg5[%c0_62, %c0_63] : memref<8x512xf32, #tpu.memory_space<vmem>>, vector<8x512xf32>
      tpu.vector_store %arg5[%c0_62, %c0_63], %123 {strides = array<i32>} : memref<8x512xf32, #tpu.memory_space<vmem>>, vector<8x512xf32>,
    } else {
    }
    return
  }
  func.func @transform_0(%arg0: i32, %arg1: i32) -> (i32, i32, i32) {
    %c0_i32 = arith.constant 0 : i32
    %c0_i32_0 = arith.constant 0 : i32
    return %arg0, %c0_i32, %arg1 : i32, i32, i32
  }
  func.func @transform_1(%arg0: i32, %arg1: i32) -> (i32, i32) {
    %c0_i32 = arith.constant 0 : i32
    %c0_i32_0 = arith.constant 0 : i32
    %c0_i32_1 = arith.constant 0 : i32
    return %c0_i32, %c0_i32_0 : i32, i32
  }
  func.func @transform_2(%arg0: i32, %arg1: i32) -> (i32, i32) {
    %c0_i32 = arith.constant 0 : i32
    %c0_i32_0 = arith.constant 0 : i32
    %c0_i32_1 = arith.constant 0 : i32
    return %c0_i32, %c0_i32_0 : i32, i32
  }
  func.func @transform_3(%arg0: i32, %arg1: i32) -> (i32, i32) {
    %c0_i32 = arith.constant 0 : i32
    %c0_i32_0 = arith.constant 0 : i32
    return %arg0, %c0_i32 : i32, i32
  }
}

</mosaic_0001>

<llo_original>
// kernel: tpu_custom_call.1
$region0: #{tpu_custom_call.1}
  #allocation0 [shape = 'u32[]', space=smem, size = 0x4, offset = 0x4, fixed_abs, tag = 'smem constant byte address 0x4 - core index']
  #allocation1 [shape = 'u32[72,128]{1,0:T(1,128)}', space=vmem, size = 0x9000, scoped, tag = 'internal scratch']
  %s0 = inlined_call_operand.hbm [shape: f32[16,8,256], index: 0, kind: input, shape index: {}]
  %s1 = inlined_call_operand.hbm [shape: f32[8,512], index: 1, kind: input, shape index: {}]
  %s2 = inlined_call_operand.hbm [shape: f32[1,512], index: 2, kind: input, shape index: {}]
  %s3 = inlined_call_operand.hbm [shape: f32[16,512], index: 3, kind: output, shape index: {}]
  %s4 = sld [smem:[#allocation0]]
  $region65: #{tpu_custom_call.1} parent=0
    _
  %s6 = ssub.s32 1, %s4
  %s7 = scalar_select 0, %s6, %s4
  $region1: #{tpu_custom_call.1} parent=0
    #allocation2 [shape = 'u8[131072]{0}', space=vmem, size = 0x20000, scoped, tag = 'input window, operand 0']
    #allocation3 [shape = 's32[2]{0}', space=sflag, size = 0x8, scoped, tag = 'scoped memory for tpu_custom_call.1']
    #allocation4 [shape = 's32[2]{0}', space=sflag, size = 0x8, scoped, tag = 'scoped memory for tpu_custom_call.1']
    #allocation5 [shape = 'u8[16384]{0}', space=vmem, size = 0x4000, scoped, tag = 'input window, operand 1, single buffered']
    #allocation6 [shape = 's32[1]{0}', space=sflag, size = 0x4, scoped, tag = 'scoped memory for tpu_custom_call.1']
    #allocation7 [shape = 'u8[2048]{0}', space=vmem, size = 0x800, scoped, tag = 'input window, operand 2, single buffered']
    #allocation8 [shape = 'u8[32768]{0}', space=vmem, size = 0x8000, scoped, tag = 'output window, operand 0']
    %8 = vsyncpa [#allocation3], 0
    %s9 = scalar_lea.sflag [#allocation3], 1
    %10 = vsyncpa %s9, 0
    %11 = vsyncpa [#allocation6], 0
    %12 = vsyncpa [#allocation4], 0
    %s13 = scalar_lea.sflag [#allocation4], 1
    %14 = vsyncpa %s13, 0
    loop: start=0, step=1, limit=4
    $region2: #{tpu_custom_call.1} parent=1 // loop_pre_header
      _
    $region3: #{tpu_custom_call.1} parent=1 // loop_header
      %s16 = sphi 0, %s20
      %p17 = scmp.ge.s32.totalorder %s16, 4
      %s23 = sphi 0, %s35
      %s24 = sphi 0, %s31
      %s25 = sphi 0, %s23
      %s26 = sphi 0, %s24
      %s27 = sphi 0, %s25
      %s28 = sphi 0, %s26
      %s40 = sphi 0, %s42
      %s43 = sphi 0, %s40
      %s44 = sphi 0, %s43
      %s60 = sphi 0, %s44
      %s64 = sphi 0, %s64
      %s66 = sphi 0, %s64
      %s67 = sphi 0, %s66
      %s81 = sphi 0, %s67
      %s85 = sphi 0, %s85
      %s87 = sphi 0, %s85
      %s88 = sphi 0, %s87
      %s102 = sphi 0, %s88
      %s108 = sphi 0, %s110
      %s111 = sphi 0, %s108
      %s112 = sphi 0, %s111
      %s128 = sphi 0, %s112
    $region4: #{tpu_custom_call.1} parent=1 // loop_header_branch
      %19 = sbr.rel (%p17) target = $region8
    $region5: #{tpu_custom_call.1} parent=1 // loop_body
      %s21 = ssub.s32 %s16, 1
      %s22 = ssub.s32 %s16, 2
      %s29 = sadd.s32 1, %s24
      %p30 = scmp.ge.s32.totalorder %s29, 1
      %s31 = scalar_select %p30, 0, %s29
      %s32 = sadd.s32 1, %s23
      %s33 = scalar_select %p30, %s32, %s23
      %p34 = scmp.ge.s32.totalorder %s33, 2
      %s35 = scalar_select %p34, 0, %s33
      %s36 = ssub.s32 %s23, %s35
      %s37 = ssub.s32 %s24, %s31
      %s38 = sor.u32 %s36, %s37
      %p39 = scmp.eq.s32.totalorder %s38, 0
      %s41 = sadd.s32 %s40, 1
      %s42 = scalar_select %p39, %s40, %s41
      %p45 = pneg %p39
      %p46 = scmp.eq.s32.totalorder %s16, 1
      %p47 = por %p45, %p46
      %p48 = scmp.ne.s32.totalorder %s40, %s43
      %p49 = scmp.eq.s32.totalorder %s16, 0
      %p50 = por %p48, %p49
      %p51 = scmp.ne.s32.totalorder %s40, %s43
      %p52 = scmp.eq.s32.totalorder %s21, 1
      %p53 = por %p51, %p52
      %p54 = scmp.ne.s32.totalorder %s43, %s44
      %p55 = scmp.eq.s32.totalorder %s21, 0
      %p56 = por %p54, %p55
      %p57 = scmp.ne.s32.totalorder %s43, %s44
      %p58 = scmp.eq.s32.totalorder %s22, 1
      %p59 = por %p57, %p58
      %p61 = scmp.ne.s32.totalorder %s44, %s60
      %p62 = scmp.eq.s32.totalorder %s22, 0
      %p63 = por %p61, %p62
      %s65 = sadd.s32 %s64, 1
      %p68 = scmp.eq.s32.totalorder %s16, 1
      %p69 = scmp.ne.s32.totalorder %s64, %s66
      %p70 = scmp.eq.s32.totalorder %s16, 0
      %p71 = por %p69, %p70
      %p72 = scmp.ne.s32.totalorder %s64, %s66
      %p73 = scmp.eq.s32.totalorder %s21, 1
      %p74 = por %p72, %p73
      %p75 = scmp.ne.s32.totalorder %s66, %s67
      %p76 = scmp.eq.s32.totalorder %s21, 0
      %p77 = por %p75, %p76
      %p78 = scmp.ne.s32.totalorder %s66, %s67
      %p79 = scmp.eq.s32.totalorder %s22, 1
      %p80 = por %p78, %p79
      %p82 = scmp.ne.s32.totalorder %s67, %s81
      %p83 = scmp.eq.s32.totalorder %s22, 0
      %p84 = por %p82, %p83
      %s86 = sadd.s32 %s85, 1
      %p89 = scmp.eq.s32.totalorder %s16, 1
      %p90 = scmp.ne.s32.totalorder %s85, %s87
      %p91 = scmp.eq.s32.totalorder %s16, 0
      %p92 = por %p90, %p91
      %p93 = scmp.ne.s32.totalorder %s85, %s87
      %p94 = scmp.eq.s32.totalorder %s21, 1
      %p95 = por %p93, %p94
      %p96 = scmp.ne.s32.totalorder %s87, %s88
      %p97 = scmp.eq.s32.totalorder %s21, 0
      %p98 = por %p96, %p97
      %p99 = scmp.ne.s32.totalorder %s87, %s88
      %p100 = scmp.eq.s32.totalorder %s22, 1
      %p101 = por %p99, %p100
      %p103 = scmp.ne.s32.totalorder %s88, %s102
      %p104 = scmp.eq.s32.totalorder %s22, 0
      %p105 = por %p103, %p104
      %s106 = ssub.s32 %s23, %s35
      %p107 = scmp.eq.s32.totalorder %s106, 0
      %s109 = sadd.s32 %s108, 1
      %s110 = scalar_select %p107, %s108, %s109
      %p113 = pneg %p107
      %p114 = scmp.eq.s32.totalorder %s16, 1
      %p115 = por %p113, %p114
      %p116 = scmp.ne.s32.totalorder %s108, %s111
      %p117 = scmp.eq.s32.totalorder %s16, 0
      %p118 = por %p116, %p117
      %p119 = scmp.ne.s32.totalorder %s108, %s111
      %p120 = scmp.eq.s32.totalorder %s21, 1
      %p121 = por %p119, %p120
      %p122 = scmp.ne.s32.totalorder %s111, %s112
      %p123 = scmp.eq.s32.totalorder %s21, 0
      %p124 = por %p122, %p123
      %p125 = scmp.ne.s32.totalorder %s111, %s112
      %p126 = scmp.eq.s32.totalorder %s22, 1
      %p127 = por %p125, %p126
      %p129 = scmp.ne.s32.totalorder %s112, %s128
      %p130 = scmp.eq.s32.totalorder %s22, 0
      %p131 = por %p129, %p130
      %p132 = scmp.le.s32.totalorder 1, %s16
      %p133 = scmp.lt.s32.totalorder %s16, 3
      %p134 = pnand %p132, %p133
      %p135 = pneg %p134
      // Predicated region
      $region9: #{tpu_custom_call.1} parent=5 // pred_check
        _
      $region10: #{tpu_custom_call.1} parent=5 // pred_check_branch
        %137 = sbr.rel (%p134) target = $region12
      $region11: #{tpu_custom_call.1} parent=5 // pred_region
        %s138 = ssub.s32 %s16, 1
        // Predicated region
        $region13: #{tpu_custom_call.1} parent=11 // pred_check
          %p139 = pneg %p77
        $region14: #{tpu_custom_call.1} parent=11 // pred_check_branch
          %141 = sbr.rel (%p139) target = $region16
        $region15: #{tpu_custom_call.1} parent=11 // pred_region
          %143 = vsyncadd [#allocation6], 0
          %s145 = sshll.u32 %s1, 4
          %s146 = int_to_ptr.hbm [resolvable:$true] %s145
          %s147 = sshll.u32 [#allocation5], 4
          %s148 = int_to_ptr.vmem [resolvable:$true] %s147
          %150 = dma.hbm_to_vmem [thread:$0]  %s146, 512, %s148, [#allocation6]
        $region16: #{tpu_custom_call.1} parent=11 // pred_fallthru
          _
        // Predicated region
        $region17: #{tpu_custom_call.1} parent=11 // pred_check
          %p151 = pneg %p98
        $region18: #{tpu_custom_call.1} parent=11 // pred_check_branch
          %153 = sbr.rel (%p151) target = $region20
        $region19: #{tpu_custom_call.1} parent=11 // pred_region
          %155 = vsyncadd [#allocation6], 0
          %s157 = sshll.u32 %s2, 4
          %s158 = int_to_ptr.hbm [resolvable:$true] %s157
          %s159 = sshll.u32 [#allocation7], 4
          %s160 = int_to_ptr.vmem [resolvable:$true] %s159
          %162 = dma.hbm_to_vmem [thread:$0]  %s158, 64, %s160, [#allocation6]
        $region20: #{tpu_custom_call.1} parent=11 // pred_fallthru
          _
      $region12: #{tpu_custom_call.1} parent=5 // pred_fallthru
        _
      %p163 = scmp.lt.s32.totalorder %s16, 2
      // Predicated region
      $region21: #{tpu_custom_call.1} parent=5 // pred_check
        %p164 = pneg %p163
      $region22: #{tpu_custom_call.1} parent=5 // pred_check_branch
        %166 = sbr.rel (%p164) target = $region24
      $region23: #{tpu_custom_call.1} parent=5 // pred_region
        // Predicated region
        $region25: #{tpu_custom_call.1} parent=23 // pred_check
          %p167 = pneg %p50
        $region26: #{tpu_custom_call.1} parent=23 // pred_check_branch
          %169 = sbr.rel (%p167) target = $region28
        $region27: #{tpu_custom_call.1} parent=23 // pred_region
          %s170 = sand.u32 %s40, 1
          %s171 = scalar_lea.sflag [#allocation3], %s170
          %s172 = sand.u32 %s40, 1
          %s173 = smul.addr %s172, 128
          %s174 = scalar_lea.vmem [#allocation2], %s173
          %s175 = smul.u32 8, %s23
          %s176 = smul.u32 2, %s24
          %178 = vsyncadd %s171, 0
          %s179 = smul.addr %s175, 2
          %s180 = sadd.s32 %s176, %s179
          %s181 = smul.addr %s180, 8
          %s182 = scalar_lea.hbm %s0, %s181
          %s183 = sshll.u32 %s182, 4
          %s184 = int_to_ptr.hbm [resolvable:$true] %s183
          %s185 = sshll.u32 %s174, 4
          %s186 = int_to_ptr.vmem [resolvable:$true] %s185
          %191 = dma.hbm_to_vmem [thread:$0]  %s184, 2048, %s186, %s171, 256, 256, 16
        $region28: #{tpu_custom_call.1} parent=23 // pred_fallthru
          _
      $region24: #{tpu_custom_call.1} parent=5 // pred_fallthru
        _
      %p192 = scmp.le.s32.totalorder 1, %s16
      %p193 = scmp.lt.s32.totalorder %s16, 3
      %p194 = pnand %p192, %p193
      %p195 = pneg %p194
      // Predicated region
      $region29: #{tpu_custom_call.1} parent=5 // pred_check
        _
      $region30: #{tpu_custom_call.1} parent=5 // pred_check_branch
        %197 = sbr.rel (%p194) target = $region32
      $region31: #{tpu_custom_call.1} parent=5 // pred_region
        %s198 = ssub.s32 %s16, 1
        %s199 = sand.u32 %s43, 1
        %s200 = scalar_lea.sflag [#allocation3], %s199
        %s201 = sand.u32 %s43, 1
        %s202 = smul.addr %s201, 128
        %s203 = scalar_lea.vmem [#allocation2], %s202
        // Predicated region
        $region33: #{tpu_custom_call.1} parent=31 // pred_check
          %p204 = pneg %p56
        $region34: #{tpu_custom_call.1} parent=31 // pred_check_branch
          %206 = sbr.rel (%p204) target = $region36
        $region35: #{tpu_custom_call.1} parent=31 // pred_region
          %208 = dma.done %s200, 2048
        $region36: #{tpu_custom_call.1} parent=31 // pred_fallthru
          _
        // Predicated region
        $region37: #{tpu_custom_call.1} parent=31 // pred_check
          %p209 = pneg %p77
        $region38: #{tpu_custom_call.1} parent=31 // pred_check_branch
          %211 = sbr.rel (%p209) target = $region40
        $region39: #{tpu_custom_call.1} parent=31 // pred_region
          %213 = dma.done [#allocation6], 512
        $region40: #{tpu_custom_call.1} parent=31 // pred_fallthru
          _
        // Predicated region
        $region41: #{tpu_custom_call.1} parent=31 // pred_check
          %p214 = pneg %p98
        $region42: #{tpu_custom_call.1} parent=31 // pred_check_branch
          %216 = sbr.rel (%p214) target = $region44
        $region43: #{tpu_custom_call.1} parent=31 // pred_region
          %218 = dma.done [#allocation6], 64
        $region44: #{tpu_custom_call.1} parent=31 // pred_fallthru
          _
        %s219 = sand.u32 %s43, 1
        %s220 = scalar_lea.sflag [#allocation3], %s219
        %s221 = sand.u32 %s43, 1
        %s222 = smul.addr %s221, 128
        %s223 = scalar_lea.vmem [#allocation2], %s222
        %p224 = pneg %p56
        %p225 = pneg %p53
        %p226 = pneg %p77
        %p227 = pneg %p74
        %p228 = pneg %p98
        %p229 = pneg %p95
        %p230 = pneg %p124
        %p231 = pneg %p121
        %s232 = sand.u32 %s111, 1
        %s233 = scalar_lea.sflag [#allocation4], %s232
        %s234 = sand.u32 %s111, 1
        %s235 = smul.addr %s234, 32
        %s236 = scalar_lea.vmem [#allocation8], %s235
        %s237 = smul.u32 8, %s25
        %s238 = smul.u32 2, %s26
        %p239 = scmp.eq.s32.totalorder %s26, 0
        // Predicated region
        $region45: #{tpu_custom_call.1} parent=31 // pred_check
          %p240 = pneg %p239
        $region46: #{tpu_custom_call.1} parent=31 // pred_check_branch
          %242 = sbr.rel (%p240) target = $region48
        $region47: #{tpu_custom_call.1} parent=31 // pred_region
          %243 = vst [vmem:[%s236] sm:$0xff] 0.0
          %244 = vst [vmem:[%s236 + $0x8] sm:$0xff] 0.0
          %245 = vst [vmem:[%s236 + $0x10] sm:$0xff] 0.0
          %246 = vst [vmem:[%s236 + $0x18] sm:$0xff] 0.0
        $region48: #{tpu_custom_call.1} parent=31 // pred_fallthru
          _
        %v247 = vld [vmem:[%s203] sm:$0xff]
        %v248 = vld [vmem:[%s203 + $0x8] sm:$0xff]
        %v249 = vld [vmem:[%s203 + $0x10] sm:$0xff]
        %v250 = vld [vmem:[%s203 + $0x18] sm:$0xff]
        %v251 = vld [vmem:[%s203 + $0x20] sm:$0xff]
        %v252 = vld [vmem:[%s203 + $0x28] sm:$0xff]
        %v253 = vld [vmem:[%s203 + $0x30] sm:$0xff]
        %v254 = vld [vmem:[%s203 + $0x38] sm:$0xff]
        %v255 = vld [vmem:[%s203 + $0x40] sm:$0xff]
        %v256 = vld [vmem:[%s203 + $0x48] sm:$0xff]
        %v257 = vld [vmem:[%s203 + $0x50] sm:$0xff]
        %v258 = vld [vmem:[%s203 + $0x58] sm:$0xff]
        %v259 = vld [vmem:[%s203 + $0x60] sm:$0xff]
        %v260 = vld [vmem:[%s203 + $0x68] sm:$0xff]
        %v261 = vld [vmem:[%s203 + $0x70] sm:$0xff]
        %v262 = vld [vmem:[%s203 + $0x78] sm:$0xff]
        %v263 = vld [vmem:[#allocation5] sm:$0xff]
        %v264 = vld [vmem:[#allocation5 + $0x8] sm:$0xff]
        %v265 = vld [vmem:[#allocation5 + $0x10] sm:$0xff]
        %v266 = vld [vmem:[#allocation5 + $0x18] sm:$0xff]
        %v267 = vld [vmem:[#allocation7] sm:$0xf]
        %268 = vxpose.xlu0.b32.start [1/16] %v247, 128
        %269 = vxpose.xlu0.b32.cont [2/16] 0.0, 128
        %270 = vxpose.xlu0.b32.cont [3/16] 0.0, 128
        %271 = vxpose.xlu0.b32.cont [4/16] 0.0, 128
        %272 = vxpose.xlu0.b32.cont [5/16] 0.0, 128
        %273 = vxpose.xlu0.b32.cont [6/16] 0.0, 128
        %274 = vxpose.xlu0.b32.cont [7/16] 0.0, 128
        %275 = vxpose.xlu0.b32.cont [8/16] 0.0, 128
        %276 = vxpose.xlu0.b32.cont [9/16] 0.0, 128
        %277 = vxpose.xlu0.b32.cont [10/16] 0.0, 128
        %278 = vxpose.xlu0.b32.cont [11/16] 0.0, 128
        %279 = vxpose.xlu0.b32.cont [12/16] 0.0, 128
        %280 = vxpose.xlu0.b32.cont [13/16] 0.0, 128
        %281 = vxpose.xlu0.b32.cont [14/16] 0.0, 128
        %282 = vxpose.xlu0.b32.cont [15/16] 0.0, 128
        %283 = vxpose.xlu0.b32.end [16/16] 0.0, 128
        %v284 = vpop.trf.xlu0
        %v285 = vpop.trf.xlu0
        %v286 = vpop.trf.xlu0
        %v287 = vpop.trf.xlu0
        %v288 = vpop.trf.xlu0
        %v289 = vpop.trf.xlu0
        %v290 = vpop.trf.xlu0
        %v291 = vpop.trf.xlu0
        %v292 = vpop.trf.xlu0
        %v293 = vpop.trf.xlu0
        %v294 = vpop.trf.xlu0
        %v295 = vpop.trf.xlu0
        %v296 = vpop.trf.xlu0
        %v297 = vpop.trf.xlu0
        %v298 = vpop.trf.xlu0
        %v299 = vpop.trf.xlu0
        %300 = vxpose.xlu0.b32.start [1/16] %v248, 128
        %301 = vxpose.xlu0.b32.cont [2/16] 0.0, 128
        %302 = vxpose.xlu0.b32.cont [3/16] 0.0, 128
        %303 = vxpose.xlu0.b32.cont [4/16] 0.0, 128
        %304 = vxpose.xlu0.b32.cont [5/16] 0.0, 128
        %305 = vxpose.xlu0.b32.cont [6/16] 0.0, 128
        %306 = vxpose.xlu0.b32.cont [7/16] 0.0, 128
        %307 = vxpose.xlu0.b32.cont [8/16] 0.0, 128
        %308 = vxpose.xlu0.b32.cont [9/16] 0.0, 128
        %309 = vxpose.xlu0.b32.cont [10/16] 0.0, 128
        %310 = vxpose.xlu0.b32.cont [11/16] 0.0, 128
        %311 = vxpose.xlu0.b32.cont [12/16] 0.0, 128
        %312 = vxpose.xlu0.b32.cont [13/16] 0.0, 128
        %313 = vxpose.xlu0.b32.cont [14/16] 0.0, 128
        %314 = vxpose.xlu0.b32.cont [15/16] 0.0, 128
        %315 = vxpose.xlu0.b32.end [16/16] 0.0, 128
        %v316 = vpop.trf.xlu0
        %v317 = vpop.trf.xlu0
        %v318 = vpop.trf.xlu0
        %v319 = vpop.trf.xlu0
        %v320 = vpop.trf.xlu0
        %v321 = vpop.trf.xlu0
        %v322 = vpop.trf.xlu0
        %v323 = vpop.trf.xlu0
        %v324 = vpop.trf.xlu0
        %v325 = vpop.trf.xlu0
        %v326 = vpop.trf.xlu0
        %v327 = vpop.trf.xlu0
        %v328 = vpop.trf.xlu0
        %v329 = vpop.trf.xlu0
        %v330 = vpop.trf.xlu0
        %v331 = vpop.trf.xlu0
        %v333 = vperm.slane %v267, 0
        %v334 = vperm.slane %v267, 1
        %v335 = vperm.slane %v267, 2
        %v336 = vperm.slane %v267, 3
        %vm341 = vcmask 64512
        %v343 = vsel %vm341, %v284, 0
        %v346 = vsel %vm341, %v285, 0
        %v349 = vsel %vm341, %v286, 0
        %v352 = vsel %vm341, %v287, 0
        %v355 = vsel %vm341, %v288, 0
        %v358 = vsel %vm341, %v289, 0
        %v361 = vsel %vm341, %v290, 0
        %v364 = vsel %vm341, %v291, 0
        %v367 = vsel %vm341, %v292, 0
        %v370 = vsel %vm341, %v293, 0
        %v373 = vsel %vm341, %v294, 0
        %v376 = vsel %vm341, %v295, 0
        %v379 = vsel %vm341, %v296, 0
        %v382 = vsel %vm341, %v297, 0
        %v385 = vsel %vm341, %v298, 0
        %v388 = vsel %vm341, %v299, 0
        %v391 = vsel %vm341, %v316, 0
        %v394 = vsel %vm341, %v317, 0
        %v397 = vsel %vm341, %v318, 0
        %v400 = vsel %vm341, %v319, 0
        %v403 = vsel %vm341, %v320, 0
        %v406 = vsel %vm341, %v321, 0
        %v409 = vsel %vm341, %v322, 0
        %v412 = vsel %vm341, %v323, 0
        %v415 = vsel %vm341, %v324, 0
        %v418 = vsel %vm341, %v325, 0
        %v421 = vsel %vm341, %v326, 0
        %v424 = vsel %vm341, %v327, 0
        %v427 = vsel %vm341, %v328, 0
        %v430 = vsel %vm341, %v329, 0
        %v433 = vsel %vm341, %v330, 0
        %v436 = vsel %vm341, %v331, 0
        %438 = vmatpush.msra.mxu0 0.0
        %439 = vmatpush.msra.mxu0 0.0
        %440 = vmatpush.msra.mxu0 0.0
        %441 = vmatpush.msra.mxu0 0.0
        %442 = vmatpush.msra.mxu0 0.0
        %443 = vmatpush.msra.mxu0 0.0
        %444 = vmatpush.msra.mxu0 0.0
        %445 = vmatpush.msra.mxu0 0.0
        %446 = vmatpush.msra.mxu0 0.0
        %447 = vmatpush.msra.mxu0 0.0
        %448 = vmatpush.msra.mxu0 0.0
        %449 = vmatpush.msra.mxu0 0.0
        %450 = vmatpush.msra.mxu0 0.0
        %451 = vmatpush.msra.mxu0 0.0
        %452 = vmatpush.msra.mxu0 0.0
        %453 = vmatpush.msra.mxu0 %v263
        %454 = vmatmul.f32.gmra.mxu0 %v343
        %v455 = vpop.f32.mrf.mxu0
        %v456 = vadd.f32 %v333, %v455
        %457 = vmatmul.f32.gmra.mxu0 %v346
        %v458 = vpop.f32.mrf.mxu0
        %v459 = vadd.f32 %v333, %v458
        %460 = vmatmul.f32.gmra.mxu0 %v349
        %v461 = vpop.f32.mrf.mxu0
        %v462 = vadd.f32 %v333, %v461
        %463 = vmatmul.f32.gmra.mxu0 %v352
        %v464 = vpop.f32.mrf.mxu0
        %v465 = vadd.f32 %v333, %v464
        %466 = vmatmul.f32.gmra.mxu0 %v355
        %v467 = vpop.f32.mrf.mxu0
        %v468 = vadd.f32 %v333, %v467
        %469 = vmatmul.f32.gmra.mxu0 %v358
        %v470 = vpop.f32.mrf.mxu0
        %v471 = vadd.f32 %v333, %v470
        %472 = vmatmul.f32.gmra.mxu0 %v361
        %v473 = vpop.f32.mrf.mxu0
        %v474 = vadd.f32 %v333, %v473
        %475 = vmatmul.f32.gmra.mxu0 %v364
        %v476 = vpop.f32.mrf.mxu0
        %v477 = vadd.f32 %v333, %v476
        %478 = vmatmul.f32.gmra.mxu0 %v367
        %v479 = vpop.f32.mrf.mxu0
        %v480 = vadd.f32 %v333, %v479
        %481 = vmatmul.f32.gmra.mxu0 %v370
        %v482 = vpop.f32.mrf.mxu0
        %v483 = vadd.f32 %v333, %v482
        %484 = vmatmul.f32.gmra.mxu0 %v373
        %v485 = vpop.f32.mrf.mxu0
        %v486 = vadd.f32 %v333, %v485
        %487 = vmatmul.f32.gmra.mxu0 %v376
        %v488 = vpop.f32.mrf.mxu0
        %v489 = vadd.f32 %v333, %v488
        %490 = vmatmul.f32.gmra.mxu0 %v379
        %v491 = vpop.f32.mrf.mxu0
        %v492 = vadd.f32 %v333, %v491
        %493 = vmatmul.f32.gmra.mxu0 %v382
        %v494 = vpop.f32.mrf.mxu0
        %v495 = vadd.f32 %v333, %v494
        %496 = vmatmul.f32.gmra.mxu0 %v385
        %v497 = vpop.f32.mrf.mxu0
        %v498 = vadd.f32 %v333, %v497
        %499 = vmatmul.f32.gmra.mxu0 %v388
        %v500 = vpop.f32.mrf.mxu0
        %v501 = vadd.f32 %v333, %v500
        %502 = vmatmul.f32.gmra.mxu0 %v391
        %v503 = vpop.f32.mrf.mxu0
        %v504 = vadd.f32 %v333, %v503
        %505 = vmatmul.f32.gmra.mxu0 %v394
        %v506 = vpop.f32.mrf.mxu0
        %v507 = vadd.f32 %v333, %v506
        %508 = vmatmul.f32.gmra.mxu0 %v397
        %v509 = vpop.f32.mrf.mxu0
        %v510 = vadd.f32 %v333, %v509
        %511 = vmatmul.f32.gmra.mxu0 %v400
        %v512 = vpop.f32.mrf.mxu0
        %v513 = vadd.f32 %v333, %v512
        %514 = vmatmul.f32.gmra.mxu0 %v403
        %v515 = vpop.f32.mrf.mxu0
        %v516 = vadd.f32 %v333, %v515
        %517 = vmatmul.f32.gmra.mxu0 %v406
        %v518 = vpop.f32.mrf.mxu0
        %v519 = vadd.f32 %v333, %v518
        %520 = vmatmul.f32.gmra.mxu0 %v409
        %v521 = vpop.f32.mrf.mxu0
        %v522 = vadd.f32 %v333, %v521
        %523 = vmatmul.f32.gmra.mxu0 %v412
        %v524 = vpop.f32.mrf.mxu0
        %v525 = vadd.f32 %v333, %v524
        %526 = vmatmul.f32.gmra.mxu0 %v415
        %v527 = vpop.f32.mrf.mxu0
        %v528 = vadd.f32 %v333, %v527
        %529 = vmatmul.f32.gmra.mxu0 %v418
        %v530 = vpop.f32.mrf.mxu0
        %v531 = vadd.f32 %v333, %v530
        %532 = vmatmul.f32.gmra.mxu0 %v421
        %v533 = vpop.f32.mrf.mxu0
        %v534 = vadd.f32 %v333, %v533
        %535 = vmatmul.f32.gmra.mxu0 %v424
        %v536 = vpop.f32.mrf.mxu0
        %v537 = vadd.f32 %v333, %v536
        %538 = vmatmul.f32.gmra.mxu0 %v427
        %v539 = vpop.f32.mrf.mxu0
        %v540 = vadd.f32 %v333, %v539
        %541 = vmatmul.f32.gmra.mxu0 %v430
        %v542 = vpop.f32.mrf.mxu0
        %v543 = vadd.f32 %v333, %v542
        %544 = vmatmul.f32.gmra.mxu0 %v433
        %v545 = vpop.f32.mrf.mxu0
        %v546 = vadd.f32 %v333, %v545
        %547 = vmatmul.f32.gmra.mxu0 %v436
        %v548 = vpop.f32.mrf.mxu0
        %v549 = vadd.f32 %v333, %v548
        %550 = vdwg.mxu0
        %551 = vmatpush.msra.mxu0 0.0
        %552 = vmatpush.msra.mxu0 0.0
        %553 = vmatpush.msra.mxu0 0.0
        %554 = vmatpush.msra.mxu0 0.0
        %555 = vmatpush.msra.mxu0 0.0
        %556 = vmatpush.msra.mxu0 0.0
        %557 = vmatpush.msra.mxu0 0.0
        %558 = vmatpush.msra.mxu0 0.0
        %559 = vmatpush.msra.mxu0 0.0
        %560 = vmatpush.msra.mxu0 0.0
        %561 = vmatpush.msra.mxu0 0.0
        %562 = vmatpush.msra.mxu0 0.0
        %563 = vmatpush.msra.mxu0 0.0
        %564 = vmatpush.msra.mxu0 0.0
        %565 = vmatpush.msra.mxu0 0.0
        %566 = vmatpush.msra.mxu0 %v264
        %567 = vmatmul.f32.gmra.mxu0 %v343
        %v568 = vpop.f32.mrf.mxu0
        %v569 = vadd.f32 %v334, %v568
        %570 = vmatmul.f32.gmra.mxu0 %v346
        %v571 = vpop.f32.mrf.mxu0
        %v572 = vadd.f32 %v334, %v571
        %573 = vmatmul.f32.gmra.mxu0 %v349
        %v574 = vpop.f32.mrf.mxu0
        %v575 = vadd.f32 %v334, %v574
        %576 = vmatmul.f32.gmra.mxu0 %v352
        %v577 = vpop.f32.mrf.mxu0
        %v578 = vadd.f32 %v334, %v577
        %579 = vmatmul.f32.gmra.mxu0 %v355
        %v580 = vpop.f32.mrf.mxu0
        %v581 = vadd.f32 %v334, %v580
        %582 = vmatmul.f32.gmra.mxu0 %v358
        %v583 = vpop.f32.mrf.mxu0
        %v584 = vadd.f32 %v334, %v583
        %585 = vmatmul.f32.gmra.mxu0 %v361
        %v586 = vpop.f32.mrf.mxu0
        %v587 = vadd.f32 %v334, %v586
        %588 = vmatmul.f32.gmra.mxu0 %v364
        %v589 = vpop.f32.mrf.mxu0
        %v590 = vadd.f32 %v334, %v589
        %591 = vmatmul.f32.gmra.mxu0 %v367
        %v592 = vpop.f32.mrf.mxu0
        %v593 = vadd.f32 %v334, %v592
        %594 = vmatmul.f32.gmra.mxu0 %v370
        %v595 = vpop.f32.mrf.mxu0
        %v596 = vadd.f32 %v334, %v595
        %597 = vmatmul.f32.gmra.mxu0 %v373
        %v598 = vpop.f32.mrf.mxu0
        %v599 = vadd.f32 %v334, %v598
        %600 = vmatmul.f32.gmra.mxu0 %v376
        %v601 = vpop.f32.mrf.mxu0
        %v602 = vadd.f32 %v334, %v601
        %603 = vmatmul.f32.gmra.mxu0 %v379
        %v604 = vpop.f32.mrf.mxu0
        %v605 = vadd.f32 %v334, %v604
        %606 = vmatmul.f32.gmra.mxu0 %v382
        %v607 = vpop.f32.mrf.mxu0
        %v608 = vadd.f32 %v334, %v607
        %609 = vmatmul.f32.gmra.mxu0 %v385
        %v610 = vpop.f32.mrf.mxu0
        %v611 = vadd.f32 %v334, %v610
        %612 = vmatmul.f32.gmra.mxu0 %v388
        %v613 = vpop.f32.mrf.mxu0
        %v614 = vadd.f32 %v334, %v613
        %615 = vmatmul.f32.gmra.mxu0 %v391
        %v616 = vpop.f32.mrf.mxu0
        %v617 = vadd.f32 %v334, %v616
        %618 = vmatmul.f32.gmra.mxu0 %v394
        %v619 = vpop.f32.mrf.mxu0
        %v620 = vadd.f32 %v334, %v619
        %621 = vmatmul.f32.gmra.mxu0 %v397
        %v622 = vpop.f32.mrf.mxu0
        %v623 = vadd.f32 %v334, %v622
        %624 = vmatmul.f32.gmra.mxu0 %v400
        %v625 = vpop.f32.mrf.mxu0
        %v626 = vadd.f32 %v334, %v625
        %627 = vmatmul.f32.gmra.mxu0 %v403
        %v628 = vpop.f32.mrf.mxu0
        %v629 = vadd.f32 %v334, %v628
        %630 = vmatmul.f32.gmra.mxu0 %v406
        %v631 = vpop.f32.mrf.mxu0
        %v632 = vadd.f32 %v334, %v631
        %633 = vmatmul.f32.gmra.mxu0 %v409
        %v634 = vpop.f32.mrf.mxu0
        %v635 = vadd.f32 %v334, %v634
        %636 = vmatmul.f32.gmra.mxu0 %v412
        %v637 = vpop.f32.mrf.mxu0
        %v638 = vadd.f32 %v334, %v637
        %639 = vmatmul.f32.gmra.mxu0 %v415
        %v640 = vpop.f32.mrf.mxu0
        %v641 = vadd.f32 %v334, %v640
        %642 = vmatmul.f32.gmra.mxu0 %v418
        %v643 = vpop.f32.mrf.mxu0
        %v644 = vadd.f32 %v334, %v643
        %645 = vmatmul.f32.gmra.mxu0 %v421
        %v646 = vpop.f32.mrf.mxu0
        %v647 = vadd.f32 %v334, %v646
        %648 = vmatmul.f32.gmra.mxu0 %v424
        %v649 = vpop.f32.mrf.mxu0
        %v650 = vadd.f32 %v334, %v649
        %651 = vmatmul.f32.gmra.mxu0 %v427
        %v652 = vpop.f32.mrf.mxu0
        %v653 = vadd.f32 %v334, %v652
        %654 = vmatmul.f32.gmra.mxu0 %v430
        %v655 = vpop.f32.mrf.mxu0
        %v656 = vadd.f32 %v334, %v655
        %657 = vmatmul.f32.gmra.mxu0 %v433
        %v658 = vpop.f32.mrf.mxu0
        %v659 = vadd.f32 %v334, %v658
        %660 = vmatmul.f32.gmra.mxu0 %v436
        %v661 = vpop.f32.mrf.mxu0
        %v662 = vadd.f32 %v334, %v661
        %663 = vdwg.mxu0
        %664 = vmatpush.msra.mxu0 0.0
        %665 = vmatpush.msra.mxu0 0.0
        %666 = vmatpush.msra.mxu0 0.0
        %667 = vmatpush.msra.mxu0 0.0
        %668 = vmatpush.msra.mxu0 0.0
        %669 = vmatpush.msra.mxu0 0.0
        %670 = vmatpush.msra.mxu0 0.0
        %671 = vmatpush.msra.mxu0 0.0
        %672 = vmatpush.msra.mxu0 0.0
        %673 = vmatpush.msra.mxu0 0.0
        %674 = vmatpush.msra.mxu0 0.0
        %675 = vmatpush.msra.mxu0 0.0
        %676 = vmatpush.msra.mxu0 0.0
        %677 = vmatpush.msra.mxu0 0.0
        %678 = vmatpush.msra.mxu0 0.0
        %679 = vmatpush.msra.mxu0 %v265
        %680 = vmatmul.f32.gmra.mxu0 %v343
        %v681 = vpop.f32.mrf.mxu0
        %v682 = vadd.f32 %v335, %v681
        %683 = vmatmul.f32.gmra.mxu0 %v346
        %v684 = vpop.f32.mrf.mxu0
        %v685 = vadd.f32 %v335, %v684
        %686 = vmatmul.f32.gmra.mxu0 %v349
        %v687 = vpop.f32.mrf.mxu0
        %v688 = vadd.f32 %v335, %v687
        %689 = vmatmul.f32.gmra.mxu0 %v352
        %v690 = vpop.f32.mrf.mxu0
        %v691 = vadd.f32 %v335, %v690
        %692 = vmatmul.f32.gmra.mxu0 %v355
        %v693 = vpop.f32.mrf.mxu0
        %v694 = vadd.f32 %v335, %v693
        %695 = vmatmul.f32.gmra.mxu0 %v358
        %v696 = vpop.f32.mrf.mxu0
        %v697 = vadd.f32 %v335, %v696
        %698 = vmatmul.f32.gmra.mxu0 %v361
        %v699 = vpop.f32.mrf.mxu0
        %v700 = vadd.f32 %v335, %v699
        %701 = vmatmul.f32.gmra.mxu0 %v364
        %v702 = vpop.f32.mrf.mxu0
        %v703 = vadd.f32 %v335, %v702
        %704 = vmatmul.f32.gmra.mxu0 %v367
        %v705 = vpop.f32.mrf.mxu0
        %v706 = vadd.f32 %v335, %v705
        %707 = vmatmul.f32.gmra.mxu0 %v370
        %v708 = vpop.f32.mrf.mxu0
        %v709 = vadd.f32 %v335, %v708
        %710 = vmatmul.f32.gmra.mxu0 %v373
        %v711 = vpop.f32.mrf.mxu0
        %v712 = vadd.f32 %v335, %v711
        %713 = vmatmul.f32.gmra.mxu0 %v376
        %v714 = vpop.f32.mrf.mxu0
        %v715 = vadd.f32 %v335, %v714
        %716 = vmatmul.f32.gmra.mxu0 %v379
        %v717 = vpop.f32.mrf.mxu0
        %v718 = vadd.f32 %v335, %v717
        %719 = vmatmul.f32.gmra.mxu0 %v382
        %v720 = vpop.f32.mrf.mxu0
        %v721 = vadd.f32 %v335, %v720
        %722 = vmatmul.f32.gmra.mxu0 %v385
        %v723 = vpop.f32.mrf.mxu0
        %v724 = vadd.f32 %v335, %v723
        %725 = vmatmul.f32.gmra.mxu0 %v388
        %v726 = vpop.f32.mrf.mxu0
        %v727 = vadd.f32 %v335, %v726
        %728 = vmatmul.f32.gmra.mxu0 %v391
        %v729 = vpop.f32.mrf.mxu0
        %v730 = vadd.f32 %v335, %v729
        %731 = vmatmul.f32.gmra.mxu0 %v394
        %v732 = vpop.f32.mrf.mxu0
        %v733 = vadd.f32 %v335, %v732
        %734 = vmatmul.f32.gmra.mxu0 %v397
        %v735 = vpop.f32.mrf.mxu0
        %v736 = vadd.f32 %v335, %v735
        %737 = vmatmul.f32.gmra.mxu0 %v400
        %v738 = vpop.f32.mrf.mxu0
        %v739 = vadd.f32 %v335, %v738
        %740 = vmatmul.f32.gmra.mxu0 %v403
        %v741 = vpop.f32.mrf.mxu0
        %v742 = vadd.f32 %v335, %v741
        %743 = vmatmul.f32.gmra.mxu0 %v406
        %v744 = vpop.f32.mrf.mxu0
        %v745 = vadd.f32 %v335, %v744
        %746 = vmatmul.f32.gmra.mxu0 %v409
        %v747 = vpop.f32.mrf.mxu0
        %v748 = vadd.f32 %v335, %v747
        %749 = vmatmul.f32.gmra.mxu0 %v412
        %v750 = vpop.f32.mrf.mxu0
        %v751 = vadd.f32 %v335, %v750
        %752 = vmatmul.f32.gmra.mxu0 %v415
        %v753 = vpop.f32.mrf.mxu0
        %v754 = vadd.f32 %v335, %v753
        %755 = vmatmul.f32.gmra.mxu0 %v418
        %v756 = vpop.f32.mrf.mxu0
        %v757 = vadd.f32 %v335, %v756
        %758 = vmatmul.f32.gmra.mxu0 %v421
        %v759 = vpop.f32.mrf.mxu0
        %v760 = vadd.f32 %v335, %v759
        %761 = vmatmul.f32.gmra.mxu0 %v424
        %v762 = vpop.f32.mrf.mxu0
        %v763 = vadd.f32 %v335, %v762
        %764 = vmatmul.f32.gmra.mxu0 %v427
        %v765 = vpop.f32.mrf.mxu0
        %v766 = vadd.f32 %v335, %v765
        %767 = vmatmul.f32.gmra.mxu0 %v430
        %v768 = vpop.f32.mrf.mxu0
        %v769 = vadd.f32 %v335, %v768
        %770 = vmatmul.f32.gmra.mxu0 %v433
        %v771 = vpop.f32.mrf.mxu0
        %v772 = vadd.f32 %v335, %v771
        %773 = vmatmul.f32.gmra.mxu0 %v436
        %v774 = vpop.f32.mrf.mxu0
        %v775 = vadd.f32 %v335, %v774
        %776 = vdwg.mxu0
        %777 = vmatpush.msra.mxu0 0.0
        %778 = vmatpush.msra.mxu0 0.0
        %779 = vmatpush.msra.mxu0 0.0
        %780 = vmatpush.msra.mxu0 0.0
        %781 = vmatpush.msra.mxu0 0.0
        %782 = vmatpush.msra.mxu0 0.0
        %783 = vmatpush.msra.mxu0 0.0
        %784 = vmatpush.msra.mxu0 0.0
        %785 = vmatpush.msra.mxu0 0.0
        %786 = vmatpush.msra.mxu0 0.0
        %787 = vmatpush.msra.mxu0 0.0
        %788 = vmatpush.msra.mxu0 0.0
        %789 = vmatpush.msra.mxu0 0.0
        %790 = vmatpush.msra.mxu0 0.0
        %791 = vmatpush.msra.mxu0 0.0
        %792 = vmatpush.msra.mxu0 %v266
        %793 = vmatmul.f32.gmra.mxu0 %v343
        %v794 = vpop.f32.mrf.mxu0
        %v795 = vadd.f32 %v336, %v794
        %796 = vmatmul.f32.gmra.mxu0 %v346
        %v797 = vpop.f32.mrf.mxu0
        %v798 = vadd.f32 %v336, %v797
        %799 = vmatmul.f32.gmra.mxu0 %v349
        %v800 = vpop.f32.mrf.mxu0
        %v801 = vadd.f32 %v336, %v800
        %802 = vmatmul.f32.gmra.mxu0 %v352
        %v803 = vpop.f32.mrf.mxu0
        %v804 = vadd.f32 %v336, %v803
        %805 = vmatmul.f32.gmra.mxu0 %v355
        %v806 = vpop.f32.mrf.mxu0
        %v807 = vadd.f32 %v336, %v806
        %808 = vmatmul.f32.gmra.mxu0 %v358
        %v809 = vpop.f32.mrf.mxu0
        %v810 = vadd.f32 %v336, %v809
        %811 = vmatmul.f32.gmra.mxu0 %v361
        %v812 = vpop.f32.mrf.mxu0
        %v813 = vadd.f32 %v336, %v812
        %814 = vmatmul.f32.gmra.mxu0 %v364
        %v815 = vpop.f32.mrf.mxu0
        %v816 = vadd.f32 %v336, %v815
        %817 = vmatmul.f32.gmra.mxu0 %v367
        %v818 = vpop.f32.mrf.mxu0
        %v819 = vadd.f32 %v336, %v818
        %820 = vmatmul.f32.gmra.mxu0 %v370
        %v821 = vpop.f32.mrf.mxu0
        %v822 = vadd.f32 %v336, %v821
        %823 = vmatmul.f32.gmra.mxu0 %v373
        %v824 = vpop.f32.mrf.mxu0
        %v825 = vadd.f32 %v336, %v824
        %826 = vmatmul.f32.gmra.mxu0 %v376
        %v827 = vpop.f32.mrf.mxu0
        %v828 = vadd.f32 %v336, %v827
        %829 = vmatmul.f32.gmra.mxu0 %v379
        %v830 = vpop.f32.mrf.mxu0
        %v831 = vadd.f32 %v336, %v830
        %832 = vmatmul.f32.gmra.mxu0 %v382
        %v833 = vpop.f32.mrf.mxu0
        %v834 = vadd.f32 %v336, %v833
        %835 = vmatmul.f32.gmra.mxu0 %v385
        %v836 = vpop.f32.mrf.mxu0
        %v837 = vadd.f32 %v336, %v836
        %838 = vmatmul.f32.gmra.mxu0 %v388
        %v839 = vpop.f32.mrf.mxu0
        %v840 = vadd.f32 %v336, %v839
        %841 = vmatmul.f32.gmra.mxu0 %v391
        %v842 = vpop.f32.mrf.mxu0
        %v843 = vadd.f32 %v336, %v842
        %844 = vmatmul.f32.gmra.mxu0 %v394
        %v845 = vpop.f32.mrf.mxu0
        %v846 = vadd.f32 %v336, %v845
        %847 = vmatmul.f32.gmra.mxu0 %v397
        %v848 = vpop.f32.mrf.mxu0
        %v849 = vadd.f32 %v336, %v848
        %850 = vmatmul.f32.gmra.mxu0 %v400
        %v851 = vpop.f32.mrf.mxu0
        %v852 = vadd.f32 %v336, %v851
        %853 = vmatmul.f32.gmra.mxu0 %v403
        %v854 = vpop.f32.mrf.mxu0
        %v855 = vadd.f32 %v336, %v854
        %856 = vmatmul.f32.gmra.mxu0 %v406
        %v857 = vpop.f32.mrf.mxu0
        %v858 = vadd.f32 %v336, %v857
        %859 = vmatmul.f32.gmra.mxu0 %v409
        %v860 = vpop.f32.mrf.mxu0
        %v861 = vadd.f32 %v336, %v860
        %862 = vmatmul.f32.gmra.mxu0 %v412
        %v863 = vpop.f32.mrf.mxu0
        %v864 = vadd.f32 %v336, %v863
        %865 = vmatmul.f32.gmra.mxu0 %v415
        %v866 = vpop.f32.mrf.mxu0
        %v867 = vadd.f32 %v336, %v866
        %868 = vmatmul.f32.gmra.mxu0 %v418
        %v869 = vpop.f32.mrf.mxu0
        %v870 = vadd.f32 %v336, %v869
        %871 = vmatmul.f32.gmra.mxu0 %v421
        %v872 = vpop.f32.mrf.mxu0
        %v873 = vadd.f32 %v336, %v872
        %874 = vmatmul.f32.gmra.mxu0 %v424
        %v875 = vpop.f32.mrf.mxu0
        %v876 = vadd.f32 %v336, %v875
        %877 = vmatmul.f32.gmra.mxu0 %v427
        %v878 = vpop.f32.mrf.mxu0
        %v879 = vadd.f32 %v336, %v878
        %880 = vmatmul.f32.gmra.mxu0 %v430
        %v881 = vpop.f32.mrf.mxu0
        %v882 = vadd.f32 %v336, %v881
        %883 = vmatmul.f32.gmra.mxu0 %v433
        %v884 = vpop.f32.mrf.mxu0
        %v885 = vadd.f32 %v336, %v884
        %886 = vmatmul.f32.gmra.mxu0 %v436
        %v887 = vpop.f32.mrf.mxu0
        %v888 = vadd.f32 %v336, %v887
        %889 = vdwg.mxu0
        %v890 = vmax.f32 %v456, 0.0
        %v891 = vmax.f32 %v569, 0.0
        %v892 = vmax.f32 %v682, 0.0
        %v893 = vmax.f32 %v795, 0.0
        %v894 = vmax.f32 %v459, 0.0
        %v895 = vmax.f32 %v572, 0.0
        %v896 = vmax.f32 %v685, 0.0
        %v897 = vmax.f32 %v798, 0.0
        %v898 = vmax.f32 %v462, 0.0
        %v899 = vmax.f32 %v575, 0.0
        %v900 = vmax.f32 %v688, 0.0
        %v901 = vmax.f32 %v801, 0.0
        %v902 = vmax.f32 %v465, 0.0
        %v903 = vmax.f32 %v578, 0.0
        %v904 = vmax.f32 %v691, 0.0
        %v905 = vmax.f32 %v804, 0.0
        %v906 = vmax.f32 %v468, 0.0
        %v907 = vmax.f32 %v581, 0.0
        %v908 = vmax.f32 %v694, 0.0
        %v909 = vmax.f32 %v807, 0.0
        %v910 = vmax.f32 %v471, 0.0
        %v911 = vmax.f32 %v584, 0.0
        %v912 = vmax.f32 %v697, 0.0
        %v913 = vmax.f32 %v810, 0.0
        %v914 = vmax.f32 %v474, 0.0
        %v915 = vmax.f32 %v587, 0.0
        %v916 = vmax.f32 %v700, 0.0
        %v917 = vmax.f32 %v813, 0.0
        %v918 = vmax.f32 %v477, 0.0
        %v919 = vmax.f32 %v590, 0.0
        %v920 = vmax.f32 %v703, 0.0
        %v921 = vmax.f32 %v816, 0.0
        %v922 = vmax.f32 %v480, 0.0
        %v923 = vmax.f32 %v593, 0.0
        %v924 = vmax.f32 %v706, 0.0
        %v925 = vmax.f32 %v819, 0.0
        %v926 = vmax.f32 %v483, 0.0
        %v927 = vmax.f32 %v596, 0.0
        %v928 = vmax.f32 %v709, 0.0
        %v929 = vmax.f32 %v822, 0.0
        %v930 = vmax.f32 %v486, 0.0
        %v931 = vmax.f32 %v599, 0.0
        %v932 = vmax.f32 %v712, 0.0
        %v933 = vmax.f32 %v825, 0.0
        %v934 = vmax.f32 %v489, 0.0
        %v935 = vmax.f32 %v602, 0.0
        %v936 = vmax.f32 %v715, 0.0
        %v937 = vmax.f32 %v828, 0.0
        %v938 = vmax.f32 %v492, 0.0
        %v939 = vmax.f32 %v605, 0.0
        %v940 = vmax.f32 %v718, 0.0
        %v941 = vmax.f32 %v831, 0.0
        %v942 = vmax.f32 %v495, 0.0
        %v943 = vmax.f32 %v608, 0.0
        %v944 = vmax.f32 %v721, 0.0
        %v945 = vmax.f32 %v834, 0.0
        %v946 = vmax.f32 %v498, 0.0
        %v947 = vmax.f32 %v611, 0.0
        %v948 = vmax.f32 %v724, 0.0
        %v949 = vmax.f32 %v837, 0.0
        %v950 = vmax.f32 %v501, 0.0
        %v951 = vmax.f32 %v614, 0.0
        %v952 = vmax.f32 %v727, 0.0
        %v953 = vmax.f32 %v840, 0.0
        %v954 = vmax.f32 %v504, 0.0
        %v955 = vmax.f32 %v617, 0.0
        %v956 = vmax.f32 %v730, 0.0
        %v957 = vmax.f32 %v843, 0.0
        %v958 = vmax.f32 %v507, 0.0
        %v959 = vmax.f32 %v620, 0.0
        %v960 = vmax.f32 %v733, 0.0
        %v961 = vmax.f32 %v846, 0.0
        %v962 = vmax.f32 %v510, 0.0
        %v963 = vmax.f32 %v623, 0.0
        %v964 = vmax.f32 %v736, 0.0
        %v965 = vmax.f32 %v849, 0.0
        %v966 = vmax.f32 %v513, 0.0
        %v967 = vmax.f32 %v626, 0.0
        %v968 = vmax.f32 %v739, 0.0
        %v969 = vmax.f32 %v852, 0.0
        %v970 = vmax.f32 %v516, 0.0
        %v971 = vmax.f32 %v629, 0.0
        %v972 = vmax.f32 %v742, 0.0
        %v973 = vmax.f32 %v855, 0.0
        %v974 = vmax.f32 %v519, 0.0
        %v975 = vmax.f32 %v632, 0.0
        %v976 = vmax.f32 %v745, 0.0
        %v977 = vmax.f32 %v858, 0.0
        %v978 = vmax.f32 %v522, 0.0
        %v979 = vmax.f32 %v635, 0.0
        %v980 = vmax.f32 %v748, 0.0
        %v981 = vmax.f32 %v861, 0.0
        %v982 = vmax.f32 %v525, 0.0
        %v983 = vmax.f32 %v638, 0.0
        %v984 = vmax.f32 %v751, 0.0
        %v985 = vmax.f32 %v864, 0.0
        %v986 = vmax.f32 %v528, 0.0
        %v987 = vmax.f32 %v641, 0.0
        %v988 = vmax.f32 %v754, 0.0
        %v989 = vmax.f32 %v867, 0.0
        %v990 = vmax.f32 %v531, 0.0
        %v991 = vmax.f32 %v644, 0.0
        %v992 = vmax.f32 %v757, 0.0
        %v993 = vmax.f32 %v870, 0.0
        %v994 = vmax.f32 %v534, 0.0
        %v995 = vmax.f32 %v647, 0.0
        %v996 = vmax.f32 %v760, 0.0
        %v997 = vmax.f32 %v873, 0.0
        %v998 = vmax.f32 %v537, 0.0
        %v999 = vmax.f32 %v650, 0.0
        %v1000 = vmax.f32 %v763, 0.0
        %v1001 = vmax.f32 %v876, 0.0
        %v1002 = vmax.f32 %v540, 0.0
        %v1003 = vmax.f32 %v653, 0.0
        %v1004 = vmax.f32 %v766, 0.0
        %v1005 = vmax.f32 %v879, 0.0
        %v1006 = vmax.f32 %v543, 0.0
        %v1007 = vmax.f32 %v656, 0.0
        %v1008 = vmax.f32 %v769, 0.0
        %v1009 = vmax.f32 %v882, 0.0
        %v1010 = vmax.f32 %v546, 0.0
        %v1011 = vmax.f32 %v659, 0.0
        %v1012 = vmax.f32 %v772, 0.0
        %v1013 = vmax.f32 %v885, 0.0
        %v1014 = vmax.f32 %v549, 0.0
        %v1015 = vmax.f32 %v662, 0.0
        %v1016 = vmax.f32 %v775, 0.0
        %v1017 = vmax.f32 %v888, 0.0
        %v1018 = vld [vmem:[%s236] ss:$8 sm:$0xf]
        %v1019 = vadd.f32 %v890, %v894
        %v1020 = vadd.f32 %v1019, %v898
        %v1021 = vadd.f32 %v1020, %v902
        %v1022 = vadd.f32 %v1021, %v906
        %v1023 = vadd.f32 %v1022, %v910
        %v1024 = vadd.f32 %v1023, %v914
        %v1025 = vadd.f32 %v1024, %v918
        %v1026 = vadd.f32 %v1025, %v922
        %v1027 = vadd.f32 %v1026, %v926
        %v1028 = vadd.f32 %v1027, %v930
        %v1029 = vadd.f32 %v1028, %v934
        %v1030 = vadd.f32 %v1029, %v938
        %v1031 = vadd.f32 %v1030, %v942
        %v1032 = vadd.f32 %v1031, %v946
        %v1033 = vadd.f32 %v1032, %v950
        %v1034 = vadd.f32 %v1033, %v954
        %v1035 = vadd.f32 %v1034, %v958
        %v1036 = vadd.f32 %v1035, %v962
        %v1037 = vadd.f32 %v1036, %v966
        %v1038 = vadd.f32 %v1037, %v970
        %v1039 = vadd.f32 %v1038, %v974
        %v1040 = vadd.f32 %v1039, %v978
        %v1041 = vadd.f32 %v1040, %v982
        %v1042 = vadd.f32 %v1041, %v986
        %v1043 = vadd.f32 %v1042, %v990
        %v1044 = vadd.f32 %v1043, %v994
        %v1045 = vadd.f32 %v1044, %v998
        %v1046 = vadd.f32 %v1045, %v1002
        %v1047 = vadd.f32 %v1046, %v1006
        %v1048 = vadd.f32 %v1047, %v1010
        %v1049 = vadd.f32 %v1048, %v1014
        %v1050 = vrot.slane %v1049, 4
        %v1051 = vadd.f32 %v1049, %v1050
        %v1052 = vrot.slane %v1051, 2
        %v1053 = vadd.f32 %v1051, %v1052
        %v1054 = vrot.slane %v1053, 1
        %v1055 = vadd.f32 %v1053, %v1054
        %v1056 = vadd.f32 %v891, %v895
        %v1057 = vadd.f32 %v1056, %v899
        %v1058 = vadd.f32 %v1057, %v903
        %v1059 = vadd.f32 %v1058, %v907
        %v1060 = vadd.f32 %v1059, %v911
        %v1061 = vadd.f32 %v1060, %v915
        %v1062 = vadd.f32 %v1061, %v919
        %v1063 = vadd.f32 %v1062, %v923
        %v1064 = vadd.f32 %v1063, %v927
        %v1065 = vadd.f32 %v1064, %v931
        %v1066 = vadd.f32 %v1065, %v935
        %v1067 = vadd.f32 %v1066, %v939
        %v1068 = vadd.f32 %v1067, %v943
        %v1069 = vadd.f32 %v1068, %v947
        %v1070 = vadd.f32 %v1069, %v951
        %v1071 = vadd.f32 %v1070, %v955
        %v1072 = vadd.f32 %v1071, %v959
        %v1073 = vadd.f32 %v1072, %v963
        %v1074 = vadd.f32 %v1073, %v967
        %v1075 = vadd.f32 %v1074, %v971
        %v1076 = vadd.f32 %v1075, %v975
        %v1077 = vadd.f32 %v1076, %v979
        %v1078 = vadd.f32 %v1077, %v983
        %v1079 = vadd.f32 %v1078, %v987
        %v1080 = vadd.f32 %v1079, %v991
        %v1081 = vadd.f32 %v1080, %v995
        %v1082 = vadd.f32 %v1081, %v999
        %v1083 = vadd.f32 %v1082, %v1003
        %v1084 = vadd.f32 %v1083, %v1007
        %v1085 = vadd.f32 %v1084, %v1011
        %v1086 = vadd.f32 %v1085, %v1015
        %v1087 = vrot.slane %v1086, 4
        %v1088 = vadd.f32 %v1086, %v1087
        %v1089 = vrot.slane %v1088, 2
        %v1090 = vadd.f32 %v1088, %v1089
        %v1091 = vrot.slane %v1090, 1
        %v1092 = vadd.f32 %v1090, %v1091
        %v1093 = vadd.f32 %v892, %v896
        %v1094 = vadd.f32 %v1093, %v900
        %v1095 = vadd.f32 %v1094, %v904
        %v1096 = vadd.f32 %v1095, %v908
        %v1097 = vadd.f32 %v1096, %v912
        %v1098 = vadd.f32 %v1097, %v916
        %v1099 = vadd.f32 %v1098, %v920
        %v1100 = vadd.f32 %v1099, %v924
        %v1101 = vadd.f32 %v1100, %v928
        %v1102 = vadd.f32 %v1101, %v932
        %v1103 = vadd.f32 %v1102, %v936
        %v1104 = vadd.f32 %v1103, %v940
        %v1105 = vadd.f32 %v1104, %v944
        %v1106 = vadd.f32 %v1105, %v948
        %v1107 = vadd.f32 %v1106, %v952
        %v1108 = vadd.f32 %v1107, %v956
        %v1109 = vadd.f32 %v1108, %v960
        %v1110 = vadd.f32 %v1109, %v964
        %v1111 = vadd.f32 %v1110, %v968
        %v1112 = vadd.f32 %v1111, %v972
        %v1113 = vadd.f32 %v1112, %v976
        %v1114 = vadd.f32 %v1113, %v980
        %v1115 = vadd.f32 %v1114, %v984
        %v1116 = vadd.f32 %v1115, %v988
        %v1117 = vadd.f32 %v1116, %v992
        %v1118 = vadd.f32 %v1117, %v996
        %v1119 = vadd.f32 %v1118, %v1000
        %v1120 = vadd.f32 %v1119, %v1004
        %v1121 = vadd.f32 %v1120, %v1008
        %v1122 = vadd.f32 %v1121, %v1012
        %v1123 = vadd.f32 %v1122, %v1016
        %v1124 = vrot.slane %v1123, 4
        %v1125 = vadd.f32 %v1123, %v1124
        %v1126 = vrot.slane %v1125, 2
        %v1127 = vadd.f32 %v1125, %v1126
        %v1128 = vrot.slane %v1127, 1
        %v1129 = vadd.f32 %v1127, %v1128
        %v1130 = vadd.f32 %v893, %v897
        %v1131 = vadd.f32 %v1130, %v901
        %v1132 = vadd.f32 %v1131, %v905
        %v1133 = vadd.f32 %v1132, %v909
        %v1134 = vadd.f32 %v1133, %v913
        %v1135 = vadd.f32 %v1134, %v917
        %v1136 = vadd.f32 %v1135, %v921
        %v1137 = vadd.f32 %v1136, %v925
        %v1138 = vadd.f32 %v1137, %v929
        %v1139 = vadd.f32 %v1138, %v933
        %v1140 = vadd.f32 %v1139, %v937
        %v1141 = vadd.f32 %v1140, %v941
        %v1142 = vadd.f32 %v1141, %v945
        %v1143 = vadd.f32 %v1142, %v949
        %v1144 = vadd.f32 %v1143, %v953
        %v1145 = vadd.f32 %v1144, %v957
        %v1146 = vadd.f32 %v1145, %v961
        %v1147 = vadd.f32 %v1146, %v965
        %v1148 = vadd.f32 %v1147, %v969
        %v1149 = vadd.f32 %v1148, %v973
        %v1150 = vadd.f32 %v1149, %v977
        %v1151 = vadd.f32 %v1150, %v981
        %v1152 = vadd.f32 %v1151, %v985
        %v1153 = vadd.f32 %v1152, %v989
        %v1154 = vadd.f32 %v1153, %v993
        %v1155 = vadd.f32 %v1154, %v997
        %v1156 = vadd.f32 %v1155, %v1001
        %v1157 = vadd.f32 %v1156, %v1005
        %v1158 = vadd.f32 %v1157, %v1009
        %v1159 = vadd.f32 %v1158, %v1013
        %v1160 = vadd.f32 %v1159, %v1017
        %v1161 = vrot.slane %v1160, 4
        %v1162 = vadd.f32 %v1160, %v1161
        %v1163 = vrot.slane %v1162, 2
        %v1164 = vadd.f32 %v1162, %v1163
        %v1165 = vrot.slane %v1164, 1
        %v1166 = vadd.f32 %v1164, %v1165
        %v1171 = vrot.slane %v1092, 7
        %v1172 = vrot.slane %v1129, 6
        %v1173 = vrot.slane %v1166, 5
        %vm1174 = vcmask 1040384
        %v1175 = vsel %vm1174, %v1055, %v1171
        %vm1176 = vcmask 1042434
        %v1177 = vsel %vm1176, %v1172, %v1173
        %vm1178 = vcmask 1041408
        %v1179 = vsel %vm1178, %v1175, %v1177
        %v1181 = vadd.f32 %v1018, %v1179
        %v1182 = vlaneseq
        %vm1183 = vcmp.ge.s32.totalorder %v1182, 0
        %vm1184 = vcmp.lt.s32.totalorder %v1182, 512
        %vm1185 = vmand %vm1183, %vm1184
        %1186 = vst.msk [vmem:[%s236] ss:$8 sm:$0xf] %vm1185, %v1181
        %1187 = vst.msk [vmem:[%s236] ss:$8 sm:$0x0] %vm1185, %v1181
        %1188 = vxpose.xlu0.b32.start [1/16] %v249, 128
        %1189 = vxpose.xlu0.b32.cont [2/16] 0.0, 128
        %1190 = vxpose.xlu0.b32.cont [3/16] 0.0, 128
        %1191 = vxpose.xlu0.b32.cont [4/16] 0.0, 128
        %1192 = vxpose.xlu0.b32.cont [5/16] 0.0, 128
        %1193 = vxpose.xlu0.b32.cont [6/16] 0.0, 128
        %1194 = vxpose.xlu0.b32.cont [7/16] 0.0, 128
        %1195 = vxpose.xlu0.b32.cont [8/16] 0.0, 128
        %1196 = vxpose.xlu0.b32.cont [9/16] 0.0, 128
        %1197 = vxpose.xlu0.b32.cont [10/16] 0.0, 128
        %1198 = vxpose.xlu0.b32.cont [11/16] 0.0, 128
        %1199 = vxpose.xlu0.b32.cont [12/16] 0.0, 128
        %1200 = vxpose.xlu0.b32.cont [13/16] 0.0, 128
        %1201 = vxpose.xlu0.b32.cont [14/16] 0.0, 128
        %1202 = vxpose.xlu0.b32.cont [15/16] 0.0, 128
        %1203 = vxpose.xlu0.b32.end [16/16] 0.0, 128
        %v1204 = vpop.trf.xlu0
        %v1205 = vpop.trf.xlu0
        %v1206 = vpop.trf.xlu0
        %v1207 = vpop.trf.xlu0
        %v1208 = vpop.trf.xlu0
        %v1209 = vpop.trf.xlu0
        %v1210 = vpop.trf.xlu0
        %v1211 = vpop.trf.xlu0
        %v1212 = vpop.trf.xlu0
        %v1213 = vpop.trf.xlu0
        %v1214 = vpop.trf.xlu0
        %v1215 = vpop.trf.xlu0
        %v1216 = vpop.trf.xlu0
        %v1217 = vpop.trf.xlu0
        %v1218 = vpop.trf.xlu0
        %v1219 = vpop.trf.xlu0
        %1220 = vxpose.xlu0.b32.start [1/16] %v250, 128
        %1221 = vxpose.xlu0.b32.cont [2/16] 0.0, 128
        %1222 = vxpose.xlu0.b32.cont [3/16] 0.0, 128
        %1223 = vxpose.xlu0.b32.cont [4/16] 0.0, 128
        %1224 = vxpose.xlu0.b32.cont [5/16] 0.0, 128
        %1225 = vxpose.xlu0.b32.cont [6/16] 0.0, 128
        %1226 = vxpose.xlu0.b32.cont [7/16] 0.0, 128
        %1227 = vxpose.xlu0.b32.cont [8/16] 0.0, 128
        %1228 = vxpose.xlu0.b32.cont [9/16] 0.0, 128
        %1229 = vxpose.xlu0.b32.cont [10/16] 0.0, 128
        %1230 = vxpose.xlu0.b32.cont [11/16] 0.0, 128
        %1231 = vxpose.xlu0.b32.cont [12/16] 0.0, 128
        %1232 = vxpose.xlu0.b32.cont [13/16] 0.0, 128
        %1233 = vxpose.xlu0.b32.cont [14/16] 0.0, 128
        %1234 = vxpose.xlu0.b32.cont [15/16] 0.0, 128
        %1235 = vxpose.xlu0.b32.end [16/16] 0.0, 128
        %v1236 = vpop.trf.xlu0
        %v1237 = vpop.trf.xlu0
        %v1238 = vpop.trf.xlu0
        %v1239 = vpop.trf.xlu0
        %v1240 = vpop.trf.xlu0
        %v1241 = vpop.trf.xlu0
        %v1242 = vpop.trf.xlu0
        %v1243 = vpop.trf.xlu0
        %v1244 = vpop.trf.xlu0
        %v1245 = vpop.trf.xlu0
        %v1246 = vpop.trf.xlu0
        %v1247 = vpop.trf.xlu0
        %v1248 = vpop.trf.xlu0
        %v1249 = vpop.trf.xlu0
        %v1250 = vpop.trf.xlu0
        %v1251 = vpop.trf.xlu0
        %v1253 = vsel %vm341, %v1204, 0
        %v1256 = vsel %vm341, %v1205, 0
        %v1259 = vsel %vm341, %v1206, 0
        %v1262 = vsel %vm341, %v1207, 0
        %v1265 = vsel %vm341, %v1208, 0
        %v1268 = vsel %vm341, %v1209, 0
        %v1271 = vsel %vm341, %v1210, 0
        %v1274 = vsel %vm341, %v1211, 0
        %v1277 = vsel %vm341, %v1212, 0
        %v1280 = vsel %vm341, %v1213, 0
        %v1283 = vsel %vm341, %v1214, 0
        %v1286 = vsel %vm341, %v1215, 0
        %v1289 = vsel %vm341, %v1216, 0
        %v1292 = vsel %vm341, %v1217, 0
        %v1295 = vsel %vm341, %v1218, 0
        %v1298 = vsel %vm341, %v1219, 0
        %v1301 = vsel %vm341, %v1236, 0
        %v1304 = vsel %vm341, %v1237, 0
        %v1307 = vsel %vm341, %v1238, 0
        %v1310 = vsel %vm341, %v1239, 0
        %v1313 = vsel %vm341, %v1240, 0
        %v1316 = vsel %vm341, %v1241, 0
        %v1319 = vsel %vm341, %v1242, 0
        %v1322 = vsel %vm341, %v1243, 0
        %v1325 = vsel %vm341, %v1244, 0
        %v1328 = vsel %vm341, %v1245, 0
        %v1331 = vsel %vm341, %v1246, 0
        %v1334 = vsel %vm341, %v1247, 0
        %v1337 = vsel %vm341, %v1248, 0
        %v1340 = vsel %vm341, %v1249, 0
        %v1343 = vsel %vm341, %v1250, 0
        %v1346 = vsel %vm341, %v1251, 0
        %1348 = vmatpush.msra.mxu0 0.0
        %1349 = vmatpush.msra.mxu0 0.0
        %1350 = vmatpush.msra.mxu0 0.0
        %1351 = vmatpush.msra.mxu0 0.0
        %1352 = vmatpush.msra.mxu0 0.0
        %1353 = vmatpush.msra.mxu0 0.0
        %1354 = vmatpush.msra.mxu0 0.0
        %1355 = vmatpush.msra.mxu0 0.0
        %1356 = vmatpush.msra.mxu0 0.0
        %1357 = vmatpush.msra.mxu0 0.0
        %1358 = vmatpush.msra.mxu0 0.0
        %1359 = vmatpush.msra.mxu0 0.0
        %1360 = vmatpush.msra.mxu0 0.0
        %1361 = vmatpush.msra.mxu0 0.0
        %1362 = vmatpush.msra.mxu0 0.0
        %1363 = vmatpush.msra.mxu0 %v263
        %1364 = vmatmul.f32.gmra.mxu0 %v1253
        %v1365 = vpop.f32.mrf.mxu0
        %v1366 = vadd.f32 %v333, %v1365
        %1367 = vmatmul.f32.gmra.mxu0 %v1256
        %v1368 = vpop.f32.mrf.mxu0
        %v1369 = vadd.f32 %v333, %v1368
        %1370 = vmatmul.f32.gmra.mxu0 %v1259
        %v1371 = vpop.f32.mrf.mxu0
        %v1372 = vadd.f32 %v333, %v1371
        %1373 = vmatmul.f32.gmra.mxu0 %v1262
        %v1374 = vpop.f32.mrf.mxu0
        %v1375 = vadd.f32 %v333, %v1374
        %1376 = vmatmul.f32.gmra.mxu0 %v1265
        %v1377 = vpop.f32.mrf.mxu0
        %v1378 = vadd.f32 %v333, %v1377
        %1379 = vmatmul.f32.gmra.mxu0 %v1268
        %v1380 = vpop.f32.mrf.mxu0
        %v1381 = vadd.f32 %v333, %v1380
        %1382 = vmatmul.f32.gmra.mxu0 %v1271
        %v1383 = vpop.f32.mrf.mxu0
        %v1384 = vadd.f32 %v333, %v1383
        %1385 = vmatmul.f32.gmra.mxu0 %v1274
        %v1386 = vpop.f32.mrf.mxu0
        %v1387 = vadd.f32 %v333, %v1386
        %1388 = vmatmul.f32.gmra.mxu0 %v1277
        %v1389 = vpop.f32.mrf.mxu0
        %v1390 = vadd.f32 %v333, %v1389
        %1391 = vmatmul.f32.gmra.mxu0 %v1280
        %v1392 = vpop.f32.mrf.mxu0
        %v1393 = vadd.f32 %v333, %v1392
        %1394 = vmatmul.f32.gmra.mxu0 %v1283
        %v1395 = vpop.f32.mrf.mxu0
        %v1396 = vadd.f32 %v333, %v1395
        %1397 = vmatmul.f32.gmra.mxu0 %v1286
        %v1398 = vpop.f32.mrf.mxu0
        %v1399 = vadd.f32 %v333, %v1398
        %1400 = vmatmul.f32.gmra.mxu0 %v1289
        %v1401 = vpop.f32.mrf.mxu0
        %v1402 = vadd.f32 %v333, %v1401
        %1403 = vmatmul.f32.gmra.mxu0 %v1292
        %v1404 = vpop.f32.mrf.mxu0
        %v1405 = vadd.f32 %v333, %v1404
        %1406 = vmatmul.f32.gmra.mxu0 %v1295
        %v1407 = vpop.f32.mrf.mxu0
        %v1408 = vadd.f32 %v333, %v1407
        %1409 = vmatmul.f32.gmra.mxu0 %v1298
        %v1410 = vpop.f32.mrf.mxu0
        %v1411 = vadd.f32 %v333, %v1410
        %1412 = vmatmul.f32.gmra.mxu0 %v1301
        %v1413 = vpop.f32.mrf.mxu0
        %v1414 = vadd.f32 %v333, %v1413
        %1415 = vmatmul.f32.gmra.mxu0 %v1304
        %v1416 = vpop.f32.mrf.mxu0
        %v1417 = vadd.f32 %v333, %v1416
        %1418 = vmatmul.f32.gmra.mxu0 %v1307
        %v1419 = vpop.f32.mrf.mxu0
        %v1420 = vadd.f32 %v333, %v1419
        %1421 = vmatmul.f32.gmra.mxu0 %v1310
        %v1422 = vpop.f32.mrf.mxu0
        %v1423 = vadd.f32 %v333, %v1422
        %1424 = vmatmul.f32.gmra.mxu0 %v1313
        %v1425 = vpop.f32.mrf.mxu0
        %v1426 = vadd.f32 %v333, %v1425
        %1427 = vmatmul.f32.gmra.mxu0 %v1316
        %v1428 = vpop.f32.mrf.mxu0
        %v1429 = vadd.f32 %v333, %v1428
        %1430 = vmatmul.f32.gmra.mxu0 %v1319
        %v1431 = vpop.f32.mrf.mxu0
        %v1432 = vadd.f32 %v333, %v1431
        %1433 = vmatmul.f32.gmra.mxu0 %v1322
        %v1434 = vpop.f32.mrf.mxu0
        %v1435 = vadd.f32 %v333, %v1434
        %1436 = vmatmul.f32.gmra.mxu0 %v1325
        %v1437 = vpop.f32.mrf.mxu0
        %v1438 = vadd.f32 %v333, %v1437
        %1439 = vmatmul.f32.gmra.mxu0 %v1328
        %v1440 = vpop.f32.mrf.mxu0
        %v1441 = vadd.f32 %v333, %v1440
        %1442 = vmatmul.f32.gmra.mxu0 %v1331
        %v1443 = vpop.f32.mrf.mxu0
        %v1444 = vadd.f32 %v333, %v1443
        %1445 = vmatmul.f32.gmra.mxu0 %v1334
        %v1446 = vpop.f32.mrf.mxu0
        %v1447 = vadd.f32 %v333, %v1446
        %1448 = vmatmul.f32.gmra.mxu0 %v1337
        %v1449 = vpop.f32.mrf.mxu0
        %v1450 = vadd.f32 %v333, %v1449
        %1451 = vmatmul.f32.gmra.mxu0 %v1340
        %v1452 = vpop.f32.mrf.mxu0
        %v1453 = vadd.f32 %v333, %v1452
        %1454 = vmatmul.f32.gmra.mxu0 %v1343
        %v1455 = vpop.f32.mrf.mxu0
        %v1456 = vadd.f32 %v333, %v1455
        %1457 = vmatmul.f32.gmra.mxu0 %v1346
        %v1458 = vpop.f32.mrf.mxu0
        %v1459 = vadd.f32 %v333, %v1458
        %1460 = vdwg.mxu0
        %1461 = vmatpush.msra.mxu0 0.0
        %1462 = vmatpush.msra.mxu0 0.0
        %1463 = vmatpush.msra.mxu0 0.0
        %1464 = vmatpush.msra.mxu0 0.0
        %1465 = vmatpush.msra.mxu0 0.0
        %1466 = vmatpush.msra.mxu0 0.0
        %1467 = vmatpush.msra.mxu0 0.0
        %1468 = vmatpush.msra.mxu0 0.0
        %1469 = vmatpush.msra.mxu0 0.0
        %1470 = vmatpush.msra.mxu0 0.0
        %1471 = vmatpush.msra.mxu0 0.0
        %1472 = vmatpush.msra.mxu0 0.0
        %1473 = vmatpush.msra.mxu0 0.0
        %1474 = vmatpush.msra.mxu0 0.0
        %1475 = vmatpush.msra.mxu0 0.0
        %1476 = vmatpush.msra.mxu0 %v264
        %1477 = vmatmul.f32.gmra.mxu0 %v1253
        %v1478 = vpop.f32.mrf.mxu0
        %v1479 = vadd.f32 %v334, %v1478
        %1480 = vmatmul.f32.gmra.mxu0 %v1256
        %v1481 = vpop.f32.mrf.mxu0
        %v1482 = vadd.f32 %v334, %v1481
        %1483 = vmatmul.f32.gmra.mxu0 %v1259
        %v1484 = vpop.f32.mrf.mxu0
        %v1485 = vadd.f32 %v334, %v1484
        %1486 = vmatmul.f32.gmra.mxu0 %v1262
        %v1487 = vpop.f32.mrf.mxu0
        %v1488 = vadd.f32 %v334, %v1487
        %1489 = vmatmul.f32.gmra.mxu0 %v1265
        %v1490 = vpop.f32.mrf.mxu0
        %v1491 = vadd.f32 %v334, %v1490
        %1492 = vmatmul.f32.gmra.mxu0 %v1268
        %v1493 = vpop.f32.mrf.mxu0
        %v1494 = vadd.f32 %v334, %v1493
        %1495 = vmatmul.f32.gmra.mxu0 %v1271
        %v1496 = vpop.f32.mrf.mxu0
        %v1497 = vadd.f32 %v334, %v1496
        %1498 = vmatmul.f32.gmra.mxu0 %v1274
        %v1499 = vpop.f32.mrf.mxu0
        %v1500 = vadd.f32 %v334, %v1499
        %1501 = vmatmul.f32.gmra.mxu0 %v1277
        %v1502 = vpop.f32.mrf.mxu0
        %v1503 = vadd.f32 %v334, %v1502
        %1504 = vmatmul.f32.gmra.mxu0 %v1280
        %v1505 = vpop.f32.mrf.mxu0
        %v1506 = vadd.f32 %v334, %v1505
        %1507 = vmatmul.f32.gmra.mxu0 %v1283
        %v1508 = vpop.f32.mrf.mxu0
        %v1509 = vadd.f32 %v334, %v1508
        %1510 = vmatmul.f32.gmra.mxu0 %v1286
        %v1511 = vpop.f32.mrf.mxu0
        %v1512 = vadd.f32 %v334, %v1511
        %1513 = vmatmul.f32.gmra.mxu0 %v1289
        %v1514 = vpop.f32.mrf.mxu0
        %v1515 = vadd.f32 %v334, %v1514
        %1516 = vmatmul.f32.gmra.mxu0 %v1292
        %v1517 = vpop.f32.mrf.mxu0
        %v1518 = vadd.f32 %v334, %v1517
        %1519 = vmatmul.f32.gmra.mxu0 %v1295
        %v1520 = vpop.f32.mrf.mxu0
        %v1521 = vadd.f32 %v334, %v1520
        %1522 = vmatmul.f32.gmra.mxu0 %v1298
        %v1523 = vpop.f32.mrf.mxu0
        %v1524 = vadd.f32 %v334, %v1523
        %1525 = vmatmul.f32.gmra.mxu0 %v1301
        %v1526 = vpop.f32.mrf.mxu0
        %v1527 = vadd.f32 %v334, %v1526
        %1528 = vmatmul.f32.gmra.mxu0 %v1304
        %v1529 = vpop.f32.mrf.mxu0
        %v1530 = vadd.f32 %v334, %v1529
        %1531 = vmatmul.f32.gmra.mxu0 %v1307
        %v1532 = vpop.f32.mrf.mxu0
        %v1533 = vadd.f32 %v334, %v1532
        %1534 = vmatmul.f32.gmra.mxu0 %v1310
        %v1535 = vpop.f32.mrf.mxu0
        %v1536 = vadd.f32 %v334, %v1535
        %1537 = vmatmul.f32.gmra.mxu0 %v1313
        %v1538 = vpop.f32.mrf.mxu0
        %v1539 = vadd.f32 %v334, %v1538
        %1540 = vmatmul.f32.gmra.mxu0 %v1316
        %v1541 = vpop.f32.mrf.mxu0
        %v1542 = vadd.f32 %v334, %v1541
        %1543 = vmatmul.f32.gmra.mxu0 %v1319
        %v1544 = vpop.f32.mrf.mxu0
        %v1545 = vadd.f32 %v334, %v1544
        %1546 = vmatmul.f32.gmra.mxu0 %v1322
        %v1547 = vpop.f32.mrf.mxu0
        %v1548 = vadd.f32 %v334, %v1547
        %1549 = vmatmul.f32.gmra.mxu0 %v1325
        %v1550 = vpop.f32.mrf.mxu0
        %v1551 = vadd.f32 %v334, %v1550
        %1552 = vmatmul.f32.gmra.mxu0 %v1328
        %v1553 = vpop.f32.mrf.mxu0
        %v1554 = vadd.f32 %v334, %v1553
        %1555 = vmatmul.f32.gmra.mxu0 %v1331
        %v1556 = vpop.f32.mrf.mxu0
        %v1557 = vadd.f32 %v334, %v1556
        %1558 = vmatmul.f32.gmra.mxu0 %v1334
        %v1559 = vpop.f32.mrf.mxu0
        %v1560 = vadd.f32 %v334, %v1559
        %1561 = vmatmul.f32.gmra.mxu0 %v1337
        %v1562 = vpop.f32.mrf.mxu0
        %v1563 = vadd.f32 %v334, %v1562
        %1564 = vmatmul.f32.gmra.mxu0 %v1340
        %v1565 = vpop.f32.mrf.mxu0
        %v1566 = vadd.f32 %v334, %v1565
        %1567 = vmatmul.f32.gmra.mxu0 %v1343
        %v1568 = vpop.f32.mrf.mxu0
        %v1569 = vadd.f32 %v334, %v1568
        %1570 = vmatmul.f32.gmra.mxu0 %v1346
        %v1571 = vpop.f32.mrf.mxu0
        %v1572 = vadd.f32 %v334, %v1571
        %1573 = vdwg.mxu0
        %1574 = vmatpush.msra.mxu0 0.0
        %1575 = vmatpush.msra.mxu0 0.0
        %1576 = vmatpush.msra.mxu0 0.0
        %1577 = vmatpush.msra.mxu0 0.0
        %1578 = vmatpush.msra.mxu0 0.0
        %1579 = vmatpush.msra.mxu0 0.0
        %1580 = vmatpush.msra.mxu0 0.0
        %1581 = vmatpush.msra.mxu0 0.0
        %1582 = vmatpush.msra.mxu0 0.0
        %1583 = vmatpush.msra.mxu0 0.0
        %1584 = vmatpush.msra.mxu0 0.0
        %1585 = vmatpush.msra.mxu0 0.0
        %1586 = vmatpush.msra.mxu0 0.0
        %1587 = vmatpush.msra.mxu0 0.0
        %1588 = vmatpush.msra.mxu0 0.0
        %1589 = vmatpush.msra.mxu0 %v265
        %1590 = vmatmul.f32.gmra.mxu0 %v1253
        %v1591 = vpop.f32.mrf.mxu0
        %v1592 = vadd.f32 %v335, %v1591
        %1593 = vmatmul.f32.gmra.mxu0 %v1256
        %v1594 = vpop.f32.mrf.mxu0
        %v1595 = vadd.f32 %v335, %v1594
        %1596 = vmatmul.f32.gmra.mxu0 %v1259
        %v1597 = vpop.f32.mrf.mxu0
        %v1598 = vadd.f32 %v335, %v1597
        %1599 = vmatmul.f32.gmra.mxu0 %v1262
        %v1600 = vpop.f32.mrf.mxu0
        %v1601 = vadd.f32 %v335, %v1600
        %1602 = vmatmul.f32.gmra.mxu0 %v1265
        %v1603 = vpop.f32.mrf.mxu0
        %v1604 = vadd.f32 %v335, %v1603
        %1605 = vmatmul.f32.gmra.mxu0 %v1268
        %v1606 = vpop.f32.mrf.mxu0
        %v1607 = vadd.f32 %v335, %v1606
        %1608 = vmatmul.f32.gmra.mxu0 %v1271
        %v1609 = vpop.f32.mrf.mxu0
        %v1610 = vadd.f32 %v335, %v1609
        %1611 = vmatmul.f32.gmra.mxu0 %v1274
        %v1612 = vpop.f32.mrf.mxu0
        %v1613 = vadd.f32 %v335, %v1612
        %1614 = vmatmul.f32.gmra.mxu0 %v1277
        %v1615 = vpop.f32.mrf.mxu0
        %v1616 = vadd.f32 %v335, %v1615
        %1617 = vmatmul.f32.gmra.mxu0 %v1280
        %v1618 = vpop.f32.mrf.mxu0
        %v1619 = vadd.f32 %v335, %v1618
        %1620 = vmatmul.f32.gmra.mxu0 %v1283
        %v1621 = vpop.f32.mrf.mxu0
        %v1622 = vadd.f32 %v335, %v1621
        %1623 = vmatmul.f32.gmra.mxu0 %v1286
        %v1624 = vpop.f32.mrf.mxu0
        %v1625 = vadd.f32 %v335, %v1624
        %1626 = vmatmul.f32.gmra.mxu0 %v1289
        %v1627 = vpop.f32.mrf.mxu0
        %v1628 = vadd.f32 %v335, %v1627
        %1629 = vmatmul.f32.gmra.mxu0 %v1292
        %v1630 = vpop.f32.mrf.mxu0
        %v1631 = vadd.f32 %v335, %v1630
        %1632 = vmatmul.f32.gmra.mxu0 %v1295
        %v1633 = vpop.f32.mrf.mxu0
        %v1634 = vadd.f32 %v335, %v1633
        %1635 = vmatmul.f32.gmra.mxu0 %v1298
        %v1636 = vpop.f32.mrf.mxu0
        %v1637 = vadd.f32 %v335, %v1636
        %1638 = vmatmul.f32.gmra.mxu0 %v1301
        %v1639 = vpop.f32.mrf.mxu0
        %v1640 = vadd.f32 %v335, %v1639
        %1641 = vmatmul.f32.gmra.mxu0 %v1304
        %v1642 = vpop.f32.mrf.mxu0
        %v1643 = vadd.f32 %v335, %v1642
        %1644 = vmatmul.f32.gmra.mxu0 %v1307
        %v1645 = vpop.f32.mrf.mxu0
        %v1646 = vadd.f32 %v335, %v1645
        %1647 = vmatmul.f32.gmra.mxu0 %v1310
        %v1648 = vpop.f32.mrf.mxu0
        %v1649 = vadd.f32 %v335, %v1648
        %1650 = vmatmul.f32.gmra.mxu0 %v1313
        %v1651 = vpop.f32.mrf.mxu0
        %v1652 = vadd.f32 %v335, %v1651
        %1653 = vmatmul.f32.gmra.mxu0 %v1316
        %v1654 = vpop.f32.mrf.mxu0
        %v1655 = vadd.f32 %v335, %v1654
        %1656 = vmatmul.f32.gmra.mxu0 %v1319
        %v1657 = vpop.f32.mrf.mxu0
        %v1658 = vadd.f32 %v335, %v1657
        %1659 = vmatmul.f32.gmra.mxu0 %v1322
        %v1660 = vpop.f32.mrf.mxu0
        %v1661 = vadd.f32 %v335, %v1660
        %1662 = vmatmul.f32.gmra.mxu0 %v1325
        %v1663 = vpop.f32.mrf.mxu0
        %v1664 = vadd.f32 %v335, %v1663
        %1665 = vmatmul.f32.gmra.mxu0 %v1328
        %v1666 = vpop.f32.mrf.mxu0
        %v1667 = vadd.f32 %v335, %v1666
        %1668 = vmatmul.f32.gmra.mxu0 %v1331
        %v1669 = vpop.f32.mrf.mxu0
        %v1670 = vadd.f32 %v335, %v1669
        %1671 = vmatmul.f32.gmra.mxu0 %v1334
        %v1672 = vpop.f32.mrf.mxu0
        %v1673 = vadd.f32 %v335, %v1672
        %1674 = vmatmul.f32.gmra.mxu0 %v1337
        %v1675 = vpop.f32.mrf.mxu0
        %v1676 = vadd.f32 %v335, %v1675
        %1677 = vmatmul.f32.gmra.mxu0 %v1340
        %v1678 = vpop.f32.mrf.mxu0
        %v1679 = vadd.f32 %v335, %v1678
        %1680 = vmatmul.f32.gmra.mxu0 %v1343
        %v1681 = vpop.f32.mrf.mxu0
        %v1682 = vadd.f32 %v335, %v1681
        %1683 = vmatmul.f32.gmra.mxu0 %v1346
        %v1684 = vpop.f32.mrf.mxu0
        %v1685 = vadd.f32 %v335, %v1684
        %1686 = vdwg.mxu0
        %1687 = vmatpush.msra.mxu0 0.0
        %1688 = vmatpush.msra.mxu0 0.0
        %1689 = vmatpush.msra.mxu0 0.0
        %1690 = vmatpush.msra.mxu0 0.0
        %1691 = vmatpush.msra.mxu0 0.0
        %1692 = vmatpush.msra.mxu0 0.0
        %1693 = vmatpush.msra.mxu0 0.0
        %1694 = vmatpush.msra.mxu0 0.0
        %1695 = vmatpush.msra.mxu0 0.0
        %1696 = vmatpush.msra.mxu0 0.0
        %1697 = vmatpush.msra.mxu0 0.0
        %1698 = vmatpush.msra.mxu0 0.0
        %1699 = vmatpush.msra.mxu0 0.0
        %1700 = vmatpush.msra.mxu0 0.0
        %1701 = vmatpush.msra.mxu0 0.0
        %1702 = vmatpush.msra.mxu0 %v266
        %1703 = vmatmul.f32.gmra.mxu0 %v1253
        %v1704 = vpop.f32.mrf.mxu0
        %v1705 = vadd.f32 %v336, %v1704
        %1706 = vmatmul.f32.gmra.mxu0 %v1256
        %v1707 = vpop.f32.mrf.mxu0
        %v1708 = vadd.f32 %v336, %v1707
        %1709 = vmatmul.f32.gmra.mxu0 %v1259
        %v1710 = vpop.f32.mrf.mxu0
        %v1711 = vadd.f32 %v336, %v1710
        %1712 = vmatmul.f32.gmra.mxu0 %v1262
        %v1713 = vpop.f32.mrf.mxu0
        %v1714 = vadd.f32 %v336, %v1713
        %1715 = vmatmul.f32.gmra.mxu0 %v1265
        %v1716 = vpop.f32.mrf.mxu0
        %v1717 = vadd.f32 %v336, %v1716
        %1718 = vmatmul.f32.gmra.mxu0 %v1268
        %v1719 = vpop.f32.mrf.mxu0
        %v1720 = vadd.f32 %v336, %v1719
        %1721 = vmatmul.f32.gmra.mxu0 %v1271
        %v1722 = vpop.f32.mrf.mxu0
        %v1723 = vadd.f32 %v336, %v1722
        %1724 = vmatmul.f32.gmra.mxu0 %v1274
        %v1725 = vpop.f32.mrf.mxu0
        %v1726 = vadd.f32 %v336, %v1725
        %1727 = vmatmul.f32.gmra.mxu0 %v1277
        %v1728 = vpop.f32.mrf.mxu0
        %v1729 = vadd.f32 %v336, %v1728
        %1730 = vmatmul.f32.gmra.mxu0 %v1280
        %v1731 = vpop.f32.mrf.mxu0
        %v1732 = vadd.f32 %v336, %v1731
        %1733 = vmatmul.f32.gmra.mxu0 %v1283
        %v1734 = vpop.f32.mrf.mxu0
        %v1735 = vadd.f32 %v336, %v1734
        %1736 = vmatmul.f32.gmra.mxu0 %v1286
        %v1737 = vpop.f32.mrf.mxu0
        %v1738 = vadd.f32 %v336, %v1737
        %1739 = vmatmul.f32.gmra.mxu0 %v1289
        %v1740 = vpop.f32.mrf.mxu0
        %v1741 = vadd.f32 %v336, %v1740
        %1742 = vmatmul.f32.gmra.mxu0 %v1292
        %v1743 = vpop.f32.mrf.mxu0
        %v1744 = vadd.f32 %v336, %v1743
        %1745 = vmatmul.f32.gmra.mxu0 %v1295
        %v1746 = vpop.f32.mrf.mxu0
        %v1747 = vadd.f32 %v336, %v1746
        %1748 = vmatmul.f32.gmra.mxu0 %v1298
        %v1749 = vpop.f32.mrf.mxu0
        %v1750 = vadd.f32 %v336, %v1749
        %1751 = vmatmul.f32.gmra.mxu0 %v1301
        %v1752 = vpop.f32.mrf.mxu0
        %v1753 = vadd.f32 %v336, %v1752
        %1754 = vmatmul.f32.gmra.mxu0 %v1304
        %v1755 = vpop.f32.mrf.mxu0
        %v1756 = vadd.f32 %v336, %v1755
        %1757 = vmatmul.f32.gmra.mxu0 %v1307
        %v1758 = vpop.f32.mrf.mxu0
        %v1759 = vadd.f32 %v336, %v1758
        %1760 = vmatmul.f32.gmra.mxu0 %v1310
        %v1761 = vpop.f32.mrf.mxu0
        %v1762 = vadd.f32 %v336, %v1761
        %1763 = vmatmul.f32.gmra.mxu0 %v1313
        %v1764 = vpop.f32.mrf.mxu0
        %v1765 = vadd.f32 %v336, %v1764
        %1766 = vmatmul.f32.gmra.mxu0 %v1316
        %v1767 = vpop.f32.mrf.mxu0
        %v1768 = vadd.f32 %v336, %v1767
        %1769 = vmatmul.f32.gmra.mxu0 %v1319
        %v1770 = vpop.f32.mrf.mxu0
        %v1771 = vadd.f32 %v336, %v1770
        %1772 = vmatmul.f32.gmra.mxu0 %v1322
        %v1773 = vpop.f32.mrf.mxu0
        %v1774 = vadd.f32 %v336, %v1773
        %1775 = vmatmul.f32.gmra.mxu0 %v1325
        %v1776 = vpop.f32.mrf.mxu0
        %v1777 = vadd.f32 %v336, %v1776
        %1778 = vmatmul.f32.gmra.mxu0 %v1328
        %v1779 = vpop.f32.mrf.mxu0
        %v1780 = vadd.f32 %v336, %v1779
        %1781 = vmatmul.f32.gmra.mxu0 %v1331
        %v1782 = vpop.f32.mrf.mxu0
        %v1783 = vadd.f32 %v336, %v1782
        %1784 = vmatmul.f32.gmra.mxu0 %v1334
        %v1785 = vpop.f32.mrf.mxu0
        %v1786 = vadd.f32 %v336, %v1785
        %1787 = vmatmul.f32.gmra.mxu0 %v1337
        %v1788 = vpop.f32.mrf.mxu0
        %v1789 = vadd.f32 %v336, %v1788
        %1790 = vmatmul.f32.gmra.mxu0 %v1340
        %v1791 = vpop.f32.mrf.mxu0
        %v1792 = vadd.f32 %v336, %v1791
        %1793 = vmatmul.f32.gmra.mxu0 %v1343
        %v1794 = vpop.f32.mrf.mxu0
        %v1795 = vadd.f32 %v336, %v1794
        %1796 = vmatmul.f32.gmra.mxu0 %v1346
        %v1797 = vpop.f32.mrf.mxu0
        %v1798 = vadd.f32 %v336, %v1797
        %1799 = vdwg.mxu0
        %v1800 = vmax.f32 %v1366, 0.0
        %v1801 = vmax.f32 %v1479, 0.0
        %v1802 = vmax.f32 %v1592, 0.0
        %v1803 = vmax.f32 %v1705, 0.0
        %v1804 = vmax.f32 %v1369, 0.0
        %v1805 = vmax.f32 %v1482, 0.0
        %v1806 = vmax.f32 %v1595, 0.0
        %v1807 = vmax.f32 %v1708, 0.0
        %v1808 = vmax.f32 %v1372, 0.0
        %v1809 = vmax.f32 %v1485, 0.0
        %v1810 = vmax.f32 %v1598, 0.0
        %v1811 = vmax.f32 %v1711, 0.0
        %v1812 = vmax.f32 %v1375, 0.0
        %v1813 = vmax.f32 %v1488, 0.0
        %v1814 = vmax.f32 %v1601, 0.0
        %v1815 = vmax.f32 %v1714, 0.0
        %v1816 = vmax.f32 %v1378, 0.0
        %v1817 = vmax.f32 %v1491, 0.0
        %v1818 = vmax.f32 %v1604, 0.0
        %v1819 = vmax.f32 %v1717, 0.0
        %v1820 = vmax.f32 %v1381, 0.0
        %v1821 = vmax.f32 %v1494, 0.0
        %v1822 = vmax.f32 %v1607, 0.0
        %v1823 = vmax.f32 %v1720, 0.0
        %v1824 = vmax.f32 %v1384, 0.0
        %v1825 = vmax.f32 %v1497, 0.0
        %v1826 = vmax.f32 %v1610, 0.0
        %v1827 = vmax.f32 %v1723, 0.0
        %v1828 = vmax.f32 %v1387, 0.0
        %v1829 = vmax.f32 %v1500, 0.0
        %v1830 = vmax.f32 %v1613, 0.0
        %v1831 = vmax.f32 %v1726, 0.0
        %v1832 = vmax.f32 %v1390, 0.0
        %v1833 = vmax.f32 %v1503, 0.0
        %v1834 = vmax.f32 %v1616, 0.0
        %v1835 = vmax.f32 %v1729, 0.0
        %v1836 = vmax.f32 %v1393, 0.0
        %v1837 = vmax.f32 %v1506, 0.0
        %v1838 = vmax.f32 %v1619, 0.0
        %v1839 = vmax.f32 %v1732, 0.0
        %v1840 = vmax.f32 %v1396, 0.0
        %v1841 = vmax.f32 %v1509, 0.0
        %v1842 = vmax.f32 %v1622, 0.0
        %v1843 = vmax.f32 %v1735, 0.0
        %v1844 = vmax.f32 %v1399, 0.0
        %v1845 = vmax.f32 %v1512, 0.0
        %v1846 = vmax.f32 %v1625, 0.0
        %v1847 = vmax.f32 %v1738, 0.0
        %v1848 = vmax.f32 %v1402, 0.0
        %v1849 = vmax.f32 %v1515, 0.0
        %v1850 = vmax.f32 %v1628, 0.0
        %v1851 = vmax.f32 %v1741, 0.0
        %v1852 = vmax.f32 %v1405, 0.0
        %v1853 = vmax.f32 %v1518, 0.0
        %v1854 = vmax.f32 %v1631, 0.0
        %v1855 = vmax.f32 %v1744, 0.0
        %v1856 = vmax.f32 %v1408, 0.0
        %v1857 = vmax.f32 %v1521, 0.0
        %v1858 = vmax.f32 %v1634, 0.0
        %v1859 = vmax.f32 %v1747, 0.0
        %v1860 = vmax.f32 %v1411, 0.0
        %v1861 = vmax.f32 %v1524, 0.0
        %v1862 = vmax.f32 %v1637, 0.0
        %v1863 = vmax.f32 %v1750, 0.0
        %v1864 = vmax.f32 %v1414, 0.0
        %v1865 = vmax.f32 %v1527, 0.0
        %v1866 = vmax.f32 %v1640, 0.0
        %v1867 = vmax.f32 %v1753, 0.0
        %v1868 = vmax.f32 %v1417, 0.0
        %v1869 = vmax.f32 %v1530, 0.0
        %v1870 = vmax.f32 %v1643, 0.0
        %v1871 = vmax.f32 %v1756, 0.0
        %v1872 = vmax.f32 %v1420, 0.0
        %v1873 = vmax.f32 %v1533, 0.0
        %v1874 = vmax.f32 %v1646, 0.0
        %v1875 = vmax.f32 %v1759, 0.0
        %v1876 = vmax.f32 %v1423, 0.0
        %v1877 = vmax.f32 %v1536, 0.0
        %v1878 = vmax.f32 %v1649, 0.0
        %v1879 = vmax.f32 %v1762, 0.0
        %v1880 = vmax.f32 %v1426, 0.0
        %v1881 = vmax.f32 %v1539, 0.0
        %v1882 = vmax.f32 %v1652, 0.0
        %v1883 = vmax.f32 %v1765, 0.0
        %v1884 = vmax.f32 %v1429, 0.0
        %v1885 = vmax.f32 %v1542, 0.0
        %v1886 = vmax.f32 %v1655, 0.0
        %v1887 = vmax.f32 %v1768, 0.0
        %v1888 = vmax.f32 %v1432, 0.0
        %v1889 = vmax.f32 %v1545, 0.0
        %v1890 = vmax.f32 %v1658, 0.0
        %v1891 = vmax.f32 %v1771, 0.0
        %v1892 = vmax.f32 %v1435, 0.0
        %v1893 = vmax.f32 %v1548, 0.0
        %v1894 = vmax.f32 %v1661, 0.0
        %v1895 = vmax.f32 %v1774, 0.0
        %v1896 = vmax.f32 %v1438, 0.0
        %v1897 = vmax.f32 %v1551, 0.0
        %v1898 = vmax.f32 %v1664, 0.0
        %v1899 = vmax.f32 %v1777, 0.0
        %v1900 = vmax.f32 %v1441, 0.0
        %v1901 = vmax.f32 %v1554, 0.0
        %v1902 = vmax.f32 %v1667, 0.0
        %v1903 = vmax.f32 %v1780, 0.0
        %v1904 = vmax.f32 %v1444, 0.0
        %v1905 = vmax.f32 %v1557, 0.0
        %v1906 = vmax.f32 %v1670, 0.0
        %v1907 = vmax.f32 %v1783, 0.0
        %v1908 = vmax.f32 %v1447, 0.0
        %v1909 = vmax.f32 %v1560, 0.0
        %v1910 = vmax.f32 %v1673, 0.0
        %v1911 = vmax.f32 %v1786, 0.0
        %v1912 = vmax.f32 %v1450, 0.0
        %v1913 = vmax.f32 %v1563, 0.0
        %v1914 = vmax.f32 %v1676, 0.0
        %v1915 = vmax.f32 %v1789, 0.0
        %v1916 = vmax.f32 %v1453, 0.0
        %v1917 = vmax.f32 %v1566, 0.0
        %v1918 = vmax.f32 %v1679, 0.0
        %v1919 = vmax.f32 %v1792, 0.0
        %v1920 = vmax.f32 %v1456, 0.0
        %v1921 = vmax.f32 %v1569, 0.0
        %v1922 = vmax.f32 %v1682, 0.0
        %v1923 = vmax.f32 %v1795, 0.0
        %v1924 = vmax.f32 %v1459, 0.0
        %v1925 = vmax.f32 %v1572, 0.0
        %v1926 = vmax.f32 %v1685, 0.0
        %v1927 = vmax.f32 %v1798, 0.0
        %s1928 = scalar_lea.vmem %s236, 1 [#allocation8]
        %v1929 = vld [vmem:[%s1928] ss:$8 sm:$0xf]
        %v1930 = vadd.f32 %v1800, %v1804
        %v1931 = vadd.f32 %v1930, %v1808
        %v1932 = vadd.f32 %v1931, %v1812
        %v1933 = vadd.f32 %v1932, %v1816
        %v1934 = vadd.f32 %v1933, %v1820
        %v1935 = vadd.f32 %v1934, %v1824
        %v1936 = vadd.f32 %v1935, %v1828
        %v1937 = vadd.f32 %v1936, %v1832
        %v1938 = vadd.f32 %v1937, %v1836
        %v1939 = vadd.f32 %v1938, %v1840
        %v1940 = vadd.f32 %v1939, %v1844
        %v1941 = vadd.f32 %v1940, %v1848
        %v1942 = vadd.f32 %v1941, %v1852
        %v1943 = vadd.f32 %v1942, %v1856
        %v1944 = vadd.f32 %v1943, %v1860
        %v1945 = vadd.f32 %v1944, %v1864
        %v1946 = vadd.f32 %v1945, %v1868
        %v1947 = vadd.f32 %v1946, %v1872
        %v1948 = vadd.f32 %v1947, %v1876
        %v1949 = vadd.f32 %v1948, %v1880
        %v1950 = vadd.f32 %v1949, %v1884
        %v1951 = vadd.f32 %v1950, %v1888
        %v1952 = vadd.f32 %v1951, %v1892
        %v1953 = vadd.f32 %v1952, %v1896
        %v1954 = vadd.f32 %v1953, %v1900
        %v1955 = vadd.f32 %v1954, %v1904
        %v1956 = vadd.f32 %v1955, %v1908
        %v1957 = vadd.f32 %v1956, %v1912
        %v1958 = vadd.f32 %v1957, %v1916
        %v1959 = vadd.f32 %v1958, %v1920
        %v1960 = vadd.f32 %v1959, %v1924
        %v1961 = vrot.slane %v1960, 4
        %v1962 = vadd.f32 %v1960, %v1961
        %v1963 = vrot.slane %v1962, 2
        %v1964 = vadd.f32 %v1962, %v1963
        %v1965 = vrot.slane %v1964, 1
        %v1966 = vadd.f32 %v1964, %v1965
        %v1967 = vadd.f32 %v1801, %v1805
        %v1968 = vadd.f32 %v1967, %v1809
        %v1969 = vadd.f32 %v1968, %v1813
        %v1970 = vadd.f32 %v1969, %v1817
        %v1971 = vadd.f32 %v1970, %v1821
        %v1972 = vadd.f32 %v1971, %v1825
        %v1973 = vadd.f32 %v1972, %v1829
        %v1974 = vadd.f32 %v1973, %v1833
        %v1975 = vadd.f32 %v1974, %v1837
        %v1976 = vadd.f32 %v1975, %v1841
        %v1977 = vadd.f32 %v1976, %v1845
        %v1978 = vadd.f32 %v1977, %v1849
        %v1979 = vadd.f32 %v1978, %v1853
        %v1980 = vadd.f32 %v1979, %v1857
        %v1981 = vadd.f32 %v1980, %v1861
        %v1982 = vadd.f32 %v1981, %v1865
        %v1983 = vadd.f32 %v1982, %v1869
        %v1984 = vadd.f32 %v1983, %v1873
        %v1985 = vadd.f32 %v1984, %v1877
        %v1986 = vadd.f32 %v1985, %v1881
        %v1987 = vadd.f32 %v1986, %v1885
        %v1988 = vadd.f32 %v1987, %v1889
        %v1989 = vadd.f32 %v1988, %v1893
        %v1990 = vadd.f32 %v1989, %v1897
        %v1991 = vadd.f32 %v1990, %v1901
        %v1992 = vadd.f32 %v1991, %v1905
        %v1993 = vadd.f32 %v1992, %v1909
        %v1994 = vadd.f32 %v1993, %v1913
        %v1995 = vadd.f32 %v1994, %v1917
        %v1996 = vadd.f32 %v1995, %v1921
        %v1997 = vadd.f32 %v1996, %v1925
        %v1998 = vrot.slane %v1997, 4
        %v1999 = vadd.f32 %v1997, %v1998
        %v2000 = vrot.slane %v1999, 2
        %v2001 = vadd.f32 %v1999, %v2000
        %v2002 = vrot.slane %v2001, 1
        %v2003 = vadd.f32 %v2001, %v2002
        %v2004 = vadd.f32 %v1802, %v1806
        %v2005 = vadd.f32 %v2004, %v1810
        %v2006 = vadd.f32 %v2005, %v1814
        %v2007 = vadd.f32 %v2006, %v1818
        %v2008 = vadd.f32 %v2007, %v1822
        %v2009 = vadd.f32 %v2008, %v1826
        %v2010 = vadd.f32 %v2009, %v1830
        %v2011 = vadd.f32 %v2010, %v1834
        %v2012 = vadd.f32 %v2011, %v1838
        %v2013 = vadd.f32 %v2012, %v1842
        %v2014 = vadd.f32 %v2013, %v1846
        %v2015 = vadd.f32 %v2014, %v1850
        %v2016 = vadd.f32 %v2015, %v1854
        %v2017 = vadd.f32 %v2016, %v1858
        %v2018 = vadd.f32 %v2017, %v1862
        %v2019 = vadd.f32 %v2018, %v1866
        %v2020 = vadd.f32 %v2019, %v1870
        %v2021 = vadd.f32 %v2020, %v1874
        %v2022 = vadd.f32 %v2021, %v1878
        %v2023 = vadd.f32 %v2022, %v1882
        %v2024 = vadd.f32 %v2023, %v1886
        %v2025 = vadd.f32 %v2024, %v1890
        %v2026 = vadd.f32 %v2025, %v1894
        %v2027 = vadd.f32 %v2026, %v1898
        %v2028 = vadd.f32 %v2027, %v1902
        %v2029 = vadd.f32 %v2028, %v1906
        %v2030 = vadd.f32 %v2029, %v1910
        %v2031 = vadd.f32 %v2030, %v1914
        %v2032 = vadd.f32 %v2031, %v1918
        %v2033 = vadd.f32 %v2032, %v1922
        %v2034 = vadd.f32 %v2033, %v1926
        %v2035 = vrot.slane %v2034, 4
        %v2036 = vadd.f32 %v2034, %v2035
        %v2037 = vrot.slane %v2036, 2
        %v2038 = vadd.f32 %v2036, %v2037
        %v2039 = vrot.slane %v2038, 1
        %v2040 = vadd.f32 %v2038, %v2039
        %v2041 = vadd.f32 %v1803, %v1807
        %v2042 = vadd.f32 %v2041, %v1811
        %v2043 = vadd.f32 %v2042, %v1815
        %v2044 = vadd.f32 %v2043, %v1819
        %v2045 = vadd.f32 %v2044, %v1823
        %v2046 = vadd.f32 %v2045, %v1827
        %v2047 = vadd.f32 %v2046, %v1831
        %v2048 = vadd.f32 %v2047, %v1835
        %v2049 = vadd.f32 %v2048, %v1839
        %v2050 = vadd.f32 %v2049, %v1843
        %v2051 = vadd.f32 %v2050, %v1847
        %v2052 = vadd.f32 %v2051, %v1851
        %v2053 = vadd.f32 %v2052, %v1855
        %v2054 = vadd.f32 %v2053, %v1859
        %v2055 = vadd.f32 %v2054, %v1863
        %v2056 = vadd.f32 %v2055, %v1867
        %v2057 = vadd.f32 %v2056, %v1871
        %v2058 = vadd.f32 %v2057, %v1875
        %v2059 = vadd.f32 %v2058, %v1879
        %v2060 = vadd.f32 %v2059, %v1883
        %v2061 = vadd.f32 %v2060, %v1887
        %v2062 = vadd.f32 %v2061, %v1891
        %v2063 = vadd.f32 %v2062, %v1895
        %v2064 = vadd.f32 %v2063, %v1899
        %v2065 = vadd.f32 %v2064, %v1903
        %v2066 = vadd.f32 %v2065, %v1907
        %v2067 = vadd.f32 %v2066, %v1911
        %v2068 = vadd.f32 %v2067, %v1915
        %v2069 = vadd.f32 %v2068, %v1919
        %v2070 = vadd.f32 %v2069, %v1923
        %v2071 = vadd.f32 %v2070, %v1927
        %v2072 = vrot.slane %v2071, 4
        %v2073 = vadd.f32 %v2071, %v2072
        %v2074 = vrot.slane %v2073, 2
        %v2075 = vadd.f32 %v2073, %v2074
        %v2076 = vrot.slane %v2075, 1
        %v2077 = vadd.f32 %v2075, %v2076
        %v2082 = vrot.slane %v2003, 7
        %v2083 = vrot.slane %v2040, 6
        %v2084 = vrot.slane %v2077, 5
        %v2085 = vsel %vm1174, %v1966, %v2082
        %v2086 = vsel %vm1176, %v2083, %v2084
        %v2087 = vsel %vm1178, %v2085, %v2086
        %v2089 = vadd.f32 %v1929, %v2087
        %2090 = vst.msk [vmem:[%s1928] ss:$8 sm:$0xf] %vm1185, %v2089
        %2091 = vst.msk [vmem:[%s1928] ss:$8 sm:$0x0] %vm1185, %v2089
        %2092 = vxpose.xlu0.b32.start [1/16] %v251, 128
        %2093 = vxpose.xlu0.b32.cont [2/16] 0.0, 128
        %2094 = vxpose.xlu0.b32.cont [3/16] 0.0, 128
        %2095 = vxpose.xlu0.b32.cont [4/16] 0.0, 128
        %2096 = vxpose.xlu0.b32.cont [5/16] 0.0, 128
        %2097 = vxpose.xlu0.b32.cont [6/16] 0.0, 128
        %2098 = vxpose.xlu0.b32.cont [7/16] 0.0, 128
        %2099 = vxpose.xlu0.b32.cont [8/16] 0.0, 128
        %2100 = vxpose.xlu0.b32.cont [9/16] 0.0, 128
        %2101 = vxpose.xlu0.b32.cont [10/16] 0.0, 128
        %2102 = vxpose.xlu0.b32.cont [11/16] 0.0, 128
        %2103 = vxpose.xlu0.b32.cont [12/16] 0.0, 128
        %2104 = vxpose.xlu0.b32.cont [13/16] 0.0, 128
        %2105 = vxpose.xlu0.b32.cont [14/16] 0.0, 128
        %2106 = vxpose.xlu0.b32.cont [15/16] 0.0, 128
        %2107 = vxpose.xlu0.b32.end [16/16] 0.0, 128
        %v2108 = vpop.trf.xlu0
        %v2109 = vpop.trf.xlu0
        %v2110 = vpop.trf.xlu0
        %v2111 = vpop.trf.xlu0
        %v2112 = vpop.trf.xlu0
        %v2113 = vpop.trf.xlu0
        %v2114 = vpop.trf.xlu0
        %v2115 = vpop.trf.xlu0
        %v2116 = vpop.trf.xlu0
        %v2117 = vpop.trf.xlu0
        %v2118 = vpop.trf.xlu0
        %v2119 = vpop.trf.xlu0
        %v2120 = vpop.trf.xlu0
        %v2121 = vpop.trf.xlu0
        %v2122 = vpop.trf.xlu0
        %v2123 = vpop.trf.xlu0
        %2124 = vxpose.xlu0.b32.start [1/16] %v252, 128
        %2125 = vxpose.xlu0.b32.cont [2/16] 0.0, 128
        %2126 = vxpose.xlu0.b32.cont [3/16] 0.0, 128
        %2127 = vxpose.xlu0.b32.cont [4/16] 0.0, 128
        %2128 = vxpose.xlu0.b32.cont [5/16] 0.0, 128
        %2129 = vxpose.xlu0.b32.cont [6/16] 0.0, 128
        %2130 = vxpose.xlu0.b32.cont [7/16] 0.0, 128
        %2131 = vxpose.xlu0.b32.cont [8/16] 0.0, 128
        %2132 = vxpose.xlu0.b32.cont [9/16] 0.0, 128
        %2133 = vxpose.xlu0.b32.cont [10/16] 0.0, 128
        %2134 = vxpose.xlu0.b32.cont [11/16] 0.0, 128
        %2135 = vxpose.xlu0.b32.cont [12/16] 0.0, 128
        %2136 = vxpose.xlu0.b32.cont [13/16] 0.0, 128
        %2137 = vxpose.xlu0.b32.cont [14/16] 0.0, 128
        %2138 = vxpose.xlu0.b32.cont [15/16] 0.0, 128
        %2139 = vxpose.xlu0.b32.end [16/16] 0.0, 128
        %v2140 = vpop.trf.xlu0
        %v2141 = vpop.trf.xlu0
        %v2142 = vpop.trf.xlu0
        %v2143 = vpop.trf.xlu0
        %v2144 = vpop.trf.xlu0
        %v2145 = vpop.trf.xlu0
        %v2146 = vpop.trf.xlu0
        %v2147 = vpop.trf.xlu0
        %v2148 = vpop.trf.xlu0
        %v2149 = vpop.trf.xlu0
        %v2150 = vpop.trf.xlu0
        %v2151 = vpop.trf.xlu0
        %v2152 = vpop.trf.xlu0
        %v2153 = vpop.trf.xlu0
        %v2154 = vpop.trf.xlu0
        %v2155 = vpop.trf.xlu0
        %v2157 = vsel %vm341, %v2108, 0
        %v2160 = vsel %vm341, %v2109, 0
        %v2163 = vsel %vm341, %v2110, 0
        %v2166 = vsel %vm341, %v2111, 0
        %v2169 = vsel %vm341, %v2112, 0
        %v2172 = vsel %vm341, %v2113, 0
        %v2175 = vsel %vm341, %v2114, 0
        %v2178 = vsel %vm341, %v2115, 0
        %v2181 = vsel %vm341, %v2116, 0
        %v2184 = vsel %vm341, %v2117, 0
        %v2187 = vsel %vm341, %v2118, 0
        %v2190 = vsel %vm341, %v2119, 0
        %v2193 = vsel %vm341, %v2120, 0
        %v2196 = vsel %vm341, %v2121, 0
        %v2199 = vsel %vm341, %v2122, 0
        %v2202 = vsel %vm341, %v2123, 0
        %v2205 = vsel %vm341, %v2140, 0
        %v2208 = vsel %vm341, %v2141, 0
        %v2211 = vsel %vm341, %v2142, 0
        %v2214 = vsel %vm341, %v2143, 0
        %v2217 = vsel %vm341, %v2144, 0
        %v2220 = vsel %vm341, %v2145, 0
        %v2223 = vsel %vm341, %v2146, 0
        %v2226 = vsel %vm341, %v2147, 0
        %v2229 = vsel %vm341, %v2148, 0
        %v2232 = vsel %vm341, %v2149, 0
        %v2235 = vsel %vm341, %v2150, 0
        %v2238 = vsel %vm341, %v2151, 0
        %v2241 = vsel %vm341, %v2152, 0
        %v2244 = vsel %vm341, %v2153, 0
        %v2247 = vsel %vm341, %v2154, 0
        %v2250 = vsel %vm341, %v2155, 0
        %2252 = vmatpush.msra.mxu0 0.0
        %2253 = vmatpush.msra.mxu0 0.0
        %2254 = vmatpush.msra.mxu0 0.0
        %2255 = vmatpush.msra.mxu0 0.0
        %2256 = vmatpush.msra.mxu0 0.0
        %2257 = vmatpush.msra.mxu0 0.0
        %2258 = vmatpush.msra.mxu0 0.0
        %2259 = vmatpush.msra.mxu0 0.0
        %2260 = vmatpush.msra.mxu0 0.0
        %2261 = vmatpush.msra.mxu0 0.0
        %2262 = vmatpush.msra.mxu0 0.0
        %2263 = vmatpush.msra.mxu0 0.0
        %2264 = vmatpush.msra.mxu0 0.0
        %2265 = vmatpush.msra.mxu0 0.0
        %2266 = vmatpush.msra.mxu0 0.0
        %2267 = vmatpush.msra.mxu0 %v263
        %2268 = vmatmul.f32.gmra.mxu0 %v2157
        %v2269 = vpop.f32.mrf.mxu0
        %v2270 = vadd.f32 %v333, %v2269
        %2271 = vmatmul.f32.gmra.mxu0 %v2160
        %v2272 = vpop.f32.mrf.mxu0
        %v2273 = vadd.f32 %v333, %v2272
        %2274 = vmatmul.f32.gmra.mxu0 %v2163
        %v2275 = vpop.f32.mrf.mxu0
        %v2276 = vadd.f32 %v333, %v2275
        %2277 = vmatmul.f32.gmra.mxu0 %v2166
        %v2278 = vpop.f32.mrf.mxu0
        %v2279 = vadd.f32 %v333, %v2278
        %2280 = vmatmul.f32.gmra.mxu0 %v2169
        %v2281 = vpop.f32.mrf.mxu0
        %v2282 = vadd.f32 %v333, %v2281
        %2283 = vmatmul.f32.gmra.mxu0 %v2172
        %v2284 = vpop.f32.mrf.mxu0
        %v2285 = vadd.f32 %v333, %v2284
        %2286 = vmatmul.f32.gmra.mxu0 %v2175
        %v2287 = vpop.f32.mrf.mxu0
        %v2288 = vadd.f32 %v333, %v2287
        %2289 = vmatmul.f32.gmra.mxu0 %v2178
        %v2290 = vpop.f32.mrf.mxu0
        %v2291 = vadd.f32 %v333, %v2290
        %2292 = vmatmul.f32.gmra.mxu0 %v2181
        %v2293 = vpop.f32.mrf.mxu0
        %v2294 = vadd.f32 %v333, %v2293
        %2295 = vmatmul.f32.gmra.mxu0 %v2184
        %v2296 = vpop.f32.mrf.mxu0
        %v2297 = vadd.f32 %v333, %v2296
        %2298 = vmatmul.f32.gmra.mxu0 %v2187
        %v2299 = vpop.f32.mrf.mxu0
        %v2300 = vadd.f32 %v333, %v2299
        %2301 = vmatmul.f32.gmra.mxu0 %v2190
        %v2302 = vpop.f32.mrf.mxu0
        %v2303 = vadd.f32 %v333, %v2302
        %2304 = vmatmul.f32.gmra.mxu0 %v2193
        %v2305 = vpop.f32.mrf.mxu0
        %v2306 = vadd.f32 %v333, %v2305
        %2307 = vmatmul.f32.gmra.mxu0 %v2196
        %v2308 = vpop.f32.mrf.mxu0
        %v2309 = vadd.f32 %v333, %v2308
        %2310 = vmatmul.f32.gmra.mxu0 %v2199
        %v2311 = vpop.f32.mrf.mxu0
        %v2312 = vadd.f32 %v333, %v2311
        %2313 = vmatmul.f32.gmra.mxu0 %v2202
        %v2314 = vpop.f32.mrf.mxu0
        %v2315 = vadd.f32 %v333, %v2314
        %2316 = vmatmul.f32.gmra.mxu0 %v2205
        %v2317 = vpop.f32.mrf.mxu0
        %v2318 = vadd.f32 %v333, %v2317
        %2319 = vmatmul.f32.gmra.mxu0 %v2208
        %v2320 = vpop.f32.mrf.mxu0
        %v2321 = vadd.f32 %v333, %v2320
        %2322 = vmatmul.f32.gmra.mxu0 %v2211
        %v2323 = vpop.f32.mrf.mxu0
        %v2324 = vadd.f32 %v333, %v2323
        %2325 = vmatmul.f32.gmra.mxu0 %v2214
        %v2326 = vpop.f32.mrf.mxu0
        %v2327 = vadd.f32 %v333, %v2326
        %2328 = vmatmul.f32.gmra.mxu0 %v2217
        %v2329 = vpop.f32.mrf.mxu0
        %v2330 = vadd.f32 %v333, %v2329
        %2331 = vmatmul.f32.gmra.mxu0 %v2220
        %v2332 = vpop.f32.mrf.mxu0
        %v2333 = vadd.f32 %v333, %v2332
        %2334 = vmatmul.f32.gmra.mxu0 %v2223
        %v2335 = vpop.f32.mrf.mxu0
        %v2336 = vadd.f32 %v333, %v2335
        %2337 = vmatmul.f32.gmra.mxu0 %v2226
        %v2338 = vpop.f32.mrf.mxu0
        %v2339 = vadd.f32 %v333, %v2338
        %2340 = vmatmul.f32.gmra.mxu0 %v2229
        %v2341 = vpop.f32.mrf.mxu0
        %v2342 = vadd.f32 %v333, %v2341
        %2343 = vmatmul.f32.gmra.mxu0 %v2232
        %v2344 = vpop.f32.mrf.mxu0
        %v2345 = vadd.f32 %v333, %v2344
        %2346 = vmatmul.f32.gmra.mxu0 %v2235
        %v2347 = vpop.f32.mrf.mxu0
        %v2348 = vadd.f32 %v333, %v2347
        %2349 = vmatmul.f32.gmra.mxu0 %v2238
        %v2350 = vpop.f32.mrf.mxu0
        %v2351 = vadd.f32 %v333, %v2350
        %2352 = vmatmul.f32.gmra.mxu0 %v2241
        %v2353 = vpop.f32.mrf.mxu0
        %v2354 = vadd.f32 %v333, %v2353
        %2355 = vmatmul.f32.gmra.mxu0 %v2244
        %v2356 = vpop.f32.mrf.mxu0
        %v2357 = vadd.f32 %v333, %v2356
        %2358 = vmatmul.f32.gmra.mxu0 %v2247
        %v2359 = vpop.f32.mrf.mxu0
        %v2360 = vadd.f32 %v333, %v2359
        %2361 = vmatmul.f32.gmra.mxu0 %v2250
        %v2362 = vpop.f32.mrf.mxu0
        %v2363 = vadd.f32 %v333, %v2362
        %2364 = vdwg.mxu0
        %2365 = vmatpush.msra.mxu0 0.0
        %2366 = vmatpush.msra.mxu0 0.0
        %2367 = vmatpush.msra.mxu0 0.0
        %2368 = vmatpush.msra.mxu0 0.0
        %2369 = vmatpush.msra.mxu0 0.0
        %2370 = vmatpush.msra.mxu0 0.0
        %2371 = vmatpush.msra.mxu0 0.0
        %2372 = vmatpush.msra.mxu0 0.0
        %2373 = vmatpush.msra.mxu0 0.0
        %2374 = vmatpush.msra.mxu0 0.0
        %2375 = vmatpush.msra.mxu0 0.0
        %2376 = vmatpush.msra.mxu0 0.0
        %2377 = vmatpush.msra.mxu0 0.0
        %2378 = vmatpush.msra.mxu0 0.0
        %2379 = vmatpush.msra.mxu0 0.0
        %2380 = vmatpush.msra.mxu0 %v264
        %2381 = vmatmul.f32.gmra.mxu0 %v2157
        %v2382 = vpop.f32.mrf.mxu0
        %v2383 = vadd.f32 %v334, %v2382
        %2384 = vmatmul.f32.gmra.mxu0 %v2160
        %v2385 = vpop.f32.mrf.mxu0
        %v2386 = vadd.f32 %v334, %v2385
        %2387 = vmatmul.f32.gmra.mxu0 %v2163
        %v2388 = vpop.f32.mrf.mxu0
        %v2389 = vadd.f32 %v334, %v2388
        %2390 = vmatmul.f32.gmra.mxu0 %v2166
        %v2391 = vpop.f32.mrf.mxu0
        %v2392 = vadd.f32 %v334, %v2391
        %2393 = vmatmul.f32.gmra.mxu0 %v2169
        %v2394 = vpop.f32.mrf.mxu0
        %v2395 = vadd.f32 %v334, %v2394
        %2396 = vmatmul.f32.gmra.mxu0 %v2172
        %v2397 = vpop.f32.mrf.mxu0
        %v2398 = vadd.f32 %v334, %v2397
        %2399 = vmatmul.f32.gmra.mxu0 %v2175
        %v2400 = vpop.f32.mrf.mxu0
        %v2401 = vadd.f32 %v334, %v2400
        %2402 = vmatmul.f32.gmra.mxu0 %v2178
        %v2403 = vpop.f32.mrf.mxu0
        %v2404 = vadd.f32 %v334, %v2403
        %2405 = vmatmul.f32.gmra.mxu0 %v2181
        %v2406 = vpop.f32.mrf.mxu0
        %v2407 = vadd.f32 %v334, %v2406
        %2408 = vmatmul.f32.gmra.mxu0 %v2184
        %v2409 = vpop.f32.mrf.mxu0
        %v2410 = vadd.f32 %v334, %v2409
        %2411 = vmatmul.f32.gmra.mxu0 %v2187
        %v2412 = vpop.f32.mrf.mxu0
        %v2413 = vadd.f32 %v334, %v2412
        %2414 = vmatmul.f32.gmra.mxu0 %v2190
        %v2415 = vpop.f32.mrf.mxu0
        %v2416 = vadd.f32 %v334, %v2415
        %2417 = vmatmul.f32.gmra.mxu0 %v2193
        %v2418 = vpop.f32.mrf.mxu0
        %v2419 = vadd.f32 %v334, %v2418
        %2420 = vmatmul.f32.gmra.mxu0 %v2196
        %v2421 = vpop.f32.mrf.mxu0
        %v2422 = vadd.f32 %v334, %v2421
        %2423 = vmatmul.f32.gmra.mxu0 %v2199
        %v2424 = vpop.f32.mrf.mxu0
        %v2425 = vadd.f32 %v334, %v2424
        %2426 = vmatmul.f32.gmra.mxu0 %v2202
        %v2427 = vpop.f32.mrf.mxu0
        %v2428 = vadd.f32 %v334, %v2427
        %2429 = vmatmul.f32.gmra.mxu0 %v2205
        %v2430 = vpop.f32.mrf.mxu0
        %v2431 = vadd.f32 %v334, %v2430
        %2432 = vmatmul.f32.gmra.mxu0 %v2208
        %v2433 = vpop.f32.mrf.mxu0
        %v2434 = vadd.f32 %v334, %v2433
        %2435 = vmatmul.f32.gmra.mxu0 %v2211
        %v2436 = vpop.f32.mrf.mxu0
        %v2437 = vadd.f32 %v334, %v2436
        %2438 = vmatmul.f32.gmra.mxu0 %v2214
        %v2439 = vpop.f32.mrf.mxu0
        %v2440 = vadd.f32 %v334, %v2439
        %2441 = vmatmul.f32.gmra.mxu0 %v2217
        %v2442 = vpop.f32.mrf.mxu0
        %v2443 = vadd.f32 %v334, %v2442
        %2444 = vmatmul.f32.gmra.mxu0 %v2220
        %v2445 = vpop.f32.mrf.mxu0
        %v2446 = vadd.f32 %v334, %v2445
        %2447 = vmatmul.f32.gmra.mxu0 %v2223
        %v2448 = vpop.f32.mrf.mxu0
        %v2449 = vadd.f32 %v334, %v2448
        %2450 = vmatmul.f32.gmra.mxu0 %v2226
        %v2451 = vpop.f32.mrf.mxu0
        %v2452 = vadd.f32 %v334, %v2451
        %2453 = vmatmul.f32.gmra.mxu0 %v2229
        %v2454 = vpop.f32.mrf.mxu0
        %v2455 = vadd.f32 %v334, %v2454
        %2456 = vmatmul.f32.gmra.mxu0 %v2232
        %v2457 = vpop.f32.mrf.mxu0
        %v2458 = vadd.f32 %v334, %v2457
        %2459 = vmatmul.f32.gmra.mxu0 %v2235
        %v2460 = vpop.f32.mrf.mxu0
        %v2461 = vadd.f32 %v334, %v2460
        %2462 = vmatmul.f32.gmra.mxu0 %v2238
        %v2463 = vpop.f32.mrf.mxu0
        %v2464 = vadd.f32 %v334, %v2463
        %2465 = vmatmul.f32.gmra.mxu0 %v2241
        %v2466 = vpop.f32.mrf.mxu0
        %v2467 = vadd.f32 %v334, %v2466
        %2468 = vmatmul.f32.gmra.mxu0 %v2244
        %v2469 = vpop.f32.mrf.mxu0
        %v2470 = vadd.f32 %v334, %v2469
        %2471 = vmatmul.f32.gmra.mxu0 %v2247
        %v2472 = vpop.f32.mrf.mxu0
        %v2473 = vadd.f32 %v334, %v2472
        %2474 = vmatmul.f32.gmra.mxu0 %v2250
        %v2475 = vpop.f32.mrf.mxu0
        %v2476 = vadd.f32 %v334, %v2475
        %2477 = vdwg.mxu0
        %2478 = vmatpush.msra.mxu0 0.0
        %2479 = vmatpush.msra.mxu0 0.0
        %2480 = vmatpush.msra.mxu0 0.0
        %2481 = vmatpush.msra.mxu0 0.0
        %2482 = vmatpush.msra.mxu0 0.0
        %2483 = vmatpush.msra.mxu0 0.0
        %2484 = vmatpush.msra.mxu0 0.0
        %2485 = vmatpush.msra.mxu0 0.0
        %2486 = vmatpush.msra.mxu0 0.0
        %2487 = vmatpush.msra.mxu0 0.0
        %2488 = vmatpush.msra.mxu0 0.0
        %2489 = vmatpush.msra.mxu0 0.0
        %2490 = vmatpush.msra.mxu0 0.0
        %2491 = vmatpush.msra.mxu0 0.0
        %2492 = vmatpush.msra.mxu0 0.0
        %2493 = vmatpush.msra.mxu0 %v265
        %2494 = vmatmul.f32.gmra.mxu0 %v2157
        %v2495 = vpop.f32.mrf.mxu0
        %v2496 = vadd.f32 %v335, %v2495
        %2497 = vmatmul.f32.gmra.mxu0 %v2160
        %v2498 = vpop.f32.mrf.mxu0
        %v2499 = vadd.f32 %v335, %v2498
        %2500 = vmatmul.f32.gmra.mxu0 %v2163
        %v2501 = vpop.f32.mrf.mxu0
        %v2502 = vadd.f32 %v335, %v2501
        %2503 = vmatmul.f32.gmra.mxu0 %v2166
        %v2504 = vpop.f32.mrf.mxu0
        %v2505 = vadd.f32 %v335, %v2504
        %2506 = vmatmul.f32.gmra.mxu0 %v2169
        %v2507 = vpop.f32.mrf.mxu0
        %v2508 = vadd.f32 %v335, %v2507
        %2509 = vmatmul.f32.gmra.mxu0 %v2172
        %v2510 = vpop.f32.mrf.mxu0
        %v2511 = vadd.f32 %v335, %v2510
        %2512 = vmatmul.f32.gmra.mxu0 %v2175
        %v2513 = vpop.f32.mrf.mxu0
        %v2514 = vadd.f32 %v335, %v2513
        %2515 = vmatmul.f32.gmra.mxu0 %v2178
        %v2516 = vpop.f32.mrf.mxu0
        %v2517 = vadd.f32 %v335, %v2516
        %2518 = vmatmul.f32.gmra.mxu0 %v2181
        %v2519 = vpop.f32.mrf.mxu0
        %v2520 = vadd.f32 %v335, %v2519
        %2521 = vmatmul.f32.gmra.mxu0 %v2184
        %v2522 = vpop.f32.mrf.mxu0
        %v2523 = vadd.f32 %v335, %v2522
        %2524 = vmatmul.f32.gmra.mxu0 %v2187
        %v2525 = vpop.f32.mrf.mxu0
        %v2526 = vadd.f32 %v335, %v2525
        %2527 = vmatmul.f32.gmra.mxu0 %v2190
        %v2528 = vpop.f32.mrf.mxu0
        %v2529 = vadd.f32 %v335, %v2528
        %2530 = vmatmul.f32.gmra.mxu0 %v2193
        %v2531 = vpop.f32.mrf.mxu0
        %v2532 = vadd.f32 %v335, %v2531
        %2533 = vmatmul.f32.gmra.mxu0 %v2196
        %v2534 = vpop.f32.mrf.mxu0
        %v2535 = vadd.f32 %v335, %v2534
        %2536 = vmatmul.f32.gmra.mxu0 %v2199
        %v2537 = vpop.f32.mrf.mxu0
        %v2538 = vadd.f32 %v335, %v2537
        %2539 = vmatmul.f32.gmra.mxu0 %v2202
        %v2540 = vpop.f32.mrf.mxu0
        %v2541 = vadd.f32 %v335, %v2540
        %2542 = vmatmul.f32.gmra.mxu0 %v2205
        %v2543 = vpop.f32.mrf.mxu0
        %v2544 = vadd.f32 %v335, %v2543
        %2545 = vmatmul.f32.gmra.mxu0 %v2208
        %v2546 = vpop.f32.mrf.mxu0
        %v2547 = vadd.f32 %v335, %v2546
        %2548 = vmatmul.f32.gmra.mxu0 %v2211
        %v2549 = vpop.f32.mrf.mxu0
        %v2550 = vadd.f32 %v335, %v2549
        %2551 = vmatmul.f32.gmra.mxu0 %v2214
        %v2552 = vpop.f32.mrf.mxu0
        %v2553 = vadd.f32 %v335, %v2552
        %2554 = vmatmul.f32.gmra.mxu0 %v2217
        %v2555 = vpop.f32.mrf.mxu0
        %v2556 = vadd.f32 %v335, %v2555
        %2557 = vmatmul.f32.gmra.mxu0 %v2220
        %v2558 = vpop.f32.mrf.mxu0
        %v2559 = vadd.f32 %v335, %v2558
        %2560 = vmatmul.f32.gmra.mxu0 %v2223
        %v2561 = vpop.f32.mrf.mxu0
        %v2562 = vadd.f32 %v335, %v2561
        %2563 = vmatmul.f32.gmra.mxu0 %v2226
        %v2564 = vpop.f32.mrf.mxu0
        %v2565 = vadd.f32 %v335, %v2564
        %2566 = vmatmul.f32.gmra.mxu0 %v2229
        %v2567 = vpop.f32.mrf.mxu0
        %v2568 = vadd.f32 %v335, %v2567
        %2569 = vmatmul.f32.gmra.mxu0 %v2232
        %v2570 = vpop.f32.mrf.mxu0
        %v2571 = vadd.f32 %v335, %v2570
        %2572 = vmatmul.f32.gmra.mxu0 %v2235
        %v2573 = vpop.f32.mrf.mxu0
        %v2574 = vadd.f32 %v335, %v2573
        %2575 = vmatmul.f32.gmra.mxu0 %v2238
        %v2576 = vpop.f32.mrf.mxu0
        %v2577 = vadd.f32 %v335, %v2576
        %2578 = vmatmul.f32.gmra.mxu0 %v2241
        %v2579 = vpop.f32.mrf.mxu0
        %v2580 = vadd.f32 %v335, %v2579
        %2581 = vmatmul.f32.gmra.mxu0 %v2244
        %v2582 = vpop.f32.mrf.mxu0
        %v2583 = vadd.f32 %v335, %v2582
        %2584 = vmatmul.f32.gmra.mxu0 %v2247
        %v2585 = vpop.f32.mrf.mxu0
        %v2586 = vadd.f32 %v335, %v2585
        %2587 = vmatmul.f32.gmra.mxu0 %v2250
        %v2588 = vpop.f32.mrf.mxu0
        %v2589 = vadd.f32 %v335, %v2588
        %2590 = vdwg.mxu0
        %2591 = vmatpush.msra.mxu0 0.0
        %2592 = vmatpush.msra.mxu0 0.0
        %2593 = vmatpush.msra.mxu0 0.0
        %2594 = vmatpush.msra.mxu0 0.0
        %2595 = vmatpush.msra.mxu0 0.0
        %2596 = vmatpush.msra.mxu0 0.0
        %2597 = vmatpush.msra.mxu0 0.0
        %2598 = vmatpush.msra.mxu0 0.0
        %2599 = vmatpush.msra.mxu0 0.0
        %2600 = vmatpush.msra.mxu0 0.0
        %2601 = vmatpush.msra.mxu0 0.0
        %2602 = vmatpush.msra.mxu0 0.0
        %2603 = vmatpush.msra.mxu0 0.0
        %2604 = vmatpush.msra.mxu0 0.0
        %2605 = vmatpush.msra.mxu0 0.0
        %2606 = vmatpush.msra.mxu0 %v266
        %2607 = vmatmul.f32.gmra.mxu0 %v2157
        %v2608 = vpop.f32.mrf.mxu0
        %v2609 = vadd.f32 %v336, %v2608
        %2610 = vmatmul.f32.gmra.mxu0 %v2160
        %v2611 = vpop.f32.mrf.mxu0
        %v2612 = vadd.f32 %v336, %v2611
        %2613 = vmatmul.f32.gmra.mxu0 %v2163
        %v2614 = vpop.f32.mrf.mxu0
        %v2615 = vadd.f32 %v336, %v2614
        %2616 = vmatmul.f32.gmra.mxu0 %v2166
        %v2617 = vpop.f32.mrf.mxu0
        %v2618 = vadd.f32 %v336, %v2617
        %2619 = vmatmul.f32.gmra.mxu0 %v2169
        %v2620 = vpop.f32.mrf.mxu0
        %v2621 = vadd.f32 %v336, %v2620
        %2622 = vmatmul.f32.gmra.mxu0 %v2172
        %v2623 = vpop.f32.mrf.mxu0
        %v2624 = vadd.f32 %v336, %v2623
        %2625 = vmatmul.f32.gmra.mxu0 %v2175
        %v2626 = vpop.f32.mrf.mxu0
        %v2627 = vadd.f32 %v336, %v2626
        %2628 = vmatmul.f32.gmra.mxu0 %v2178
        %v2629 = vpop.f32.mrf.mxu0
        %v2630 = vadd.f32 %v336, %v2629
        %2631 = vmatmul.f32.gmra.mxu0 %v2181
        %v2632 = vpop.f32.mrf.mxu0
        %v2633 = vadd.f32 %v336, %v2632
        %2634 = vmatmul.f32.gmra.mxu0 %v2184
        %v2635 = vpop.f32.mrf.mxu0
        %v2636 = vadd.f32 %v336, %v2635
        %2637 = vmatmul.f32.gmra.mxu0 %v2187
        %v2638 = vpop.f32.mrf.mxu0
        %v2639 = vadd.f32 %v336, %v2638
        %2640 = vmatmul.f32.gmra.mxu0 %v2190
        %v2641 = vpop.f32.mrf.mxu0
        %v2642 = vadd.f32 %v336, %v2641
        %2643 = vmatmul.f32.gmra.mxu0 %v2193
        %v2644 = vpop.f32.mrf.mxu0
        %v2645 = vadd.f32 %v336, %v2644
        %2646 = vmatmul.f32.gmra.mxu0 %v2196
        %v2647 = vpop.f32.mrf.mxu0
        %v2648 = vadd.f32 %v336, %v2647
        %2649 = vmatmul.f32.gmra.mxu0 %v2199
        %v2650 = vpop.f32.mrf.mxu0
        %v2651 = vadd.f32 %v336, %v2650
        %2652 = vmatmul.f32.gmra.mxu0 %v2202
        %v2653 = vpop.f32.mrf.mxu0
        %v2654 = vadd.f32 %v336, %v2653
        %2655 = vmatmul.f32.gmra.mxu0 %v2205
        %v2656 = vpop.f32.mrf.mxu0
        %v2657 = vadd.f32 %v336, %v2656
        %2658 = vmatmul.f32.gmra.mxu0 %v2208
        %v2659 = vpop.f32.mrf.mxu0
        %v2660 = vadd.f32 %v336, %v2659
        %2661 = vmatmul.f32.gmra.mxu0 %v2211
        %v2662 = vpop.f32.mrf.mxu0
        %v2663 = vadd.f32 %v336, %v2662
        %2664 = vmatmul.f32.gmra.mxu0 %v2214
        %v2665 = vpop.f32.mrf.mxu0
        %v2666 = vadd.f32 %v336, %v2665
        %2667 = vmatmul.f32.gmra.mxu0 %v2217
        %v2668 = vpop.f32.mrf.mxu0
        %v2669 = vadd.f32 %v336, %v2668
        %2670 = vmatmul.f32.gmra.mxu0 %v2220
        %v2671 = vpop.f32.mrf.mxu0
        %v2672 = vadd.f32 %v336, %v2671
        %2673 = vmatmul.f32.gmra.mxu0 %v2223
        %v2674 = vpop.f32.mrf.mxu0
        %v2675 = vadd.f32 %v336, %v2674
        %2676 = vmatmul.f32.gmra.mxu0 %v2226
        %v2677 = vpop.f32.mrf.mxu0
        %v2678 = vadd.f32 %v336, %v2677
        %2679 = vmatmul.f32.gmra.mxu0 %v2229
        %v2680 = vpop.f32.mrf.mxu0
        %v2681 = vadd.f32 %v336, %v2680
        %2682 = vmatmul.f32.gmra.mxu0 %v2232
        %v2683 = vpop.f32.mrf.mxu0
        %v2684 = vadd.f32 %v336, %v2683
        %2685 = vmatmul.f32.gmra.mxu0 %v2235
        %v2686 = vpop.f32.mrf.mxu0
        %v2687 = vadd.f32 %v336, %v2686
        %2688 = vmatmul.f32.gmra.mxu0 %v2238
        %v2689 = vpop.f32.mrf.mxu0
        %v2690 = vadd.f32 %v336, %v2689
        %2691 = vmatmul.f32.gmra.mxu0 %v2241
        %v2692 = vpop.f32.mrf.mxu0
        %v2693 = vadd.f32 %v336, %v2692
        %2694 = vmatmul.f32.gmra.mxu0 %v2244
        %v2695 = vpop.f32.mrf.mxu0
        %v2696 = vadd.f32 %v336, %v2695
        %2697 = vmatmul.f32.gmra.mxu0 %v2247
        %v2698 = vpop.f32.mrf.mxu0
        %v2699 = vadd.f32 %v336, %v2698
        %2700 = vmatmul.f32.gmra.mxu0 %v2250
        %v2701 = vpop.f32.mrf.mxu0
        %v2702 = vadd.f32 %v336, %v2701
        %2703 = vdwg.mxu0
        %v2704 = vmax.f32 %v2270, 0.0
        %v2705 = vmax.f32 %v2383, 0.0
        %v2706 = vmax.f32 %v2496, 0.0
        %v2707 = vmax.f32 %v2609, 0.0
        %v2708 = vmax.f32 %v2273, 0.0
        %v2709 = vmax.f32 %v2386, 0.0
        %v2710 = vmax.f32 %v2499, 0.0
        %v2711 = vmax.f32 %v2612, 0.0
        %v2712 = vmax.f32 %v2276, 0.0
        %v2713 = vmax.f32 %v2389, 0.0
        %v2714 = vmax.f32 %v2502, 0.0
        %v2715 = vmax.f32 %v2615, 0.0
        %v2716 = vmax.f32 %v2279, 0.0
        %v2717 = vmax.f32 %v2392, 0.0
        %v2718 = vmax.f32 %v2505, 0.0
        %v2719 = vmax.f32 %v2618, 0.0
        %v2720 = vmax.f32 %v2282, 0.0
        %v2721 = vmax.f32 %v2395, 0.0
        %v2722 = vmax.f32 %v2508, 0.0
        %v2723 = vmax.f32 %v2621, 0.0
        %v2724 = vmax.f32 %v2285, 0.0
        %v2725 = vmax.f32 %v2398, 0.0
        %v2726 = vmax.f32 %v2511, 0.0
        %v2727 = vmax.f32 %v2624, 0.0
        %v2728 = vmax.f32 %v2288, 0.0
        %v2729 = vmax.f32 %v2401, 0.0
        %v2730 = vmax.f32 %v2514, 0.0
        %v2731 = vmax.f32 %v2627, 0.0
        %v2732 = vmax.f32 %v2291, 0.0
        %v2733 = vmax.f32 %v2404, 0.0
        %v2734 = vmax.f32 %v2517, 0.0
        %v2735 = vmax.f32 %v2630, 0.0
        %v2736 = vmax.f32 %v2294, 0.0
        %v2737 = vmax.f32 %v2407, 0.0
        %v2738 = vmax.f32 %v2520, 0.0
        %v2739 = vmax.f32 %v2633, 0.0
        %v2740 = vmax.f32 %v2297, 0.0
        %v2741 = vmax.f32 %v2410, 0.0
        %v2742 = vmax.f32 %v2523, 0.0
        %v2743 = vmax.f32 %v2636, 0.0
        %v2744 = vmax.f32 %v2300, 0.0
        %v2745 = vmax.f32 %v2413, 0.0
        %v2746 = vmax.f32 %v2526, 0.0
        %v2747 = vmax.f32 %v2639, 0.0
        %v2748 = vmax.f32 %v2303, 0.0
        %v2749 = vmax.f32 %v2416, 0.0
        %v2750 = vmax.f32 %v2529, 0.0
        %v2751 = vmax.f32 %v2642, 0.0
        %v2752 = vmax.f32 %v2306, 0.0
        %v2753 = vmax.f32 %v2419, 0.0
        %v2754 = vmax.f32 %v2532, 0.0
        %v2755 = vmax.f32 %v2645, 0.0
        %v2756 = vmax.f32 %v2309, 0.0
        %v2757 = vmax.f32 %v2422, 0.0
        %v2758 = vmax.f32 %v2535, 0.0
        %v2759 = vmax.f32 %v2648, 0.0
        %v2760 = vmax.f32 %v2312, 0.0
        %v2761 = vmax.f32 %v2425, 0.0
        %v2762 = vmax.f32 %v2538, 0.0
        %v2763 = vmax.f32 %v2651, 0.0
        %v2764 = vmax.f32 %v2315, 0.0
        %v2765 = vmax.f32 %v2428, 0.0
        %v2766 = vmax.f32 %v2541, 0.0
        %v2767 = vmax.f32 %v2654, 0.0
        %v2768 = vmax.f32 %v2318, 0.0
        %v2769 = vmax.f32 %v2431, 0.0
        %v2770 = vmax.f32 %v2544, 0.0
        %v2771 = vmax.f32 %v2657, 0.0
        %v2772 = vmax.f32 %v2321, 0.0
        %v2773 = vmax.f32 %v2434, 0.0
        %v2774 = vmax.f32 %v2547, 0.0
        %v2775 = vmax.f32 %v2660, 0.0
        %v2776 = vmax.f32 %v2324, 0.0
        %v2777 = vmax.f32 %v2437, 0.0
        %v2778 = vmax.f32 %v2550, 0.0
        %v2779 = vmax.f32 %v2663, 0.0
        %v2780 = vmax.f32 %v2327, 0.0
        %v2781 = vmax.f32 %v2440, 0.0
        %v2782 = vmax.f32 %v2553, 0.0
        %v2783 = vmax.f32 %v2666, 0.0
        %v2784 = vmax.f32 %v2330, 0.0
        %v2785 = vmax.f32 %v2443, 0.0
        %v2786 = vmax.f32 %v2556, 0.0
        %v2787 = vmax.f32 %v2669, 0.0
        %v2788 = vmax.f32 %v2333, 0.0
        %v2789 = vmax.f32 %v2446, 0.0
        %v2790 = vmax.f32 %v2559, 0.0
        %v2791 = vmax.f32 %v2672, 0.0
        %v2792 = vmax.f32 %v2336, 0.0
        %v2793 = vmax.f32 %v2449, 0.0
        %v2794 = vmax.f32 %v2562, 0.0
        %v2795 = vmax.f32 %v2675, 0.0
        %v2796 = vmax.f32 %v2339, 0.0
        %v2797 = vmax.f32 %v2452, 0.0
        %v2798 = vmax.f32 %v2565, 0.0
        %v2799 = vmax.f32 %v2678, 0.0
        %v2800 = vmax.f32 %v2342, 0.0
        %v2801 = vmax.f32 %v2455, 0.0
        %v2802 = vmax.f32 %v2568, 0.0
        %v2803 = vmax.f32 %v2681, 0.0
        %v2804 = vmax.f32 %v2345, 0.0
        %v2805 = vmax.f32 %v2458, 0.0
        %v2806 = vmax.f32 %v2571, 0.0
        %v2807 = vmax.f32 %v2684, 0.0
        %v2808 = vmax.f32 %v2348, 0.0
        %v2809 = vmax.f32 %v2461, 0.0
        %v2810 = vmax.f32 %v2574, 0.0
        %v2811 = vmax.f32 %v2687, 0.0
        %v2812 = vmax.f32 %v2351, 0.0
        %v2813 = vmax.f32 %v2464, 0.0
        %v2814 = vmax.f32 %v2577, 0.0
        %v2815 = vmax.f32 %v2690, 0.0
        %v2816 = vmax.f32 %v2354, 0.0
        %v2817 = vmax.f32 %v2467, 0.0
        %v2818 = vmax.f32 %v2580, 0.0
        %v2819 = vmax.f32 %v2693, 0.0
        %v2820 = vmax.f32 %v2357, 0.0
        %v2821 = vmax.f32 %v2470, 0.0
        %v2822 = vmax.f32 %v2583, 0.0
        %v2823 = vmax.f32 %v2696, 0.0
        %v2824 = vmax.f32 %v2360, 0.0
        %v2825 = vmax.f32 %v2473, 0.0
        %v2826 = vmax.f32 %v2586, 0.0
        %v2827 = vmax.f32 %v2699, 0.0
        %v2828 = vmax.f32 %v2363, 0.0
        %v2829 = vmax.f32 %v2476, 0.0
        %v2830 = vmax.f32 %v2589, 0.0
        %v2831 = vmax.f32 %v2702, 0.0
        %s2832 = scalar_lea.vmem %s236, 2 [#allocation8]
        %v2833 = vld [vmem:[%s2832] ss:$8 sm:$0xf]
        %v2834 = vadd.f32 %v2704, %v2708
        %v2835 = vadd.f32 %v2834, %v2712
        %v2836 = vadd.f32 %v2835, %v2716
        %v2837 = vadd.f32 %v2836, %v2720
        %v2838 = vadd.f32 %v2837, %v2724
        %v2839 = vadd.f32 %v2838, %v2728
        %v2840 = vadd.f32 %v2839, %v2732
        %v2841 = vadd.f32 %v2840, %v2736
        %v2842 = vadd.f32 %v2841, %v2740
        %v2843 = vadd.f32 %v2842, %v2744
        %v2844 = vadd.f32 %v2843, %v2748
        %v2845 = vadd.f32 %v2844, %v2752
        %v2846 = vadd.f32 %v2845, %v2756
        %v2847 = vadd.f32 %v2846, %v2760
        %v2848 = vadd.f32 %v2847, %v2764
        %v2849 = vadd.f32 %v2848, %v2768
        %v2850 = vadd.f32 %v2849, %v2772
        %v2851 = vadd.f32 %v2850, %v2776
        %v2852 = vadd.f32 %v2851, %v2780
        %v2853 = vadd.f32 %v2852, %v2784
        %v2854 = vadd.f32 %v2853, %v2788
        %v2855 = vadd.f32 %v2854, %v2792
        %v2856 = vadd.f32 %v2855, %v2796
        %v2857 = vadd.f32 %v2856, %v2800
        %v2858 = vadd.f32 %v2857, %v2804
        %v2859 = vadd.f32 %v2858, %v2808
        %v2860 = vadd.f32 %v2859, %v2812
        %v2861 = vadd.f32 %v2860, %v2816
        %v2862 = vadd.f32 %v2861, %v2820
        %v2863 = vadd.f32 %v2862, %v2824
        %v2864 = vadd.f32 %v2863, %v2828
        %v2865 = vrot.slane %v2864, 4
        %v2866 = vadd.f32 %v2864, %v2865
        %v2867 = vrot.slane %v2866, 2
        %v2868 = vadd.f32 %v2866, %v2867
        %v2869 = vrot.slane %v2868, 1
        %v2870 = vadd.f32 %v2868, %v2869
        %v2871 = vadd.f32 %v2705, %v2709
        %v2872 = vadd.f32 %v2871, %v2713
        %v2873 = vadd.f32 %v2872, %v2717
        %v2874 = vadd.f32 %v2873, %v2721
        %v2875 = vadd.f32 %v2874, %v2725
        %v2876 = vadd.f32 %v2875, %v2729
        %v2877 = vadd.f32 %v2876, %v2733
        %v2878 = vadd.f32 %v2877, %v2737
        %v2879 = vadd.f32 %v2878, %v2741
        %v2880 = vadd.f32 %v2879, %v2745
        %v2881 = vadd.f32 %v2880, %v2749
        %v2882 = vadd.f32 %v2881, %v2753
        %v2883 = vadd.f32 %v2882, %v2757
        %v2884 = vadd.f32 %v2883, %v2761
        %v2885 = vadd.f32 %v2884, %v2765
        %v2886 = vadd.f32 %v2885, %v2769
        %v2887 = vadd.f32 %v2886, %v2773
        %v2888 = vadd.f32 %v2887, %v2777
        %v2889 = vadd.f32 %v2888, %v2781
        %v2890 = vadd.f32 %v2889, %v2785
        %v2891 = vadd.f32 %v2890, %v2789
        %v2892 = vadd.f32 %v2891, %v2793
        %v2893 = vadd.f32 %v2892, %v2797
        %v2894 = vadd.f32 %v2893, %v2801
        %v2895 = vadd.f32 %v2894, %v2805
        %v2896 = vadd.f32 %v2895, %v2809
        %v2897 = vadd.f32 %v2896, %v2813
        %v2898 = vadd.f32 %v2897, %v2817
        %v2899 = vadd.f32 %v2898, %v2821
        %v2900 = vadd.f32 %v2899, %v2825
        %v2901 = vadd.f32 %v2900, %v2829
        %v2902 = vrot.slane %v2901, 4
        %v2903 = vadd.f32 %v2901, %v2902
        %v2904 = vrot.slane %v2903, 2
        %v2905 = vadd.f32 %v2903, %v2904
        %v2906 = vrot.slane %v2905, 1
        %v2907 = vadd.f32 %v2905, %v2906
        %v2908 = vadd.f32 %v2706, %v2710
        %v2909 = vadd.f32 %v2908, %v2714
        %v2910 = vadd.f32 %v2909, %v2718
        %v2911 = vadd.f32 %v2910, %v2722
        %v2912 = vadd.f32 %v2911, %v2726
        %v2913 = vadd.f32 %v2912, %v2730
        %v2914 = vadd.f32 %v2913, %v2734
        %v2915 = vadd.f32 %v2914, %v2738
        %v2916 = vadd.f32 %v2915, %v2742
        %v2917 = vadd.f32 %v2916, %v2746
        %v2918 = vadd.f32 %v2917, %v2750
        %v2919 = vadd.f32 %v2918, %v2754
        %v2920 = vadd.f32 %v2919, %v2758
        %v2921 = vadd.f32 %v2920, %v2762
        %v2922 = vadd.f32 %v2921, %v2766
        %v2923 = vadd.f32 %v2922, %v2770
        %v2924 = vadd.f32 %v2923, %v2774
        %v2925 = vadd.f32 %v2924, %v2778
        %v2926 = vadd.f32 %v2925, %v2782
        %v2927 = vadd.f32 %v2926, %v2786
        %v2928 = vadd.f32 %v2927, %v2790
        %v2929 = vadd.f32 %v2928, %v2794
        %v2930 = vadd.f32 %v2929, %v2798
        %v2931 = vadd.f32 %v2930, %v2802
        %v2932 = vadd.f32 %v2931, %v2806
        %v2933 = vadd.f32 %v2932, %v2810
        %v2934 = vadd.f32 %v2933, %v2814
        %v2935 = vadd.f32 %v2934, %v2818
        %v2936 = vadd.f32 %v2935, %v2822
        %v2937 = vadd.f32 %v2936, %v2826
        %v2938 = vadd.f32 %v2937, %v2830
        %v2939 = vrot.slane %v2938, 4
        %v2940 = vadd.f32 %v2938, %v2939
        %v2941 = vrot.slane %v2940, 2
        %v2942 = vadd.f32 %v2940, %v2941
        %v2943 = vrot.slane %v2942, 1
        %v2944 = vadd.f32 %v2942, %v2943
        %v2945 = vadd.f32 %v2707, %v2711
        %v2946 = vadd.f32 %v2945, %v2715
        %v2947 = vadd.f32 %v2946, %v2719
        %v2948 = vadd.f32 %v2947, %v2723
        %v2949 = vadd.f32 %v2948, %v2727
        %v2950 = vadd.f32 %v2949, %v2731
        %v2951 = vadd.f32 %v2950, %v2735
        %v2952 = vadd.f32 %v2951, %v2739
        %v2953 = vadd.f32 %v2952, %v2743
        %v2954 = vadd.f32 %v2953, %v2747
        %v2955 = vadd.f32 %v2954, %v2751
        %v2956 = vadd.f32 %v2955, %v2755
        %v2957 = vadd.f32 %v2956, %v2759
        %v2958 = vadd.f32 %v2957, %v2763
        %v2959 = vadd.f32 %v2958, %v2767
        %v2960 = vadd.f32 %v2959, %v2771
        %v2961 = vadd.f32 %v2960, %v2775
        %v2962 = vadd.f32 %v2961, %v2779
        %v2963 = vadd.f32 %v2962, %v2783
        %v2964 = vadd.f32 %v2963, %v2787
        %v2965 = vadd.f32 %v2964, %v2791
        %v2966 = vadd.f32 %v2965, %v2795
        %v2967 = vadd.f32 %v2966, %v2799
        %v2968 = vadd.f32 %v2967, %v2803
        %v2969 = vadd.f32 %v2968, %v2807
        %v2970 = vadd.f32 %v2969, %v2811
        %v2971 = vadd.f32 %v2970, %v2815
        %v2972 = vadd.f32 %v2971, %v2819
        %v2973 = vadd.f32 %v2972, %v2823
        %v2974 = vadd.f32 %v2973, %v2827
        %v2975 = vadd.f32 %v2974, %v2831
        %v2976 = vrot.slane %v2975, 4
        %v2977 = vadd.f32 %v2975, %v2976
        %v2978 = vrot.slane %v2977, 2
        %v2979 = vadd.f32 %v2977, %v2978
        %v2980 = vrot.slane %v2979, 1
        %v2981 = vadd.f32 %v2979, %v2980
        %v2986 = vrot.slane %v2907, 7
        %v2987 = vrot.slane %v2944, 6
        %v2988 = vrot.slane %v2981, 5
        %v2989 = vsel %vm1174, %v2870, %v2986
        %v2990 = vsel %vm1176, %v2987, %v2988
        %v2991 = vsel %vm1178, %v2989, %v2990
        %v2993 = vadd.f32 %v2833, %v2991
        %2994 = vst.msk [vmem:[%s2832] ss:$8 sm:$0xf] %vm1185, %v2993
        %2995 = vst.msk [vmem:[%s2832] ss:$8 sm:$0x0] %vm1185, %v2993
        %2996 = vxpose.xlu0.b32.start [1/16] %v253, 128
        %2997 = vxpose.xlu0.b32.cont [2/16] 0.0, 128
        %2998 = vxpose.xlu0.b32.cont [3/16] 0.0, 128
        %2999 = vxpose.xlu0.b32.cont [4/16] 0.0, 128
        %3000 = vxpose.xlu0.b32.cont [5/16] 0.0, 128
        %3001 = vxpose.xlu0.b32.cont [6/16] 0.0, 128
        %3002 = vxpose.xlu0.b32.cont [7/16] 0.0, 128
        %3003 = vxpose.xlu0.b32.cont [8/16] 0.0, 128
        %3004 = vxpose.xlu0.b32.cont [9/16] 0.0, 128
        %3005 = vxpose.xlu0.b32.cont [10/16] 0.0, 128
        %3006 = vxpose.xlu0.b32.cont [11/16] 0.0, 128
        %3007 = vxpose.xlu0.b32.cont [12/16] 0.0, 128
        %3008 = vxpose.xlu0.b32.cont [13/16] 0.0, 128
        %3009 = vxpose.xlu0.b32.cont [14/16] 0.0, 128
        %3010 = vxpose.xlu0.b32.cont [15/16] 0.0, 128
        %3011 = vxpose.xlu0.b32.end [16/16] 0.0, 128
        %v3012 = vpop.trf.xlu0
        %v3013 = vpop.trf.xlu0
        %v3014 = vpop.trf.xlu0
        %v3015 = vpop.trf.xlu0
        %v3016 = vpop.trf.xlu0
        %v3017 = vpop.trf.xlu0
        %v3018 = vpop.trf.xlu0
        %v3019 = vpop.trf.xlu0
        %v3020 = vpop.trf.xlu0
        %v3021 = vpop.trf.xlu0
        %v3022 = vpop.trf.xlu0
        %v3023 = vpop.trf.xlu0
        %v3024 = vpop.trf.xlu0
        %v3025 = vpop.trf.xlu0
        %v3026 = vpop.trf.xlu0
        %v3027 = vpop.trf.xlu0
        %3028 = vxpose.xlu0.b32.start [1/16] %v254, 128
        %3029 = vxpose.xlu0.b32.cont [2/16] 0.0, 128
        %3030 = vxpose.xlu0.b32.cont [3/16] 0.0, 128
        %3031 = vxpose.xlu0.b32.cont [4/16] 0.0, 128
        %3032 = vxpose.xlu0.b32.cont [5/16] 0.0, 128
        %3033 = vxpose.xlu0.b32.cont [6/16] 0.0, 128
        %3034 = vxpose.xlu0.b32.cont [7/16] 0.0, 128
        %3035 = vxpose.xlu0.b32.cont [8/16] 0.0, 128
        %3036 = vxpose.xlu0.b32.cont [9/16] 0.0, 128
        %3037 = vxpose.xlu0.b32.cont [10/16] 0.0, 128
        %3038 = vxpose.xlu0.b32.cont [11/16] 0.0, 128
        %3039 = vxpose.xlu0.b32.cont [12/16] 0.0, 128
        %3040 = vxpose.xlu0.b32.cont [13/16] 0.0, 128
        %3041 = vxpose.xlu0.b32.cont [14/16] 0.0, 128
        %3042 = vxpose.xlu0.b32.cont [15/16] 0.0, 128
        %3043 = vxpose.xlu0.b32.end [16/16] 0.0, 128
        %v3044 = vpop.trf.xlu0
        %v3045 = vpop.trf.xlu0
        %v3046 = vpop.trf.xlu0
        %v3047 = vpop.trf.xlu0
        %v3048 = vpop.trf.xlu0
        %v3049 = vpop.trf.xlu0
        %v3050 = vpop.trf.xlu0
        %v3051 = vpop.trf.xlu0
        %v3052 = vpop.trf.xlu0
        %v3053 = vpop.trf.xlu0
        %v3054 = vpop.trf.xlu0
        %v3055 = vpop.trf.xlu0
        %v3056 = vpop.trf.xlu0
        %v3057 = vpop.trf.xlu0
        %v3058 = vpop.trf.xlu0
        %v3059 = vpop.trf.xlu0
        %v3061 = vsel %vm341, %v3012, 0
        %v3064 = vsel %vm341, %v3013, 0
        %v3067 = vsel %vm341, %v3014, 0
        %v3070 = vsel %vm341, %v3015, 0
        %v3073 = vsel %vm341, %v3016, 0
        %v3076 = vsel %vm341, %v3017, 0
        %v3079 = vsel %vm341, %v3018, 0
        %v3082 = vsel %vm341, %v3019, 0
        %v3085 = vsel %vm341, %v3020, 0
        %v3088 = vsel %vm341, %v3021, 0
        %v3091 = vsel %vm341, %v3022, 0
        %v3094 = vsel %vm341, %v3023, 0
        %v3097 = vsel %vm341, %v3024, 0
        %v3100 = vsel %vm341, %v3025, 0
        %v3103 = vsel %vm341, %v3026, 0
        %v3106 = vsel %vm341, %v3027, 0
        %v3109 = vsel %vm341, %v3044, 0
        %v3112 = vsel %vm341, %v3045, 0
        %v3115 = vsel %vm341, %v3046, 0
        %v3118 = vsel %vm341, %v3047, 0
        %v3121 = vsel %vm341, %v3048, 0
        %v3124 = vsel %vm341, %v3049, 0
        %v3127 = vsel %vm341, %v3050, 0
        %v3130 = vsel %vm341, %v3051, 0
        %v3133 = vsel %vm341, %v3052, 0
        %v3136 = vsel %vm341, %v3053, 0
        %v3139 = vsel %vm341, %v3054, 0
        %v3142 = vsel %vm341, %v3055, 0
        %v3145 = vsel %vm341, %v3056, 0
        %v3148 = vsel %vm341, %v3057, 0
        %v3151 = vsel %vm341, %v3058, 0
        %v3154 = vsel %vm341, %v3059, 0
        %3156 = vmatpush.msra.mxu0 0.0
        %3157 = vmatpush.msra.mxu0 0.0
        %3158 = vmatpush.msra.mxu0 0.0
        %3159 = vmatpush.msra.mxu0 0.0
        %3160 = vmatpush.msra.mxu0 0.0
        %3161 = vmatpush.msra.mxu0 0.0
        %3162 = vmatpush.msra.mxu0 0.0
        %3163 = vmatpush.msra.mxu0 0.0
        %3164 = vmatpush.msra.mxu0 0.0
        %3165 = vmatpush.msra.mxu0 0.0
        %3166 = vmatpush.msra.mxu0 0.0
        %3167 = vmatpush.msra.mxu0 0.0
        %3168 = vmatpush.msra.mxu0 0.0
        %3169 = vmatpush.msra.mxu0 0.0
        %3170 = vmatpush.msra.mxu0 0.0
        %3171 = vmatpush.msra.mxu0 %v263
        %3172 = vmatmul.f32.gmra.mxu0 %v3061
        %v3173 = vpop.f32.mrf.mxu0
        %v3174 = vadd.f32 %v333, %v3173
        %3175 = vmatmul.f32.gmra.mxu0 %v3064
        %v3176 = vpop.f32.mrf.mxu0
        %v3177 = vadd.f32 %v333, %v3176
        %3178 = vmatmul.f32.gmra.mxu0 %v3067
        %v3179 = vpop.f32.mrf.mxu0
        %v3180 = vadd.f32 %v333, %v3179
        %3181 = vmatmul.f32.gmra.mxu0 %v3070
        %v3182 = vpop.f32.mrf.mxu0
        %v3183 = vadd.f32 %v333, %v3182
        %3184 = vmatmul.f32.gmra.mxu0 %v3073
        %v3185 = vpop.f32.mrf.mxu0
        %v3186 = vadd.f32 %v333, %v3185
        %3187 = vmatmul.f32.gmra.mxu0 %v3076
        %v3188 = vpop.f32.mrf.mxu0
        %v3189 = vadd.f32 %v333, %v3188
        %3190 = vmatmul.f32.gmra.mxu0 %v3079
        %v3191 = vpop.f32.mrf.mxu0
        %v3192 = vadd.f32 %v333, %v3191
        %3193 = vmatmul.f32.gmra.mxu0 %v3082
        %v3194 = vpop.f32.mrf.mxu0
        %v3195 = vadd.f32 %v333, %v3194
        %3196 = vmatmul.f32.gmra.mxu0 %v3085
        %v3197 = vpop.f32.mrf.mxu0
        %v3198 = vadd.f32 %v333, %v3197
        %3199 = vmatmul.f32.gmra.mxu0 %v3088
        %v3200 = vpop.f32.mrf.mxu0
        %v3201 = vadd.f32 %v333, %v3200
        %3202 = vmatmul.f32.gmra.mxu0 %v3091
        %v3203 = vpop.f32.mrf.mxu0
        %v3204 = vadd.f32 %v333, %v3203
        %3205 = vmatmul.f32.gmra.mxu0 %v3094
        %v3206 = vpop.f32.mrf.mxu0
        %v3207 = vadd.f32 %v333, %v3206
        %3208 = vmatmul.f32.gmra.mxu0 %v3097
        %v3209 = vpop.f32.mrf.mxu0
        %v3210 = vadd.f32 %v333, %v3209
        %3211 = vmatmul.f32.gmra.mxu0 %v3100
        %v3212 = vpop.f32.mrf.mxu0
        %v3213 = vadd.f32 %v333, %v3212
        %3214 = vmatmul.f32.gmra.mxu0 %v3103
        %v3215 = vpop.f32.mrf.mxu0
        %v3216 = vadd.f32 %v333, %v3215
        %3217 = vmatmul.f32.gmra.mxu0 %v3106
        %v3218 = vpop.f32.mrf.mxu0
        %v3219 = vadd.f32 %v333, %v3218
        %3220 = vmatmul.f32.gmra.mxu0 %v3109
        %v3221 = vpop.f32.mrf.mxu0
        %v3222 = vadd.f32 %v333, %v3221
        %3223 = vmatmul.f32.gmra.mxu0 %v3112
        %v3224 = vpop.f32.mrf.mxu0
        %v3225 = vadd.f32 %v333, %v3224
        %3226 = vmatmul.f32.gmra.mxu0 %v3115
        %v3227 = vpop.f32.mrf.mxu0
        %v3228 = vadd.f32 %v333, %v3227
        %3229 = vmatmul.f32.gmra.mxu0 %v3118
        %v3230 = vpop.f32.mrf.mxu0
        %v3231 = vadd.f32 %v333, %v3230
        %3232 = vmatmul.f32.gmra.mxu0 %v3121
        %v3233 = vpop.f32.mrf.mxu0
        %v3234 = vadd.f32 %v333, %v3233
        %3235 = vmatmul.f32.gmra.mxu0 %v3124
        %v3236 = vpop.f32.mrf.mxu0
        %v3237 = vadd.f32 %v333, %v3236
        %3238 = vmatmul.f32.gmra.mxu0 %v3127
        %v3239 = vpop.f32.mrf.mxu0
        %v3240 = vadd.f32 %v333, %v3239
        %3241 = vmatmul.f32.gmra.mxu0 %v3130
        %v3242 = vpop.f32.mrf.mxu0
        %v3243 = vadd.f32 %v333, %v3242
        %3244 = vmatmul.f32.gmra.mxu0 %v3133
        %v3245 = vpop.f32.mrf.mxu0
        %v3246 = vadd.f32 %v333, %v3245
        %3247 = vmatmul.f32.gmra.mxu0 %v3136
        %v3248 = vpop.f32.mrf.mxu0
        %v3249 = vadd.f32 %v333, %v3248
        %3250 = vmatmul.f32.gmra.mxu0 %v3139
        %v3251 = vpop.f32.mrf.mxu0
        %v3252 = vadd.f32 %v333, %v3251
        %3253 = vmatmul.f32.gmra.mxu0 %v3142
        %v3254 = vpop.f32.mrf.mxu0
        %v3255 = vadd.f32 %v333, %v3254
        %3256 = vmatmul.f32.gmra.mxu0 %v3145
        %v3257 = vpop.f32.mrf.mxu0
        %v3258 = vadd.f32 %v333, %v3257
        %3259 = vmatmul.f32.gmra.mxu0 %v3148
        %v3260 = vpop.f32.mrf.mxu0
        %v3261 = vadd.f32 %v333, %v3260
        %3262 = vmatmul.f32.gmra.mxu0 %v3151
        %v3263 = vpop.f32.mrf.mxu0
        %v3264 = vadd.f32 %v333, %v3263
        %3265 = vmatmul.f32.gmra.mxu0 %v3154
        %v3266 = vpop.f32.mrf.mxu0
        %v3267 = vadd.f32 %v333, %v3266
        %3268 = vdwg.mxu0
        %3269 = vmatpush.msra.mxu0 0.0
        %3270 = vmatpush.msra.mxu0 0.0
        %3271 = vmatpush.msra.mxu0 0.0
        %3272 = vmatpush.msra.mxu0 0.0
        %3273 = vmatpush.msra.mxu0 0.0
        %3274 = vmatpush.msra.mxu0 0.0
        %3275 = vmatpush.msra.mxu0 0.0
        %3276 = vmatpush.msra.mxu0 0.0
        %3277 = vmatpush.msra.mxu0 0.0
        %3278 = vmatpush.msra.mxu0 0.0
        %3279 = vmatpush.msra.mxu0 0.0
        %3280 = vmatpush.msra.mxu0 0.0
        %3281 = vmatpush.msra.mxu0 0.0
        %3282 = vmatpush.msra.mxu0 0.0
        %3283 = vmatpush.msra.mxu0 0.0
        %3284 = vmatpush.msra.mxu0 %v264
        %3285 = vmatmul.f32.gmra.mxu0 %v3061
        %v3286 = vpop.f32.mrf.mxu0
        %v3287 = vadd.f32 %v334, %v3286
        %3288 = vmatmul.f32.gmra.mxu0 %v3064
        %v3289 = vpop.f32.mrf.mxu0
        %v3290 = vadd.f32 %v334, %v3289
        %3291 = vmatmul.f32.gmra.mxu0 %v3067
        %v3292 = vpop.f32.mrf.mxu0
        %v3293 = vadd.f32 %v334, %v3292
        %3294 = vmatmul.f32.gmra.mxu0 %v3070
        %v3295 = vpop.f32.mrf.mxu0
        %v3296 = vadd.f32 %v334, %v3295
        %3297 = vmatmul.f32.gmra.mxu0 %v3073
        %v3298 = vpop.f32.mrf.mxu0
        %v3299 = vadd.f32 %v334, %v3298
        %3300 = vmatmul.f32.gmra.mxu0 %v3076
        %v3301 = vpop.f32.mrf.mxu0
        %v3302 = vadd.f32 %v334, %v3301
        %3303 = vmatmul.f32.gmra.mxu0 %v3079
        %v3304 = vpop.f32.mrf.mxu0
        %v3305 = vadd.f32 %v334, %v3304
        %3306 = vmatmul.f32.gmra.mxu0 %v3082
        %v3307 = vpop.f32.mrf.mxu0
        %v3308 = vadd.f32 %v334, %v3307
        %3309 = vmatmul.f32.gmra.mxu0 %v3085
        %v3310 = vpop.f32.mrf.mxu0
        %v3311 = vadd.f32 %v334, %v3310
        %3312 = vmatmul.f32.gmra.mxu0 %v3088
        %v3313 = vpop.f32.mrf.mxu0
        %v3314 = vadd.f32 %v334, %v3313
        %3315 = vmatmul.f32.gmra.mxu0 %v3091
        %v3316 = vpop.f32.mrf.mxu0
        %v3317 = vadd.f32 %v334, %v3316
        %3318 = vmatmul.f32.gmra.mxu0 %v3094
        %v3319 = vpop.f32.mrf.mxu0
        %v3320 = vadd.f32 %v334, %v3319
        %3321 = vmatmul.f32.gmra.mxu0 %v3097
        %v3322 = vpop.f32.mrf.mxu0
        %v3323 = vadd.f32 %v334, %v3322
        %3324 = vmatmul.f32.gmra.mxu0 %v3100
        %v3325 = vpop.f32.mrf.mxu0
        %v3326 = vadd.f32 %v334, %v3325
        %3327 = vmatmul.f32.gmra.mxu0 %v3103
        %v3328 = vpop.f32.mrf.mxu0
        %v3329 = vadd.f32 %v334, %v3328
        %3330 = vmatmul.f32.gmra.mxu0 %v3106
        %v3331 = vpop.f32.mrf.mxu0
        %v3332 = vadd.f32 %v334, %v3331
        %3333 = vmatmul.f32.gmra.mxu0 %v3109
        %v3334 = vpop.f32.mrf.mxu0
        %v3335 = vadd.f32 %v334, %v3334
        %3336 = vmatmul.f32.gmra.mxu0 %v3112
        %v3337 = vpop.f32.mrf.mxu0
        %v3338 = vadd.f32 %v334, %v3337
        %3339 = vmatmul.f32.gmra.mxu0 %v3115
        %v3340 = vpop.f32.mrf.mxu0
        %v3341 = vadd.f32 %v334, %v3340
        %3342 = vmatmul.f32.gmra.mxu0 %v3118
        %v3343 = vpop.f32.mrf.mxu0
        %v3344 = vadd.f32 %v334, %v3343
        %3345 = vmatmul.f32.gmra.mxu0 %v3121
        %v3346 = vpop.f32.mrf.mxu0
        %v3347 = vadd.f32 %v334, %v3346
        %3348 = vmatmul.f32.gmra.mxu0 %v3124
        %v3349 = vpop.f32.mrf.mxu0
        %v3350 = vadd.f32 %v334, %v3349
        %3351 = vmatmul.f32.gmra.mxu0 %v3127
        %v3352 = vpop.f32.mrf.mxu0
        %v3353 = vadd.f32 %v334, %v3352
        %3354 = vmatmul.f32.gmra.mxu0 %v3130
        %v3355 = vpop.f32.mrf.mxu0
        %v3356 = vadd.f32 %v334, %v3355
        %3357 = vmatmul.f32.gmra.mxu0 %v3133
        %v3358 = vpop.f32.mrf.mxu0
        %v3359 = vadd.f32 %v334, %v3358
        %3360 = vmatmul.f32.gmra.mxu0 %v3136
        %v3361 = vpop.f32.mrf.mxu0
        %v3362 = vadd.f32 %v334, %v3361
        %3363 = vmatmul.f32.gmra.mxu0 %v3139
        %v3364 = vpop.f32.mrf.mxu0
        %v3365 = vadd.f32 %v334, %v3364
        %3366 = vmatmul.f32.gmra.mxu0 %v3142
        %v3367 = vpop.f32.mrf.mxu0
        %v3368 = vadd.f32 %v334, %v3367
        %3369 = vmatmul.f32.gmra.mxu0 %v3145
        %v3370 = vpop.f32.mrf.mxu0
        %v3371 = vadd.f32 %v334, %v3370
        %3372 = vmatmul.f32.gmra.mxu0 %v3148
        %v3373 = vpop.f32.mrf.mxu0
        %v3374 = vadd.f32 %v334, %v3373
        %3375 = vmatmul.f32.gmra.mxu0 %v3151
        %v3376 = vpop.f32.mrf.mxu0
        %v3377 = vadd.f32 %v334, %v3376
        %3378 = vmatmul.f32.gmra.mxu0 %v3154
        %v3379 = vpop.f32.mrf.mxu0
        %v3380 = vadd.f32 %v334, %v3379
        %3381 = vdwg.mxu0
        %3382 = vmatpush.msra.mxu0 0.0
        %3383 = vmatpush.msra.mxu0 0.0
        %3384 = vmatpush.msra.mxu0 0.0
        %3385 = vmatpush.msra.mxu0 0.0
        %3386 = vmatpush.msra.mxu0 0.0
        %3387 = vmatpush.msra.mxu0 0.0
        %3388 = vmatpush.msra.mxu0 0.0
        %3389 = vmatpush.msra.mxu0 0.0
        %3390 = vmatpush.msra.mxu0 0.0
        %3391 = vmatpush.msra.mxu0 0.0
        %3392 = vmatpush.msra.mxu0 0.0
        %3393 = vmatpush.msra.mxu0 0.0
        %3394 = vmatpush.msra.mxu0 0.0
        %3395 = vmatpush.msra.mxu0 0.0
        %3396 = vmatpush.msra.mxu0 0.0
        %3397 = vmatpush.msra.mxu0 %v265
        %3398 = vmatmul.f32.gmra.mxu0 %v3061
        %v3399 = vpop.f32.mrf.mxu0
        %v3400 = vadd.f32 %v335, %v3399
        %3401 = vmatmul.f32.gmra.mxu0 %v3064
        %v3402 = vpop.f32.mrf.mxu0
        %v3403 = vadd.f32 %v335, %v3402
        %3404 = vmatmul.f32.gmra.mxu0 %v3067
        %v3405 = vpop.f32.mrf.mxu0
        %v3406 = vadd.f32 %v335, %v3405
        %3407 = vmatmul.f32.gmra.mxu0 %v3070
        %v3408 = vpop.f32.mrf.mxu0
        %v3409 = vadd.f32 %v335, %v3408
        %3410 = vmatmul.f32.gmra.mxu0 %v3073
        %v3411 = vpop.f32.mrf.mxu0
        %v3412 = vadd.f32 %v335, %v3411
        %3413 = vmatmul.f32.gmra.mxu0 %v3076
        %v3414 = vpop.f32.mrf.mxu0
        %v3415 = vadd.f32 %v335, %v3414
        %3416 = vmatmul.f32.gmra.mxu0 %v3079
        %v3417 = vpop.f32.mrf.mxu0
        %v3418 = vadd.f32 %v335, %v3417
        %3419 = vmatmul.f32.gmra.mxu0 %v3082
        %v3420 = vpop.f32.mrf.mxu0
        %v3421 = vadd.f32 %v335, %v3420
        %3422 = vmatmul.f32.gmra.mxu0 %v3085
        %v3423 = vpop.f32.mrf.mxu0
        %v3424 = vadd.f32 %v335, %v3423
        %3425 = vmatmul.f32.gmra.mxu0 %v3088
        %v3426 = vpop.f32.mrf.mxu0
        %v3427 = vadd.f32 %v335, %v3426
        %3428 = vmatmul.f32.gmra.mxu0 %v3091
        %v3429 = vpop.f32.mrf.mxu0
        %v3430 = vadd.f32 %v335, %v3429
        %3431 = vmatmul.f32.gmra.mxu0 %v3094
        %v3432 = vpop.f32.mrf.mxu0
        %v3433 = vadd.f32 %v335, %v3432
        %3434 = vmatmul.f32.gmra.mxu0 %v3097
        %v3435 = vpop.f32.mrf.mxu0
        %v3436 = vadd.f32 %v335, %v3435
        %3437 = vmatmul.f32.gmra.mxu0 %v3100
        %v3438 = vpop.f32.mrf.mxu0
        %v3439 = vadd.f32 %v335, %v3438
        %3440 = vmatmul.f32.gmra.mxu0 %v3103
        %v3441 = vpop.f32.mrf.mxu0
        %v3442 = vadd.f32 %v335, %v3441
        %3443 = vmatmul.f32.gmra.mxu0 %v3106
        %v3444 = vpop.f32.mrf.mxu0
        %v3445 = vadd.f32 %v335, %v3444
        %3446 = vmatmul.f32.gmra.mxu0 %v3109
        %v3447 = vpop.f32.mrf.mxu0
        %v3448 = vadd.f32 %v335, %v3447
        %3449 = vmatmul.f32.gmra.mxu0 %v3112
        %v3450 = vpop.f32.mrf.mxu0
        %v3451 = vadd.f32 %v335, %v3450
        %3452 = vmatmul.f32.gmra.mxu0 %v3115
        %v3453 = vpop.f32.mrf.mxu0
        %v3454 = vadd.f32 %v335, %v3453
        %3455 = vmatmul.f32.gmra.mxu0 %v3118
        %v3456 = vpop.f32.mrf.mxu0
        %v3457 = vadd.f32 %v335, %v3456
        %3458 = vmatmul.f32.gmra.mxu0 %v3121
        %v3459 = vpop.f32.mrf.mxu0
        %v3460 = vadd.f32 %v335, %v3459
        %3461 = vmatmul.f32.gmra.mxu0 %v3124
        %v3462 = vpop.f32.mrf.mxu0
        %v3463 = vadd.f32 %v335, %v3462
        %3464 = vmatmul.f32.gmra.mxu0 %v3127
        %v3465 = vpop.f32.mrf.mxu0
        %v3466 = vadd.f32 %v335, %v3465
        %3467 = vmatmul.f32.gmra.mxu0 %v3130
        %v3468 = vpop.f32.mrf.mxu0
        %v3469 = vadd.f32 %v335, %v3468
        %3470 = vmatmul.f32.gmra.mxu0 %v3133
        %v3471 = vpop.f32.mrf.mxu0
        %v3472 = vadd.f32 %v335, %v3471
        %3473 = vmatmul.f32.gmra.mxu0 %v3136
        %v3474 = vpop.f32.mrf.mxu0
        %v3475 = vadd.f32 %v335, %v3474
        %3476 = vmatmul.f32.gmra.mxu0 %v3139
        %v3477 = vpop.f32.mrf.mxu0
        %v3478 = vadd.f32 %v335, %v3477
        %3479 = vmatmul.f32.gmra.mxu0 %v3142
        %v3480 = vpop.f32.mrf.mxu0
        %v3481 = vadd.f32 %v335, %v3480
        %3482 = vmatmul.f32.gmra.mxu0 %v3145
        %v3483 = vpop.f32.mrf.mxu0
        %v3484 = vadd.f32 %v335, %v3483
        %3485 = vmatmul.f32.gmra.mxu0 %v3148
        %v3486 = vpop.f32.mrf.mxu0
        %v3487 = vadd.f32 %v335, %v3486
        %3488 = vmatmul.f32.gmra.mxu0 %v3151
        %v3489 = vpop.f32.mrf.mxu0
        %v3490 = vadd.f32 %v335, %v3489
        %3491 = vmatmul.f32.gmra.mxu0 %v3154
        %v3492 = vpop.f32.mrf.mxu0
        %v3493 = vadd.f32 %v335, %v3492
        %3494 = vdwg.mxu0
        %3495 = vmatpush.msra.mxu0 0.0
        %3496 = vmatpush.msra.mxu0 0.0
        %3497 = vmatpush.msra.mxu0 0.0
        %3498 = vmatpush.msra.mxu0 0.0
        %3499 = vmatpush.msra.mxu0 0.0
        %3500 = vmatpush.msra.mxu0 0.0
        %3501 = vmatpush.msra.mxu0 0.0
        %3502 = vmatpush.msra.mxu0 0.0
        %3503 = vmatpush.msra.mxu0 0.0
        %3504 = vmatpush.msra.mxu0 0.0
        %3505 = vmatpush.msra.mxu0 0.0
        %3506 = vmatpush.msra.mxu0 0.0
        %3507 = vmatpush.msra.mxu0 0.0
        %3508 = vmatpush.msra.mxu0 0.0
        %3509 = vmatpush.msra.mxu0 0.0
        %3510 = vmatpush.msra.mxu0 %v266
        %3511 = vmatmul.f32.gmra.mxu0 %v3061
        %v3512 = vpop.f32.mrf.mxu0
        %v3513 = vadd.f32 %v336, %v3512
        %3514 = vmatmul.f32.gmra.mxu0 %v3064
        %v3515 = vpop.f32.mrf.mxu0
        %v3516 = vadd.f32 %v336, %v3515
        %3517 = vmatmul.f32.gmra.mxu0 %v3067
        %v3518 = vpop.f32.mrf.mxu0
        %v3519 = vadd.f32 %v336, %v3518
        %3520 = vmatmul.f32.gmra.mxu0 %v3070
        %v3521 = vpop.f32.mrf.mxu0
        %v3522 = vadd.f32 %v336, %v3521
        %3523 = vmatmul.f32.gmra.mxu0 %v3073
        %v3524 = vpop.f32.mrf.mxu0
        %v3525 = vadd.f32 %v336, %v3524
        %3526 = vmatmul.f32.gmra.mxu0 %v3076
        %v3527 = vpop.f32.mrf.mxu0
        %v3528 = vadd.f32 %v336, %v3527
        %3529 = vmatmul.f32.gmra.mxu0 %v3079
        %v3530 = vpop.f32.mrf.mxu0
        %v3531 = vadd.f32 %v336, %v3530
        %3532 = vmatmul.f32.gmra.mxu0 %v3082
        %v3533 = vpop.f32.mrf.mxu0
        %v3534 = vadd.f32 %v336, %v3533
        %3535 = vmatmul.f32.gmra.mxu0 %v3085
        %v3536 = vpop.f32.mrf.mxu0
        %v3537 = vadd.f32 %v336, %v3536
        %3538 = vmatmul.f32.gmra.mxu0 %v3088
        %v3539 = vpop.f32.mrf.mxu0
        %v3540 = vadd.f32 %v336, %v3539
        %3541 = vmatmul.f32.gmra.mxu0 %v3091
        %v3542 = vpop.f32.mrf.mxu0
        %v3543 = vadd.f32 %v336, %v3542
        %3544 = vmatmul.f32.gmra.mxu0 %v3094
        %v3545 = vpop.f32.mrf.mxu0
        %v3546 = vadd.f32 %v336, %v3545
        %3547 = vmatmul.f32.gmra.mxu0 %v3097
        %v3548 = vpop.f32.mrf.mxu0
        %v3549 = vadd.f32 %v336, %v3548
        %3550 = vmatmul.f32.gmra.mxu0 %v3100
        %v3551 = vpop.f32.mrf.mxu0
        %v3552 = vadd.f32 %v336, %v3551
        %3553 = vmatmul.f32.gmra.mxu0 %v3103
        %v3554 = vpop.f32.mrf.mxu0
        %v3555 = vadd.f32 %v336, %v3554
        %3556 = vmatmul.f32.gmra.mxu0 %v3106
        %v3557 = vpop.f32.mrf.mxu0
        %v3558 = vadd.f32 %v336, %v3557
        %3559 = vmatmul.f32.gmra.mxu0 %v3109
        %v3560 = vpop.f32.mrf.mxu0
        %v3561 = vadd.f32 %v336, %v3560
        %3562 = vmatmul.f32.gmra.mxu0 %v3112
        %v3563 = vpop.f32.mrf.mxu0
        %v3564 = vadd.f32 %v336, %v3563
        %3565 = vmatmul.f32.gmra.mxu0 %v3115
        %v3566 = vpop.f32.mrf.mxu0
        %v3567 = vadd.f32 %v336, %v3566
        %3568 = vmatmul.f32.gmra.mxu0 %v3118
        %v3569 = vpop.f32.mrf.mxu0
        %v3570 = vadd.f32 %v336, %v3569
        %3571 = vmatmul.f32.gmra.mxu0 %v3121
        %v3572 = vpop.f32.mrf.mxu0
        %v3573 = vadd.f32 %v336, %v3572
        %3574 = vmatmul.f32.gmra.mxu0 %v3124
        %v3575 = vpop.f32.mrf.mxu0
        %v3576 = vadd.f32 %v336, %v3575
        %3577 = vmatmul.f32.gmra.mxu0 %v3127
        %v3578 = vpop.f32.mrf.mxu0
        %v3579 = vadd.f32 %v336, %v3578
        %3580 = vmatmul.f32.gmra.mxu0 %v3130
        %v3581 = vpop.f32.mrf.mxu0
        %v3582 = vadd.f32 %v336, %v3581
        %3583 = vmatmul.f32.gmra.mxu0 %v3133
        %v3584 = vpop.f32.mrf.mxu0
        %v3585 = vadd.f32 %v336, %v3584
        %3586 = vmatmul.f32.gmra.mxu0 %v3136
        %v3587 = vpop.f32.mrf.mxu0
        %v3588 = vadd.f32 %v336, %v3587
        %3589 = vmatmul.f32.gmra.mxu0 %v3139
        %v3590 = vpop.f32.mrf.mxu0
        %v3591 = vadd.f32 %v336, %v3590
        %3592 = vmatmul.f32.gmra.mxu0 %v3142
        %v3593 = vpop.f32.mrf.mxu0
        %v3594 = vadd.f32 %v336, %v3593
        %3595 = vmatmul.f32.gmra.mxu0 %v3145
        %v3596 = vpop.f32.mrf.mxu0
        %v3597 = vadd.f32 %v336, %v3596
        %3598 = vmatmul.f32.gmra.mxu0 %v3148
        %v3599 = vpop.f32.mrf.mxu0
        %v3600 = vadd.f32 %v336, %v3599
        %3601 = vmatmul.f32.gmra.mxu0 %v3151
        %v3602 = vpop.f32.mrf.mxu0
        %v3603 = vadd.f32 %v336, %v3602
        %3604 = vmatmul.f32.gmra.mxu0 %v3154
        %v3605 = vpop.f32.mrf.mxu0
        %v3606 = vadd.f32 %v336, %v3605
        %3607 = vdwg.mxu0
        %v3608 = vmax.f32 %v3174, 0.0
        %v3609 = vmax.f32 %v3287, 0.0
        %v3610 = vmax.f32 %v3400, 0.0
        %v3611 = vmax.f32 %v3513, 0.0
        %v3612 = vmax.f32 %v3177, 0.0
        %v3613 = vmax.f32 %v3290, 0.0
        %v3614 = vmax.f32 %v3403, 0.0
        %v3615 = vmax.f32 %v3516, 0.0
        %v3616 = vmax.f32 %v3180, 0.0
        %v3617 = vmax.f32 %v3293, 0.0
        %v3618 = vmax.f32 %v3406, 0.0
        %v3619 = vmax.f32 %v3519, 0.0
        %v3620 = vmax.f32 %v3183, 0.0
        %v3621 = vmax.f32 %v3296, 0.0
        %v3622 = vmax.f32 %v3409, 0.0
        %v3623 = vmax.f32 %v3522, 0.0
        %v3624 = vmax.f32 %v3186, 0.0
        %v3625 = vmax.f32 %v3299, 0.0
        %v3626 = vmax.f32 %v3412, 0.0
        %v3627 = vmax.f32 %v3525, 0.0
        %v3628 = vmax.f32 %v3189, 0.0
        %v3629 = vmax.f32 %v3302, 0.0
        %v3630 = vmax.f32 %v3415, 0.0
        %v3631 = vmax.f32 %v3528, 0.0
        %v3632 = vmax.f32 %v3192, 0.0
        %v3633 = vmax.f32 %v3305, 0.0
        %v3634 = vmax.f32 %v3418, 0.0
        %v3635 = vmax.f32 %v3531, 0.0
        %v3636 = vmax.f32 %v3195, 0.0
        %v3637 = vmax.f32 %v3308, 0.0
        %v3638 = vmax.f32 %v3421, 0.0
        %v3639 = vmax.f32 %v3534, 0.0
        %v3640 = vmax.f32 %v3198, 0.0
        %v3641 = vmax.f32 %v3311, 0.0
        %v3642 = vmax.f32 %v3424, 0.0
        %v3643 = vmax.f32 %v3537, 0.0
        %v3644 = vmax.f32 %v3201, 0.0
        %v3645 = vmax.f32 %v3314, 0.0
        %v3646 = vmax.f32 %v3427, 0.0
        %v3647 = vmax.f32 %v3540, 0.0
        %v3648 = vmax.f32 %v3204, 0.0
        %v3649 = vmax.f32 %v3317, 0.0
        %v3650 = vmax.f32 %v3430, 0.0
        %v3651 = vmax.f32 %v3543, 0.0
        %v3652 = vmax.f32 %v3207, 0.0
        %v3653 = vmax.f32 %v3320, 0.0
        %v3654 = vmax.f32 %v3433, 0.0
        %v3655 = vmax.f32 %v3546, 0.0
        %v3656 = vmax.f32 %v3210, 0.0
        %v3657 = vmax.f32 %v3323, 0.0
        %v3658 = vmax.f32 %v3436, 0.0
        %v3659 = vmax.f32 %v3549, 0.0
        %v3660 = vmax.f32 %v3213, 0.0
        %v3661 = vmax.f32 %v3326, 0.0
        %v3662 = vmax.f32 %v3439, 0.0
        %v3663 = vmax.f32 %v3552, 0.0
        %v3664 = vmax.f32 %v3216, 0.0
        %v3665 = vmax.f32 %v3329, 0.0
        %v3666 = vmax.f32 %v3442, 0.0
        %v3667 = vmax.f32 %v3555, 0.0
        %v3668 = vmax.f32 %v3219, 0.0
        %v3669 = vmax.f32 %v3332, 0.0
        %v3670 = vmax.f32 %v3445, 0.0
        %v3671 = vmax.f32 %v3558, 0.0
        %v3672 = vmax.f32 %v3222, 0.0
        %v3673 = vmax.f32 %v3335, 0.0
        %v3674 = vmax.f32 %v3448, 0.0
        %v3675 = vmax.f32 %v3561, 0.0
        %v3676 = vmax.f32 %v3225, 0.0
        %v3677 = vmax.f32 %v3338, 0.0
        %v3678 = vmax.f32 %v3451, 0.0
        %v3679 = vmax.f32 %v3564, 0.0
        %v3680 = vmax.f32 %v3228, 0.0
        %v3681 = vmax.f32 %v3341, 0.0
        %v3682 = vmax.f32 %v3454, 0.0
        %v3683 = vmax.f32 %v3567, 0.0
        %v3684 = vmax.f32 %v3231, 0.0
        %v3685 = vmax.f32 %v3344, 0.0
        %v3686 = vmax.f32 %v3457, 0.0
        %v3687 = vmax.f32 %v3570, 0.0
        %v3688 = vmax.f32 %v3234, 0.0
        %v3689 = vmax.f32 %v3347, 0.0
        %v3690 = vmax.f32 %v3460, 0.0
        %v3691 = vmax.f32 %v3573, 0.0
        %v3692 = vmax.f32 %v3237, 0.0
        %v3693 = vmax.f32 %v3350, 0.0
        %v3694 = vmax.f32 %v3463, 0.0
        %v3695 = vmax.f32 %v3576, 0.0
        %v3696 = vmax.f32 %v3240, 0.0
        %v3697 = vmax.f32 %v3353, 0.0
        %v3698 = vmax.f32 %v3466, 0.0
        %v3699 = vmax.f32 %v3579, 0.0
        %v3700 = vmax.f32 %v3243, 0.0
        %v3701 = vmax.f32 %v3356, 0.0
        %v3702 = vmax.f32 %v3469, 0.0
        %v3703 = vmax.f32 %v3582, 0.0
        %v3704 = vmax.f32 %v3246, 0.0
        %v3705 = vmax.f32 %v3359, 0.0
        %v3706 = vmax.f32 %v3472, 0.0
        %v3707 = vmax.f32 %v3585, 0.0
        %v3708 = vmax.f32 %v3249, 0.0
        %v3709 = vmax.f32 %v3362, 0.0
        %v3710 = vmax.f32 %v3475, 0.0
        %v3711 = vmax.f32 %v3588, 0.0
        %v3712 = vmax.f32 %v3252, 0.0
        %v3713 = vmax.f32 %v3365, 0.0
        %v3714 = vmax.f32 %v3478, 0.0
        %v3715 = vmax.f32 %v3591, 0.0
        %v3716 = vmax.f32 %v3255, 0.0
        %v3717 = vmax.f32 %v3368, 0.0
        %v3718 = vmax.f32 %v3481, 0.0
        %v3719 = vmax.f32 %v3594, 0.0
        %v3720 = vmax.f32 %v3258, 0.0
        %v3721 = vmax.f32 %v3371, 0.0
        %v3722 = vmax.f32 %v3484, 0.0
        %v3723 = vmax.f32 %v3597, 0.0
        %v3724 = vmax.f32 %v3261, 0.0
        %v3725 = vmax.f32 %v3374, 0.0
        %v3726 = vmax.f32 %v3487, 0.0
        %v3727 = vmax.f32 %v3600, 0.0
        %v3728 = vmax.f32 %v3264, 0.0
        %v3729 = vmax.f32 %v3377, 0.0
        %v3730 = vmax.f32 %v3490, 0.0
        %v3731 = vmax.f32 %v3603, 0.0
        %v3732 = vmax.f32 %v3267, 0.0
        %v3733 = vmax.f32 %v3380, 0.0
        %v3734 = vmax.f32 %v3493, 0.0
        %v3735 = vmax.f32 %v3606, 0.0
        %s3736 = scalar_lea.vmem %s236, 3 [#allocation8]
        %v3737 = vld [vmem:[%s3736] ss:$8 sm:$0xf]
        %v3738 = vadd.f32 %v3608, %v3612
        %v3739 = vadd.f32 %v3738, %v3616
        %v3740 = vadd.f32 %v3739, %v3620
        %v3741 = vadd.f32 %v3740, %v3624
        %v3742 = vadd.f32 %v3741, %v3628
        %v3743 = vadd.f32 %v3742, %v3632
        %v3744 = vadd.f32 %v3743, %v3636
        %v3745 = vadd.f32 %v3744, %v3640
        %v3746 = vadd.f32 %v3745, %v3644
        %v3747 = vadd.f32 %v3746, %v3648
        %v3748 = vadd.f32 %v3747, %v3652
        %v3749 = vadd.f32 %v3748, %v3656
        %v3750 = vadd.f32 %v3749, %v3660
        %v3751 = vadd.f32 %v3750, %v3664
        %v3752 = vadd.f32 %v3751, %v3668
        %v3753 = vadd.f32 %v3752, %v3672
        %v3754 = vadd.f32 %v3753, %v3676
        %v3755 = vadd.f32 %v3754, %v3680
        %v3756 = vadd.f32 %v3755, %v3684
        %v3757 = vadd.f32 %v3756, %v3688
        %v3758 = vadd.f32 %v3757, %v3692
        %v3759 = vadd.f32 %v3758, %v3696
        %v3760 = vadd.f32 %v3759, %v3700
        %v3761 = vadd.f32 %v3760, %v3704
        %v3762 = vadd.f32 %v3761, %v3708
        %v3763 = vadd.f32 %v3762, %v3712
        %v3764 = vadd.f32 %v3763, %v3716
        %v3765 = vadd.f32 %v3764, %v3720
        %v3766 = vadd.f32 %v3765, %v3724
        %v3767 = vadd.f32 %v3766, %v3728
        %v3768 = vadd.f32 %v3767, %v3732
        %v3769 = vrot.slane %v3768, 4
        %v3770 = vadd.f32 %v3768, %v3769
        %v3771 = vrot.slane %v3770, 2
        %v3772 = vadd.f32 %v3770, %v3771
        %v3773 = vrot.slane %v3772, 1
        %v3774 = vadd.f32 %v3772, %v3773
        %v3775 = vadd.f32 %v3609, %v3613
        %v3776 = vadd.f32 %v3775, %v3617
        %v3777 = vadd.f32 %v3776, %v3621
        %v3778 = vadd.f32 %v3777, %v3625
        %v3779 = vadd.f32 %v3778, %v3629
        %v3780 = vadd.f32 %v3779, %v3633
        %v3781 = vadd.f32 %v3780, %v3637
        %v3782 = vadd.f32 %v3781, %v3641
        %v3783 = vadd.f32 %v3782, %v3645
        %v3784 = vadd.f32 %v3783, %v3649
        %v3785 = vadd.f32 %v3784, %v3653
        %v3786 = vadd.f32 %v3785, %v3657
        %v3787 = vadd.f32 %v3786, %v3661
        %v3788 = vadd.f32 %v3787, %v3665
        %v3789 = vadd.f32 %v3788, %v3669
        %v3790 = vadd.f32 %v3789, %v3673
        %v3791 = vadd.f32 %v3790, %v3677
        %v3792 = vadd.f32 %v3791, %v3681
        %v3793 = vadd.f32 %v3792, %v3685
        %v3794 = vadd.f32 %v3793, %v3689
        %v3795 = vadd.f32 %v3794, %v3693
        %v3796 = vadd.f32 %v3795, %v3697
        %v3797 = vadd.f32 %v3796, %v3701
        %v3798 = vadd.f32 %v3797, %v3705
        %v3799 = vadd.f32 %v3798, %v3709
        %v3800 = vadd.f32 %v3799, %v3713
        %v3801 = vadd.f32 %v3800, %v3717
        %v3802 = vadd.f32 %v3801, %v3721
        %v3803 = vadd.f32 %v3802, %v3725
        %v3804 = vadd.f32 %v3803, %v3729
        %v3805 = vadd.f32 %v3804, %v3733
        %v3806 = vrot.slane %v3805, 4
        %v3807 = vadd.f32 %v3805, %v3806
        %v3808 = vrot.slane %v3807, 2
        %v3809 = vadd.f32 %v3807, %v3808
        %v3810 = vrot.slane %v3809, 1
        %v3811 = vadd.f32 %v3809, %v3810
        %v3812 = vadd.f32 %v3610, %v3614
        %v3813 = vadd.f32 %v3812, %v3618
        %v3814 = vadd.f32 %v3813, %v3622
        %v3815 = vadd.f32 %v3814, %v3626
        %v3816 = vadd.f32 %v3815, %v3630
        %v3817 = vadd.f32 %v3816, %v3634
        %v3818 = vadd.f32 %v3817, %v3638
        %v3819 = vadd.f32 %v3818, %v3642
        %v3820 = vadd.f32 %v3819, %v3646
        %v3821 = vadd.f32 %v3820, %v3650
        %v3822 = vadd.f32 %v3821, %v3654
        %v3823 = vadd.f32 %v3822, %v3658
        %v3824 = vadd.f32 %v3823, %v3662
        %v3825 = vadd.f32 %v3824, %v3666
        %v3826 = vadd.f32 %v3825, %v3670
        %v3827 = vadd.f32 %v3826, %v3674
        %v3828 = vadd.f32 %v3827, %v3678
        %v3829 = vadd.f32 %v3828, %v3682
        %v3830 = vadd.f32 %v3829, %v3686
        %v3831 = vadd.f32 %v3830, %v3690
        %v3832 = vadd.f32 %v3831, %v3694
        %v3833 = vadd.f32 %v3832, %v3698
        %v3834 = vadd.f32 %v3833, %v3702
        %v3835 = vadd.f32 %v3834, %v3706
        %v3836 = vadd.f32 %v3835, %v3710
        %v3837 = vadd.f32 %v3836, %v3714
        %v3838 = vadd.f32 %v3837, %v3718
        %v3839 = vadd.f32 %v3838, %v3722
        %v3840 = vadd.f32 %v3839, %v3726
        %v3841 = vadd.f32 %v3840, %v3730
        %v3842 = vadd.f32 %v3841, %v3734
        %v3843 = vrot.slane %v3842, 4
        %v3844 = vadd.f32 %v3842, %v3843
        %v3845 = vrot.slane %v3844, 2
        %v3846 = vadd.f32 %v3844, %v3845
        %v3847 = vrot.slane %v3846, 1
        %v3848 = vadd.f32 %v3846, %v3847
        %v3849 = vadd.f32 %v3611, %v3615
        %v3850 = vadd.f32 %v3849, %v3619
        %v3851 = vadd.f32 %v3850, %v3623
        %v3852 = vadd.f32 %v3851, %v3627
        %v3853 = vadd.f32 %v3852, %v3631
        %v3854 = vadd.f32 %v3853, %v3635
        %v3855 = vadd.f32 %v3854, %v3639
        %v3856 = vadd.f32 %v3855, %v3643
        %v3857 = vadd.f32 %v3856, %v3647
        %v3858 = vadd.f32 %v3857, %v3651
        %v3859 = vadd.f32 %v3858, %v3655
        %v3860 = vadd.f32 %v3859, %v3659
        %v3861 = vadd.f32 %v3860, %v3663
        %v3862 = vadd.f32 %v3861, %v3667
        %v3863 = vadd.f32 %v3862, %v3671
        %v3864 = vadd.f32 %v3863, %v3675
        %v3865 = vadd.f32 %v3864, %v3679
        %v3866 = vadd.f32 %v3865, %v3683
        %v3867 = vadd.f32 %v3866, %v3687
        %v3868 = vadd.f32 %v3867, %v3691
        %v3869 = vadd.f32 %v3868, %v3695
        %v3870 = vadd.f32 %v3869, %v3699
        %v3871 = vadd.f32 %v3870, %v3703
        %v3872 = vadd.f32 %v3871, %v3707
        %v3873 = vadd.f32 %v3872, %v3711
        %v3874 = vadd.f32 %v3873, %v3715
        %v3875 = vadd.f32 %v3874, %v3719
        %v3876 = vadd.f32 %v3875, %v3723
        %v3877 = vadd.f32 %v3876, %v3727
        %v3878 = vadd.f32 %v3877, %v3731
        %v3879 = vadd.f32 %v3878, %v3735
        %v3880 = vrot.slane %v3879, 4
        %v3881 = vadd.f32 %v3879, %v3880
        %v3882 = vrot.slane %v3881, 2
        %v3883 = vadd.f32 %v3881, %v3882
        %v3884 = vrot.slane %v3883, 1
        %v3885 = vadd.f32 %v3883, %v3884
        %v3890 = vrot.slane %v3811, 7
        %v3891 = vrot.slane %v3848, 6
        %v3892 = vrot.slane %v3885, 5
        %v3893 = vsel %vm1174, %v3774, %v3890
        %v3894 = vsel %vm1176, %v3891, %v3892
        %v3895 = vsel %vm1178, %v3893, %v3894
        %v3897 = vadd.f32 %v3737, %v3895
        %3898 = vst.msk [vmem:[%s3736] ss:$8 sm:$0xf] %vm1185, %v3897
        %3899 = vst.msk [vmem:[%s3736] ss:$8 sm:$0x0] %vm1185, %v3897
        %3900 = vxpose.xlu0.b32.start [1/16] %v255, 128
        %3901 = vxpose.xlu0.b32.cont [2/16] 0.0, 128
        %3902 = vxpose.xlu0.b32.cont [3/16] 0.0, 128
        %3903 = vxpose.xlu0.b32.cont [4/16] 0.0, 128
        %3904 = vxpose.xlu0.b32.cont [5/16] 0.0, 128
        %3905 = vxpose.xlu0.b32.cont [6/16] 0.0, 128
        %3906 = vxpose.xlu0.b32.cont [7/16] 0.0, 128
        %3907 = vxpose.xlu0.b32.cont [8/16] 0.0, 128
        %3908 = vxpose.xlu0.b32.cont [9/16] 0.0, 128
        %3909 = vxpose.xlu0.b32.cont [10/16] 0.0, 128
        %3910 = vxpose.xlu0.b32.cont [11/16] 0.0, 128
        %3911 = vxpose.xlu0.b32.cont [12/16] 0.0, 128
        %3912 = vxpose.xlu0.b32.cont [13/16] 0.0, 128
        %3913 = vxpose.xlu0.b32.cont [14/16] 0.0, 128
        %3914 = vxpose.xlu0.b32.cont [15/16] 0.0, 128
        %3915 = vxpose.xlu0.b32.end [16/16] 0.0, 128
        %v3916 = vpop.trf.xlu0
        %v3917 = vpop.trf.xlu0
        %v3918 = vpop.trf.xlu0
        %v3919 = vpop.trf.xlu0
        %v3920 = vpop.trf.xlu0
        %v3921 = vpop.trf.xlu0
        %v3922 = vpop.trf.xlu0
        %v3923 = vpop.trf.xlu0
        %v3924 = vpop.trf.xlu0
        %v3925 = vpop.trf.xlu0
        %v3926 = vpop.trf.xlu0
        %v3927 = vpop.trf.xlu0
        %v3928 = vpop.trf.xlu0
        %v3929 = vpop.trf.xlu0
        %v3930 = vpop.trf.xlu0
        %v3931 = vpop.trf.xlu0
        %3932 = vxpose.xlu0.b32.start [1/16] %v256, 128
        %3933 = vxpose.xlu0.b32.cont [2/16] 0.0, 128
        %3934 = vxpose.xlu0.b32.cont [3/16] 0.0, 128
        %3935 = vxpose.xlu0.b32.cont [4/16] 0.0, 128
        %3936 = vxpose.xlu0.b32.cont [5/16] 0.0, 128
        %3937 = vxpose.xlu0.b32.cont [6/16] 0.0, 128
        %3938 = vxpose.xlu0.b32.cont [7/16] 0.0, 128
        %3939 = vxpose.xlu0.b32.cont [8/16] 0.0, 128
        %3940 = vxpose.xlu0.b32.cont [9/16] 0.0, 128
        %3941 = vxpose.xlu0.b32.cont [10/16] 0.0, 128
        %3942 = vxpose.xlu0.b32.cont [11/16] 0.0, 128
        %3943 = vxpose.xlu0.b32.cont [12/16] 0.0, 128
        %3944 = vxpose.xlu0.b32.cont [13/16] 0.0, 128
        %3945 = vxpose.xlu0.b32.cont [14/16] 0.0, 128
        %3946 = vxpose.xlu0.b32.cont [15/16] 0.0, 128
        %3947 = vxpose.xlu0.b32.end [16/16] 0.0, 128
        %v3948 = vpop.trf.xlu0
        %v3949 = vpop.trf.xlu0
        %v3950 = vpop.trf.xlu0
        %v3951 = vpop.trf.xlu0
        %v3952 = vpop.trf.xlu0
        %v3953 = vpop.trf.xlu0
        %v3954 = vpop.trf.xlu0
        %v3955 = vpop.trf.xlu0
        %v3956 = vpop.trf.xlu0
        %v3957 = vpop.trf.xlu0
        %v3958 = vpop.trf.xlu0
        %v3959 = vpop.trf.xlu0
        %v3960 = vpop.trf.xlu0
        %v3961 = vpop.trf.xlu0
        %v3962 = vpop.trf.xlu0
        %v3963 = vpop.trf.xlu0
        %v3965 = vsel %vm341, %v3916, 0
        %v3968 = vsel %vm341, %v3917, 0
        %v3971 = vsel %vm341, %v3918, 0
        %v3974 = vsel %vm341, %v3919, 0
        %v3977 = vsel %vm341, %v3920, 0
        %v3980 = vsel %vm341, %v3921, 0
        %v3983 = vsel %vm341, %v3922, 0
        %v3986 = vsel %vm341, %v3923, 0
        %v3989 = vsel %vm341, %v3924, 0
        %v3992 = vsel %vm341, %v3925, 0
        %v3995 = vsel %vm341, %v3926, 0
        %v3998 = vsel %vm341, %v3927, 0
        %v4001 = vsel %vm341, %v3928, 0
        %v4004 = vsel %vm341, %v3929, 0
        %v4007 = vsel %vm341, %v3930, 0
        %v4010 = vsel %vm341, %v3931, 0
        %v4013 = vsel %vm341, %v3948, 0
        %v4016 = vsel %vm341, %v3949, 0
        %v4019 = vsel %vm341, %v3950, 0
        %v4022 = vsel %vm341, %v3951, 0
        %v4025 = vsel %vm341, %v3952, 0
        %v4028 = vsel %vm341, %v3953, 0
        %v4031 = vsel %vm341, %v3954, 0
        %v4034 = vsel %vm341, %v3955, 0
        %v4037 = vsel %vm341, %v3956, 0
        %v4040 = vsel %vm341, %v3957, 0
        %v4043 = vsel %vm341, %v3958, 0
        %v4046 = vsel %vm341, %v3959, 0
        %v4049 = vsel %vm341, %v3960, 0
        %v4052 = vsel %vm341, %v3961, 0
        %v4055 = vsel %vm341, %v3962, 0
        %v4058 = vsel %vm341, %v3963, 0
        %4060 = vmatpush.msra.mxu0 0.0
        %4061 = vmatpush.msra.mxu0 0.0
        %4062 = vmatpush.msra.mxu0 0.0
        %4063 = vmatpush.msra.mxu0 0.0
        %4064 = vmatpush.msra.mxu0 0.0
        %4065 = vmatpush.msra.mxu0 0.0
        %4066 = vmatpush.msra.mxu0 0.0
        %4067 = vmatpush.msra.mxu0 0.0
        %4068 = vmatpush.msra.mxu0 0.0
        %4069 = vmatpush.msra.mxu0 0.0
        %4070 = vmatpush.msra.mxu0 0.0
        %4071 = vmatpush.msra.mxu0 0.0
        %4072 = vmatpush.msra.mxu0 0.0
        %4073 = vmatpush.msra.mxu0 0.0
        %4074 = vmatpush.msra.mxu0 0.0
        %4075 = vmatpush.msra.mxu0 %v263
        %4076 = vmatmul.f32.gmra.mxu0 %v3965
        %v4077 = vpop.f32.mrf.mxu0
        %v4078 = vadd.f32 %v333, %v4077
        %4079 = vmatmul.f32.gmra.mxu0 %v3968
        %v4080 = vpop.f32.mrf.mxu0
        %v4081 = vadd.f32 %v333, %v4080
        %4082 = vmatmul.f32.gmra.mxu0 %v3971
        %v4083 = vpop.f32.mrf.mxu0
        %v4084 = vadd.f32 %v333, %v4083
        %4085 = vmatmul.f32.gmra.mxu0 %v3974
        %v4086 = vpop.f32.mrf.mxu0
        %v4087 = vadd.f32 %v333, %v4086
        %4088 = vmatmul.f32.gmra.mxu0 %v3977
        %v4089 = vpop.f32.mrf.mxu0
        %v4090 = vadd.f32 %v333, %v4089
        %4091 = vmatmul.f32.gmra.mxu0 %v3980
        %v4092 = vpop.f32.mrf.mxu0
        %v4093 = vadd.f32 %v333, %v4092
        %4094 = vmatmul.f32.gmra.mxu0 %v3983
        %v4095 = vpop.f32.mrf.mxu0
        %v4096 = vadd.f32 %v333, %v4095
        %4097 = vmatmul.f32.gmra.mxu0 %v3986
        %v4098 = vpop.f32.mrf.mxu0
        %v4099 = vadd.f32 %v333, %v4098
        %4100 = vmatmul.f32.gmra.mxu0 %v3989
        %v4101 = vpop.f32.mrf.mxu0
        %v4102 = vadd.f32 %v333, %v4101
        %4103 = vmatmul.f32.gmra.mxu0 %v3992
        %v4104 = vpop.f32.mrf.mxu0
        %v4105 = vadd.f32 %v333, %v4104
        %4106 = vmatmul.f32.gmra.mxu0 %v3995
        %v4107 = vpop.f32.mrf.mxu0
        %v4108 = vadd.f32 %v333, %v4107
        %4109 = vmatmul.f32.gmra.mxu0 %v3998
        %v4110 = vpop.f32.mrf.mxu0
        %v4111 = vadd.f32 %v333, %v4110
        %4112 = vmatmul.f32.gmra.mxu0 %v4001
        %v4113 = vpop.f32.mrf.mxu0
        %v4114 = vadd.f32 %v333, %v4113
        %4115 = vmatmul.f32.gmra.mxu0 %v4004
        %v4116 = vpop.f32.mrf.mxu0
        %v4117 = vadd.f32 %v333, %v4116
        %4118 = vmatmul.f32.gmra.mxu0 %v4007
        %v4119 = vpop.f32.mrf.mxu0
        %v4120 = vadd.f32 %v333, %v4119
        %4121 = vmatmul.f32.gmra.mxu0 %v4010
        %v4122 = vpop.f32.mrf.mxu0
        %v4123 = vadd.f32 %v333, %v4122
        %4124 = vmatmul.f32.gmra.mxu0 %v4013
        %v4125 = vpop.f32.mrf.mxu0
        %v4126 = vadd.f32 %v333, %v4125
        %4127 = vmatmul.f32.gmra.mxu0 %v4016
        %v4128 = vpop.f32.mrf.mxu0
        %v4129 = vadd.f32 %v333, %v4128
        %4130 = vmatmul.f32.gmra.mxu0 %v4019
        %v4131 = vpop.f32.mrf.mxu0
        %v4132 = vadd.f32 %v333, %v4131
        %4133 = vmatmul.f32.gmra.mxu0 %v4022
        %v4134 = vpop.f32.mrf.mxu0
        %v4135 = vadd.f32 %v333, %v4134
        %4136 = vmatmul.f32.gmra.mxu0 %v4025
        %v4137 = vpop.f32.mrf.mxu0
        %v4138 = vadd.f32 %v333, %v4137
        %4139 = vmatmul.f32.gmra.mxu0 %v4028
        %v4140 = vpop.f32.mrf.mxu0
        %v4141 = vadd.f32 %v333, %v4140
        %4142 = vmatmul.f32.gmra.mxu0 %v4031
        %v4143 = vpop.f32.mrf.mxu0
        %v4144 = vadd.f32 %v333, %v4143
        %4145 = vmatmul.f32.gmra.mxu0 %v4034
        %v4146 = vpop.f32.mrf.mxu0
        %v4147 = vadd.f32 %v333, %v4146
        %4148 = vmatmul.f32.gmra.mxu0 %v4037
        %v4149 = vpop.f32.mrf.mxu0
        %v4150 = vadd.f32 %v333, %v4149
        %4151 = vmatmul.f32.gmra.mxu0 %v4040
        %v4152 = vpop.f32.mrf.mxu0
        %v4153 = vadd.f32 %v333, %v4152
        %4154 = vmatmul.f32.gmra.mxu0 %v4043
        %v4155 = vpop.f32.mrf.mxu0
        %v4156 = vadd.f32 %v333, %v4155
        %4157 = vmatmul.f32.gmra.mxu0 %v4046
        %v4158 = vpop.f32.mrf.mxu0
        %v4159 = vadd.f32 %v333, %v4158
        %4160 = vmatmul.f32.gmra.mxu0 %v4049
        %v4161 = vpop.f32.mrf.mxu0
        %v4162 = vadd.f32 %v333, %v4161
        %4163 = vmatmul.f32.gmra.mxu0 %v4052
        %v4164 = vpop.f32.mrf.mxu0
        %v4165 = vadd.f32 %v333, %v4164
        %4166 = vmatmul.f32.gmra.mxu0 %v4055
        %v4167 = vpop.f32.mrf.mxu0
        %v4168 = vadd.f32 %v333, %v4167
        %4169 = vmatmul.f32.gmra.mxu0 %v4058
        %v4170 = vpop.f32.mrf.mxu0
        %v4171 = vadd.f32 %v333, %v4170
        %4172 = vdwg.mxu0
        %4173 = vmatpush.msra.mxu0 0.0
        %4174 = vmatpush.msra.mxu0 0.0
        %4175 = vmatpush.msra.mxu0 0.0
        %4176 = vmatpush.msra.mxu0 0.0
        %4177 = vmatpush.msra.mxu0 0.0
        %4178 = vmatpush.msra.mxu0 0.0
        %4179 = vmatpush.msra.mxu0 0.0
        %4180 = vmatpush.msra.mxu0 0.0
        %4181 = vmatpush.msra.mxu0 0.0
        %4182 = vmatpush.msra.mxu0 0.0
        %4183 = vmatpush.msra.mxu0 0.0
        %4184 = vmatpush.msra.mxu0 0.0
        %4185 = vmatpush.msra.mxu0 0.0
        %4186 = vmatpush.msra.mxu0 0.0
        %4187 = vmatpush.msra.mxu0 0.0
        %4188 = vmatpush.msra.mxu0 %v264
        %4189 = vmatmul.f32.gmra.mxu0 %v3965
        %v4190 = vpop.f32.mrf.mxu0
        %v4191 = vadd.f32 %v334, %v4190
        %4192 = vmatmul.f32.gmra.mxu0 %v3968
        %v4193 = vpop.f32.mrf.mxu0
        %v4194 = vadd.f32 %v334, %v4193
        %4195 = vmatmul.f32.gmra.mxu0 %v3971
        %v4196 = vpop.f32.mrf.mxu0
        %v4197 = vadd.f32 %v334, %v4196
        %4198 = vmatmul.f32.gmra.mxu0 %v3974
        %v4199 = vpop.f32.mrf.mxu0
        %v4200 = vadd.f32 %v334, %v4199
        %4201 = vmatmul.f32.gmra.mxu0 %v3977
        %v4202 = vpop.f32.mrf.mxu0
        %v4203 = vadd.f32 %v334, %v4202
        %4204 = vmatmul.f32.gmra.mxu0 %v3980
        %v4205 = vpop.f32.mrf.mxu0
        %v4206 = vadd.f32 %v334, %v4205
        %4207 = vmatmul.f32.gmra.mxu0 %v3983
        %v4208 = vpop.f32.mrf.mxu0
        %v4209 = vadd.f32 %v334, %v4208
        %4210 = vmatmul.f32.gmra.mxu0 %v3986
        %v4211 = vpop.f32.mrf.mxu0
        %v4212 = vadd.f32 %v334, %v4211
        %4213 = vmatmul.f32.gmra.mxu0 %v3989
        %v4214 = vpop.f32.mrf.mxu0
        %v4215 = vadd.f32 %v334, %v4214
        %4216 = vmatmul.f32.gmra.mxu0 %v3992
        %v4217 = vpop.f32.mrf.mxu0
        %v4218 = vadd.f32 %v334, %v4217
        %4219 = vmatmul.f32.gmra.mxu0 %v3995
        %v4220 = vpop.f32.mrf.mxu0
        %v4221 = vadd.f32 %v334, %v4220
        %4222 = vmatmul.f32.gmra.mxu0 %v3998
        %v4223 = vpop.f32.mrf.mxu0
        %v4224 = vadd.f32 %v334, %v4223
        %4225 = vmatmul.f32.gmra.mxu0 %v4001
        %v4226 = vpop.f32.mrf.mxu0
        %v4227 = vadd.f32 %v334, %v4226
        %4228 = vmatmul.f32.gmra.mxu0 %v4004
        %v4229 = vpop.f32.mrf.mxu0
        %v4230 = vadd.f32 %v334, %v4229
        %4231 = vmatmul.f32.gmra.mxu0 %v4007
        %v4232 = vpop.f32.mrf.mxu0
        %v4233 = vadd.f32 %v334, %v4232
        %4234 = vmatmul.f32.gmra.mxu0 %v4010
        %v4235 = vpop.f32.mrf.mxu0
        %v4236 = vadd.f32 %v334, %v4235
        %4237 = vmatmul.f32.gmra.mxu0 %v4013
        %v4238 = vpop.f32.mrf.mxu0
        %v4239 = vadd.f32 %v334, %v4238
        %4240 = vmatmul.f32.gmra.mxu0 %v4016
        %v4241 = vpop.f32.mrf.mxu0
        %v4242 = vadd.f32 %v334, %v4241
        %4243 = vmatmul.f32.gmra.mxu0 %v4019
        %v4244 = vpop.f32.mrf.mxu0
        %v4245 = vadd.f32 %v334, %v4244
        %4246 = vmatmul.f32.gmra.mxu0 %v4022
        %v4247 = vpop.f32.mrf.mxu0
        %v4248 = vadd.f32 %v334, %v4247
        %4249 = vmatmul.f32.gmra.mxu0 %v4025
        %v4250 = vpop.f32.mrf.mxu0
        %v4251 = vadd.f32 %v334, %v4250
        %4252 = vmatmul.f32.gmra.mxu0 %v4028
        %v4253 = vpop.f32.mrf.mxu0
        %v4254 = vadd.f32 %v334, %v4253
        %4255 = vmatmul.f32.gmra.mxu0 %v4031
        %v4256 = vpop.f32.mrf.mxu0
        %v4257 = vadd.f32 %v334, %v4256
        %4258 = vmatmul.f32.gmra.mxu0 %v4034
        %v4259 = vpop.f32.mrf.mxu0
        %v4260 = vadd.f32 %v334, %v4259
        %4261 = vmatmul.f32.gmra.mxu0 %v4037
        %v4262 = vpop.f32.mrf.mxu0
        %v4263 = vadd.f32 %v334, %v4262
        %4264 = vmatmul.f32.gmra.mxu0 %v4040
        %v4265 = vpop.f32.mrf.mxu0
        %v4266 = vadd.f32 %v334, %v4265
        %4267 = vmatmul.f32.gmra.mxu0 %v4043
        %v4268 = vpop.f32.mrf.mxu0
        %v4269 = vadd.f32 %v334, %v4268
        %4270 = vmatmul.f32.gmra.mxu0 %v4046
        %v4271 = vpop.f32.mrf.mxu0
        %v4272 = vadd.f32 %v334, %v4271
        %4273 = vmatmul.f32.gmra.mxu0 %v4049
        %v4274 = vpop.f32.mrf.mxu0
        %v4275 = vadd.f32 %v334, %v4274
        %4276 = vmatmul.f32.gmra.mxu0 %v4052
        %v4277 = vpop.f32.mrf.mxu0
        %v4278 = vadd.f32 %v334, %v4277
        %4279 = vmatmul.f32.gmra.mxu0 %v4055
        %v4280 = vpop.f32.mrf.mxu0
        %v4281 = vadd.f32 %v334, %v4280
        %4282 = vmatmul.f32.gmra.mxu0 %v4058
        %v4283 = vpop.f32.mrf.mxu0
        %v4284 = vadd.f32 %v334, %v4283
        %4285 = vdwg.mxu0
        %4286 = vmatpush.msra.mxu0 0.0
        %4287 = vmatpush.msra.mxu0 0.0
        %4288 = vmatpush.msra.mxu0 0.0
        %4289 = vmatpush.msra.mxu0 0.0
        %4290 = vmatpush.msra.mxu0 0.0
        %4291 = vmatpush.msra.mxu0 0.0
        %4292 = vmatpush.msra.mxu0 0.0
        %4293 = vmatpush.msra.mxu0 0.0
        %4294 = vmatpush.msra.mxu0 0.0
        %4295 = vmatpush.msra.mxu0 0.0
        %4296 = vmatpush.msra.mxu0 0.0
        %4297 = vmatpush.msra.mxu0 0.0
        %4298 = vmatpush.msra.mxu0 0.0
        %4299 = vmatpush.msra.mxu0 0.0
        %4300 = vmatpush.msra.mxu0 0.0
        %4301 = vmatpush.msra.mxu0 %v265
        %4302 = vmatmul.f32.gmra.mxu0 %v3965
        %v4303 = vpop.f32.mrf.mxu0
        %v4304 = vadd.f32 %v335, %v4303
        %4305 = vmatmul.f32.gmra.mxu0 %v3968
        %v4306 = vpop.f32.mrf.mxu0
        %v4307 = vadd.f32 %v335, %v4306
        %4308 = vmatmul.f32.gmra.mxu0 %v3971
        %v4309 = vpop.f32.mrf.mxu0
        %v4310 = vadd.f32 %v335, %v4309
        %4311 = vmatmul.f32.gmra.mxu0 %v3974
        %v4312 = vpop.f32.mrf.mxu0
        %v4313 = vadd.f32 %v335, %v4312
        %4314 = vmatmul.f32.gmra.mxu0 %v3977
        %v4315 = vpop.f32.mrf.mxu0
        %v4316 = vadd.f32 %v335, %v4315
        %4317 = vmatmul.f32.gmra.mxu0 %v3980
        %v4318 = vpop.f32.mrf.mxu0
        %v4319 = vadd.f32 %v335, %v4318
        %4320 = vmatmul.f32.gmra.mxu0 %v3983
        %v4321 = vpop.f32.mrf.mxu0
        %v4322 = vadd.f32 %v335, %v4321
        %4323 = vmatmul.f32.gmra.mxu0 %v3986
        %v4324 = vpop.f32.mrf.mxu0
        %v4325 = vadd.f32 %v335, %v4324
        %4326 = vmatmul.f32.gmra.mxu0 %v3989
        %v4327 = vpop.f32.mrf.mxu0
        %v4328 = vadd.f32 %v335, %v4327
        %4329 = vmatmul.f32.gmra.mxu0 %v3992
        %v4330 = vpop.f32.mrf.mxu0
        %v4331 = vadd.f32 %v335, %v4330
        %4332 = vmatmul.f32.gmra.mxu0 %v3995
        %v4333 = vpop.f32.mrf.mxu0
        %v4334 = vadd.f32 %v335, %v4333
        %4335 = vmatmul.f32.gmra.mxu0 %v3998
        %v4336 = vpop.f32.mrf.mxu0
        %v4337 = vadd.f32 %v335, %v4336
        %4338 = vmatmul.f32.gmra.mxu0 %v4001
        %v4339 = vpop.f32.mrf.mxu0
        %v4340 = vadd.f32 %v335, %v4339
        %4341 = vmatmul.f32.gmra.mxu0 %v4004
        %v4342 = vpop.f32.mrf.mxu0
        %v4343 = vadd.f32 %v335, %v4342
        %4344 = vmatmul.f32.gmra.mxu0 %v4007
        %v4345 = vpop.f32.mrf.mxu0
        %v4346 = vadd.f32 %v335, %v4345
        %4347 = vmatmul.f32.gmra.mxu0 %v4010
        %v4348 = vpop.f32.mrf.mxu0
        %v4349 = vadd.f32 %v335, %v4348
        %4350 = vmatmul.f32.gmra.mxu0 %v4013
        %v4351 = vpop.f32.mrf.mxu0
        %v4352 = vadd.f32 %v335, %v4351
        %4353 = vmatmul.f32.gmra.mxu0 %v4016
        %v4354 = vpop.f32.mrf.mxu0
        %v4355 = vadd.f32 %v335, %v4354
        %4356 = vmatmul.f32.gmra.mxu0 %v4019
        %v4357 = vpop.f32.mrf.mxu0
        %v4358 = vadd.f32 %v335, %v4357
        %4359 = vmatmul.f32.gmra.mxu0 %v4022
        %v4360 = vpop.f32.mrf.mxu0
        %v4361 = vadd.f32 %v335, %v4360
        %4362 = vmatmul.f32.gmra.mxu0 %v4025
        %v4363 = vpop.f32.mrf.mxu0
        %v4364 = vadd.f32 %v335, %v4363
        %4365 = vmatmul.f32.gmra.mxu0 %v4028
        %v4366 = vpop.f32.mrf.mxu0
        %v4367 = vadd.f32 %v335, %v4366
        %4368 = vmatmul.f32.gmra.mxu0 %v4031
        %v4369 = vpop.f32.mrf.mxu0
        %v4370 = vadd.f32 %v335, %v4369
        %4371 = vmatmul.f32.gmra.mxu0 %v4034
        %v4372 = vpop.f32.mrf.mxu0
        %v4373 = vadd.f32 %v335, %v4372
        %4374 = vmatmul.f32.gmra.mxu0 %v4037
        %v4375 = vpop.f32.mrf.mxu0
        %v4376 = vadd.f32 %v335, %v4375
        %4377 = vmatmul.f32.gmra.mxu0 %v4040
        %v4378 = vpop.f32.mrf.mxu0
        %v4379 = vadd.f32 %v335, %v4378
        %4380 = vmatmul.f32.gmra.mxu0 %v4043
        %v4381 = vpop.f32.mrf.mxu0
        %v4382 = vadd.f32 %v335, %v4381
        %4383 = vmatmul.f32.gmra.mxu0 %v4046
        %v4384 = vpop.f32.mrf.mxu0
        %v4385 = vadd.f32 %v335, %v4384
        %4386 = vmatmul.f32.gmra.mxu0 %v4049
        %v4387 = vpop.f32.mrf.mxu0
        %v4388 = vadd.f32 %v335, %v4387
        %4389 = vmatmul.f32.gmra.mxu0 %v4052
        %v4390 = vpop.f32.mrf.mxu0
        %v4391 = vadd.f32 %v335, %v4390
        %4392 = vmatmul.f32.gmra.mxu0 %v4055
        %v4393 = vpop.f32.mrf.mxu0
        %v4394 = vadd.f32 %v335, %v4393
        %4395 = vmatmul.f32.gmra.mxu0 %v4058
        %v4396 = vpop.f32.mrf.mxu0
        %v4397 = vadd.f32 %v335, %v4396
        %4398 = vdwg.mxu0
        %4399 = vmatpush.msra.mxu0 0.0
        %4400 = vmatpush.msra.mxu0 0.0
        %4401 = vmatpush.msra.mxu0 0.0
        %4402 = vmatpush.msra.mxu0 0.0
        %4403 = vmatpush.msra.mxu0 0.0
        %4404 = vmatpush.msra.mxu0 0.0
        %4405 = vmatpush.msra.mxu0 0.0
        %4406 = vmatpush.msra.mxu0 0.0
        %4407 = vmatpush.msra.mxu0 0.0
        %4408 = vmatpush.msra.mxu0 0.0
        %4409 = vmatpush.msra.mxu0 0.0
        %4410 = vmatpush.msra.mxu0 0.0
        %4411 = vmatpush.msra.mxu0 0.0
        %4412 = vmatpush.msra.mxu0 0.0
        %4413 = vmatpush.msra.mxu0 0.0
        %4414 = vmatpush.msra.mxu0 %v266
        %4415 = vmatmul.f32.gmra.mxu0 %v3965
        %v4416 = vpop.f32.mrf.mxu0
        %v4417 = vadd.f32 %v336, %v4416
        %4418 = vmatmul.f32.gmra.mxu0 %v3968
        %v4419 = vpop.f32.mrf.mxu0
        %v4420 = vadd.f32 %v336, %v4419
        %4421 = vmatmul.f32.gmra.mxu0 %v3971
        %v4422 = vpop.f32.mrf.mxu0
        %v4423 = vadd.f32 %v336, %v4422
        %4424 = vmatmul.f32.gmra.mxu0 %v3974
        %v4425 = vpop.f32.mrf.mxu0
        %v4426 = vadd.f32 %v336, %v4425
        %4427 = vmatmul.f32.gmra.mxu0 %v3977
        %v4428 = vpop.f32.mrf.mxu0
        %v4429 = vadd.f32 %v336, %v4428
        %4430 = vmatmul.f32.gmra.mxu0 %v3980
        %v4431 = vpop.f32.mrf.mxu0
        %v4432 = vadd.f32 %v336, %v4431
        %4433 = vmatmul.f32.gmra.mxu0 %v3983
        %v4434 = vpop.f32.mrf.mxu0
        %v4435 = vadd.f32 %v336, %v4434
        %4436 = vmatmul.f32.gmra.mxu0 %v3986
        %v4437 = vpop.f32.mrf.mxu0
        %v4438 = vadd.f32 %v336, %v4437
        %4439 = vmatmul.f32.gmra.mxu0 %v3989
        %v4440 = vpop.f32.mrf.mxu0
        %v4441 = vadd.f32 %v336, %v4440
        %4442 = vmatmul.f32.gmra.mxu0 %v3992
        %v4443 = vpop.f32.mrf.mxu0
        %v4444 = vadd.f32 %v336, %v4443
        %4445 = vmatmul.f32.gmra.mxu0 %v3995
        %v4446 = vpop.f32.mrf.mxu0
        %v4447 = vadd.f32 %v336, %v4446
        %4448 = vmatmul.f32.gmra.mxu0 %v3998
        %v4449 = vpop.f32.mrf.mxu0
        %v4450 = vadd.f32 %v336, %v4449
        %4451 = vmatmul.f32.gmra.mxu0 %v4001
        %v4452 = vpop.f32.mrf.mxu0
        %v4453 = vadd.f32 %v336, %v4452
        %4454 = vmatmul.f32.gmra.mxu0 %v4004
        %v4455 = vpop.f32.mrf.mxu0
        %v4456 = vadd.f32 %v336, %v4455
        %4457 = vmatmul.f32.gmra.mxu0 %v4007
        %v4458 = vpop.f32.mrf.mxu0
        %v4459 = vadd.f32 %v336, %v4458
        %4460 = vmatmul.f32.gmra.mxu0 %v4010
        %v4461 = vpop.f32.mrf.mxu0
        %v4462 = vadd.f32 %v336, %v4461
        %4463 = vmatmul.f32.gmra.mxu0 %v4013
        %v4464 = vpop.f32.mrf.mxu0
        %v4465 = vadd.f32 %v336, %v4464
        %4466 = vmatmul.f32.gmra.mxu0 %v4016
        %v4467 = vpop.f32.mrf.mxu0
        %v4468 = vadd.f32 %v336, %v4467
        %4469 = vmatmul.f32.gmra.mxu0 %v4019
        %v4470 = vpop.f32.mrf.mxu0
        %v4471 = vadd.f32 %v336, %v4470
        %4472 = vmatmul.f32.gmra.mxu0 %v4022
        %v4473 = vpop.f32.mrf.mxu0
        %v4474 = vadd.f32 %v336, %v4473
        %4475 = vmatmul.f32.gmra.mxu0 %v4025
        %v4476 = vpop.f32.mrf.mxu0
        %v4477 = vadd.f32 %v336, %v4476
        %4478 = vmatmul.f32.gmra.mxu0 %v4028
        %v4479 = vpop.f32.mrf.mxu0
        %v4480 = vadd.f32 %v336, %v4479
        %4481 = vmatmul.f32.gmra.mxu0 %v4031
        %v4482 = vpop.f32.mrf.mxu0
        %v4483 = vadd.f32 %v336, %v4482
        %4484 = vmatmul.f32.gmra.mxu0 %v4034
        %v4485 = vpop.f32.mrf.mxu0
        %v4486 = vadd.f32 %v336, %v4485
        %4487 = vmatmul.f32.gmra.mxu0 %v4037
        %v4488 = vpop.f32.mrf.mxu0
        %v4489 = vadd.f32 %v336, %v4488
        %4490 = vmatmul.f32.gmra.mxu0 %v4040
        %v4491 = vpop.f32.mrf.mxu0
        %v4492 = vadd.f32 %v336, %v4491
        %4493 = vmatmul.f32.gmra.mxu0 %v4043
        %v4494 = vpop.f32.mrf.mxu0
        %v4495 = vadd.f32 %v336, %v4494
        %4496 = vmatmul.f32.gmra.mxu0 %v4046
        %v4497 = vpop.f32.mrf.mxu0
        %v4498 = vadd.f32 %v336, %v4497
        %4499 = vmatmul.f32.gmra.mxu0 %v4049
        %v4500 = vpop.f32.mrf.mxu0
        %v4501 = vadd.f32 %v336, %v4500
        %4502 = vmatmul.f32.gmra.mxu0 %v4052
        %v4503 = vpop.f32.mrf.mxu0
        %v4504 = vadd.f32 %v336, %v4503
        %4505 = vmatmul.f32.gmra.mxu0 %v4055
        %v4506 = vpop.f32.mrf.mxu0
        %v4507 = vadd.f32 %v336, %v4506
        %4508 = vmatmul.f32.gmra.mxu0 %v4058
        %v4509 = vpop.f32.mrf.mxu0
        %v4510 = vadd.f32 %v336, %v4509
        %4511 = vdwg.mxu0
        %v4512 = vmax.f32 %v4078, 0.0
        %v4513 = vmax.f32 %v4191, 0.0
        %v4514 = vmax.f32 %v4304, 0.0
        %v4515 = vmax.f32 %v4417, 0.0
        %v4516 = vmax.f32 %v4081, 0.0
        %v4517 = vmax.f32 %v4194, 0.0
        %v4518 = vmax.f32 %v4307, 0.0
        %v4519 = vmax.f32 %v4420, 0.0
        %v4520 = vmax.f32 %v4084, 0.0
        %v4521 = vmax.f32 %v4197, 0.0
        %v4522 = vmax.f32 %v4310, 0.0
        %v4523 = vmax.f32 %v4423, 0.0
        %v4524 = vmax.f32 %v4087, 0.0
        %v4525 = vmax.f32 %v4200, 0.0
        %v4526 = vmax.f32 %v4313, 0.0
        %v4527 = vmax.f32 %v4426, 0.0
        %v4528 = vmax.f32 %v4090, 0.0
        %v4529 = vmax.f32 %v4203, 0.0
        %v4530 = vmax.f32 %v4316, 0.0
        %v4531 = vmax.f32 %v4429, 0.0
        %v4532 = vmax.f32 %v4093, 0.0
        %v4533 = vmax.f32 %v4206, 0.0
        %v4534 = vmax.f32 %v4319, 0.0
        %v4535 = vmax.f32 %v4432, 0.0
        %v4536 = vmax.f32 %v4096, 0.0
        %v4537 = vmax.f32 %v4209, 0.0
        %v4538 = vmax.f32 %v4322, 0.0
        %v4539 = vmax.f32 %v4435, 0.0
        %v4540 = vmax.f32 %v4099, 0.0
        %v4541 = vmax.f32 %v4212, 0.0
        %v4542 = vmax.f32 %v4325, 0.0
        %v4543 = vmax.f32 %v4438, 0.0
        %v4544 = vmax.f32 %v4102, 0.0
        %v4545 = vmax.f32 %v4215, 0.0
        %v4546 = vmax.f32 %v4328, 0.0
        %v4547 = vmax.f32 %v4441, 0.0
        %v4548 = vmax.f32 %v4105, 0.0
        %v4549 = vmax.f32 %v4218, 0.0
        %v4550 = vmax.f32 %v4331, 0.0
        %v4551 = vmax.f32 %v4444, 0.0
        %v4552 = vmax.f32 %v4108, 0.0
        %v4553 = vmax.f32 %v4221, 0.0
        %v4554 = vmax.f32 %v4334, 0.0
        %v4555 = vmax.f32 %v4447, 0.0
        %v4556 = vmax.f32 %v4111, 0.0
        %v4557 = vmax.f32 %v4224, 0.0
        %v4558 = vmax.f32 %v4337, 0.0
        %v4559 = vmax.f32 %v4450, 0.0
        %v4560 = vmax.f32 %v4114, 0.0
        %v4561 = vmax.f32 %v4227, 0.0
        %v4562 = vmax.f32 %v4340, 0.0
        %v4563 = vmax.f32 %v4453, 0.0
        %v4564 = vmax.f32 %v4117, 0.0
        %v4565 = vmax.f32 %v4230, 0.0
        %v4566 = vmax.f32 %v4343, 0.0
        %v4567 = vmax.f32 %v4456, 0.0
        %v4568 = vmax.f32 %v4120, 0.0
        %v4569 = vmax.f32 %v4233, 0.0
        %v4570 = vmax.f32 %v4346, 0.0
        %v4571 = vmax.f32 %v4459, 0.0
        %v4572 = vmax.f32 %v4123, 0.0
        %v4573 = vmax.f32 %v4236, 0.0
        %v4574 = vmax.f32 %v4349, 0.0
        %v4575 = vmax.f32 %v4462, 0.0
        %v4576 = vmax.f32 %v4126, 0.0
        %v4577 = vmax.f32 %v4239, 0.0
        %v4578 = vmax.f32 %v4352, 0.0
        %v4579 = vmax.f32 %v4465, 0.0
        %v4580 = vmax.f32 %v4129, 0.0
        %v4581 = vmax.f32 %v4242, 0.0
        %v4582 = vmax.f32 %v4355, 0.0
        %v4583 = vmax.f32 %v4468, 0.0
        %v4584 = vmax.f32 %v4132, 0.0
        %v4585 = vmax.f32 %v4245, 0.0
        %v4586 = vmax.f32 %v4358, 0.0
        %v4587 = vmax.f32 %v4471, 0.0
        %v4588 = vmax.f32 %v4135, 0.0
        %v4589 = vmax.f32 %v4248, 0.0
        %v4590 = vmax.f32 %v4361, 0.0
        %v4591 = vmax.f32 %v4474, 0.0
        %v4592 = vmax.f32 %v4138, 0.0
        %v4593 = vmax.f32 %v4251, 0.0
        %v4594 = vmax.f32 %v4364, 0.0
        %v4595 = vmax.f32 %v4477, 0.0
        %v4596 = vmax.f32 %v4141, 0.0
        %v4597 = vmax.f32 %v4254, 0.0
        %v4598 = vmax.f32 %v4367, 0.0
        %v4599 = vmax.f32 %v4480, 0.0
        %v4600 = vmax.f32 %v4144, 0.0
        %v4601 = vmax.f32 %v4257, 0.0
        %v4602 = vmax.f32 %v4370, 0.0
        %v4603 = vmax.f32 %v4483, 0.0
        %v4604 = vmax.f32 %v4147, 0.0
        %v4605 = vmax.f32 %v4260, 0.0
        %v4606 = vmax.f32 %v4373, 0.0
        %v4607 = vmax.f32 %v4486, 0.0
        %v4608 = vmax.f32 %v4150, 0.0
        %v4609 = vmax.f32 %v4263, 0.0
        %v4610 = vmax.f32 %v4376, 0.0
        %v4611 = vmax.f32 %v4489, 0.0
        %v4612 = vmax.f32 %v4153, 0.0
        %v4613 = vmax.f32 %v4266, 0.0
        %v4614 = vmax.f32 %v4379, 0.0
        %v4615 = vmax.f32 %v4492, 0.0
        %v4616 = vmax.f32 %v4156, 0.0
        %v4617 = vmax.f32 %v4269, 0.0
        %v4618 = vmax.f32 %v4382, 0.0
        %v4619 = vmax.f32 %v4495, 0.0
        %v4620 = vmax.f32 %v4159, 0.0
        %v4621 = vmax.f32 %v4272, 0.0
        %v4622 = vmax.f32 %v4385, 0.0
        %v4623 = vmax.f32 %v4498, 0.0
        %v4624 = vmax.f32 %v4162, 0.0
        %v4625 = vmax.f32 %v4275, 0.0
        %v4626 = vmax.f32 %v4388, 0.0
        %v4627 = vmax.f32 %v4501, 0.0
        %v4628 = vmax.f32 %v4165, 0.0
        %v4629 = vmax.f32 %v4278, 0.0
        %v4630 = vmax.f32 %v4391, 0.0
        %v4631 = vmax.f32 %v4504, 0.0
        %v4632 = vmax.f32 %v4168, 0.0
        %v4633 = vmax.f32 %v4281, 0.0
        %v4634 = vmax.f32 %v4394, 0.0
        %v4635 = vmax.f32 %v4507, 0.0
        %v4636 = vmax.f32 %v4171, 0.0
        %v4637 = vmax.f32 %v4284, 0.0
        %v4638 = vmax.f32 %v4397, 0.0
        %v4639 = vmax.f32 %v4510, 0.0
        %s4640 = scalar_lea.vmem %s236, 4 [#allocation8]
        %v4641 = vld [vmem:[%s4640] ss:$8 sm:$0xf]
        %v4642 = vadd.f32 %v4512, %v4516
        %v4643 = vadd.f32 %v4642, %v4520
        %v4644 = vadd.f32 %v4643, %v4524
        %v4645 = vadd.f32 %v4644, %v4528
        %v4646 = vadd.f32 %v4645, %v4532
        %v4647 = vadd.f32 %v4646, %v4536
        %v4648 = vadd.f32 %v4647, %v4540
        %v4649 = vadd.f32 %v4648, %v4544
        %v4650 = vadd.f32 %v4649, %v4548
        %v4651 = vadd.f32 %v4650, %v4552
        %v4652 = vadd.f32 %v4651, %v4556
        %v4653 = vadd.f32 %v4652, %v4560
        %v4654 = vadd.f32 %v4653, %v4564
        %v4655 = vadd.f32 %v4654, %v4568
        %v4656 = vadd.f32 %v4655, %v4572
        %v4657 = vadd.f32 %v4656, %v4576
        %v4658 = vadd.f32 %v4657, %v4580
        %v4659 = vadd.f32 %v4658, %v4584
        %v4660 = vadd.f32 %v4659, %v4588
        %v4661 = vadd.f32 %v4660, %v4592
        %v4662 = vadd.f32 %v4661, %v4596
        %v4663 = vadd.f32 %v4662, %v4600
        %v4664 = vadd.f32 %v4663, %v4604
        %v4665 = vadd.f32 %v4664, %v4608
        %v4666 = vadd.f32 %v4665, %v4612
        %v4667 = vadd.f32 %v4666, %v4616
        %v4668 = vadd.f32 %v4667, %v4620
        %v4669 = vadd.f32 %v4668, %v4624
        %v4670 = vadd.f32 %v4669, %v4628
        %v4671 = vadd.f32 %v4670, %v4632
        %v4672 = vadd.f32 %v4671, %v4636
        %v4673 = vrot.slane %v4672, 4
        %v4674 = vadd.f32 %v4672, %v4673
        %v4675 = vrot.slane %v4674, 2
        %v4676 = vadd.f32 %v4674, %v4675
        %v4677 = vrot.slane %v4676, 1
        %v4678 = vadd.f32 %v4676, %v4677
        %v4679 = vadd.f32 %v4513, %v4517
        %v4680 = vadd.f32 %v4679, %v4521
        %v4681 = vadd.f32 %v4680, %v4525
        %v4682 = vadd.f32 %v4681, %v4529
        %v4683 = vadd.f32 %v4682, %v4533
        %v4684 = vadd.f32 %v4683, %v4537
        %v4685 = vadd.f32 %v4684, %v4541
        %v4686 = vadd.f32 %v4685, %v4545
        %v4687 = vadd.f32 %v4686, %v4549
        %v4688 = vadd.f32 %v4687, %v4553
        %v4689 = vadd.f32 %v4688, %v4557
        %v4690 = vadd.f32 %v4689, %v4561
        %v4691 = vadd.f32 %v4690, %v4565
        %v4692 = vadd.f32 %v4691, %v4569
        %v4693 = vadd.f32 %v4692, %v4573
        %v4694 = vadd.f32 %v4693, %v4577
        %v4695 = vadd.f32 %v4694, %v4581
        %v4696 = vadd.f32 %v4695, %v4585
        %v4697 = vadd.f32 %v4696, %v4589
        %v4698 = vadd.f32 %v4697, %v4593
        %v4699 = vadd.f32 %v4698, %v4597
        %v4700 = vadd.f32 %v4699, %v4601
        %v4701 = vadd.f32 %v4700, %v4605
        %v4702 = vadd.f32 %v4701, %v4609
        %v4703 = vadd.f32 %v4702, %v4613
        %v4704 = vadd.f32 %v4703, %v4617
        %v4705 = vadd.f32 %v4704, %v4621
        %v4706 = vadd.f32 %v4705, %v4625
        %v4707 = vadd.f32 %v4706, %v4629
        %v4708 = vadd.f32 %v4707, %v4633
        %v4709 = vadd.f32 %v4708, %v4637
        %v4710 = vrot.slane %v4709, 4
        %v4711 = vadd.f32 %v4709, %v4710
        %v4712 = vrot.slane %v4711, 2
        %v4713 = vadd.f32 %v4711, %v4712
        %v4714 = vrot.slane %v4713, 1
        %v4715 = vadd.f32 %v4713, %v4714
        %v4716 = vadd.f32 %v4514, %v4518
        %v4717 = vadd.f32 %v4716, %v4522
        %v4718 = vadd.f32 %v4717, %v4526
        %v4719 = vadd.f32 %v4718, %v4530
        %v4720 = vadd.f32 %v4719, %v4534
        %v4721 = vadd.f32 %v4720, %v4538
        %v4722 = vadd.f32 %v4721, %v4542
        %v4723 = vadd.f32 %v4722, %v4546
        %v4724 = vadd.f32 %v4723, %v4550
        %v4725 = vadd.f32 %v4724, %v4554
        %v4726 = vadd.f32 %v4725, %v4558
        %v4727 = vadd.f32 %v4726, %v4562
        %v4728 = vadd.f32 %v4727, %v4566
        %v4729 = vadd.f32 %v4728, %v4570
        %v4730 = vadd.f32 %v4729, %v4574
        %v4731 = vadd.f32 %v4730, %v4578
        %v4732 = vadd.f32 %v4731, %v4582
        %v4733 = vadd.f32 %v4732, %v4586
        %v4734 = vadd.f32 %v4733, %v4590
        %v4735 = vadd.f32 %v4734, %v4594
        %v4736 = vadd.f32 %v4735, %v4598
        %v4737 = vadd.f32 %v4736, %v4602
        %v4738 = vadd.f32 %v4737, %v4606
        %v4739 = vadd.f32 %v4738, %v4610
        %v4740 = vadd.f32 %v4739, %v4614
        %v4741 = vadd.f32 %v4740, %v4618
        %v4742 = vadd.f32 %v4741, %v4622
        %v4743 = vadd.f32 %v4742, %v4626
        %v4744 = vadd.f32 %v4743, %v4630
        %v4745 = vadd.f32 %v4744, %v4634
        %v4746 = vadd.f32 %v4745, %v4638
        %v4747 = vrot.slane %v4746, 4
        %v4748 = vadd.f32 %v4746, %v4747
        %v4749 = vrot.slane %v4748, 2
        %v4750 = vadd.f32 %v4748, %v4749
        %v4751 = vrot.slane %v4750, 1
        %v4752 = vadd.f32 %v4750, %v4751
        %v4753 = vadd.f32 %v4515, %v4519
        %v4754 = vadd.f32 %v4753, %v4523
        %v4755 = vadd.f32 %v4754, %v4527
        %v4756 = vadd.f32 %v4755, %v4531
        %v4757 = vadd.f32 %v4756, %v4535
        %v4758 = vadd.f32 %v4757, %v4539
        %v4759 = vadd.f32 %v4758, %v4543
        %v4760 = vadd.f32 %v4759, %v4547
        %v4761 = vadd.f32 %v4760, %v4551
        %v4762 = vadd.f32 %v4761, %v4555
        %v4763 = vadd.f32 %v4762, %v4559
        %v4764 = vadd.f32 %v4763, %v4563
        %v4765 = vadd.f32 %v4764, %v4567
        %v4766 = vadd.f32 %v4765, %v4571
        %v4767 = vadd.f32 %v4766, %v4575
        %v4768 = vadd.f32 %v4767, %v4579
        %v4769 = vadd.f32 %v4768, %v4583
        %v4770 = vadd.f32 %v4769, %v4587
        %v4771 = vadd.f32 %v4770, %v4591
        %v4772 = vadd.f32 %v4771, %v4595
        %v4773 = vadd.f32 %v4772, %v4599
        %v4774 = vadd.f32 %v4773, %v4603
        %v4775 = vadd.f32 %v4774, %v4607
        %v4776 = vadd.f32 %v4775, %v4611
        %v4777 = vadd.f32 %v4776, %v4615
        %v4778 = vadd.f32 %v4777, %v4619
        %v4779 = vadd.f32 %v4778, %v4623
        %v4780 = vadd.f32 %v4779, %v4627
        %v4781 = vadd.f32 %v4780, %v4631
        %v4782 = vadd.f32 %v4781, %v4635
        %v4783 = vadd.f32 %v4782, %v4639
        %v4784 = vrot.slane %v4783, 4
        %v4785 = vadd.f32 %v4783, %v4784
        %v4786 = vrot.slane %v4785, 2
        %v4787 = vadd.f32 %v4785, %v4786
        %v4788 = vrot.slane %v4787, 1
        %v4789 = vadd.f32 %v4787, %v4788
        %v4794 = vrot.slane %v4715, 7
        %v4795 = vrot.slane %v4752, 6
        %v4796 = vrot.slane %v4789, 5
        %v4797 = vsel %vm1174, %v4678, %v4794
        %v4798 = vsel %vm1176, %v4795, %v4796
        %v4799 = vsel %vm1178, %v4797, %v4798
        %v4801 = vadd.f32 %v4641, %v4799
        %4802 = vst.msk [vmem:[%s4640] ss:$8 sm:$0xf] %vm1185, %v4801
        %4803 = vst.msk [vmem:[%s4640] ss:$8 sm:$0x0] %vm1185, %v4801
        %4804 = vxpose.xlu0.b32.start [1/16] %v257, 128
        %4805 = vxpose.xlu0.b32.cont [2/16] 0.0, 128
        %4806 = vxpose.xlu0.b32.cont [3/16] 0.0, 128
        %4807 = vxpose.xlu0.b32.cont [4/16] 0.0, 128
        %4808 = vxpose.xlu0.b32.cont [5/16] 0.0, 128
        %4809 = vxpose.xlu0.b32.cont [6/16] 0.0, 128
        %4810 = vxpose.xlu0.b32.cont [7/16] 0.0, 128
        %4811 = vxpose.xlu0.b32.cont [8/16] 0.0, 128
        %4812 = vxpose.xlu0.b32.cont [9/16] 0.0, 128
        %4813 = vxpose.xlu0.b32.cont [10/16] 0.0, 128
        %4814 = vxpose.xlu0.b32.cont [11/16] 0.0, 128
        %4815 = vxpose.xlu0.b32.cont [12/16] 0.0, 128
        %4816 = vxpose.xlu0.b32.cont [13/16] 0.0, 128
        %4817 = vxpose.xlu0.b32.cont [14/16] 0.0, 128
        %4818 = vxpose.xlu0.b32.cont [15/16] 0.0, 128
        %4819 = vxpose.xlu0.b32.end [16/16] 0.0, 128
        %v4820 = vpop.trf.xlu0
        %v4821 = vpop.trf.xlu0
        %v4822 = vpop.trf.xlu0
        %v4823 = vpop.trf.xlu0
        %v4824 = vpop.trf.xlu0
        %v4825 = vpop.trf.xlu0
        %v4826 = vpop.trf.xlu0
        %v4827 = vpop.trf.xlu0
        %v4828 = vpop.trf.xlu0
        %v4829 = vpop.trf.xlu0
        %v4830 = vpop.trf.xlu0
        %v4831 = vpop.trf.xlu0
        %v4832 = vpop.trf.xlu0
        %v4833 = vpop.trf.xlu0
        %v4834 = vpop.trf.xlu0
        %v4835 = vpop.trf.xlu0
        %4836 = vxpose.xlu0.b32.start [1/16] %v258, 128
        %4837 = vxpose.xlu0.b32.cont [2/16] 0.0, 128
        %4838 = vxpose.xlu0.b32.cont [3/16] 0.0, 128
        %4839 = vxpose.xlu0.b32.cont [4/16] 0.0, 128
        %4840 = vxpose.xlu0.b32.cont [5/16] 0.0, 128
        %4841 = vxpose.xlu0.b32.cont [6/16] 0.0, 128
        %4842 = vxpose.xlu0.b32.cont [7/16] 0.0, 128
        %4843 = vxpose.xlu0.b32.cont [8/16] 0.0, 128
        %4844 = vxpose.xlu0.b32.cont [9/16] 0.0, 128
        %4845 = vxpose.xlu0.b32.cont [10/16] 0.0, 128
        %4846 = vxpose.xlu0.b32.cont [11/16] 0.0, 128
        %4847 = vxpose.xlu0.b32.cont [12/16] 0.0, 128
        %4848 = vxpose.xlu0.b32.cont [13/16] 0.0, 128
        %4849 = vxpose.xlu0.b32.cont [14/16] 0.0, 128
        %4850 = vxpose.xlu0.b32.cont [15/16] 0.0, 128
        %4851 = vxpose.xlu0.b32.end [16/16] 0.0, 128
        %v4852 = vpop.trf.xlu0
        %v4853 = vpop.trf.xlu0
        %v4854 = vpop.trf.xlu0
        %v4855 = vpop.trf.xlu0
        %v4856 = vpop.trf.xlu0
        %v4857 = vpop.trf.xlu0
        %v4858 = vpop.trf.xlu0
        %v4859 = vpop.trf.xlu0
        %v4860 = vpop.trf.xlu0
        %v4861 = vpop.trf.xlu0
        %v4862 = vpop.trf.xlu0
        %v4863 = vpop.trf.xlu0
        %v4864 = vpop.trf.xlu0
        %v4865 = vpop.trf.xlu0
        %v4866 = vpop.trf.xlu0
        %v4867 = vpop.trf.xlu0
        %v4869 = vsel %vm341, %v4820, 0
        %v4872 = vsel %vm341, %v4821, 0
        %v4875 = vsel %vm341, %v4822, 0
        %v4878 = vsel %vm341, %v4823, 0
        %v4881 = vsel %vm341, %v4824, 0
        %v4884 = vsel %vm341, %v4825, 0
        %v4887 = vsel %vm341, %v4826, 0
        %v4890 = vsel %vm341, %v4827, 0
        %v4893 = vsel %vm341, %v4828, 0
        %v4896 = vsel %vm341, %v4829, 0
        %v4899 = vsel %vm341, %v4830, 0
        %v4902 = vsel %vm341, %v4831, 0
        %v4905 = vsel %vm341, %v4832, 0
        %v4908 = vsel %vm341, %v4833, 0
        %v4911 = vsel %vm341, %v4834, 0
        %v4914 = vsel %vm341, %v4835, 0
        %v4917 = vsel %vm341, %v4852, 0
        %v4920 = vsel %vm341, %v4853, 0
        %v4923 = vsel %vm341, %v4854, 0
        %v4926 = vsel %vm341, %v4855, 0
        %v4929 = vsel %vm341, %v4856, 0
        %v4932 = vsel %vm341, %v4857, 0
        %v4935 = vsel %vm341, %v4858, 0
        %v4938 = vsel %vm341, %v4859, 0
        %v4941 = vsel %vm341, %v4860, 0
        %v4944 = vsel %vm341, %v4861, 0
        %v4947 = vsel %vm341, %v4862, 0
        %v4950 = vsel %vm341, %v4863, 0
        %v4953 = vsel %vm341, %v4864, 0
        %v4956 = vsel %vm341, %v4865, 0
        %v4959 = vsel %vm341, %v4866, 0
        %v4962 = vsel %vm341, %v4867, 0
        %4964 = vmatpush.msra.mxu0 0.0
        %4965 = vmatpush.msra.mxu0 0.0
        %4966 = vmatpush.msra.mxu0 0.0
        %4967 = vmatpush.msra.mxu0 0.0
        %4968 = vmatpush.msra.mxu0 0.0
        %4969 = vmatpush.msra.mxu0 0.0
        %4970 = vmatpush.msra.mxu0 0.0
        %4971 = vmatpush.msra.mxu0 0.0
        %4972 = vmatpush.msra.mxu0 0.0
        %4973 = vmatpush.msra.mxu0 0.0
        %4974 = vmatpush.msra.mxu0 0.0
        %4975 = vmatpush.msra.mxu0 0.0
        %4976 = vmatpush.msra.mxu0 0.0
        %4977 = vmatpush.msra.mxu0 0.0
        %4978 = vmatpush.msra.mxu0 0.0
        %4979 = vmatpush.msra.mxu0 %v263
        %4980 = vmatmul.f32.gmra.mxu0 %v4869
        %v4981 = vpop.f32.mrf.mxu0
        %v4982 = vadd.f32 %v333, %v4981
        %4983 = vmatmul.f32.gmra.mxu0 %v4872
        %v4984 = vpop.f32.mrf.mxu0
        %v4985 = vadd.f32 %v333, %v4984
        %4986 = vmatmul.f32.gmra.mxu0 %v4875
        %v4987 = vpop.f32.mrf.mxu0
        %v4988 = vadd.f32 %v333, %v4987
        %4989 = vmatmul.f32.gmra.mxu0 %v4878
        %v4990 = vpop.f32.mrf.mxu0
        %v4991 = vadd.f32 %v333, %v4990
        %4992 = vmatmul.f32.gmra.mxu0 %v4881
        %v4993 = vpop.f32.mrf.mxu0
        %v4994 = vadd.f32 %v333, %v4993
        %4995 = vmatmul.f32.gmra.mxu0 %v4884
        %v4996 = vpop.f32.mrf.mxu0
        %v4997 = vadd.f32 %v333, %v4996
        %4998 = vmatmul.f32.gmra.mxu0 %v4887
        %v4999 = vpop.f32.mrf.mxu0
        %v5000 = vadd.f32 %v333, %v4999
        %5001 = vmatmul.f32.gmra.mxu0 %v4890
        %v5002 = vpop.f32.mrf.mxu0
        %v5003 = vadd.f32 %v333, %v5002
        %5004 = vmatmul.f32.gmra.mxu0 %v4893
        %v5005 = vpop.f32.mrf.mxu0
        %v5006 = vadd.f32 %v333, %v5005
        %5007 = vmatmul.f32.gmra.mxu0 %v4896
        %v5008 = vpop.f32.mrf.mxu0
        %v5009 = vadd.f32 %v333, %v5008
        %5010 = vmatmul.f32.gmra.mxu0 %v4899
        %v5011 = vpop.f32.mrf.mxu0
        %v5012 = vadd.f32 %v333, %v5011
        %5013 = vmatmul.f32.gmra.mxu0 %v4902
        %v5014 = vpop.f32.mrf.mxu0
        %v5015 = vadd.f32 %v333, %v5014
        %5016 = vmatmul.f32.gmra.mxu0 %v4905
        %v5017 = vpop.f32.mrf.mxu0
        %v5018 = vadd.f32 %v333, %v5017
        %5019 = vmatmul.f32.gmra.mxu0 %v4908
        %v5020 = vpop.f32.mrf.mxu0
        %v5021 = vadd.f32 %v333, %v5020
        %5022 = vmatmul.f32.gmra.mxu0 %v4911
        %v5023 = vpop.f32.mrf.mxu0
        %v5024 = vadd.f32 %v333, %v5023
        %5025 = vmatmul.f32.gmra.mxu0 %v4914
        %v5026 = vpop.f32.mrf.mxu0
        %v5027 = vadd.f32 %v333, %v5026
        %5028 = vmatmul.f32.gmra.mxu0 %v4917
        %v5029 = vpop.f32.mrf.mxu0
        %v5030 = vadd.f32 %v333, %v5029
        %5031 = vmatmul.f32.gmra.mxu0 %v4920
        %v5032 = vpop.f32.mrf.mxu0
        %v5033 = vadd.f32 %v333, %v5032
        %5034 = vmatmul.f32.gmra.mxu0 %v4923
        %v5035 = vpop.f32.mrf.mxu0
        %v5036 = vadd.f32 %v333, %v5035
        %5037 = vmatmul.f32.gmra.mxu0 %v4926
        %v5038 = vpop.f32.mrf.mxu0
        %v5039 = vadd.f32 %v333, %v5038
        %5040 = vmatmul.f32.gmra.mxu0 %v4929
        %v5041 = vpop.f32.mrf.mxu0
        %v5042 = vadd.f32 %v333, %v5041
        %5043 = vmatmul.f32.gmra.mxu0 %v4932
        %v5044 = vpop.f32.mrf.mxu0
        %v5045 = vadd.f32 %v333, %v5044
        %5046 = vmatmul.f32.gmra.mxu0 %v4935
        %v5047 = vpop.f32.mrf.mxu0
        %v5048 = vadd.f32 %v333, %v5047
        %5049 = vmatmul.f32.gmra.mxu0 %v4938
        %v5050 = vpop.f32.mrf.mxu0
        %v5051 = vadd.f32 %v333, %v5050
        %5052 = vmatmul.f32.gmra.mxu0 %v4941
        %v5053 = vpop.f32.mrf.mxu0
        %v5054 = vadd.f32 %v333, %v5053
        %5055 = vmatmul.f32.gmra.mxu0 %v4944
        %v5056 = vpop.f32.mrf.mxu0
        %v5057 = vadd.f32 %v333, %v5056
        %5058 = vmatmul.f32.gmra.mxu0 %v4947
        %v5059 = vpop.f32.mrf.mxu0
        %v5060 = vadd.f32 %v333, %v5059
        %5061 = vmatmul.f32.gmra.mxu0 %v4950
        %v5062 = vpop.f32.mrf.mxu0
        %v5063 = vadd.f32 %v333, %v5062
        %5064 = vmatmul.f32.gmra.mxu0 %v4953
        %v5065 = vpop.f32.mrf.mxu0
        %v5066 = vadd.f32 %v333, %v5065
        %5067 = vmatmul.f32.gmra.mxu0 %v4956
        %v5068 = vpop.f32.mrf.mxu0
        %v5069 = vadd.f32 %v333, %v5068
        %5070 = vmatmul.f32.gmra.mxu0 %v4959
        %v5071 = vpop.f32.mrf.mxu0
        %v5072 = vadd.f32 %v333, %v5071
        %5073 = vmatmul.f32.gmra.mxu0 %v4962
        %v5074 = vpop.f32.mrf.mxu0
        %v5075 = vadd.f32 %v333, %v5074
        %5076 = vdwg.mxu0
        %5077 = vmatpush.msra.mxu0 0.0
        %5078 = vmatpush.msra.mxu0 0.0
        %5079 = vmatpush.msra.mxu0 0.0
        %5080 = vmatpush.msra.mxu0 0.0
        %5081 = vmatpush.msra.mxu0 0.0
        %5082 = vmatpush.msra.mxu0 0.0
        %5083 = vmatpush.msra.mxu0 0.0
        %5084 = vmatpush.msra.mxu0 0.0
        %5085 = vmatpush.msra.mxu0 0.0
        %5086 = vmatpush.msra.mxu0 0.0
        %5087 = vmatpush.msra.mxu0 0.0
        %5088 = vmatpush.msra.mxu0 0.0
        %5089 = vmatpush.msra.mxu0 0.0
        %5090 = vmatpush.msra.mxu0 0.0
        %5091 = vmatpush.msra.mxu0 0.0
        %5092 = vmatpush.msra.mxu0 %v264
        %5093 = vmatmul.f32.gmra.mxu0 %v4869
        %v5094 = vpop.f32.mrf.mxu0
        %v5095 = vadd.f32 %v334, %v5094
        %5096 = vmatmul.f32.gmra.mxu0 %v4872
        %v5097 = vpop.f32.mrf.mxu0
        %v5098 = vadd.f32 %v334, %v5097
        %5099 = vmatmul.f32.gmra.mxu0 %v4875
        %v5100 = vpop.f32.mrf.mxu0
        %v5101 = vadd.f32 %v334, %v5100
        %5102 = vmatmul.f32.gmra.mxu0 %v4878
        %v5103 = vpop.f32.mrf.mxu0
        %v5104 = vadd.f32 %v334, %v5103
        %5105 = vmatmul.f32.gmra.mxu0 %v4881
        %v5106 = vpop.f32.mrf.mxu0
        %v5107 = vadd.f32 %v334, %v5106
        %5108 = vmatmul.f32.gmra.mxu0 %v4884
        %v5109 = vpop.f32.mrf.mxu0
        %v5110 = vadd.f32 %v334, %v5109
        %5111 = vmatmul.f32.gmra.mxu0 %v4887
        %v5112 = vpop.f32.mrf.mxu0
        %v5113 = vadd.f32 %v334, %v5112
        %5114 = vmatmul.f32.gmra.mxu0 %v4890
        %v5115 = vpop.f32.mrf.mxu0
        %v5116 = vadd.f32 %v334, %v5115
        %5117 = vmatmul.f32.gmra.mxu0 %v4893
        %v5118 = vpop.f32.mrf.mxu0
        %v5119 = vadd.f32 %v334, %v5118
        %5120 = vmatmul.f32.gmra.mxu0 %v4896
        %v5121 = vpop.f32.mrf.mxu0
        %v5122 = vadd.f32 %v334, %v5121
        %5123 = vmatmul.f32.gmra.mxu0 %v4899
        %v5124 = vpop.f32.mrf.mxu0
        %v5125 = vadd.f32 %v334, %v5124
        %5126 = vmatmul.f32.gmra.mxu0 %v4902
        %v5127 = vpop.f32.mrf.mxu0
        %v5128 = vadd.f32 %v334, %v5127
        %5129 = vmatmul.f32.gmra.mxu0 %v4905
        %v5130 = vpop.f32.mrf.mxu0
        %v5131 = vadd.f32 %v334, %v5130
        %5132 = vmatmul.f32.gmra.mxu0 %v4908
        %v5133 = vpop.f32.mrf.mxu0
        %v5134 = vadd.f32 %v334, %v5133
        %5135 = vmatmul.f32.gmra.mxu0 %v4911
        %v5136 = vpop.f32.mrf.mxu0
        %v5137 = vadd.f32 %v334, %v5136
        %5138 = vmatmul.f32.gmra.mxu0 %v4914
        %v5139 = vpop.f32.mrf.mxu0
        %v5140 = vadd.f32 %v334, %v5139
        %5141 = vmatmul.f32.gmra.mxu0 %v4917
        %v5142 = vpop.f32.mrf.mxu0
        %v5143 = vadd.f32 %v334, %v5142
        %5144 = vmatmul.f32.gmra.mxu0 %v4920
        %v5145 = vpop.f32.mrf.mxu0
        %v5146 = vadd.f32 %v334, %v5145
        %5147 = vmatmul.f32.gmra.mxu0 %v4923
        %v5148 = vpop.f32.mrf.mxu0
        %v5149 = vadd.f32 %v334, %v5148
        %5150 = vmatmul.f32.gmra.mxu0 %v4926
        %v5151 = vpop.f32.mrf.mxu0
        %v5152 = vadd.f32 %v334, %v5151
        %5153 = vmatmul.f32.gmra.mxu0 %v4929
        %v5154 = vpop.f32.mrf.mxu0
        %v5155 = vadd.f32 %v334, %v5154
        %5156 = vmatmul.f32.gmra.mxu0 %v4932
        %v5157 = vpop.f32.mrf.mxu0
        %v5158 = vadd.f32 %v334, %v5157
        %5159 = vmatmul.f32.gmra.mxu0 %v4935
        %v5160 = vpop.f32.mrf.mxu0
        %v5161 = vadd.f32 %v334, %v5160
        %5162 = vmatmul.f32.gmra.mxu0 %v4938
        %v5163 = vpop.f32.mrf.mxu0
        %v5164 = vadd.f32 %v334, %v5163
        %5165 = vmatmul.f32.gmra.mxu0 %v4941
        %v5166 = vpop.f32.mrf.mxu0
        %v5167 = vadd.f32 %v334, %v5166
        %5168 = vmatmul.f32.gmra.mxu0 %v4944
        %v5169 = vpop.f32.mrf.mxu0
        %v5170 = vadd.f32 %v334, %v5169
        %5171 = vmatmul.f32.gmra.mxu0 %v4947
        %v5172 = vpop.f32.mrf.mxu0
        %v5173 = vadd.f32 %v334, %v5172
        %5174 = vmatmul.f32.gmra.mxu0 %v4950
        %v5175 = vpop.f32.mrf.mxu0
        %v5176 = vadd.f32 %v334, %v5175
        %5177 = vmatmul.f32.gmra.mxu0 %v4953
        %v5178 = vpop.f32.mrf.mxu0
        %v5179 = vadd.f32 %v334, %v5178
        %5180 = vmatmul.f32.gmra.mxu0 %v4956
        %v5181 = vpop.f32.mrf.mxu0
        %v5182 = vadd.f32 %v334, %v5181
        %5183 = vmatmul.f32.gmra.mxu0 %v4959
        %v5184 = vpop.f32.mrf.mxu0
        %v5185 = vadd.f32 %v334, %v5184
        %5186 = vmatmul.f32.gmra.mxu0 %v4962
        %v5187 = vpop.f32.mrf.mxu0
        %v5188 = vadd.f32 %v334, %v5187
        %5189 = vdwg.mxu0
        %5190 = vmatpush.msra.mxu0 0.0
        %5191 = vmatpush.msra.mxu0 0.0
        %5192 = vmatpush.msra.mxu0 0.0
        %5193 = vmatpush.msra.mxu0 0.0
        %5194 = vmatpush.msra.mxu0 0.0
        %5195 = vmatpush.msra.mxu0 0.0
        %5196 = vmatpush.msra.mxu0 0.0
        %5197 = vmatpush.msra.mxu0 0.0
        %5198 = vmatpush.msra.mxu0 0.0
        %5199 = vmatpush.msra.mxu0 0.0
        %5200 = vmatpush.msra.mxu0 0.0
        %5201 = vmatpush.msra.mxu0 0.0
        %5202 = vmatpush.msra.mxu0 0.0
        %5203 = vmatpush.msra.mxu0 0.0
        %5204 = vmatpush.msra.mxu0 0.0
        %5205 = vmatpush.msra.mxu0 %v265
        %5206 = vmatmul.f32.gmra.mxu0 %v4869
        %v5207 = vpop.f32.mrf.mxu0
        %v5208 = vadd.f32 %v335, %v5207
        %5209 = vmatmul.f32.gmra.mxu0 %v4872
        %v5210 = vpop.f32.mrf.mxu0
        %v5211 = vadd.f32 %v335, %v5210
        %5212 = vmatmul.f32.gmra.mxu0 %v4875
        %v5213 = vpop.f32.mrf.mxu0
        %v5214 = vadd.f32 %v335, %v5213
        %5215 = vmatmul.f32.gmra.mxu0 %v4878
        %v5216 = vpop.f32.mrf.mxu0
        %v5217 = vadd.f32 %v335, %v5216
        %5218 = vmatmul.f32.gmra.mxu0 %v4881
        %v5219 = vpop.f32.mrf.mxu0
        %v5220 = vadd.f32 %v335, %v5219
        %5221 = vmatmul.f32.gmra.mxu0 %v4884
        %v5222 = vpop.f32.mrf.mxu0
        %v5223 = vadd.f32 %v335, %v5222
        %5224 = vmatmul.f32.gmra.mxu0 %v4887
        %v5225 = vpop.f32.mrf.mxu0
        %v5226 = vadd.f32 %v335, %v5225
        %5227 = vmatmul.f32.gmra.mxu0 %v4890
        %v5228 = vpop.f32.mrf.mxu0
        %v5229 = vadd.f32 %v335, %v5228
        %5230 = vmatmul.f32.gmra.mxu0 %v4893
        %v5231 = vpop.f32.mrf.mxu0
        %v5232 = vadd.f32 %v335, %v5231
        %5233 = vmatmul.f32.gmra.mxu0 %v4896
        %v5234 = vpop.f32.mrf.mxu0
        %v5235 = vadd.f32 %v335, %v5234
        %5236 = vmatmul.f32.gmra.mxu0 %v4899
        %v5237 = vpop.f32.mrf.mxu0
        %v5238 = vadd.f32 %v335, %v5237
        %5239 = vmatmul.f32.gmra.mxu0 %v4902
        %v5240 = vpop.f32.mrf.mxu0
        %v5241 = vadd.f32 %v335, %v5240
        %5242 = vmatmul.f32.gmra.mxu0 %v4905
        %v5243 = vpop.f32.mrf.mxu0
        %v5244 = vadd.f32 %v335, %v5243
        %5245 = vmatmul.f32.gmra.mxu0 %v4908
        %v5246 = vpop.f32.mrf.mxu0
        %v5247 = vadd.f32 %v335, %v5246
        %5248 = vmatmul.f32.gmra.mxu0 %v4911
        %v5249 = vpop.f32.mrf.mxu0
        %v5250 = vadd.f32 %v335, %v5249
        %5251 = vmatmul.f32.gmra.mxu0 %v4914
        %v5252 = vpop.f32.mrf.mxu0
        %v5253 = vadd.f32 %v335, %v5252
        %5254 = vmatmul.f32.gmra.mxu0 %v4917
        %v5255 = vpop.f32.mrf.mxu0
        %v5256 = vadd.f32 %v335, %v5255
        %5257 = vmatmul.f32.gmra.mxu0 %v4920
        %v5258 = vpop.f32.mrf.mxu0
        %v5259 = vadd.f32 %v335, %v5258
        %5260 = vmatmul.f32.gmra.mxu0 %v4923
        %v5261 = vpop.f32.mrf.mxu0
        %v5262 = vadd.f32 %v335, %v5261
        %5263 = vmatmul.f32.gmra.mxu0 %v4926
        %v5264 = vpop.f32.mrf.mxu0
        %v5265 = vadd.f32 %v335, %v5264
        %5266 = vmatmul.f32.gmra.mxu0 %v4929
        %v5267 = vpop.f32.mrf.mxu0
        %v5268 = vadd.f32 %v335, %v5267
        %5269 = vmatmul.f32.gmra.mxu0 %v4932
        %v5270 = vpop.f32.mrf.mxu0
        %v5271 = vadd.f32 %v335, %v5270
        %5272 = vmatmul.f32.gmra.mxu0 %v4935
        %v5273 = vpop.f32.mrf.mxu0
        %v5274 = vadd.f32 %v335, %v5273
        %5275 = vmatmul.f32.gmra.mxu0 %v4938
        %v5276 = vpop.f32.mrf.mxu0
        %v5277 = vadd.f32 %v335, %v5276
        %5278 = vmatmul.f32.gmra.mxu0 %v4941
        %v5279 = vpop.f32.mrf.mxu0
        %v5280 = vadd.f32 %v335, %v5279
        %5281 = vmatmul.f32.gmra.mxu0 %v4944
        %v5282 = vpop.f32.mrf.mxu0
        %v5283 = vadd.f32 %v335, %v5282
        %5284 = vmatmul.f32.gmra.mxu0 %v4947
        %v5285 = vpop.f32.mrf.mxu0
        %v5286 = vadd.f32 %v335, %v5285
        %5287 = vmatmul.f32.gmra.mxu0 %v4950
        %v5288 = vpop.f32.mrf.mxu0
        %v5289 = vadd.f32 %v335, %v5288
        %5290 = vmatmul.f32.gmra.mxu0 %v4953
        %v5291 = vpop.f32.mrf.mxu0
        %v5292 = vadd.f32 %v335, %v5291
        %5293 = vmatmul.f32.gmra.mxu0 %v4956
        %v5294 = vpop.f32.mrf.mxu0
        %v5295 = vadd.f32 %v335, %v5294
        %5296 = vmatmul.f32.gmra.mxu0 %v4959
        %v5297 = vpop.f32.mrf.mxu0
        %v5298 = vadd.f32 %v335, %v5297
        %5299 = vmatmul.f32.gmra.mxu0 %v4962
        %v5300 = vpop.f32.mrf.mxu0
        %v5301 = vadd.f32 %v335, %v5300
        %5302 = vdwg.mxu0
        %5303 = vmatpush.msra.mxu0 0.0
        %5304 = vmatpush.msra.mxu0 0.0
        %5305 = vmatpush.msra.mxu0 0.0
        %5306 = vmatpush.msra.mxu0 0.0
        %5307 = vmatpush.msra.mxu0 0.0
        %5308 = vmatpush.msra.mxu0 0.0
        %5309 = vmatpush.msra.mxu0 0.0
        %5310 = vmatpush.msra.mxu0 0.0
        %5311 = vmatpush.msra.mxu0 0.0
        %5312 = vmatpush.msra.mxu0 0.0
        %5313 = vmatpush.msra.mxu0 0.0
        %5314 = vmatpush.msra.mxu0 0.0
        %5315 = vmatpush.msra.mxu0 0.0
        %5316 = vmatpush.msra.mxu0 0.0
        %5317 = vmatpush.msra.mxu0 0.0
        %5318 = vmatpush.msra.mxu0 %v266
        %5319 = vmatmul.f32.gmra.mxu0 %v4869
        %v5320 = vpop.f32.mrf.mxu0
        %v5321 = vadd.f32 %v336, %v5320
        %5322 = vmatmul.f32.gmra.mxu0 %v4872
        %v5323 = vpop.f32.mrf.mxu0
        %v5324 = vadd.f32 %v336, %v5323
        %5325 = vmatmul.f32.gmra.mxu0 %v4875
        %v5326 = vpop.f32.mrf.mxu0
        %v5327 = vadd.f32 %v336, %v5326
        %5328 = vmatmul.f32.gmra.mxu0 %v4878
        %v5329 = vpop.f32.mrf.mxu0
        %v5330 = vadd.f32 %v336, %v5329
        %5331 = vmatmul.f32.gmra.mxu0 %v4881
        %v5332 = vpop.f32.mrf.mxu0
        %v5333 = vadd.f32 %v336, %v5332
        %5334 = vmatmul.f32.gmra.mxu0 %v4884
        %v5335 = vpop.f32.mrf.mxu0
        %v5336 = vadd.f32 %v336, %v5335
        %5337 = vmatmul.f32.gmra.mxu0 %v4887
        %v5338 = vpop.f32.mrf.mxu0
        %v5339 = vadd.f32 %v336, %v5338
        %5340 = vmatmul.f32.gmra.mxu0 %v4890
        %v5341 = vpop.f32.mrf.mxu0
        %v5342 = vadd.f32 %v336, %v5341
        %5343 = vmatmul.f32.gmra.mxu0 %v4893
        %v5344 = vpop.f32.mrf.mxu0
        %v5345 = vadd.f32 %v336, %v5344
        %5346 = vmatmul.f32.gmra.mxu0 %v4896
        %v5347 = vpop.f32.mrf.mxu0
        %v5348 = vadd.f32 %v336, %v5347
        %5349 = vmatmul.f32.gmra.mxu0 %v4899
        %v5350 = vpop.f32.mrf.mxu0
        %v5351 = vadd.f32 %v336, %v5350
        %5352 = vmatmul.f32.gmra.mxu0 %v4902
        %v5353 = vpop.f32.mrf.mxu0
        %v5354 = vadd.f32 %v336, %v5353
        %5355 = vmatmul.f32.gmra.mxu0 %v4905
        %v5356 = vpop.f32.mrf.mxu0
        %v5357 = vadd.f32 %v336, %v5356
        %5358 = vmatmul.f32.gmra.mxu0 %v4908
        %v5359 = vpop.f32.mrf.mxu0
        %v5360 = vadd.f32 %v336, %v5359
        %5361 = vmatmul.f32.gmra.mxu0 %v4911
        %v5362 = vpop.f32.mrf.mxu0
        %v5363 = vadd.f32 %v336, %v5362
        %5364 = vmatmul.f32.gmra.mxu0 %v4914
        %v5365 = vpop.f32.mrf.mxu0
        %v5366 = vadd.f32 %v336, %v5365
        %5367 = vmatmul.f32.gmra.mxu0 %v4917
        %v5368 = vpop.f32.mrf.mxu0
        %v5369 = vadd.f32 %v336, %v5368
        %5370 = vmatmul.f32.gmra.mxu0 %v4920
        %v5371 = vpop.f32.mrf.mxu0
        %v5372 = vadd.f32 %v336, %v5371
        %5373 = vmatmul.f32.gmra.mxu0 %v4923
        %v5374 = vpop.f32.mrf.mxu0
        %v5375 = vadd.f32 %v336, %v5374
        %5376 = vmatmul.f32.gmra.mxu0 %v4926
        %v5377 = vpop.f32.mrf.mxu0
        %v5378 = vadd.f32 %v336, %v5377
        %5379 = vmatmul.f32.gmra.mxu0 %v4929
        %v5380 = vpop.f32.mrf.mxu0
        %v5381 = vadd.f32 %v336, %v5380
        %5382 = vmatmul.f32.gmra.mxu0 %v4932
        %v5383 = vpop.f32.mrf.mxu0
        %v5384 = vadd.f32 %v336, %v5383
        %5385 = vmatmul.f32.gmra.mxu0 %v4935
        %v5386 = vpop.f32.mrf.mxu0
        %v5387 = vadd.f32 %v336, %v5386
        %5388 = vmatmul.f32.gmra.mxu0 %v4938
        %v5389 = vpop.f32.mrf.mxu0
        %v5390 = vadd.f32 %v336, %v5389
        %5391 = vmatmul.f32.gmra.mxu0 %v4941
        %v5392 = vpop.f32.mrf.mxu0
        %v5393 = vadd.f32 %v336, %v5392
        %5394 = vmatmul.f32.gmra.mxu0 %v4944
        %v5395 = vpop.f32.mrf.mxu0
        %v5396 = vadd.f32 %v336, %v5395
        %5397 = vmatmul.f32.gmra.mxu0 %v4947
        %v5398 = vpop.f32.mrf.mxu0
        %v5399 = vadd.f32 %v336, %v5398
        %5400 = vmatmul.f32.gmra.mxu0 %v4950
        %v5401 = vpop.f32.mrf.mxu0
        %v5402 = vadd.f32 %v336, %v5401
        %5403 = vmatmul.f32.gmra.mxu0 %v4953
        %v5404 = vpop.f32.mrf.mxu0
        %v5405 = vadd.f32 %v336, %v5404
        %5406 = vmatmul.f32.gmra.mxu0 %v4956
        %v5407 = vpop.f32.mrf.mxu0
        %v5408 = vadd.f32 %v336, %v5407
        %5409 = vmatmul.f32.gmra.mxu0 %v4959
        %v5410 = vpop.f32.mrf.mxu0
        %v5411 = vadd.f32 %v336, %v5410
        %5412 = vmatmul.f32.gmra.mxu0 %v4962
        %v5413 = vpop.f32.mrf.mxu0
        %v5414 = vadd.f32 %v336, %v5413
        %5415 = vdwg.mxu0
        %v5416 = vmax.f32 %v4982, 0.0
        %v5417 = vmax.f32 %v5095, 0.0
        %v5418 = vmax.f32 %v5208, 0.0
        %v5419 = vmax.f32 %v5321, 0.0
        %v5420 = vmax.f32 %v4985, 0.0
        %v5421 = vmax.f32 %v5098, 0.0
        %v5422 = vmax.f32 %v5211, 0.0
        %v5423 = vmax.f32 %v5324, 0.0
        %v5424 = vmax.f32 %v4988, 0.0
        %v5425 = vmax.f32 %v5101, 0.0
        %v5426 = vmax.f32 %v5214, 0.0
        %v5427 = vmax.f32 %v5327, 0.0
        %v5428 = vmax.f32 %v4991, 0.0
        %v5429 = vmax.f32 %v5104, 0.0
        %v5430 = vmax.f32 %v5217, 0.0
        %v5431 = vmax.f32 %v5330, 0.0
        %v5432 = vmax.f32 %v4994, 0.0
        %v5433 = vmax.f32 %v5107, 0.0
        %v5434 = vmax.f32 %v5220, 0.0
        %v5435 = vmax.f32 %v5333, 0.0
        %v5436 = vmax.f32 %v4997, 0.0
        %v5437 = vmax.f32 %v5110, 0.0
        %v5438 = vmax.f32 %v5223, 0.0
        %v5439 = vmax.f32 %v5336, 0.0
        %v5440 = vmax.f32 %v5000, 0.0
        %v5441 = vmax.f32 %v5113, 0.0
        %v5442 = vmax.f32 %v5226, 0.0
        %v5443 = vmax.f32 %v5339, 0.0
        %v5444 = vmax.f32 %v5003, 0.0
        %v5445 = vmax.f32 %v5116, 0.0
        %v5446 = vmax.f32 %v5229, 0.0
        %v5447 = vmax.f32 %v5342, 0.0
        %v5448 = vmax.f32 %v5006, 0.0
        %v5449 = vmax.f32 %v5119, 0.0
        %v5450 = vmax.f32 %v5232, 0.0
        %v5451 = vmax.f32 %v5345, 0.0
        %v5452 = vmax.f32 %v5009, 0.0
        %v5453 = vmax.f32 %v5122, 0.0
        %v5454 = vmax.f32 %v5235, 0.0
        %v5455 = vmax.f32 %v5348, 0.0
        %v5456 = vmax.f32 %v5012, 0.0
        %v5457 = vmax.f32 %v5125, 0.0
        %v5458 = vmax.f32 %v5238, 0.0
        %v5459 = vmax.f32 %v5351, 0.0
        %v5460 = vmax.f32 %v5015, 0.0
        %v5461 = vmax.f32 %v5128, 0.0
        %v5462 = vmax.f32 %v5241, 0.0
        %v5463 = vmax.f32 %v5354, 0.0
        %v5464 = vmax.f32 %v5018, 0.0
        %v5465 = vmax.f32 %v5131, 0.0
        %v5466 = vmax.f32 %v5244, 0.0
        %v5467 = vmax.f32 %v5357, 0.0
        %v5468 = vmax.f32 %v5021, 0.0
        %v5469 = vmax.f32 %v5134, 0.0
        %v5470 = vmax.f32 %v5247, 0.0
        %v5471 = vmax.f32 %v5360, 0.0
        %v5472 = vmax.f32 %v5024, 0.0
        %v5473 = vmax.f32 %v5137, 0.0
        %v5474 = vmax.f32 %v5250, 0.0
        %v5475 = vmax.f32 %v5363, 0.0
        %v5476 = vmax.f32 %v5027, 0.0
        %v5477 = vmax.f32 %v5140, 0.0
        %v5478 = vmax.f32 %v5253, 0.0
        %v5479 = vmax.f32 %v5366, 0.0
        %v5480 = vmax.f32 %v5030, 0.0
        %v5481 = vmax.f32 %v5143, 0.0
        %v5482 = vmax.f32 %v5256, 0.0
        %v5483 = vmax.f32 %v5369, 0.0
        %v5484 = vmax.f32 %v5033, 0.0
        %v5485 = vmax.f32 %v5146, 0.0
        %v5486 = vmax.f32 %v5259, 0.0
        %v5487 = vmax.f32 %v5372, 0.0
        %v5488 = vmax.f32 %v5036, 0.0
        %v5489 = vmax.f32 %v5149, 0.0
        %v5490 = vmax.f32 %v5262, 0.0
        %v5491 = vmax.f32 %v5375, 0.0
        %v5492 = vmax.f32 %v5039, 0.0
        %v5493 = vmax.f32 %v5152, 0.0
        %v5494 = vmax.f32 %v5265, 0.0
        %v5495 = vmax.f32 %v5378, 0.0
        %v5496 = vmax.f32 %v5042, 0.0
        %v5497 = vmax.f32 %v5155, 0.0
        %v5498 = vmax.f32 %v5268, 0.0
        %v5499 = vmax.f32 %v5381, 0.0
        %v5500 = vmax.f32 %v5045, 0.0
        %v5501 = vmax.f32 %v5158, 0.0
        %v5502 = vmax.f32 %v5271, 0.0
        %v5503 = vmax.f32 %v5384, 0.0
        %v5504 = vmax.f32 %v5048, 0.0
        %v5505 = vmax.f32 %v5161, 0.0
        %v5506 = vmax.f32 %v5274, 0.0
        %v5507 = vmax.f32 %v5387, 0.0
        %v5508 = vmax.f32 %v5051, 0.0
        %v5509 = vmax.f32 %v5164, 0.0
        %v5510 = vmax.f32 %v5277, 0.0
        %v5511 = vmax.f32 %v5390, 0.0
        %v5512 = vmax.f32 %v5054, 0.0
        %v5513 = vmax.f32 %v5167, 0.0
        %v5514 = vmax.f32 %v5280, 0.0
        %v5515 = vmax.f32 %v5393, 0.0
        %v5516 = vmax.f32 %v5057, 0.0
        %v5517 = vmax.f32 %v5170, 0.0
        %v5518 = vmax.f32 %v5283, 0.0
        %v5519 = vmax.f32 %v5396, 0.0
        %v5520 = vmax.f32 %v5060, 0.0
        %v5521 = vmax.f32 %v5173, 0.0
        %v5522 = vmax.f32 %v5286, 0.0
        %v5523 = vmax.f32 %v5399, 0.0
        %v5524 = vmax.f32 %v5063, 0.0
        %v5525 = vmax.f32 %v5176, 0.0
        %v5526 = vmax.f32 %v5289, 0.0
        %v5527 = vmax.f32 %v5402, 0.0
        %v5528 = vmax.f32 %v5066, 0.0
        %v5529 = vmax.f32 %v5179, 0.0
        %v5530 = vmax.f32 %v5292, 0.0
        %v5531 = vmax.f32 %v5405, 0.0
        %v5532 = vmax.f32 %v5069, 0.0
        %v5533 = vmax.f32 %v5182, 0.0
        %v5534 = vmax.f32 %v5295, 0.0
        %v5535 = vmax.f32 %v5408, 0.0
        %v5536 = vmax.f32 %v5072, 0.0
        %v5537 = vmax.f32 %v5185, 0.0
        %v5538 = vmax.f32 %v5298, 0.0
        %v5539 = vmax.f32 %v5411, 0.0
        %v5540 = vmax.f32 %v5075, 0.0
        %v5541 = vmax.f32 %v5188, 0.0
        %v5542 = vmax.f32 %v5301, 0.0
        %v5543 = vmax.f32 %v5414, 0.0
        %s5544 = scalar_lea.vmem %s236, 5 [#allocation8]
        %v5545 = vld [vmem:[%s5544] ss:$8 sm:$0xf]
        %v5546 = vadd.f32 %v5416, %v5420
        %v5547 = vadd.f32 %v5546, %v5424
        %v5548 = vadd.f32 %v5547, %v5428
        %v5549 = vadd.f32 %v5548, %v5432
        %v5550 = vadd.f32 %v5549, %v5436
        %v5551 = vadd.f32 %v5550, %v5440
        %v5552 = vadd.f32 %v5551, %v5444
        %v5553 = vadd.f32 %v5552, %v5448
        %v5554 = vadd.f32 %v5553, %v5452
        %v5555 = vadd.f32 %v5554, %v5456
        %v5556 = vadd.f32 %v5555, %v5460
        %v5557 = vadd.f32 %v5556, %v5464
        %v5558 = vadd.f32 %v5557, %v5468
        %v5559 = vadd.f32 %v5558, %v5472
        %v5560 = vadd.f32 %v5559, %v5476
        %v5561 = vadd.f32 %v5560, %v5480
        %v5562 = vadd.f32 %v5561, %v5484
        %v5563 = vadd.f32 %v5562, %v5488
        %v5564 = vadd.f32 %v5563, %v5492
        %v5565 = vadd.f32 %v5564, %v5496
        %v5566 = vadd.f32 %v5565, %v5500
        %v5567 = vadd.f32 %v5566, %v5504
        %v5568 = vadd.f32 %v5567, %v5508
        %v5569 = vadd.f32 %v5568, %v5512
        %v5570 = vadd.f32 %v5569, %v5516
        %v5571 = vadd.f32 %v5570, %v5520
        %v5572 = vadd.f32 %v5571, %v5524
        %v5573 = vadd.f32 %v5572, %v5528
        %v5574 = vadd.f32 %v5573, %v5532
        %v5575 = vadd.f32 %v5574, %v5536
        %v5576 = vadd.f32 %v5575, %v5540
        %v5577 = vrot.slane %v5576, 4
        %v5578 = vadd.f32 %v5576, %v5577
        %v5579 = vrot.slane %v5578, 2
        %v5580 = vadd.f32 %v5578, %v5579
        %v5581 = vrot.slane %v5580, 1
        %v5582 = vadd.f32 %v5580, %v5581
        %v5583 = vadd.f32 %v5417, %v5421
        %v5584 = vadd.f32 %v5583, %v5425
        %v5585 = vadd.f32 %v5584, %v5429
        %v5586 = vadd.f32 %v5585, %v5433
        %v5587 = vadd.f32 %v5586, %v5437
        %v5588 = vadd.f32 %v5587, %v5441
        %v5589 = vadd.f32 %v5588, %v5445
        %v5590 = vadd.f32 %v5589, %v5449
        %v5591 = vadd.f32 %v5590, %v5453
        %v5592 = vadd.f32 %v5591, %v5457
        %v5593 = vadd.f32 %v5592, %v5461
        %v5594 = vadd.f32 %v5593, %v5465
        %v5595 = vadd.f32 %v5594, %v5469
        %v5596 = vadd.f32 %v5595, %v5473
        %v5597 = vadd.f32 %v5596, %v5477
        %v5598 = vadd.f32 %v5597, %v5481
        %v5599 = vadd.f32 %v5598, %v5485
        %v5600 = vadd.f32 %v5599, %v5489
        %v5601 = vadd.f32 %v5600, %v5493
        %v5602 = vadd.f32 %v5601, %v5497
        %v5603 = vadd.f32 %v5602, %v5501
        %v5604 = vadd.f32 %v5603, %v5505
        %v5605 = vadd.f32 %v5604, %v5509
        %v5606 = vadd.f32 %v5605, %v5513
        %v5607 = vadd.f32 %v5606, %v5517
        %v5608 = vadd.f32 %v5607, %v5521
        %v5609 = vadd.f32 %v5608, %v5525
        %v5610 = vadd.f32 %v5609, %v5529
        %v5611 = vadd.f32 %v5610, %v5533
        %v5612 = vadd.f32 %v5611, %v5537
        %v5613 = vadd.f32 %v5612, %v5541
        %v5614 = vrot.slane %v5613, 4
        %v5615 = vadd.f32 %v5613, %v5614
        %v5616 = vrot.slane %v5615, 2
        %v5617 = vadd.f32 %v5615, %v5616
        %v5618 = vrot.slane %v5617, 1
        %v5619 = vadd.f32 %v5617, %v5618
        %v5620 = vadd.f32 %v5418, %v5422
        %v5621 = vadd.f32 %v5620, %v5426
        %v5622 = vadd.f32 %v5621, %v5430
        %v5623 = vadd.f32 %v5622, %v5434
        %v5624 = vadd.f32 %v5623, %v5438
        %v5625 = vadd.f32 %v5624, %v5442
        %v5626 = vadd.f32 %v5625, %v5446
        %v5627 = vadd.f32 %v5626, %v5450
        %v5628 = vadd.f32 %v5627, %v5454
        %v5629 = vadd.f32 %v5628, %v5458
        %v5630 = vadd.f32 %v5629, %v5462
        %v5631 = vadd.f32 %v5630, %v5466
        %v5632 = vadd.f32 %v5631, %v5470
        %v5633 = vadd.f32 %v5632, %v5474
        %v5634 = vadd.f32 %v5633, %v5478
        %v5635 = vadd.f32 %v5634, %v5482
        %v5636 = vadd.f32 %v5635, %v5486
        %v5637 = vadd.f32 %v5636, %v5490
        %v5638 = vadd.f32 %v5637, %v5494
        %v5639 = vadd.f32 %v5638, %v5498
        %v5640 = vadd.f32 %v5639, %v5502
        %v5641 = vadd.f32 %v5640, %v5506
        %v5642 = vadd.f32 %v5641, %v5510
        %v5643 = vadd.f32 %v5642, %v5514
        %v5644 = vadd.f32 %v5643, %v5518
        %v5645 = vadd.f32 %v5644, %v5522
        %v5646 = vadd.f32 %v5645, %v5526
        %v5647 = vadd.f32 %v5646, %v5530
        %v5648 = vadd.f32 %v5647, %v5534
        %v5649 = vadd.f32 %v5648, %v5538
        %v5650 = vadd.f32 %v5649, %v5542
        %v5651 = vrot.slane %v5650, 4
        %v5652 = vadd.f32 %v5650, %v5651
        %v5653 = vrot.slane %v5652, 2
        %v5654 = vadd.f32 %v5652, %v5653
        %v5655 = vrot.slane %v5654, 1
        %v5656 = vadd.f32 %v5654, %v5655
        %v5657 = vadd.f32 %v5419, %v5423
        %v5658 = vadd.f32 %v5657, %v5427
        %v5659 = vadd.f32 %v5658, %v5431
        %v5660 = vadd.f32 %v5659, %v5435
        %v5661 = vadd.f32 %v5660, %v5439
        %v5662 = vadd.f32 %v5661, %v5443
        %v5663 = vadd.f32 %v5662, %v5447
        %v5664 = vadd.f32 %v5663, %v5451
        %v5665 = vadd.f32 %v5664, %v5455
        %v5666 = vadd.f32 %v5665, %v5459
        %v5667 = vadd.f32 %v5666, %v5463
        %v5668 = vadd.f32 %v5667, %v5467
        %v5669 = vadd.f32 %v5668, %v5471
        %v5670 = vadd.f32 %v5669, %v5475
        %v5671 = vadd.f32 %v5670, %v5479
        %v5672 = vadd.f32 %v5671, %v5483
        %v5673 = vadd.f32 %v5672, %v5487
        %v5674 = vadd.f32 %v5673, %v5491
        %v5675 = vadd.f32 %v5674, %v5495
        %v5676 = vadd.f32 %v5675, %v5499
        %v5677 = vadd.f32 %v5676, %v5503
        %v5678 = vadd.f32 %v5677, %v5507
        %v5679 = vadd.f32 %v5678, %v5511
        %v5680 = vadd.f32 %v5679, %v5515
        %v5681 = vadd.f32 %v5680, %v5519
        %v5682 = vadd.f32 %v5681, %v5523
        %v5683 = vadd.f32 %v5682, %v5527
        %v5684 = vadd.f32 %v5683, %v5531
        %v5685 = vadd.f32 %v5684, %v5535
        %v5686 = vadd.f32 %v5685, %v5539
        %v5687 = vadd.f32 %v5686, %v5543
        %v5688 = vrot.slane %v5687, 4
        %v5689 = vadd.f32 %v5687, %v5688
        %v5690 = vrot.slane %v5689, 2
        %v5691 = vadd.f32 %v5689, %v5690
        %v5692 = vrot.slane %v5691, 1
        %v5693 = vadd.f32 %v5691, %v5692
        %v5698 = vrot.slane %v5619, 7
        %v5699 = vrot.slane %v5656, 6
        %v5700 = vrot.slane %v5693, 5
        %v5701 = vsel %vm1174, %v5582, %v5698
        %v5702 = vsel %vm1176, %v5699, %v5700
        %v5703 = vsel %vm1178, %v5701, %v5702
        %v5705 = vadd.f32 %v5545, %v5703
        %5706 = vst.msk [vmem:[%s5544] ss:$8 sm:$0xf] %vm1185, %v5705
        %5707 = vst.msk [vmem:[%s5544] ss:$8 sm:$0x0] %vm1185, %v5705
        %5708 = vxpose.xlu0.b32.start [1/16] %v259, 128
        %5709 = vxpose.xlu0.b32.cont [2/16] 0.0, 128
        %5710 = vxpose.xlu0.b32.cont [3/16] 0.0, 128
        %5711 = vxpose.xlu0.b32.cont [4/16] 0.0, 128
        %5712 = vxpose.xlu0.b32.cont [5/16] 0.0, 128
        %5713 = vxpose.xlu0.b32.cont [6/16] 0.0, 128
        %5714 = vxpose.xlu0.b32.cont [7/16] 0.0, 128
        %5715 = vxpose.xlu0.b32.cont [8/16] 0.0, 128
        %5716 = vxpose.xlu0.b32.cont [9/16] 0.0, 128
        %5717 = vxpose.xlu0.b32.cont [10/16] 0.0, 128
        %5718 = vxpose.xlu0.b32.cont [11/16] 0.0, 128
        %5719 = vxpose.xlu0.b32.cont [12/16] 0.0, 128
        %5720 = vxpose.xlu0.b32.cont [13/16] 0.0, 128
        %5721 = vxpose.xlu0.b32.cont [14/16] 0.0, 128
        %5722 = vxpose.xlu0.b32.cont [15/16] 0.0, 128
        %5723 = vxpose.xlu0.b32.end [16/16] 0.0, 128
        %v5724 = vpop.trf.xlu0
        %v5725 = vpop.trf.xlu0
        %v5726 = vpop.trf.xlu0
        %v5727 = vpop.trf.xlu0
        %v5728 = vpop.trf.xlu0
        %v5729 = vpop.trf.xlu0
        %v5730 = vpop.trf.xlu0
        %v5731 = vpop.trf.xlu0
        %v5732 = vpop.trf.xlu0
        %v5733 = vpop.trf.xlu0
        %v5734 = vpop.trf.xlu0
        %v5735 = vpop.trf.xlu0
        %v5736 = vpop.trf.xlu0
        %v5737 = vpop.trf.xlu0
        %v5738 = vpop.trf.xlu0
        %v5739 = vpop.trf.xlu0
        %5740 = vxpose.xlu0.b32.start [1/16] %v260, 128
        %5741 = vxpose.xlu0.b32.cont [2/16] 0.0, 128
        %5742 = vxpose.xlu0.b32.cont [3/16] 0.0, 128
        %5743 = vxpose.xlu0.b32.cont [4/16] 0.0, 128
        %5744 = vxpose.xlu0.b32.cont [5/16] 0.0, 128
        %5745 = vxpose.xlu0.b32.cont [6/16] 0.0, 128
        %5746 = vxpose.xlu0.b32.cont [7/16] 0.0, 128
        %5747 = vxpose.xlu0.b32.cont [8/16] 0.0, 128
        %5748 = vxpose.xlu0.b32.cont [9/16] 0.0, 128
        %5749 = vxpose.xlu0.b32.cont [10/16] 0.0, 128
        %5750 = vxpose.xlu0.b32.cont [11/16] 0.0, 128
        %5751 = vxpose.xlu0.b32.cont [12/16] 0.0, 128
        %5752 = vxpose.xlu0.b32.cont [13/16] 0.0, 128
        %5753 = vxpose.xlu0.b32.cont [14/16] 0.0, 128
        %5754 = vxpose.xlu0.b32.cont [15/16] 0.0, 128
        %5755 = vxpose.xlu0.b32.end [16/16] 0.0, 128
        %v5756 = vpop.trf.xlu0
        %v5757 = vpop.trf.xlu0
        %v5758 = vpop.trf.xlu0
        %v5759 = vpop.trf.xlu0
        %v5760 = vpop.trf.xlu0
        %v5761 = vpop.trf.xlu0
        %v5762 = vpop.trf.xlu0
        %v5763 = vpop.trf.xlu0
        %v5764 = vpop.trf.xlu0
        %v5765 = vpop.trf.xlu0
        %v5766 = vpop.trf.xlu0
        %v5767 = vpop.trf.xlu0
        %v5768 = vpop.trf.xlu0
        %v5769 = vpop.trf.xlu0
        %v5770 = vpop.trf.xlu0
        %v5771 = vpop.trf.xlu0
        %v5773 = vsel %vm341, %v5724, 0
        %v5776 = vsel %vm341, %v5725, 0
        %v5779 = vsel %vm341, %v5726, 0
        %v5782 = vsel %vm341, %v5727, 0
        %v5785 = vsel %vm341, %v5728, 0
        %v5788 = vsel %vm341, %v5729, 0
        %v5791 = vsel %vm341, %v5730, 0
        %v5794 = vsel %vm341, %v5731, 0
        %v5797 = vsel %vm341, %v5732, 0
        %v5800 = vsel %vm341, %v5733, 0
        %v5803 = vsel %vm341, %v5734, 0
        %v5806 = vsel %vm341, %v5735, 0
        %v5809 = vsel %vm341, %v5736, 0
        %v5812 = vsel %vm341, %v5737, 0
        %v5815 = vsel %vm341, %v5738, 0
        %v5818 = vsel %vm341, %v5739, 0
        %v5821 = vsel %vm341, %v5756, 0
        %v5824 = vsel %vm341, %v5757, 0
        %v5827 = vsel %vm341, %v5758, 0
        %v5830 = vsel %vm341, %v5759, 0
        %v5833 = vsel %vm341, %v5760, 0
        %v5836 = vsel %vm341, %v5761, 0
        %v5839 = vsel %vm341, %v5762, 0
        %v5842 = vsel %vm341, %v5763, 0
        %v5845 = vsel %vm341, %v5764, 0
        %v5848 = vsel %vm341, %v5765, 0
        %v5851 = vsel %vm341, %v5766, 0
        %v5854 = vsel %vm341, %v5767, 0
        %v5857 = vsel %vm341, %v5768, 0
        %v5860 = vsel %vm341, %v5769, 0
        %v5863 = vsel %vm341, %v5770, 0
        %v5866 = vsel %vm341, %v5771, 0
        %5868 = vmatpush.msra.mxu0 0.0
        %5869 = vmatpush.msra.mxu0 0.0
        %5870 = vmatpush.msra.mxu0 0.0
        %5871 = vmatpush.msra.mxu0 0.0
        %5872 = vmatpush.msra.mxu0 0.0
        %5873 = vmatpush.msra.mxu0 0.0
        %5874 = vmatpush.msra.mxu0 0.0
        %5875 = vmatpush.msra.mxu0 0.0
        %5876 = vmatpush.msra.mxu0 0.0
        %5877 = vmatpush.msra.mxu0 0.0
        %5878 = vmatpush.msra.mxu0 0.0
        %5879 = vmatpush.msra.mxu0 0.0
        %5880 = vmatpush.msra.mxu0 0.0
        %5881 = vmatpush.msra.mxu0 0.0
        %5882 = vmatpush.msra.mxu0 0.0
        %5883 = vmatpush.msra.mxu0 %v263
        %5884 = vmatmul.f32.gmra.mxu0 %v5773
        %v5885 = vpop.f32.mrf.mxu0
        %v5886 = vadd.f32 %v333, %v5885
        %5887 = vmatmul.f32.gmra.mxu0 %v5776
        %v5888 = vpop.f32.mrf.mxu0
        %v5889 = vadd.f32 %v333, %v5888
        %5890 = vmatmul.f32.gmra.mxu0 %v5779
        %v5891 = vpop.f32.mrf.mxu0
        %v5892 = vadd.f32 %v333, %v5891
        %5893 = vmatmul.f32.gmra.mxu0 %v5782
        %v5894 = vpop.f32.mrf.mxu0
        %v5895 = vadd.f32 %v333, %v5894
        %5896 = vmatmul.f32.gmra.mxu0 %v5785
        %v5897 = vpop.f32.mrf.mxu0
        %v5898 = vadd.f32 %v333, %v5897
        %5899 = vmatmul.f32.gmra.mxu0 %v5788
        %v5900 = vpop.f32.mrf.mxu0
        %v5901 = vadd.f32 %v333, %v5900
        %5902 = vmatmul.f32.gmra.mxu0 %v5791
        %v5903 = vpop.f32.mrf.mxu0
        %v5904 = vadd.f32 %v333, %v5903
        %5905 = vmatmul.f32.gmra.mxu0 %v5794
        %v5906 = vpop.f32.mrf.mxu0
        %v5907 = vadd.f32 %v333, %v5906
        %5908 = vmatmul.f32.gmra.mxu0 %v5797
        %v5909 = vpop.f32.mrf.mxu0
        %v5910 = vadd.f32 %v333, %v5909
        %5911 = vmatmul.f32.gmra.mxu0 %v5800
        %v5912 = vpop.f32.mrf.mxu0
        %v5913 = vadd.f32 %v333, %v5912
        %5914 = vmatmul.f32.gmra.mxu0 %v5803
        %v5915 = vpop.f32.mrf.mxu0
        %v5916 = vadd.f32 %v333, %v5915
        %5917 = vmatmul.f32.gmra.mxu0 %v5806
        %v5918 = vpop.f32.mrf.mxu0
        %v5919 = vadd.f32 %v333, %v5918
        %5920 = vmatmul.f32.gmra.mxu0 %v5809
        %v5921 = vpop.f32.mrf.mxu0
        %v5922 = vadd.f32 %v333, %v5921
        %5923 = vmatmul.f32.gmra.mxu0 %v5812
        %v5924 = vpop.f32.mrf.mxu0
        %v5925 = vadd.f32 %v333, %v5924
        %5926 = vmatmul.f32.gmra.mxu0 %v5815
        %v5927 = vpop.f32.mrf.mxu0
        %v5928 = vadd.f32 %v333, %v5927
        %5929 = vmatmul.f32.gmra.mxu0 %v5818
        %v5930 = vpop.f32.mrf.mxu0
        %v5931 = vadd.f32 %v333, %v5930
        %5932 = vmatmul.f32.gmra.mxu0 %v5821
        %v5933 = vpop.f32.mrf.mxu0
        %v5934 = vadd.f32 %v333, %v5933
        %5935 = vmatmul.f32.gmra.mxu0 %v5824
        %v5936 = vpop.f32.mrf.mxu0
        %v5937 = vadd.f32 %v333, %v5936
        %5938 = vmatmul.f32.gmra.mxu0 %v5827
        %v5939 = vpop.f32.mrf.mxu0
        %v5940 = vadd.f32 %v333, %v5939
        %5941 = vmatmul.f32.gmra.mxu0 %v5830
        %v5942 = vpop.f32.mrf.mxu0
        %v5943 = vadd.f32 %v333, %v5942
        %5944 = vmatmul.f32.gmra.mxu0 %v5833
        %v5945 = vpop.f32.mrf.mxu0
        %v5946 = vadd.f32 %v333, %v5945
        %5947 = vmatmul.f32.gmra.mxu0 %v5836
        %v5948 = vpop.f32.mrf.mxu0
        %v5949 = vadd.f32 %v333, %v5948
        %5950 = vmatmul.f32.gmra.mxu0 %v5839
        %v5951 = vpop.f32.mrf.mxu0
        %v5952 = vadd.f32 %v333, %v5951
        %5953 = vmatmul.f32.gmra.mxu0 %v5842
        %v5954 = vpop.f32.mrf.mxu0
        %v5955 = vadd.f32 %v333, %v5954
        %5956 = vmatmul.f32.gmra.mxu0 %v5845
        %v5957 = vpop.f32.mrf.mxu0
        %v5958 = vadd.f32 %v333, %v5957
        %5959 = vmatmul.f32.gmra.mxu0 %v5848
        %v5960 = vpop.f32.mrf.mxu0
        %v5961 = vadd.f32 %v333, %v5960
        %5962 = vmatmul.f32.gmra.mxu0 %v5851
        %v5963 = vpop.f32.mrf.mxu0
        %v5964 = vadd.f32 %v333, %v5963
        %5965 = vmatmul.f32.gmra.mxu0 %v5854
        %v5966 = vpop.f32.mrf.mxu0
        %v5967 = vadd.f32 %v333, %v5966
        %5968 = vmatmul.f32.gmra.mxu0 %v5857
        %v5969 = vpop.f32.mrf.mxu0
        %v5970 = vadd.f32 %v333, %v5969
        %5971 = vmatmul.f32.gmra.mxu0 %v5860
        %v5972 = vpop.f32.mrf.mxu0
        %v5973 = vadd.f32 %v333, %v5972
        %5974 = vmatmul.f32.gmra.mxu0 %v5863
        %v5975 = vpop.f32.mrf.mxu0
        %v5976 = vadd.f32 %v333, %v5975
        %5977 = vmatmul.f32.gmra.mxu0 %v5866
        %v5978 = vpop.f32.mrf.mxu0
        %v5979 = vadd.f32 %v333, %v5978
        %5980 = vdwg.mxu0
        %5981 = vmatpush.msra.mxu0 0.0
        %5982 = vmatpush.msra.mxu0 0.0
        %5983 = vmatpush.msra.mxu0 0.0
        %5984 = vmatpush.msra.mxu0 0.0
        %5985 = vmatpush.msra.mxu0 0.0
        %5986 = vmatpush.msra.mxu0 0.0
        %5987 = vmatpush.msra.mxu0 0.0
        %5988 = vmatpush.msra.mxu0 0.0
        %5989 = vmatpush.msra.mxu0 0.0
        %5990 = vmatpush.msra.mxu0 0.0
        %5991 = vmatpush.msra.mxu0 0.0
        %5992 = vmatpush.msra.mxu0 0.0
        %5993 = vmatpush.msra.mxu0 0.0
        %5994 = vmatpush.msra.mxu0 0.0
        %5995 = vmatpush.msra.mxu0 0.0
        %5996 = vmatpush.msra.mxu0 %v264
        %5997 = vmatmul.f32.gmra.mxu0 %v5773
        %v5998 = vpop.f32.mrf.mxu0
        %v5999 = vadd.f32 %v334, %v5998
        %6000 = vmatmul.f32.gmra.mxu0 %v5776
        %v6001 = vpop.f32.mrf.mxu0
        %v6002 = vadd.f32 %v334, %v6001
        %6003 = vmatmul.f32.gmra.mxu0 %v5779
        %v6004 = vpop.f32.mrf.mxu0
        %v6005 = vadd.f32 %v334, %v6004
        %6006 = vmatmul.f32.gmra.mxu0 %v5782
        %v6007 = vpop.f32.mrf.mxu0
        %v6008 = vadd.f32 %v334, %v6007
        %6009 = vmatmul.f32.gmra.mxu0 %v5785
        %v6010 = vpop.f32.mrf.mxu0
        %v6011 = vadd.f32 %v334, %v6010
        %6012 = vmatmul.f32.gmra.mxu0 %v5788
        %v6013 = vpop.f32.mrf.mxu0
        %v6014 = vadd.f32 %v334, %v6013
        %6015 = vmatmul.f32.gmra.mxu0 %v5791
        %v6016 = vpop.f32.mrf.mxu0
        %v6017 = vadd.f32 %v334, %v6016
        %6018 = vmatmul.f32.gmra.mxu0 %v5794
        %v6019 = vpop.f32.mrf.mxu0
        %v6020 = vadd.f32 %v334, %v6019
        %6021 = vmatmul.f32.gmra.mxu0 %v5797
        %v6022 = vpop.f32.mrf.mxu0
        %v6023 = vadd.f32 %v334, %v6022
        %6024 = vmatmul.f32.gmra.mxu0 %v5800
        %v6025 = vpop.f32.mrf.mxu0
        %v6026 = vadd.f32 %v334, %v6025
        %6027 = vmatmul.f32.gmra.mxu0 %v5803
        %v6028 = vpop.f32.mrf.mxu0
        %v6029 = vadd.f32 %v334, %v6028
        %6030 = vmatmul.f32.gmra.mxu0 %v5806
        %v6031 = vpop.f32.mrf.mxu0
        %v6032 = vadd.f32 %v334, %v6031
        %6033 = vmatmul.f32.gmra.mxu0 %v5809
        %v6034 = vpop.f32.mrf.mxu0
        %v6035 = vadd.f32 %v334, %v6034
        %6036 = vmatmul.f32.gmra.mxu0 %v5812
        %v6037 = vpop.f32.mrf.mxu0
        %v6038 = vadd.f32 %v334, %v6037
        %6039 = vmatmul.f32.gmra.mxu0 %v5815
        %v6040 = vpop.f32.mrf.mxu0
        %v6041 = vadd.f32 %v334, %v6040
        %6042 = vmatmul.f32.gmra.mxu0 %v5818
        %v6043 = vpop.f32.mrf.mxu0
        %v6044 = vadd.f32 %v334, %v6043
        %6045 = vmatmul.f32.gmra.mxu0 %v5821
        %v6046 = vpop.f32.mrf.mxu0
        %v6047 = vadd.f32 %v334, %v6046
        %6048 = vmatmul.f32.gmra.mxu0 %v5824
        %v6049 = vpop.f32.mrf.mxu0
        %v6050 = vadd.f32 %v334, %v6049
        %6051 = vmatmul.f32.gmra.mxu0 %v5827
        %v6052 = vpop.f32.mrf.mxu0
        %v6053 = vadd.f32 %v334, %v6052
        %6054 = vmatmul.f32.gmra.mxu0 %v5830
        %v6055 = vpop.f32.mrf.mxu0
        %v6056 = vadd.f32 %v334, %v6055
        %6057 = vmatmul.f32.gmra.mxu0 %v5833
        %v6058 = vpop.f32.mrf.mxu0
        %v6059 = vadd.f32 %v334, %v6058
        %6060 = vmatmul.f32.gmra.mxu0 %v5836
        %v6061 = vpop.f32.mrf.mxu0
        %v6062 = vadd.f32 %v334, %v6061
        %6063 = vmatmul.f32.gmra.mxu0 %v5839
        %v6064 = vpop.f32.mrf.mxu0
        %v6065 = vadd.f32 %v334, %v6064
        %6066 = vmatmul.f32.gmra.mxu0 %v5842
        %v6067 = vpop.f32.mrf.mxu0
        %v6068 = vadd.f32 %v334, %v6067
        %6069 = vmatmul.f32.gmra.mxu0 %v5845
        %v6070 = vpop.f32.mrf.mxu0
        %v6071 = vadd.f32 %v334, %v6070
        %6072 = vmatmul.f32.gmra.mxu0 %v5848
        %v6073 = vpop.f32.mrf.mxu0
        %v6074 = vadd.f32 %v334, %v6073
        %6075 = vmatmul.f32.gmra.mxu0 %v5851
        %v6076 = vpop.f32.mrf.mxu0
        %v6077 = vadd.f32 %v334, %v6076
        %6078 = vmatmul.f32.gmra.mxu0 %v5854
        %v6079 = vpop.f32.mrf.mxu0
        %v6080 = vadd.f32 %v334, %v6079
        %6081 = vmatmul.f32.gmra.mxu0 %v5857
        %v6082 = vpop.f32.mrf.mxu0
        %v6083 = vadd.f32 %v334, %v6082
        %6084 = vmatmul.f32.gmra.mxu0 %v5860
        %v6085 = vpop.f32.mrf.mxu0
        %v6086 = vadd.f32 %v334, %v6085
        %6087 = vmatmul.f32.gmra.mxu0 %v5863
        %v6088 = vpop.f32.mrf.mxu0
        %v6089 = vadd.f32 %v334, %v6088
        %6090 = vmatmul.f32.gmra.mxu0 %v5866
        %v6091 = vpop.f32.mrf.mxu0
        %v6092 = vadd.f32 %v334, %v6091
        %6093 = vdwg.mxu0
        %6094 = vmatpush.msra.mxu0 0.0
        %6095 = vmatpush.msra.mxu0 0.0
        %6096 = vmatpush.msra.mxu0 0.0
        %6097 = vmatpush.msra.mxu0 0.0
        %6098 = vmatpush.msra.mxu0 0.0
        %6099 = vmatpush.msra.mxu0 0.0
        %6100 = vmatpush.msra.mxu0 0.0
        %6101 = vmatpush.msra.mxu0 0.0
        %6102 = vmatpush.msra.mxu0 0.0
        %6103 = vmatpush.msra.mxu0 0.0
        %6104 = vmatpush.msra.mxu0 0.0
        %6105 = vmatpush.msra.mxu0 0.0
        %6106 = vmatpush.msra.mxu0 0.0
        %6107 = vmatpush.msra.mxu0 0.0
        %6108 = vmatpush.msra.mxu0 0.0
        %6109 = vmatpush.msra.mxu0 %v265
        %6110 = vmatmul.f32.gmra.mxu0 %v5773
        %v6111 = vpop.f32.mrf.mxu0
        %v6112 = vadd.f32 %v335, %v6111
        %6113 = vmatmul.f32.gmra.mxu0 %v5776
        %v6114 = vpop.f32.mrf.mxu0
        %v6115 = vadd.f32 %v335, %v6114
        %6116 = vmatmul.f32.gmra.mxu0 %v5779
        %v6117 = vpop.f32.mrf.mxu0
        %v6118 = vadd.f32 %v335, %v6117
        %6119 = vmatmul.f32.gmra.mxu0 %v5782
        %v6120 = vpop.f32.mrf.mxu0
        %v6121 = vadd.f32 %v335, %v6120
        %6122 = vmatmul.f32.gmra.mxu0 %v5785
        %v6123 = vpop.f32.mrf.mxu0
        %v6124 = vadd.f32 %v335, %v6123
        %6125 = vmatmul.f32.gmra.mxu0 %v5788
        %v6126 = vpop.f32.mrf.mxu0
        %v6127 = vadd.f32 %v335, %v6126
        %6128 = vmatmul.f32.gmra.mxu0 %v5791
        %v6129 = vpop.f32.mrf.mxu0
        %v6130 = vadd.f32 %v335, %v6129
        %6131 = vmatmul.f32.gmra.mxu0 %v5794
        %v6132 = vpop.f32.mrf.mxu0
        %v6133 = vadd.f32 %v335, %v6132
        %6134 = vmatmul.f32.gmra.mxu0 %v5797
        %v6135 = vpop.f32.mrf.mxu0
        %v6136 = vadd.f32 %v335, %v6135
        %6137 = vmatmul.f32.gmra.mxu0 %v5800
        %v6138 = vpop.f32.mrf.mxu0
        %v6139 = vadd.f32 %v335, %v6138
        %6140 = vmatmul.f32.gmra.mxu0 %v5803
        %v6141 = vpop.f32.mrf.mxu0
        %v6142 = vadd.f32 %v335, %v6141
        %6143 = vmatmul.f32.gmra.mxu0 %v5806
        %v6144 = vpop.f32.mrf.mxu0
        %v6145 = vadd.f32 %v335, %v6144
        %6146 = vmatmul.f32.gmra.mxu0 %v5809
        %v6147 = vpop.f32.mrf.mxu0
        %v6148 = vadd.f32 %v335, %v6147
        %6149 = vmatmul.f32.gmra.mxu0 %v5812
        %v6150 = vpop.f32.mrf.mxu0
        %v6151 = vadd.f32 %v335, %v6150
        %6152 = vmatmul.f32.gmra.mxu0 %v5815
        %v6153 = vpop.f32.mrf.mxu0
        %v6154 = vadd.f32 %v335, %v6153
        %6155 = vmatmul.f32.gmra.mxu0 %v5818
        %v6156 = vpop.f32.mrf.mxu0
        %v6157 = vadd.f32 %v335, %v6156
        %6158 = vmatmul.f32.gmra.mxu0 %v5821
        %v6159 = vpop.f32.mrf.mxu0
        %v6160 = vadd.f32 %v335, %v6159
        %6161 = vmatmul.f32.gmra.mxu0 %v5824
        %v6162 = vpop.f32.mrf.mxu0
        %v6163 = vadd.f32 %v335, %v6162
        %6164 = vmatmul.f32.gmra.mxu0 %v5827
        %v6165 = vpop.f32.mrf.mxu0
        %v6166 = vadd.f32 %v335, %v6165
        %6167 = vmatmul.f32.gmra.mxu0 %v5830
        %v6168 = vpop.f32.mrf.mxu0
        %v6169 = vadd.f32 %v335, %v6168
        %6170 = vmatmul.f32.gmra.mxu0 %v5833
        %v6171 = vpop.f32.mrf.mxu0
        %v6172 = vadd.f32 %v335, %v6171
        %6173 = vmatmul.f32.gmra.mxu0 %v5836
        %v6174 = vpop.f32.mrf.mxu0
        %v6175 = vadd.f32 %v335, %v6174
        %6176 = vmatmul.f32.gmra.mxu0 %v5839
        %v6177 = vpop.f32.mrf.mxu0
        %v6178 = vadd.f32 %v335, %v6177
        %6179 = vmatmul.f32.gmra.mxu0 %v5842
        %v6180 = vpop.f32.mrf.mxu0
        %v6181 = vadd.f32 %v335, %v6180
        %6182 = vmatmul.f32.gmra.mxu0 %v5845
        %v6183 = vpop.f32.mrf.mxu0
        %v6184 = vadd.f32 %v335, %v6183
        %6185 = vmatmul.f32.gmra.mxu0 %v5848
        %v6186 = vpop.f32.mrf.mxu0
        %v6187 = vadd.f32 %v335, %v6186
        %6188 = vmatmul.f32.gmra.mxu0 %v5851
        %v6189 = vpop.f32.mrf.mxu0
        %v6190 = vadd.f32 %v335, %v6189
        %6191 = vmatmul.f32.gmra.mxu0 %v5854
        %v6192 = vpop.f32.mrf.mxu0
        %v6193 = vadd.f32 %v335, %v6192
        %6194 = vmatmul.f32.gmra.mxu0 %v5857
        %v6195 = vpop.f32.mrf.mxu0
        %v6196 = vadd.f32 %v335, %v6195
        %6197 = vmatmul.f32.gmra.mxu0 %v5860
        %v6198 = vpop.f32.mrf.mxu0
        %v6199 = vadd.f32 %v335, %v6198
        %6200 = vmatmul.f32.gmra.mxu0 %v5863
        %v6201 = vpop.f32.mrf.mxu0
        %v6202 = vadd.f32 %v335, %v6201
        %6203 = vmatmul.f32.gmra.mxu0 %v5866
        %v6204 = vpop.f32.mrf.mxu0
        %v6205 = vadd.f32 %v335, %v6204
        %6206 = vdwg.mxu0
        %6207 = vmatpush.msra.mxu0 0.0
        %6208 = vmatpush.msra.mxu0 0.0
        %6209 = vmatpush.msra.mxu0 0.0
        %6210 = vmatpush.msra.mxu0 0.0
        %6211 = vmatpush.msra.mxu0 0.0
        %6212 = vmatpush.msra.mxu0 0.0
        %6213 = vmatpush.msra.mxu0 0.0
        %6214 = vmatpush.msra.mxu0 0.0
        %6215 = vmatpush.msra.mxu0 0.0
        %6216 = vmatpush.msra.mxu0 0.0
        %6217 = vmatpush.msra.mxu0 0.0
        %6218 = vmatpush.msra.mxu0 0.0
        %6219 = vmatpush.msra.mxu0 0.0
        %6220 = vmatpush.msra.mxu0 0.0
        %6221 = vmatpush.msra.mxu0 0.0
        %6222 = vmatpush.msra.mxu0 %v266
        %6223 = vmatmul.f32.gmra.mxu0 %v5773
        %v6224 = vpop.f32.mrf.mxu0
        %v6225 = vadd.f32 %v336, %v6224
        %6226 = vmatmul.f32.gmra.mxu0 %v5776
        %v6227 = vpop.f32.mrf.mxu0
        %v6228 = vadd.f32 %v336, %v6227
        %6229 = vmatmul.f32.gmra.mxu0 %v5779
        %v6230 = vpop.f32.mrf.mxu0
        %v6231 = vadd.f32 %v336, %v6230
        %6232 = vmatmul.f32.gmra.mxu0 %v5782
        %v6233 = vpop.f32.mrf.mxu0
        %v6234 = vadd.f32 %v336, %v6233
        %6235 = vmatmul.f32.gmra.mxu0 %v5785
        %v6236 = vpop.f32.mrf.mxu0
        %v6237 = vadd.f32 %v336, %v6236
        %6238 = vmatmul.f32.gmra.mxu0 %v5788
        %v6239 = vpop.f32.mrf.mxu0
        %v6240 = vadd.f32 %v336, %v6239
        %6241 = vmatmul.f32.gmra.mxu0 %v5791
        %v6242 = vpop.f32.mrf.mxu0
        %v6243 = vadd.f32 %v336, %v6242
        %6244 = vmatmul.f32.gmra.mxu0 %v5794
        %v6245 = vpop.f32.mrf.mxu0
        %v6246 = vadd.f32 %v336, %v6245
        %6247 = vmatmul.f32.gmra.mxu0 %v5797
        %v6248 = vpop.f32.mrf.mxu0
        %v6249 = vadd.f32 %v336, %v6248
        %6250 = vmatmul.f32.gmra.mxu0 %v5800
        %v6251 = vpop.f32.mrf.mxu0
        %v6252 = vadd.f32 %v336, %v6251
        %6253 = vmatmul.f32.gmra.mxu0 %v5803
        %v6254 = vpop.f32.mrf.mxu0
        %v6255 = vadd.f32 %v336, %v6254
        %6256 = vmatmul.f32.gmra.mxu0 %v5806
        %v6257 = vpop.f32.mrf.mxu0
        %v6258 = vadd.f32 %v336, %v6257
        %6259 = vmatmul.f32.gmra.mxu0 %v5809
        %v6260 = vpop.f32.mrf.mxu0
        %v6261 = vadd.f32 %v336, %v6260
        %6262 = vmatmul.f32.gmra.mxu0 %v5812
        %v6263 = vpop.f32.mrf.mxu0
        %v6264 = vadd.f32 %v336, %v6263
        %6265 = vmatmul.f32.gmra.mxu0 %v5815
        %v6266 = vpop.f32.mrf.mxu0
        %v6267 = vadd.f32 %v336, %v6266
        %6268 = vmatmul.f32.gmra.mxu0 %v5818
        %v6269 = vpop.f32.mrf.mxu0
        %v6270 = vadd.f32 %v336, %v6269
        %6271 = vmatmul.f32.gmra.mxu0 %v5821
        %v6272 = vpop.f32.mrf.mxu0
        %v6273 = vadd.f32 %v336, %v6272
        %6274 = vmatmul.f32.gmra.mxu0 %v5824
        %v6275 = vpop.f32.mrf.mxu0
        %v6276 = vadd.f32 %v336, %v6275
        %6277 = vmatmul.f32.gmra.mxu0 %v5827
        %v6278 = vpop.f32.mrf.mxu0
        %v6279 = vadd.f32 %v336, %v6278
        %6280 = vmatmul.f32.gmra.mxu0 %v5830
        %v6281 = vpop.f32.mrf.mxu0
        %v6282 = vadd.f32 %v336, %v6281
        %6283 = vmatmul.f32.gmra.mxu0 %v5833
        %v6284 = vpop.f32.mrf.mxu0
        %v6285 = vadd.f32 %v336, %v6284
        %6286 = vmatmul.f32.gmra.mxu0 %v5836
        %v6287 = vpop.f32.mrf.mxu0
        %v6288 = vadd.f32 %v336, %v6287
        %6289 = vmatmul.f32.gmra.mxu0 %v5839
        %v6290 = vpop.f32.mrf.mxu0
        %v6291 = vadd.f32 %v336, %v6290
        %6292 = vmatmul.f32.gmra.mxu0 %v5842
        %v6293 = vpop.f32.mrf.mxu0
        %v6294 = vadd.f32 %v336, %v6293
        %6295 = vmatmul.f32.gmra.mxu0 %v5845
        %v6296 = vpop.f32.mrf.mxu0
        %v6297 = vadd.f32 %v336, %v6296
        %6298 = vmatmul.f32.gmra.mxu0 %v5848
        %v6299 = vpop.f32.mrf.mxu0
        %v6300 = vadd.f32 %v336, %v6299
        %6301 = vmatmul.f32.gmra.mxu0 %v5851
        %v6302 = vpop.f32.mrf.mxu0
        %v6303 = vadd.f32 %v336, %v6302
        %6304 = vmatmul.f32.gmra.mxu0 %v5854
        %v6305 = vpop.f32.mrf.mxu0
        %v6306 = vadd.f32 %v336, %v6305
        %6307 = vmatmul.f32.gmra.mxu0 %v5857
        %v6308 = vpop.f32.mrf.mxu0
        %v6309 = vadd.f32 %v336, %v6308
        %6310 = vmatmul.f32.gmra.mxu0 %v5860
        %v6311 = vpop.f32.mrf.mxu0
        %v6312 = vadd.f32 %v336, %v6311
        %6313 = vmatmul.f32.gmra.mxu0 %v5863
        %v6314 = vpop.f32.mrf.mxu0
        %v6315 = vadd.f32 %v336, %v6314
        %6316 = vmatmul.f32.gmra.mxu0 %v5866
        %v6317 = vpop.f32.mrf.mxu0
        %v6318 = vadd.f32 %v336, %v6317
        %6319 = vdwg.mxu0
        %v6320 = vmax.f32 %v5886, 0.0
        %v6321 = vmax.f32 %v5999, 0.0
        %v6322 = vmax.f32 %v6112, 0.0
        %v6323 = vmax.f32 %v6225, 0.0
        %v6324 = vmax.f32 %v5889, 0.0
        %v6325 = vmax.f32 %v6002, 0.0
        %v6326 = vmax.f32 %v6115, 0.0
        %v6327 = vmax.f32 %v6228, 0.0
        %v6328 = vmax.f32 %v5892, 0.0
        %v6329 = vmax.f32 %v6005, 0.0
        %v6330 = vmax.f32 %v6118, 0.0
        %v6331 = vmax.f32 %v6231, 0.0
        %v6332 = vmax.f32 %v5895, 0.0
        %v6333 = vmax.f32 %v6008, 0.0
        %v6334 = vmax.f32 %v6121, 0.0
        %v6335 = vmax.f32 %v6234, 0.0
        %v6336 = vmax.f32 %v5898, 0.0
        %v6337 = vmax.f32 %v6011, 0.0
        %v6338 = vmax.f32 %v6124, 0.0
        %v6339 = vmax.f32 %v6237, 0.0
        %v6340 = vmax.f32 %v5901, 0.0
        %v6341 = vmax.f32 %v6014, 0.0
        %v6342 = vmax.f32 %v6127, 0.0
        %v6343 = vmax.f32 %v6240, 0.0
        %v6344 = vmax.f32 %v5904, 0.0
        %v6345 = vmax.f32 %v6017, 0.0
        %v6346 = vmax.f32 %v6130, 0.0
        %v6347 = vmax.f32 %v6243, 0.0
        %v6348 = vmax.f32 %v5907, 0.0
        %v6349 = vmax.f32 %v6020, 0.0
        %v6350 = vmax.f32 %v6133, 0.0
        %v6351 = vmax.f32 %v6246, 0.0
        %v6352 = vmax.f32 %v5910, 0.0
        %v6353 = vmax.f32 %v6023, 0.0
        %v6354 = vmax.f32 %v6136, 0.0
        %v6355 = vmax.f32 %v6249, 0.0
        %v6356 = vmax.f32 %v5913, 0.0
        %v6357 = vmax.f32 %v6026, 0.0
        %v6358 = vmax.f32 %v6139, 0.0
        %v6359 = vmax.f32 %v6252, 0.0
        %v6360 = vmax.f32 %v5916, 0.0
        %v6361 = vmax.f32 %v6029, 0.0
        %v6362 = vmax.f32 %v6142, 0.0
        %v6363 = vmax.f32 %v6255, 0.0
        %v6364 = vmax.f32 %v5919, 0.0
        %v6365 = vmax.f32 %v6032, 0.0
        %v6366 = vmax.f32 %v6145, 0.0
        %v6367 = vmax.f32 %v6258, 0.0
        %v6368 = vmax.f32 %v5922, 0.0
        %v6369 = vmax.f32 %v6035, 0.0
        %v6370 = vmax.f32 %v6148, 0.0
        %v6371 = vmax.f32 %v6261, 0.0
        %v6372 = vmax.f32 %v5925, 0.0
        %v6373 = vmax.f32 %v6038, 0.0
        %v6374 = vmax.f32 %v6151, 0.0
        %v6375 = vmax.f32 %v6264, 0.0
        %v6376 = vmax.f32 %v5928, 0.0
        %v6377 = vmax.f32 %v6041, 0.0
        %v6378 = vmax.f32 %v6154, 0.0
        %v6379 = vmax.f32 %v6267, 0.0
        %v6380 = vmax.f32 %v5931, 0.0
        %v6381 = vmax.f32 %v6044, 0.0
        %v6382 = vmax.f32 %v6157, 0.0
        %v6383 = vmax.f32 %v6270, 0.0
        %v6384 = vmax.f32 %v5934, 0.0
        %v6385 = vmax.f32 %v6047, 0.0
        %v6386 = vmax.f32 %v6160, 0.0
        %v6387 = vmax.f32 %v6273, 0.0
        %v6388 = vmax.f32 %v5937, 0.0
        %v6389 = vmax.f32 %v6050, 0.0
        %v6390 = vmax.f32 %v6163, 0.0
        %v6391 = vmax.f32 %v6276, 0.0
        %v6392 = vmax.f32 %v5940, 0.0
        %v6393 = vmax.f32 %v6053, 0.0
        %v6394 = vmax.f32 %v6166, 0.0
        %v6395 = vmax.f32 %v6279, 0.0
        %v6396 = vmax.f32 %v5943, 0.0
        %v6397 = vmax.f32 %v6056, 0.0
        %v6398 = vmax.f32 %v6169, 0.0
        %v6399 = vmax.f32 %v6282, 0.0
        %v6400 = vmax.f32 %v5946, 0.0
        %v6401 = vmax.f32 %v6059, 0.0
        %v6402 = vmax.f32 %v6172, 0.0
        %v6403 = vmax.f32 %v6285, 0.0
        %v6404 = vmax.f32 %v5949, 0.0
        %v6405 = vmax.f32 %v6062, 0.0
        %v6406 = vmax.f32 %v6175, 0.0
        %v6407 = vmax.f32 %v6288, 0.0
        %v6408 = vmax.f32 %v5952, 0.0
        %v6409 = vmax.f32 %v6065, 0.0
        %v6410 = vmax.f32 %v6178, 0.0
        %v6411 = vmax.f32 %v6291, 0.0
        %v6412 = vmax.f32 %v5955, 0.0
        %v6413 = vmax.f32 %v6068, 0.0
        %v6414 = vmax.f32 %v6181, 0.0
        %v6415 = vmax.f32 %v6294, 0.0
        %v6416 = vmax.f32 %v5958, 0.0
        %v6417 = vmax.f32 %v6071, 0.0
        %v6418 = vmax.f32 %v6184, 0.0
        %v6419 = vmax.f32 %v6297, 0.0
        %v6420 = vmax.f32 %v5961, 0.0
        %v6421 = vmax.f32 %v6074, 0.0
        %v6422 = vmax.f32 %v6187, 0.0
        %v6423 = vmax.f32 %v6300, 0.0
        %v6424 = vmax.f32 %v5964, 0.0
        %v6425 = vmax.f32 %v6077, 0.0
        %v6426 = vmax.f32 %v6190, 0.0
        %v6427 = vmax.f32 %v6303, 0.0
        %v6428 = vmax.f32 %v5967, 0.0
        %v6429 = vmax.f32 %v6080, 0.0
        %v6430 = vmax.f32 %v6193, 0.0
        %v6431 = vmax.f32 %v6306, 0.0
        %v6432 = vmax.f32 %v5970, 0.0
        %v6433 = vmax.f32 %v6083, 0.0
        %v6434 = vmax.f32 %v6196, 0.0
        %v6435 = vmax.f32 %v6309, 0.0
        %v6436 = vmax.f32 %v5973, 0.0
        %v6437 = vmax.f32 %v6086, 0.0
        %v6438 = vmax.f32 %v6199, 0.0
        %v6439 = vmax.f32 %v6312, 0.0
        %v6440 = vmax.f32 %v5976, 0.0
        %v6441 = vmax.f32 %v6089, 0.0
        %v6442 = vmax.f32 %v6202, 0.0
        %v6443 = vmax.f32 %v6315, 0.0
        %v6444 = vmax.f32 %v5979, 0.0
        %v6445 = vmax.f32 %v6092, 0.0
        %v6446 = vmax.f32 %v6205, 0.0
        %v6447 = vmax.f32 %v6318, 0.0
        %s6448 = scalar_lea.vmem %s236, 6 [#allocation8]
        %v6449 = vld [vmem:[%s6448] ss:$8 sm:$0xf]
        %v6450 = vadd.f32 %v6320, %v6324
        %v6451 = vadd.f32 %v6450, %v6328
        %v6452 = vadd.f32 %v6451, %v6332
        %v6453 = vadd.f32 %v6452, %v6336
        %v6454 = vadd.f32 %v6453, %v6340
        %v6455 = vadd.f32 %v6454, %v6344
        %v6456 = vadd.f32 %v6455, %v6348
        %v6457 = vadd.f32 %v6456, %v6352
        %v6458 = vadd.f32 %v6457, %v6356
        %v6459 = vadd.f32 %v6458, %v6360
        %v6460 = vadd.f32 %v6459, %v6364
        %v6461 = vadd.f32 %v6460, %v6368
        %v6462 = vadd.f32 %v6461, %v6372
        %v6463 = vadd.f32 %v6462, %v6376
        %v6464 = vadd.f32 %v6463, %v6380
        %v6465 = vadd.f32 %v6464, %v6384
        %v6466 = vadd.f32 %v6465, %v6388
        %v6467 = vadd.f32 %v6466, %v6392
        %v6468 = vadd.f32 %v6467, %v6396
        %v6469 = vadd.f32 %v6468, %v6400
        %v6470 = vadd.f32 %v6469, %v6404
        %v6471 = vadd.f32 %v6470, %v6408
        %v6472 = vadd.f32 %v6471, %v6412
        %v6473 = vadd.f32 %v6472, %v6416
        %v6474 = vadd.f32 %v6473, %v6420
        %v6475 = vadd.f32 %v6474, %v6424
        %v6476 = vadd.f32 %v6475, %v6428
        %v6477 = vadd.f32 %v6476, %v6432
        %v6478 = vadd.f32 %v6477, %v6436
        %v6479 = vadd.f32 %v6478, %v6440
        %v6480 = vadd.f32 %v6479, %v6444
        %v6481 = vrot.slane %v6480, 4
        %v6482 = vadd.f32 %v6480, %v6481
        %v6483 = vrot.slane %v6482, 2
        %v6484 = vadd.f32 %v6482, %v6483
        %v6485 = vrot.slane %v6484, 1
        %v6486 = vadd.f32 %v6484, %v6485
        %v6487 = vadd.f32 %v6321, %v6325
        %v6488 = vadd.f32 %v6487, %v6329
        %v6489 = vadd.f32 %v6488, %v6333
        %v6490 = vadd.f32 %v6489, %v6337
        %v6491 = vadd.f32 %v6490, %v6341
        %v6492 = vadd.f32 %v6491, %v6345
        %v6493 = vadd.f32 %v6492, %v6349
        %v6494 = vadd.f32 %v6493, %v6353
        %v6495 = vadd.f32 %v6494, %v6357
        %v6496 = vadd.f32 %v6495, %v6361
        %v6497 = vadd.f32 %v6496, %v6365
        %v6498 = vadd.f32 %v6497, %v6369
        %v6499 = vadd.f32 %v6498, %v6373
        %v6500 = vadd.f32 %v6499, %v6377
        %v6501 = vadd.f32 %v6500, %v6381
        %v6502 = vadd.f32 %v6501, %v6385
        %v6503 = vadd.f32 %v6502, %v6389
        %v6504 = vadd.f32 %v6503, %v6393
        %v6505 = vadd.f32 %v6504, %v6397
        %v6506 = vadd.f32 %v6505, %v6401
        %v6507 = vadd.f32 %v6506, %v6405
        %v6508 = vadd.f32 %v6507, %v6409
        %v6509 = vadd.f32 %v6508, %v6413
        %v6510 = vadd.f32 %v6509, %v6417
        %v6511 = vadd.f32 %v6510, %v6421
        %v6512 = vadd.f32 %v6511, %v6425
        %v6513 = vadd.f32 %v6512, %v6429
        %v6514 = vadd.f32 %v6513, %v6433
        %v6515 = vadd.f32 %v6514, %v6437
        %v6516 = vadd.f32 %v6515, %v6441
        %v6517 = vadd.f32 %v6516, %v6445
        %v6518 = vrot.slane %v6517, 4
        %v6519 = vadd.f32 %v6517, %v6518
        %v6520 = vrot.slane %v6519, 2
        %v6521 = vadd.f32 %v6519, %v6520
        %v6522 = vrot.slane %v6521, 1
        %v6523 = vadd.f32 %v6521, %v6522
        %v6524 = vadd.f32 %v6322, %v6326
        %v6525 = vadd.f32 %v6524, %v6330
        %v6526 = vadd.f32 %v6525, %v6334
        %v6527 = vadd.f32 %v6526, %v6338
        %v6528 = vadd.f32 %v6527, %v6342
        %v6529 = vadd.f32 %v6528, %v6346
        %v6530 = vadd.f32 %v6529, %v6350
        %v6531 = vadd.f32 %v6530, %v6354
        %v6532 = vadd.f32 %v6531, %v6358
        %v6533 = vadd.f32 %v6532, %v6362
        %v6534 = vadd.f32 %v6533, %v6366
        %v6535 = vadd.f32 %v6534, %v6370
        %v6536 = vadd.f32 %v6535, %v6374
        %v6537 = vadd.f32 %v6536, %v6378
        %v6538 = vadd.f32 %v6537, %v6382
        %v6539 = vadd.f32 %v6538, %v6386
        %v6540 = vadd.f32 %v6539, %v6390
        %v6541 = vadd.f32 %v6540, %v6394
        %v6542 = vadd.f32 %v6541, %v6398
        %v6543 = vadd.f32 %v6542, %v6402
        %v6544 = vadd.f32 %v6543, %v6406
        %v6545 = vadd.f32 %v6544, %v6410
        %v6546 = vadd.f32 %v6545, %v6414
        %v6547 = vadd.f32 %v6546, %v6418
        %v6548 = vadd.f32 %v6547, %v6422
        %v6549 = vadd.f32 %v6548, %v6426
        %v6550 = vadd.f32 %v6549, %v6430
        %v6551 = vadd.f32 %v6550, %v6434
        %v6552 = vadd.f32 %v6551, %v6438
        %v6553 = vadd.f32 %v6552, %v6442
        %v6554 = vadd.f32 %v6553, %v6446
        %v6555 = vrot.slane %v6554, 4
        %v6556 = vadd.f32 %v6554, %v6555
        %v6557 = vrot.slane %v6556, 2
        %v6558 = vadd.f32 %v6556, %v6557
        %v6559 = vrot.slane %v6558, 1
        %v6560 = vadd.f32 %v6558, %v6559
        %v6561 = vadd.f32 %v6323, %v6327
        %v6562 = vadd.f32 %v6561, %v6331
        %v6563 = vadd.f32 %v6562, %v6335
        %v6564 = vadd.f32 %v6563, %v6339
        %v6565 = vadd.f32 %v6564, %v6343
        %v6566 = vadd.f32 %v6565, %v6347
        %v6567 = vadd.f32 %v6566, %v6351
        %v6568 = vadd.f32 %v6567, %v6355
        %v6569 = vadd.f32 %v6568, %v6359
        %v6570 = vadd.f32 %v6569, %v6363
        %v6571 = vadd.f32 %v6570, %v6367
        %v6572 = vadd.f32 %v6571, %v6371
        %v6573 = vadd.f32 %v6572, %v6375
        %v6574 = vadd.f32 %v6573, %v6379
        %v6575 = vadd.f32 %v6574, %v6383
        %v6576 = vadd.f32 %v6575, %v6387
        %v6577 = vadd.f32 %v6576, %v6391
        %v6578 = vadd.f32 %v6577, %v6395
        %v6579 = vadd.f32 %v6578, %v6399
        %v6580 = vadd.f32 %v6579, %v6403
        %v6581 = vadd.f32 %v6580, %v6407
        %v6582 = vadd.f32 %v6581, %v6411
        %v6583 = vadd.f32 %v6582, %v6415
        %v6584 = vadd.f32 %v6583, %v6419
        %v6585 = vadd.f32 %v6584, %v6423
        %v6586 = vadd.f32 %v6585, %v6427
        %v6587 = vadd.f32 %v6586, %v6431
        %v6588 = vadd.f32 %v6587, %v6435
        %v6589 = vadd.f32 %v6588, %v6439
        %v6590 = vadd.f32 %v6589, %v6443
        %v6591 = vadd.f32 %v6590, %v6447
        %v6592 = vrot.slane %v6591, 4
        %v6593 = vadd.f32 %v6591, %v6592
        %v6594 = vrot.slane %v6593, 2
        %v6595 = vadd.f32 %v6593, %v6594
        %v6596 = vrot.slane %v6595, 1
        %v6597 = vadd.f32 %v6595, %v6596
        %v6602 = vrot.slane %v6523, 7
        %v6603 = vrot.slane %v6560, 6
        %v6604 = vrot.slane %v6597, 5
        %v6605 = vsel %vm1174, %v6486, %v6602
        %v6606 = vsel %vm1176, %v6603, %v6604
        %v6607 = vsel %vm1178, %v6605, %v6606
        %v6609 = vadd.f32 %v6449, %v6607
        %6610 = vst.msk [vmem:[%s6448] ss:$8 sm:$0xf] %vm1185, %v6609
        %6611 = vst.msk [vmem:[%s6448] ss:$8 sm:$0x0] %vm1185, %v6609
        %6612 = vxpose.xlu0.b32.start [1/16] %v261, 128
        %6613 = vxpose.xlu0.b32.cont [2/16] 0.0, 128
        %6614 = vxpose.xlu0.b32.cont [3/16] 0.0, 128
        %6615 = vxpose.xlu0.b32.cont [4/16] 0.0, 128
        %6616 = vxpose.xlu0.b32.cont [5/16] 0.0, 128
        %6617 = vxpose.xlu0.b32.cont [6/16] 0.0, 128
        %6618 = vxpose.xlu0.b32.cont [7/16] 0.0, 128
        %6619 = vxpose.xlu0.b32.cont [8/16] 0.0, 128
        %6620 = vxpose.xlu0.b32.cont [9/16] 0.0, 128
        %6621 = vxpose.xlu0.b32.cont [10/16] 0.0, 128
        %6622 = vxpose.xlu0.b32.cont [11/16] 0.0, 128
        %6623 = vxpose.xlu0.b32.cont [12/16] 0.0, 128
        %6624 = vxpose.xlu0.b32.cont [13/16] 0.0, 128
        %6625 = vxpose.xlu0.b32.cont [14/16] 0.0, 128
        %6626 = vxpose.xlu0.b32.cont [15/16] 0.0, 128
        %6627 = vxpose.xlu0.b32.end [16/16] 0.0, 128
        %v6628 = vpop.trf.xlu0
        %v6629 = vpop.trf.xlu0
        %v6630 = vpop.trf.xlu0
        %v6631 = vpop.trf.xlu0
        %v6632 = vpop.trf.xlu0
        %v6633 = vpop.trf.xlu0
        %v6634 = vpop.trf.xlu0
        %v6635 = vpop.trf.xlu0
        %v6636 = vpop.trf.xlu0
        %v6637 = vpop.trf.xlu0
        %v6638 = vpop.trf.xlu0
        %v6639 = vpop.trf.xlu0
        %v6640 = vpop.trf.xlu0
        %v6641 = vpop.trf.xlu0
        %v6642 = vpop.trf.xlu0
        %v6643 = vpop.trf.xlu0
        %6644 = vxpose.xlu0.b32.start [1/16] %v262, 128
        %6645 = vxpose.xlu0.b32.cont [2/16] 0.0, 128
        %6646 = vxpose.xlu0.b32.cont [3/16] 0.0, 128
        %6647 = vxpose.xlu0.b32.cont [4/16] 0.0, 128
        %6648 = vxpose.xlu0.b32.cont [5/16] 0.0, 128
        %6649 = vxpose.xlu0.b32.cont [6/16] 0.0, 128
        %6650 = vxpose.xlu0.b32.cont [7/16] 0.0, 128
        %6651 = vxpose.xlu0.b32.cont [8/16] 0.0, 128
        %6652 = vxpose.xlu0.b32.cont [9/16] 0.0, 128
        %6653 = vxpose.xlu0.b32.cont [10/16] 0.0, 128
        %6654 = vxpose.xlu0.b32.cont [11/16] 0.0, 128
        %6655 = vxpose.xlu0.b32.cont [12/16] 0.0, 128
        %6656 = vxpose.xlu0.b32.cont [13/16] 0.0, 128
        %6657 = vxpose.xlu0.b32.cont [14/16] 0.0, 128
        %6658 = vxpose.xlu0.b32.cont [15/16] 0.0, 128
        %6659 = vxpose.xlu0.b32.end [16/16] 0.0, 128
        %v6660 = vpop.trf.xlu0
        %v6661 = vpop.trf.xlu0
        %v6662 = vpop.trf.xlu0
        %v6663 = vpop.trf.xlu0
        %v6664 = vpop.trf.xlu0
        %v6665 = vpop.trf.xlu0
        %v6666 = vpop.trf.xlu0
        %v6667 = vpop.trf.xlu0
        %v6668 = vpop.trf.xlu0
        %v6669 = vpop.trf.xlu0
        %v6670 = vpop.trf.xlu0
        %v6671 = vpop.trf.xlu0
        %v6672 = vpop.trf.xlu0
        %v6673 = vpop.trf.xlu0
        %v6674 = vpop.trf.xlu0
        %v6675 = vpop.trf.xlu0
        %v6677 = vsel %vm341, %v6628, 0
        %v6680 = vsel %vm341, %v6629, 0
        %v6683 = vsel %vm341, %v6630, 0
        %v6686 = vsel %vm341, %v6631, 0
        %v6689 = vsel %vm341, %v6632, 0
        %v6692 = vsel %vm341, %v6633, 0
        %v6695 = vsel %vm341, %v6634, 0
        %v6698 = vsel %vm341, %v6635, 0
        %v6701 = vsel %vm341, %v6636, 0
        %v6704 = vsel %vm341, %v6637, 0
        %v6707 = vsel %vm341, %v6638, 0
        %v6710 = vsel %vm341, %v6639, 0
        %v6713 = vsel %vm341, %v6640, 0
        %v6716 = vsel %vm341, %v6641, 0
        %v6719 = vsel %vm341, %v6642, 0
        %v6722 = vsel %vm341, %v6643, 0
        %v6725 = vsel %vm341, %v6660, 0
        %v6728 = vsel %vm341, %v6661, 0
        %v6731 = vsel %vm341, %v6662, 0
        %v6734 = vsel %vm341, %v6663, 0
        %v6737 = vsel %vm341, %v6664, 0
        %v6740 = vsel %vm341, %v6665, 0
        %v6743 = vsel %vm341, %v6666, 0
        %v6746 = vsel %vm341, %v6667, 0
        %v6749 = vsel %vm341, %v6668, 0
        %v6752 = vsel %vm341, %v6669, 0
        %v6755 = vsel %vm341, %v6670, 0
        %v6758 = vsel %vm341, %v6671, 0
        %v6761 = vsel %vm341, %v6672, 0
        %v6764 = vsel %vm341, %v6673, 0
        %v6767 = vsel %vm341, %v6674, 0
        %v6770 = vsel %vm341, %v6675, 0
        %6772 = vmatpush.msra.mxu0 0.0
        %6773 = vmatpush.msra.mxu0 0.0
        %6774 = vmatpush.msra.mxu0 0.0
        %6775 = vmatpush.msra.mxu0 0.0
        %6776 = vmatpush.msra.mxu0 0.0
        %6777 = vmatpush.msra.mxu0 0.0
        %6778 = vmatpush.msra.mxu0 0.0
        %6779 = vmatpush.msra.mxu0 0.0
        %6780 = vmatpush.msra.mxu0 0.0
        %6781 = vmatpush.msra.mxu0 0.0
        %6782 = vmatpush.msra.mxu0 0.0
        %6783 = vmatpush.msra.mxu0 0.0
        %6784 = vmatpush.msra.mxu0 0.0
        %6785 = vmatpush.msra.mxu0 0.0
        %6786 = vmatpush.msra.mxu0 0.0
        %6787 = vmatpush.msra.mxu0 %v263
        %6788 = vmatmul.f32.gmra.mxu0 %v6677
        %v6789 = vpop.f32.mrf.mxu0
        %v6790 = vadd.f32 %v333, %v6789
        %6791 = vmatmul.f32.gmra.mxu0 %v6680
        %v6792 = vpop.f32.mrf.mxu0
        %v6793 = vadd.f32 %v333, %v6792
        %6794 = vmatmul.f32.gmra.mxu0 %v6683
        %v6795 = vpop.f32.mrf.mxu0
        %v6796 = vadd.f32 %v333, %v6795
        %6797 = vmatmul.f32.gmra.mxu0 %v6686
        %v6798 = vpop.f32.mrf.mxu0
        %v6799 = vadd.f32 %v333, %v6798
        %6800 = vmatmul.f32.gmra.mxu0 %v6689
        %v6801 = vpop.f32.mrf.mxu0
        %v6802 = vadd.f32 %v333, %v6801
        %6803 = vmatmul.f32.gmra.mxu0 %v6692
        %v6804 = vpop.f32.mrf.mxu0
        %v6805 = vadd.f32 %v333, %v6804
        %6806 = vmatmul.f32.gmra.mxu0 %v6695
        %v6807 = vpop.f32.mrf.mxu0
        %v6808 = vadd.f32 %v333, %v6807
        %6809 = vmatmul.f32.gmra.mxu0 %v6698
        %v6810 = vpop.f32.mrf.mxu0
        %v6811 = vadd.f32 %v333, %v6810
        %6812 = vmatmul.f32.gmra.mxu0 %v6701
        %v6813 = vpop.f32.mrf.mxu0
        %v6814 = vadd.f32 %v333, %v6813
        %6815 = vmatmul.f32.gmra.mxu0 %v6704
        %v6816 = vpop.f32.mrf.mxu0
        %v6817 = vadd.f32 %v333, %v6816
        %6818 = vmatmul.f32.gmra.mxu0 %v6707
        %v6819 = vpop.f32.mrf.mxu0
        %v6820 = vadd.f32 %v333, %v6819
        %6821 = vmatmul.f32.gmra.mxu0 %v6710
        %v6822 = vpop.f32.mrf.mxu0
        %v6823 = vadd.f32 %v333, %v6822
        %6824 = vmatmul.f32.gmra.mxu0 %v6713
        %v6825 = vpop.f32.mrf.mxu0
        %v6826 = vadd.f32 %v333, %v6825
        %6827 = vmatmul.f32.gmra.mxu0 %v6716
        %v6828 = vpop.f32.mrf.mxu0
        %v6829 = vadd.f32 %v333, %v6828
        %6830 = vmatmul.f32.gmra.mxu0 %v6719
        %v6831 = vpop.f32.mrf.mxu0
        %v6832 = vadd.f32 %v333, %v6831
        %6833 = vmatmul.f32.gmra.mxu0 %v6722
        %v6834 = vpop.f32.mrf.mxu0
        %v6835 = vadd.f32 %v333, %v6834
        %6836 = vmatmul.f32.gmra.mxu0 %v6725
        %v6837 = vpop.f32.mrf.mxu0
        %v6838 = vadd.f32 %v333, %v6837
        %6839 = vmatmul.f32.gmra.mxu0 %v6728
        %v6840 = vpop.f32.mrf.mxu0
        %v6841 = vadd.f32 %v333, %v6840
        %6842 = vmatmul.f32.gmra.mxu0 %v6731
        %v6843 = vpop.f32.mrf.mxu0
        %v6844 = vadd.f32 %v333, %v6843
        %6845 = vmatmul.f32.gmra.mxu0 %v6734
        %v6846 = vpop.f32.mrf.mxu0
        %v6847 = vadd.f32 %v333, %v6846
        %6848 = vmatmul.f32.gmra.mxu0 %v6737
        %v6849 = vpop.f32.mrf.mxu0
        %v6850 = vadd.f32 %v333, %v6849
        %6851 = vmatmul.f32.gmra.mxu0 %v6740
        %v6852 = vpop.f32.mrf.mxu0
        %v6853 = vadd.f32 %v333, %v6852
        %6854 = vmatmul.f32.gmra.mxu0 %v6743
        %v6855 = vpop.f32.mrf.mxu0
        %v6856 = vadd.f32 %v333, %v6855
        %6857 = vmatmul.f32.gmra.mxu0 %v6746
        %v6858 = vpop.f32.mrf.mxu0
        %v6859 = vadd.f32 %v333, %v6858
        %6860 = vmatmul.f32.gmra.mxu0 %v6749
        %v6861 = vpop.f32.mrf.mxu0
        %v6862 = vadd.f32 %v333, %v6861
        %6863 = vmatmul.f32.gmra.mxu0 %v6752
        %v6864 = vpop.f32.mrf.mxu0
        %v6865 = vadd.f32 %v333, %v6864
        %6866 = vmatmul.f32.gmra.mxu0 %v6755
        %v6867 = vpop.f32.mrf.mxu0
        %v6868 = vadd.f32 %v333, %v6867
        %6869 = vmatmul.f32.gmra.mxu0 %v6758
        %v6870 = vpop.f32.mrf.mxu0
        %v6871 = vadd.f32 %v333, %v6870
        %6872 = vmatmul.f32.gmra.mxu0 %v6761
        %v6873 = vpop.f32.mrf.mxu0
        %v6874 = vadd.f32 %v333, %v6873
        %6875 = vmatmul.f32.gmra.mxu0 %v6764
        %v6876 = vpop.f32.mrf.mxu0
        %v6877 = vadd.f32 %v333, %v6876
        %6878 = vmatmul.f32.gmra.mxu0 %v6767
        %v6879 = vpop.f32.mrf.mxu0
        %v6880 = vadd.f32 %v333, %v6879
        %6881 = vmatmul.f32.gmra.mxu0 %v6770
        %v6882 = vpop.f32.mrf.mxu0
        %v6883 = vadd.f32 %v333, %v6882
        %6884 = vdwg.mxu0
        %6885 = vmatpush.msra.mxu0 0.0
        %6886 = vmatpush.msra.mxu0 0.0
        %6887 = vmatpush.msra.mxu0 0.0
        %6888 = vmatpush.msra.mxu0 0.0
        %6889 = vmatpush.msra.mxu0 0.0
        %6890 = vmatpush.msra.mxu0 0.0
        %6891 = vmatpush.msra.mxu0 0.0
        %6892 = vmatpush.msra.mxu0 0.0
        %6893 = vmatpush.msra.mxu0 0.0
        %6894 = vmatpush.msra.mxu0 0.0
        %6895 = vmatpush.msra.mxu0 0.0
        %6896 = vmatpush.msra.mxu0 0.0
        %6897 = vmatpush.msra.mxu0 0.0
        %6898 = vmatpush.msra.mxu0 0.0
        %6899 = vmatpush.msra.mxu0 0.0
        %6900 = vmatpush.msra.mxu0 %v264
        %6901 = vmatmul.f32.gmra.mxu0 %v6677
        %v6902 = vpop.f32.mrf.mxu0
        %v6903 = vadd.f32 %v334, %v6902
        %6904 = vmatmul.f32.gmra.mxu0 %v6680
        %v6905 = vpop.f32.mrf.mxu0
        %v6906 = vadd.f32 %v334, %v6905
        %6907 = vmatmul.f32.gmra.mxu0 %v6683
        %v6908 = vpop.f32.mrf.mxu0
        %v6909 = vadd.f32 %v334, %v6908
        %6910 = vmatmul.f32.gmra.mxu0 %v6686
        %v6911 = vpop.f32.mrf.mxu0
        %v6912 = vadd.f32 %v334, %v6911
        %6913 = vmatmul.f32.gmra.mxu0 %v6689
        %v6914 = vpop.f32.mrf.mxu0
        %v6915 = vadd.f32 %v334, %v6914
        %6916 = vmatmul.f32.gmra.mxu0 %v6692
        %v6917 = vpop.f32.mrf.mxu0
        %v6918 = vadd.f32 %v334, %v6917
        %6919 = vmatmul.f32.gmra.mxu0 %v6695
        %v6920 = vpop.f32.mrf.mxu0
        %v6921 = vadd.f32 %v334, %v6920
        %6922 = vmatmul.f32.gmra.mxu0 %v6698
        %v6923 = vpop.f32.mrf.mxu0
        %v6924 = vadd.f32 %v334, %v6923
        %6925 = vmatmul.f32.gmra.mxu0 %v6701
        %v6926 = vpop.f32.mrf.mxu0
        %v6927 = vadd.f32 %v334, %v6926
        %6928 = vmatmul.f32.gmra.mxu0 %v6704
        %v6929 = vpop.f32.mrf.mxu0
        %v6930 = vadd.f32 %v334, %v6929
        %6931 = vmatmul.f32.gmra.mxu0 %v6707
        %v6932 = vpop.f32.mrf.mxu0
        %v6933 = vadd.f32 %v334, %v6932
        %6934 = vmatmul.f32.gmra.mxu0 %v6710
        %v6935 = vpop.f32.mrf.mxu0
        %v6936 = vadd.f32 %v334, %v6935
        %6937 = vmatmul.f32.gmra.mxu0 %v6713
        %v6938 = vpop.f32.mrf.mxu0
        %v6939 = vadd.f32 %v334, %v6938
        %6940 = vmatmul.f32.gmra.mxu0 %v6716
        %v6941 = vpop.f32.mrf.mxu0
        %v6942 = vadd.f32 %v334, %v6941
        %6943 = vmatmul.f32.gmra.mxu0 %v6719
        %v6944 = vpop.f32.mrf.mxu0
        %v6945 = vadd.f32 %v334, %v6944
        %6946 = vmatmul.f32.gmra.mxu0 %v6722
        %v6947 = vpop.f32.mrf.mxu0
        %v6948 = vadd.f32 %v334, %v6947
        %6949 = vmatmul.f32.gmra.mxu0 %v6725
        %v6950 = vpop.f32.mrf.mxu0
        %v6951 = vadd.f32 %v334, %v6950
        %6952 = vmatmul.f32.gmra.mxu0 %v6728
        %v6953 = vpop.f32.mrf.mxu0
        %v6954 = vadd.f32 %v334, %v6953
        %6955 = vmatmul.f32.gmra.mxu0 %v6731
        %v6956 = vpop.f32.mrf.mxu0
        %v6957 = vadd.f32 %v334, %v6956
        %6958 = vmatmul.f32.gmra.mxu0 %v6734
        %v6959 = vpop.f32.mrf.mxu0
        %v6960 = vadd.f32 %v334, %v6959
        %6961 = vmatmul.f32.gmra.mxu0 %v6737
        %v6962 = vpop.f32.mrf.mxu0
        %v6963 = vadd.f32 %v334, %v6962
        %6964 = vmatmul.f32.gmra.mxu0 %v6740
        %v6965 = vpop.f32.mrf.mxu0
        %v6966 = vadd.f32 %v334, %v6965
        %6967 = vmatmul.f32.gmra.mxu0 %v6743
        %v6968 = vpop.f32.mrf.mxu0
        %v6969 = vadd.f32 %v334, %v6968
        %6970 = vmatmul.f32.gmra.mxu0 %v6746
        %v6971 = vpop.f32.mrf.mxu0
        %v6972 = vadd.f32 %v334, %v6971
        %6973 = vmatmul.f32.gmra.mxu0 %v6749
        %v6974 = vpop.f32.mrf.mxu0
        %v6975 = vadd.f32 %v334, %v6974
        %6976 = vmatmul.f32.gmra.mxu0 %v6752
        %v6977 = vpop.f32.mrf.mxu0
        %v6978 = vadd.f32 %v334, %v6977
        %6979 = vmatmul.f32.gmra.mxu0 %v6755
        %v6980 = vpop.f32.mrf.mxu0
        %v6981 = vadd.f32 %v334, %v6980
        %6982 = vmatmul.f32.gmra.mxu0 %v6758
        %v6983 = vpop.f32.mrf.mxu0
        %v6984 = vadd.f32 %v334, %v6983
        %6985 = vmatmul.f32.gmra.mxu0 %v6761
        %v6986 = vpop.f32.mrf.mxu0
        %v6987 = vadd.f32 %v334, %v6986
        %6988 = vmatmul.f32.gmra.mxu0 %v6764
        %v6989 = vpop.f32.mrf.mxu0
        %v6990 = vadd.f32 %v334, %v6989
        %6991 = vmatmul.f32.gmra.mxu0 %v6767
        %v6992 = vpop.f32.mrf.mxu0
        %v6993 = vadd.f32 %v334, %v6992
        %6994 = vmatmul.f32.gmra.mxu0 %v6770
        %v6995 = vpop.f32.mrf.mxu0
        %v6996 = vadd.f32 %v334, %v6995
        %6997 = vdwg.mxu0
        %6998 = vmatpush.msra.mxu0 0.0
        %6999 = vmatpush.msra.mxu0 0.0
        %7000 = vmatpush.msra.mxu0 0.0
        %7001 = vmatpush.msra.mxu0 0.0
        %7002 = vmatpush.msra.mxu0 0.0
        %7003 = vmatpush.msra.mxu0 0.0
        %7004 = vmatpush.msra.mxu0 0.0
        %7005 = vmatpush.msra.mxu0 0.0
        %7006 = vmatpush.msra.mxu0 0.0
        %7007 = vmatpush.msra.mxu0 0.0
        %7008 = vmatpush.msra.mxu0 0.0
        %7009 = vmatpush.msra.mxu0 0.0
        %7010 = vmatpush.msra.mxu0 0.0
        %7011 = vmatpush.msra.mxu0 0.0
        %7012 = vmatpush.msra.mxu0 0.0
        %7013 = vmatpush.msra.mxu0 %v265
        %7014 = vmatmul.f32.gmra.mxu0 %v6677
        %v7015 = vpop.f32.mrf.mxu0
        %v7016 = vadd.f32 %v335, %v7015
        %7017 = vmatmul.f32.gmra.mxu0 %v6680
        %v7018 = vpop.f32.mrf.mxu0
        %v7019 = vadd.f32 %v335, %v7018
        %7020 = vmatmul.f32.gmra.mxu0 %v6683
        %v7021 = vpop.f32.mrf.mxu0
        %v7022 = vadd.f32 %v335, %v7021
        %7023 = vmatmul.f32.gmra.mxu0 %v6686
        %v7024 = vpop.f32.mrf.mxu0
        %v7025 = vadd.f32 %v335, %v7024
        %7026 = vmatmul.f32.gmra.mxu0 %v6689
        %v7027 = vpop.f32.mrf.mxu0
        %v7028 = vadd.f32 %v335, %v7027
        %7029 = vmatmul.f32.gmra.mxu0 %v6692
        %v7030 = vpop.f32.mrf.mxu0
        %v7031 = vadd.f32 %v335, %v7030
        %7032 = vmatmul.f32.gmra.mxu0 %v6695
        %v7033 = vpop.f32.mrf.mxu0
        %v7034 = vadd.f32 %v335, %v7033
        %7035 = vmatmul.f32.gmra.mxu0 %v6698
        %v7036 = vpop.f32.mrf.mxu0
        %v7037 = vadd.f32 %v335, %v7036
        %7038 = vmatmul.f32.gmra.mxu0 %v6701
        %v7039 = vpop.f32.mrf.mxu0
        %v7040 = vadd.f32 %v335, %v7039
        %7041 = vmatmul.f32.gmra.mxu0 %v6704
        %v7042 = vpop.f32.mrf.mxu0
        %v7043 = vadd.f32 %v335, %v7042
        %7044 = vmatmul.f32.gmra.mxu0 %v6707
        %v7045 = vpop.f32.mrf.mxu0
        %v7046 = vadd.f32 %v335, %v7045
        %7047 = vmatmul.f32.gmra.mxu0 %v6710
        %v7048 = vpop.f32.mrf.mxu0
        %v7049 = vadd.f32 %v335, %v7048
        %7050 = vmatmul.f32.gmra.mxu0 %v6713
        %v7051 = vpop.f32.mrf.mxu0
        %v7052 = vadd.f32 %v335, %v7051
        %7053 = vmatmul.f32.gmra.mxu0 %v6716
        %v7054 = vpop.f32.mrf.mxu0
        %v7055 = vadd.f32 %v335, %v7054
        %7056 = vmatmul.f32.gmra.mxu0 %v6719
        %v7057 = vpop.f32.mrf.mxu0
        %v7058 = vadd.f32 %v335, %v7057
        %7059 = vmatmul.f32.gmra.mxu0 %v6722
        %v7060 = vpop.f32.mrf.mxu0
        %v7061 = vadd.f32 %v335, %v7060
        %7062 = vmatmul.f32.gmra.mxu0 %v6725
        %v7063 = vpop.f32.mrf.mxu0
        %v7064 = vadd.f32 %v335, %v7063
        %7065 = vmatmul.f32.gmra.mxu0 %v6728
        %v7066 = vpop.f32.mrf.mxu0
        %v7067 = vadd.f32 %v335, %v7066
        %7068 = vmatmul.f32.gmra.mxu0 %v6731
        %v7069 = vpop.f32.mrf.mxu0
        %v7070 = vadd.f32 %v335, %v7069
        %7071 = vmatmul.f32.gmra.mxu0 %v6734
        %v7072 = vpop.f32.mrf.mxu0
        %v7073 = vadd.f32 %v335, %v7072
        %7074 = vmatmul.f32.gmra.mxu0 %v6737
        %v7075 = vpop.f32.mrf.mxu0
        %v7076 = vadd.f32 %v335, %v7075
        %7077 = vmatmul.f32.gmra.mxu0 %v6740
        %v7078 = vpop.f32.mrf.mxu0
        %v7079 = vadd.f32 %v335, %v7078
        %7080 = vmatmul.f32.gmra.mxu0 %v6743
        %v7081 = vpop.f32.mrf.mxu0
        %v7082 = vadd.f32 %v335, %v7081
        %7083 = vmatmul.f32.gmra.mxu0 %v6746
        %v7084 = vpop.f32.mrf.mxu0
        %v7085 = vadd.f32 %v335, %v7084
        %7086 = vmatmul.f32.gmra.mxu0 %v6749
        %v7087 = vpop.f32.mrf.mxu0
        %v7088 = vadd.f32 %v335, %v7087
        %7089 = vmatmul.f32.gmra.mxu0 %v6752
        %v7090 = vpop.f32.mrf.mxu0
        %v7091 = vadd.f32 %v335, %v7090
        %7092 = vmatmul.f32.gmra.mxu0 %v6755
        %v7093 = vpop.f32.mrf.mxu0
        %v7094 = vadd.f32 %v335, %v7093
        %7095 = vmatmul.f32.gmra.mxu0 %v6758
        %v7096 = vpop.f32.mrf.mxu0
        %v7097 = vadd.f32 %v335, %v7096
        %7098 = vmatmul.f32.gmra.mxu0 %v6761
        %v7099 = vpop.f32.mrf.mxu0
        %v7100 = vadd.f32 %v335, %v7099
        %7101 = vmatmul.f32.gmra.mxu0 %v6764
        %v7102 = vpop.f32.mrf.mxu0
        %v7103 = vadd.f32 %v335, %v7102
        %7104 = vmatmul.f32.gmra.mxu0 %v6767
        %v7105 = vpop.f32.mrf.mxu0
        %v7106 = vadd.f32 %v335, %v7105
        %7107 = vmatmul.f32.gmra.mxu0 %v6770
        %v7108 = vpop.f32.mrf.mxu0
        %v7109 = vadd.f32 %v335, %v7108
        %7110 = vdwg.mxu0
        %7111 = vmatpush.msra.mxu0 0.0
        %7112 = vmatpush.msra.mxu0 0.0
        %7113 = vmatpush.msra.mxu0 0.0
        %7114 = vmatpush.msra.mxu0 0.0
        %7115 = vmatpush.msra.mxu0 0.0
        %7116 = vmatpush.msra.mxu0 0.0
        %7117 = vmatpush.msra.mxu0 0.0
        %7118 = vmatpush.msra.mxu0 0.0
        %7119 = vmatpush.msra.mxu0 0.0
        %7120 = vmatpush.msra.mxu0 0.0
        %7121 = vmatpush.msra.mxu0 0.0
        %7122 = vmatpush.msra.mxu0 0.0
        %7123 = vmatpush.msra.mxu0 0.0
        %7124 = vmatpush.msra.mxu0 0.0
        %7125 = vmatpush.msra.mxu0 0.0
        %7126 = vmatpush.msra.mxu0 %v266
        %7127 = vmatmul.f32.gmra.mxu0 %v6677
        %v7128 = vpop.f32.mrf.mxu0
        %v7129 = vadd.f32 %v336, %v7128
        %7130 = vmatmul.f32.gmra.mxu0 %v6680
        %v7131 = vpop.f32.mrf.mxu0
        %v7132 = vadd.f32 %v336, %v7131
        %7133 = vmatmul.f32.gmra.mxu0 %v6683
        %v7134 = vpop.f32.mrf.mxu0
        %v7135 = vadd.f32 %v336, %v7134
        %7136 = vmatmul.f32.gmra.mxu0 %v6686
        %v7137 = vpop.f32.mrf.mxu0
        %v7138 = vadd.f32 %v336, %v7137
        %7139 = vmatmul.f32.gmra.mxu0 %v6689
        %v7140 = vpop.f32.mrf.mxu0
        %v7141 = vadd.f32 %v336, %v7140
        %7142 = vmatmul.f32.gmra.mxu0 %v6692
        %v7143 = vpop.f32.mrf.mxu0
        %v7144 = vadd.f32 %v336, %v7143
        %7145 = vmatmul.f32.gmra.mxu0 %v6695
        %v7146 = vpop.f32.mrf.mxu0
        %v7147 = vadd.f32 %v336, %v7146
        %7148 = vmatmul.f32.gmra.mxu0 %v6698
        %v7149 = vpop.f32.mrf.mxu0
        %v7150 = vadd.f32 %v336, %v7149
        %7151 = vmatmul.f32.gmra.mxu0 %v6701
        %v7152 = vpop.f32.mrf.mxu0
        %v7153 = vadd.f32 %v336, %v7152
        %7154 = vmatmul.f32.gmra.mxu0 %v6704
        %v7155 = vpop.f32.mrf.mxu0
        %v7156 = vadd.f32 %v336, %v7155
        %7157 = vmatmul.f32.gmra.mxu0 %v6707
        %v7158 = vpop.f32.mrf.mxu0
        %v7159 = vadd.f32 %v336, %v7158
        %7160 = vmatmul.f32.gmra.mxu0 %v6710
        %v7161 = vpop.f32.mrf.mxu0
        %v7162 = vadd.f32 %v336, %v7161
        %7163 = vmatmul.f32.gmra.mxu0 %v6713
        %v7164 = vpop.f32.mrf.mxu0
        %v7165 = vadd.f32 %v336, %v7164
        %7166 = vmatmul.f32.gmra.mxu0 %v6716
        %v7167 = vpop.f32.mrf.mxu0
        %v7168 = vadd.f32 %v336, %v7167
        %7169 = vmatmul.f32.gmra.mxu0 %v6719
        %v7170 = vpop.f32.mrf.mxu0
        %v7171 = vadd.f32 %v336, %v7170
        %7172 = vmatmul.f32.gmra.mxu0 %v6722
        %v7173 = vpop.f32.mrf.mxu0
        %v7174 = vadd.f32 %v336, %v7173
        %7175 = vmatmul.f32.gmra.mxu0 %v6725
        %v7176 = vpop.f32.mrf.mxu0
        %v7177 = vadd.f32 %v336, %v7176
        %7178 = vmatmul.f32.gmra.mxu0 %v6728
        %v7179 = vpop.f32.mrf.mxu0
        %v7180 = vadd.f32 %v336, %v7179
        %7181 = vmatmul.f32.gmra.mxu0 %v6731
        %v7182 = vpop.f32.mrf.mxu0
        %v7183 = vadd.f32 %v336, %v7182
        %7184 = vmatmul.f32.gmra.mxu0 %v6734
        %v7185 = vpop.f32.mrf.mxu0
        %v7186 = vadd.f32 %v336, %v7185
        %7187 = vmatmul.f32.gmra.mxu0 %v6737
        %v7188 = vpop.f32.mrf.mxu0
        %v7189 = vadd.f32 %v336, %v7188
        %7190 = vmatmul.f32.gmra.mxu0 %v6740
        %v7191 = vpop.f32.mrf.mxu0
        %v7192 = vadd.f32 %v336, %v7191
        %7193 = vmatmul.f32.gmra.mxu0 %v6743
        %v7194 = vpop.f32.mrf.mxu0
        %v7195 = vadd.f32 %v336, %v7194
        %7196 = vmatmul.f32.gmra.mxu0 %v6746
        %v7197 = vpop.f32.mrf.mxu0
        %v7198 = vadd.f32 %v336, %v7197
        %7199 = vmatmul.f32.gmra.mxu0 %v6749
        %v7200 = vpop.f32.mrf.mxu0
        %v7201 = vadd.f32 %v336, %v7200
        %7202 = vmatmul.f32.gmra.mxu0 %v6752
        %v7203 = vpop.f32.mrf.mxu0
        %v7204 = vadd.f32 %v336, %v7203
        %7205 = vmatmul.f32.gmra.mxu0 %v6755
        %v7206 = vpop.f32.mrf.mxu0
        %v7207 = vadd.f32 %v336, %v7206
        %7208 = vmatmul.f32.gmra.mxu0 %v6758
        %v7209 = vpop.f32.mrf.mxu0
        %v7210 = vadd.f32 %v336, %v7209
        %7211 = vmatmul.f32.gmra.mxu0 %v6761
        %v7212 = vpop.f32.mrf.mxu0
        %v7213 = vadd.f32 %v336, %v7212
        %7214 = vmatmul.f32.gmra.mxu0 %v6764
        %v7215 = vpop.f32.mrf.mxu0
        %v7216 = vadd.f32 %v336, %v7215
        %7217 = vmatmul.f32.gmra.mxu0 %v6767
        %v7218 = vpop.f32.mrf.mxu0
        %v7219 = vadd.f32 %v336, %v7218
        %7220 = vmatmul.f32.gmra.mxu0 %v6770
        %v7221 = vpop.f32.mrf.mxu0
        %v7222 = vadd.f32 %v336, %v7221
        %7223 = vdwg.mxu0
        %v7224 = vmax.f32 %v6790, 0.0
        %v7225 = vmax.f32 %v6903, 0.0
        %v7226 = vmax.f32 %v7016, 0.0
        %v7227 = vmax.f32 %v7129, 0.0
        %v7228 = vmax.f32 %v6793, 0.0
        %v7229 = vmax.f32 %v6906, 0.0
        %v7230 = vmax.f32 %v7019, 0.0
        %v7231 = vmax.f32 %v7132, 0.0
        %v7232 = vmax.f32 %v6796, 0.0
        %v7233 = vmax.f32 %v6909, 0.0
        %v7234 = vmax.f32 %v7022, 0.0
        %v7235 = vmax.f32 %v7135, 0.0
        %v7236 = vmax.f32 %v6799, 0.0
        %v7237 = vmax.f32 %v6912, 0.0
        %v7238 = vmax.f32 %v7025, 0.0
        %v7239 = vmax.f32 %v7138, 0.0
        %v7240 = vmax.f32 %v6802, 0.0
        %v7241 = vmax.f32 %v6915, 0.0
        %v7242 = vmax.f32 %v7028, 0.0
        %v7243 = vmax.f32 %v7141, 0.0
        %v7244 = vmax.f32 %v6805, 0.0
        %v7245 = vmax.f32 %v6918, 0.0
        %v7246 = vmax.f32 %v7031, 0.0
        %v7247 = vmax.f32 %v7144, 0.0
        %v7248 = vmax.f32 %v6808, 0.0
        %v7249 = vmax.f32 %v6921, 0.0
        %v7250 = vmax.f32 %v7034, 0.0
        %v7251 = vmax.f32 %v7147, 0.0
        %v7252 = vmax.f32 %v6811, 0.0
        %v7253 = vmax.f32 %v6924, 0.0
        %v7254 = vmax.f32 %v7037, 0.0
        %v7255 = vmax.f32 %v7150, 0.0
        %v7256 = vmax.f32 %v6814, 0.0
        %v7257 = vmax.f32 %v6927, 0.0
        %v7258 = vmax.f32 %v7040, 0.0
        %v7259 = vmax.f32 %v7153, 0.0
        %v7260 = vmax.f32 %v6817, 0.0
        %v7261 = vmax.f32 %v6930, 0.0
        %v7262 = vmax.f32 %v7043, 0.0
        %v7263 = vmax.f32 %v7156, 0.0
        %v7264 = vmax.f32 %v6820, 0.0
        %v7265 = vmax.f32 %v6933, 0.0
        %v7266 = vmax.f32 %v7046, 0.0
        %v7267 = vmax.f32 %v7159, 0.0
        %v7268 = vmax.f32 %v6823, 0.0
        %v7269 = vmax.f32 %v6936, 0.0
        %v7270 = vmax.f32 %v7049, 0.0
        %v7271 = vmax.f32 %v7162, 0.0
        %v7272 = vmax.f32 %v6826, 0.0
        %v7273 = vmax.f32 %v6939, 0.0
        %v7274 = vmax.f32 %v7052, 0.0
        %v7275 = vmax.f32 %v7165, 0.0
        %v7276 = vmax.f32 %v6829, 0.0
        %v7277 = vmax.f32 %v6942, 0.0
        %v7278 = vmax.f32 %v7055, 0.0
        %v7279 = vmax.f32 %v7168, 0.0
        %v7280 = vmax.f32 %v6832, 0.0
        %v7281 = vmax.f32 %v6945, 0.0
        %v7282 = vmax.f32 %v7058, 0.0
        %v7283 = vmax.f32 %v7171, 0.0
        %v7284 = vmax.f32 %v6835, 0.0
        %v7285 = vmax.f32 %v6948, 0.0
        %v7286 = vmax.f32 %v7061, 0.0
        %v7287 = vmax.f32 %v7174, 0.0
        %v7288 = vmax.f32 %v6838, 0.0
        %v7289 = vmax.f32 %v6951, 0.0
        %v7290 = vmax.f32 %v7064, 0.0
        %v7291 = vmax.f32 %v7177, 0.0
        %v7292 = vmax.f32 %v6841, 0.0
        %v7293 = vmax.f32 %v6954, 0.0
        %v7294 = vmax.f32 %v7067, 0.0
        %v7295 = vmax.f32 %v7180, 0.0
        %v7296 = vmax.f32 %v6844, 0.0
        %v7297 = vmax.f32 %v6957, 0.0
        %v7298 = vmax.f32 %v7070, 0.0
        %v7299 = vmax.f32 %v7183, 0.0
        %v7300 = vmax.f32 %v6847, 0.0
        %v7301 = vmax.f32 %v6960, 0.0
        %v7302 = vmax.f32 %v7073, 0.0
        %v7303 = vmax.f32 %v7186, 0.0
        %v7304 = vmax.f32 %v6850, 0.0
        %v7305 = vmax.f32 %v6963, 0.0
        %v7306 = vmax.f32 %v7076, 0.0
        %v7307 = vmax.f32 %v7189, 0.0
        %v7308 = vmax.f32 %v6853, 0.0
        %v7309 = vmax.f32 %v6966, 0.0
        %v7310 = vmax.f32 %v7079, 0.0
        %v7311 = vmax.f32 %v7192, 0.0
        %v7312 = vmax.f32 %v6856, 0.0
        %v7313 = vmax.f32 %v6969, 0.0
        %v7314 = vmax.f32 %v7082, 0.0
        %v7315 = vmax.f32 %v7195, 0.0
        %v7316 = vmax.f32 %v6859, 0.0
        %v7317 = vmax.f32 %v6972, 0.0
        %v7318 = vmax.f32 %v7085, 0.0
        %v7319 = vmax.f32 %v7198, 0.0
        %v7320 = vmax.f32 %v6862, 0.0
        %v7321 = vmax.f32 %v6975, 0.0
        %v7322 = vmax.f32 %v7088, 0.0
        %v7323 = vmax.f32 %v7201, 0.0
        %v7324 = vmax.f32 %v6865, 0.0
        %v7325 = vmax.f32 %v6978, 0.0
        %v7326 = vmax.f32 %v7091, 0.0
        %v7327 = vmax.f32 %v7204, 0.0
        %v7328 = vmax.f32 %v6868, 0.0
        %v7329 = vmax.f32 %v6981, 0.0
        %v7330 = vmax.f32 %v7094, 0.0
        %v7331 = vmax.f32 %v7207, 0.0
        %v7332 = vmax.f32 %v6871, 0.0
        %v7333 = vmax.f32 %v6984, 0.0
        %v7334 = vmax.f32 %v7097, 0.0
        %v7335 = vmax.f32 %v7210, 0.0
        %v7336 = vmax.f32 %v6874, 0.0
        %v7337 = vmax.f32 %v6987, 0.0
        %v7338 = vmax.f32 %v7100, 0.0
        %v7339 = vmax.f32 %v7213, 0.0
        %v7340 = vmax.f32 %v6877, 0.0
        %v7341 = vmax.f32 %v6990, 0.0
        %v7342 = vmax.f32 %v7103, 0.0
        %v7343 = vmax.f32 %v7216, 0.0
        %v7344 = vmax.f32 %v6880, 0.0
        %v7345 = vmax.f32 %v6993, 0.0
        %v7346 = vmax.f32 %v7106, 0.0
        %v7347 = vmax.f32 %v7219, 0.0
        %v7348 = vmax.f32 %v6883, 0.0
        %v7349 = vmax.f32 %v6996, 0.0
        %v7350 = vmax.f32 %v7109, 0.0
        %v7351 = vmax.f32 %v7222, 0.0
        %s7352 = scalar_lea.vmem %s236, 7 [#allocation8]
        %v7353 = vld [vmem:[%s7352] ss:$8 sm:$0xf]
        %v7354 = vadd.f32 %v7224, %v7228
        %v7355 = vadd.f32 %v7354, %v7232
        %v7356 = vadd.f32 %v7355, %v7236
        %v7357 = vadd.f32 %v7356, %v7240
        %v7358 = vadd.f32 %v7357, %v7244
        %v7359 = vadd.f32 %v7358, %v7248
        %v7360 = vadd.f32 %v7359, %v7252
        %v7361 = vadd.f32 %v7360, %v7256
        %v7362 = vadd.f32 %v7361, %v7260
        %v7363 = vadd.f32 %v7362, %v7264
        %v7364 = vadd.f32 %v7363, %v7268
        %v7365 = vadd.f32 %v7364, %v7272
        %v7366 = vadd.f32 %v7365, %v7276
        %v7367 = vadd.f32 %v7366, %v7280
        %v7368 = vadd.f32 %v7367, %v7284
        %v7369 = vadd.f32 %v7368, %v7288
        %v7370 = vadd.f32 %v7369, %v7292
        %v7371 = vadd.f32 %v7370, %v7296
        %v7372 = vadd.f32 %v7371, %v7300
        %v7373 = vadd.f32 %v7372, %v7304
        %v7374 = vadd.f32 %v7373, %v7308
        %v7375 = vadd.f32 %v7374, %v7312
        %v7376 = vadd.f32 %v7375, %v7316
        %v7377 = vadd.f32 %v7376, %v7320
        %v7378 = vadd.f32 %v7377, %v7324
        %v7379 = vadd.f32 %v7378, %v7328
        %v7380 = vadd.f32 %v7379, %v7332
        %v7381 = vadd.f32 %v7380, %v7336
        %v7382 = vadd.f32 %v7381, %v7340
        %v7383 = vadd.f32 %v7382, %v7344
        %v7384 = vadd.f32 %v7383, %v7348
        %v7385 = vrot.slane %v7384, 4
        %v7386 = vadd.f32 %v7384, %v7385
        %v7387 = vrot.slane %v7386, 2
        %v7388 = vadd.f32 %v7386, %v7387
        %v7389 = vrot.slane %v7388, 1
        %v7390 = vadd.f32 %v7388, %v7389
        %v7391 = vadd.f32 %v7225, %v7229
        %v7392 = vadd.f32 %v7391, %v7233
        %v7393 = vadd.f32 %v7392, %v7237
        %v7394 = vadd.f32 %v7393, %v7241
        %v7395 = vadd.f32 %v7394, %v7245
        %v7396 = vadd.f32 %v7395, %v7249
        %v7397 = vadd.f32 %v7396, %v7253
        %v7398 = vadd.f32 %v7397, %v7257
        %v7399 = vadd.f32 %v7398, %v7261
        %v7400 = vadd.f32 %v7399, %v7265
        %v7401 = vadd.f32 %v7400, %v7269
        %v7402 = vadd.f32 %v7401, %v7273
        %v7403 = vadd.f32 %v7402, %v7277
        %v7404 = vadd.f32 %v7403, %v7281
        %v7405 = vadd.f32 %v7404, %v7285
        %v7406 = vadd.f32 %v7405, %v7289
        %v7407 = vadd.f32 %v7406, %v7293
        %v7408 = vadd.f32 %v7407, %v7297
        %v7409 = vadd.f32 %v7408, %v7301
        %v7410 = vadd.f32 %v7409, %v7305
        %v7411 = vadd.f32 %v7410, %v7309
        %v7412 = vadd.f32 %v7411, %v7313
        %v7413 = vadd.f32 %v7412, %v7317
        %v7414 = vadd.f32 %v7413, %v7321
        %v7415 = vadd.f32 %v7414, %v7325
        %v7416 = vadd.f32 %v7415, %v7329
        %v7417 = vadd.f32 %v7416, %v7333
        %v7418 = vadd.f32 %v7417, %v7337
        %v7419 = vadd.f32 %v7418, %v7341
        %v7420 = vadd.f32 %v7419, %v7345
        %v7421 = vadd.f32 %v7420, %v7349
        %v7422 = vrot.slane %v7421, 4
        %v7423 = vadd.f32 %v7421, %v7422
        %v7424 = vrot.slane %v7423, 2
        %v7425 = vadd.f32 %v7423, %v7424
        %v7426 = vrot.slane %v7425, 1
        %v7427 = vadd.f32 %v7425, %v7426
        %v7428 = vadd.f32 %v7226, %v7230
        %v7429 = vadd.f32 %v7428, %v7234
        %v7430 = vadd.f32 %v7429, %v7238
        %v7431 = vadd.f32 %v7430, %v7242
        %v7432 = vadd.f32 %v7431, %v7246
        %v7433 = vadd.f32 %v7432, %v7250
        %v7434 = vadd.f32 %v7433, %v7254
        %v7435 = vadd.f32 %v7434, %v7258
        %v7436 = vadd.f32 %v7435, %v7262
        %v7437 = vadd.f32 %v7436, %v7266
        %v7438 = vadd.f32 %v7437, %v7270
        %v7439 = vadd.f32 %v7438, %v7274
        %v7440 = vadd.f32 %v7439, %v7278
        %v7441 = vadd.f32 %v7440, %v7282
        %v7442 = vadd.f32 %v7441, %v7286
        %v7443 = vadd.f32 %v7442, %v7290
        %v7444 = vadd.f32 %v7443, %v7294
        %v7445 = vadd.f32 %v7444, %v7298
        %v7446 = vadd.f32 %v7445, %v7302
        %v7447 = vadd.f32 %v7446, %v7306
        %v7448 = vadd.f32 %v7447, %v7310
        %v7449 = vadd.f32 %v7448, %v7314
        %v7450 = vadd.f32 %v7449, %v7318
        %v7451 = vadd.f32 %v7450, %v7322
        %v7452 = vadd.f32 %v7451, %v7326
        %v7453 = vadd.f32 %v7452, %v7330
        %v7454 = vadd.f32 %v7453, %v7334
        %v7455 = vadd.f32 %v7454, %v7338
        %v7456 = vadd.f32 %v7455, %v7342
        %v7457 = vadd.f32 %v7456, %v7346
        %v7458 = vadd.f32 %v7457, %v7350
        %v7459 = vrot.slane %v7458, 4
        %v7460 = vadd.f32 %v7458, %v7459
        %v7461 = vrot.slane %v7460, 2
        %v7462 = vadd.f32 %v7460, %v7461
        %v7463 = vrot.slane %v7462, 1
        %v7464 = vadd.f32 %v7462, %v7463
        %v7465 = vadd.f32 %v7227, %v7231
        %v7466 = vadd.f32 %v7465, %v7235
        %v7467 = vadd.f32 %v7466, %v7239
        %v7468 = vadd.f32 %v7467, %v7243
        %v7469 = vadd.f32 %v7468, %v7247
        %v7470 = vadd.f32 %v7469, %v7251
        %v7471 = vadd.f32 %v7470, %v7255
        %v7472 = vadd.f32 %v7471, %v7259
        %v7473 = vadd.f32 %v7472, %v7263
        %v7474 = vadd.f32 %v7473, %v7267
        %v7475 = vadd.f32 %v7474, %v7271
        %v7476 = vadd.f32 %v7475, %v7275
        %v7477 = vadd.f32 %v7476, %v7279
        %v7478 = vadd.f32 %v7477, %v7283
        %v7479 = vadd.f32 %v7478, %v7287
        %v7480 = vadd.f32 %v7479, %v7291
        %v7481 = vadd.f32 %v7480, %v7295
        %v7482 = vadd.f32 %v7481, %v7299
        %v7483 = vadd.f32 %v7482, %v7303
        %v7484 = vadd.f32 %v7483, %v7307
        %v7485 = vadd.f32 %v7484, %v7311
        %v7486 = vadd.f32 %v7485, %v7315
        %v7487 = vadd.f32 %v7486, %v7319
        %v7488 = vadd.f32 %v7487, %v7323
        %v7489 = vadd.f32 %v7488, %v7327
        %v7490 = vadd.f32 %v7489, %v7331
        %v7491 = vadd.f32 %v7490, %v7335
        %v7492 = vadd.f32 %v7491, %v7339
        %v7493 = vadd.f32 %v7492, %v7343
        %v7494 = vadd.f32 %v7493, %v7347
        %v7495 = vadd.f32 %v7494, %v7351
        %v7496 = vrot.slane %v7495, 4
        %v7497 = vadd.f32 %v7495, %v7496
        %v7498 = vrot.slane %v7497, 2
        %v7499 = vadd.f32 %v7497, %v7498
        %v7500 = vrot.slane %v7499, 1
        %v7501 = vadd.f32 %v7499, %v7500
        %v7506 = vrot.slane %v7427, 7
        %v7507 = vrot.slane %v7464, 6
        %v7508 = vrot.slane %v7501, 5
        %v7509 = vsel %vm1174, %v7390, %v7506
        %v7510 = vsel %vm1176, %v7507, %v7508
        %v7511 = vsel %vm1178, %v7509, %v7510
        %v7513 = vadd.f32 %v7353, %v7511
        %7514 = vst.msk [vmem:[%s7352] ss:$8 sm:$0xf] %vm1185, %v7513
        %7515 = vst.msk [vmem:[%s7352] ss:$8 sm:$0x0] %vm1185, %v7513
        // Predicated region
        $region49: #{tpu_custom_call.1} parent=31 // pred_check
          %p7516 = pneg %p239
        $region50: #{tpu_custom_call.1} parent=31 // pred_check_branch
          %7518 = sbr.rel (%p7516) target = $region52
        $region51: #{tpu_custom_call.1} parent=31 // pred_region
          %v7519 = vld [vmem:[%s236] sm:$0xff]
          %v7520 = vld [vmem:[%s236 + $0x8] sm:$0xff]
          %v7521 = vld [vmem:[%s236 + $0x10] sm:$0xff]
          %v7522 = vld [vmem:[%s236 + $0x18] sm:$0xff]
          %v7523 = vmul.f32 %v7519, 0.00390625
          %v7524 = vmul.f32 %v7520, 0.00390625
          %v7525 = vmul.f32 %v7521, 0.00390625
          %v7526 = vmul.f32 %v7522, 0.00390625
          %v7527 = vmul.f32 %v7523, %v7523
          %v7528 = vmul.f32 %v7524, %v7524
          %v7529 = vmul.f32 %v7525, %v7525
          %v7530 = vmul.f32 %v7526, %v7526
          %v7531 = vadd.f32 %v7527, %v7528
          %v7532 = vadd.f32 %v7531, %v7529
          %v7533 = vadd.f32 %v7532, %v7530
          %7534 = vadd.xlane.f32.xlu0 %v7533
          %v7535 = vpop.xlane.xlu0 %7534
          %v7536 = vmax.f32 %v7535, 1e-24
          %v7537 = vrsqrt.pop %v7536
          %v7538 = vmul.f32 %v7537, %v7536
          %v7539 = vmul.f32 %v7538, %v7537
          %v7540 = vmul.f32 0.5, %v7539
          %v7541 = vsub.f32 1.5, %v7540
          %v7542 = vmul.f32 %v7537, %v7541
          %vm7543 = vweird.f32 %v7536
          %vm7544 = vweird.f32 %v7537
          %vm7545 = vmor %vm7543, %vm7544
          %v7546 = vsel %vm7545, %v7537, %v7542
          %v7547 = vmul.f32 %v7523, %v7546
          %v7548 = vmul.f32 %v7524, %v7546
          %v7549 = vmul.f32 %v7525, %v7546
          %v7550 = vmul.f32 %v7526, %v7546
          %7551 = vst [vmem:[%s236] sm:$0xff] %v7547
          %7552 = vst [vmem:[%s236 + $0x8] sm:$0xff] %v7548
          %7553 = vst [vmem:[%s236 + $0x10] sm:$0xff] %v7549
          %7554 = vst [vmem:[%s236 + $0x18] sm:$0xff] %v7550
        $region52: #{tpu_custom_call.1} parent=31 // pred_fallthru
          _
        %s7555 = sand.u32 %s111, 1
        %s7556 = scalar_lea.sflag [#allocation4], %s7555
        %s7557 = sand.u32 %s111, 1
        %s7558 = smul.addr %s7557, 32
        %s7559 = scalar_lea.vmem [#allocation8], %s7558
        // Predicated region
        $region53: #{tpu_custom_call.1} parent=31 // pred_check
          %p7560 = pneg %p121
        $region54: #{tpu_custom_call.1} parent=31 // pred_check_branch
          %7562 = sbr.rel (%p7560) target = $region56
        $region55: #{tpu_custom_call.1} parent=31 // pred_region
          %7564 = vsyncadd %s7556, 0
          %s7565 = smul.addr %s25, 4
          %s7566 = smul.addr %s7565, 8
          %s7567 = scalar_lea.hbm %s3, %s7566
          %s7569 = sshll.u32 %s7559, 4
          %s7570 = int_to_ptr.vmem [resolvable:$true] %s7569
          %s7571 = sshll.u32 %s7567, 4
          %s7572 = int_to_ptr.hbm [resolvable:$true] %s7571
          %7574 = dma.vmem_to_hbm [thread:$0]  %s7570, 512, %s7572, %s7556
        $region56: #{tpu_custom_call.1} parent=31 // pred_fallthru
          _
      $region32: #{tpu_custom_call.1} parent=5 // pred_fallthru
        _
      %p7575 = scmp.le.s32.totalorder 2, %s16
      // Predicated region
      $region57: #{tpu_custom_call.1} parent=5 // pred_check
        %p7576 = pneg %p7575
      $region58: #{tpu_custom_call.1} parent=5 // pred_check_branch
        %7578 = sbr.rel (%p7576) target = $region60
      $region59: #{tpu_custom_call.1} parent=5 // pred_region
        %s7579 = ssub.s32 %s16, 2
        // Predicated region
        $region61: #{tpu_custom_call.1} parent=59 // pred_check
          %p7580 = pneg %p127
        $region62: #{tpu_custom_call.1} parent=59 // pred_check_branch
          %7582 = sbr.rel (%p7580) target = $region64
        $region63: #{tpu_custom_call.1} parent=59 // pred_region
          %s7583 = sand.u32 %s112, 1
          %s7584 = scalar_lea.sflag [#allocation4], %s7583
          %s7585 = sand.u32 %s112, 1
          %s7586 = smul.addr %s7585, 32
          %s7587 = scalar_lea.vmem [#allocation8], %s7586
          %7589 = dma.done %s7584, 512
        $region64: #{tpu_custom_call.1} parent=59 // pred_fallthru
          _
      $region60: #{tpu_custom_call.1} parent=5 // pred_fallthru
        _
    $region6: #{tpu_custom_call.1} parent=1 // loop_footer
      %s20 = sadd.s32 1, %s16
    $region7: #{tpu_custom_call.1} parent=1 // loop_footer_branch
      %15 = sbr.rel target = $region3
    $region8: #{tpu_custom_call.1} parent=1 // loop_exit
      _
    %7590 = vsyncpa [#allocation3], 1
    %s7591 = scalar_lea.sflag [#allocation3], 1
    %7592 = vsyncpa %s7591, 1
    %7593 = vsyncpa [#allocation6], 1
    %7594 = vsyncpa [#allocation4], 1
    %s7595 = scalar_lea.sflag [#allocation4], 1
    %7596 = vsyncpa %s7595, 1

</llo_original>
